<compile_context>
chip_gen: v6e
topology: v6e:2x2x1
jax: 0.10.0
libtpu: 0.0.40
codegen_flags: <defaults>
</compile_context>

<pallas_src>
import functools
import math

import jax
import jax.numpy as jnp
from jax.experimental import pallas as pl
from jax.experimental.pallas import tpu as pltpu


def _round_up(x, m):
    return (x + m - 1) // m * m


# ----------------------------- Pallas kernels ------------------------------
def _matmul_bias_act_kernel(x_ref, w_ref, b_ref, o_ref, acc_ref, *, apply_relu):
    """One (tm, tn) output tile; K is the innermost ('arbitrary') grid axis."""

    @pl.when(pl.program_id(2) == 0)
    def _init():
        acc_ref[...] = jnp.zeros_like(acc_ref)

    acc_ref[...] += jnp.dot(
        x_ref[...], w_ref[...], preferred_element_type=jnp.float32
    )

    @pl.when(pl.program_id(2) == pl.num_programs(2) - 1)
    def _finalize():
        out = acc_ref[...] + b_ref[...]          # bias / ReLU epilogue in f32
        if apply_relu:
            out = jnp.maximum(out, 0.0)
        o_ref[...] = out.astype(o_ref.dtype)


def matmul_bias_act_pallas(x, w, b, relu):
    """y = [relu](x @ w + b): tiled MXU matmul, bf16 operands, f32 accumulate."""
    M, K = x.shape
    K2, N = w.shape
    assert K == K2

    # Lane/sublane-aligned padded problem: K and N to multiples of 128
    # (aligned MXU feeds, lane-dense unmasked stores); M to a multiple of 8.
    Kp = _round_up(K, 128)
    Np = _round_up(N, 128)
    Mp = _round_up(M, 8)
    tm = min(512, Mp)
    Mp = _round_up(Mp, tm)
    tk = next(t for t in (512, 256, 128) if Kp % t == 0)
    tn = next(t for t in (512, 256, 128) if Np % t == 0)

    xp = jnp.pad(x, ((0, Mp - M), (0, Kp - K))).astype(jnp.bfloat16)
    wp = jnp.pad(w, ((0, Kp - K), (0, Np - N))).astype(jnp.bfloat16)
    bp = jnp.pad(b.astype(jnp.float32), (0, Np - N)).reshape(1, Np)

    grid = (Mp // tm, Np // tn, Kp // tk)
    out = pl.pallas_call(
        functools.partial(_matmul_bias_act_kernel, apply_relu=relu),
        out_shape=jax.ShapeDtypeStruct((Mp, Np), jnp.float32),
        grid_spec=pltpu.PrefetchScalarGridSpec(
            num_scalar_prefetch=0,
            grid=grid,
            in_specs=[
                pl.BlockSpec((tm, tk), lambda i, j, k: (i, k)),
                pl.BlockSpec((tk, tn), lambda i, j, k: (k, j)),
                pl.BlockSpec((1, tn), lambda i, j, k: (0, j)),
            ],
            out_specs=pl.BlockSpec((tm, tn), lambda i, j, k: (i, j)),
            scratch_shapes=[pltpu.VMEM((tm, tn), jnp.float32)],
        ),
        compiler_params=pltpu.CompilerParams(
            # M/N parallel -> megacore / 2-TC sharding; K arbitrary (reduction).
            dimension_semantics=("parallel", "parallel", "arbitrary"),
            # Small blocks; 32 MiB leaves double-buffer headroom on v7x (64 MiB).
            vmem_limit_bytes=32 * 1024 * 1024,
        ),
        cost_estimate=pl.CostEstimate(
            flops=2 * Mp * Np * Kp,
            transcendentals=0,
            bytes_accessed=(Mp * Kp + Kp * Np) * 2 + Np * 4 + Mp * Np * 4,
        ),
    )(xp, wp, bp)
    return out[:M, :N]


def _maxpool_kernel(x_ref, o_ref, *, c):
    # x_ref: (1, Ho, 2, Wo, 2*C) -- a pure reshape of NHWC, lane dim = 2*C.
    v = x_ref[...]
    m = jnp.maximum(v[:, :, 0], v[:, :, 1])              # max over H window
    o_ref[...] = jnp.maximum(m[..., :c], m[..., c:])     # max over W window


def maxpool2x2_pallas(x):
    """nn.MaxPool2d(kernel_size=2, stride=2) on NHWC; no XLA-side transpose."""
    N, H, W, C = x.shape
    Ho, Wo = H // 2, W // 2
    xr = x.reshape(N, Ho, 2, Wo, 2 * C)      # contiguous reinterpretation only
    return pl.pallas_call(
        functools.partial(_maxpool_kernel, c=C),
        out_shape=jax.ShapeDtypeStruct((N, Ho, Wo, C), x.dtype),
        grid_spec=pltpu.PrefetchScalarGridSpec(
            num_scalar_prefetch=0,
            grid=(N,),
            in_specs=[pl.BlockSpec((1, Ho, 2, Wo, 2 * C),
                                   lambda n: (n, 0, 0, 0, 0))],
            out_specs=pl.BlockSpec((1, Ho, Wo, C), lambda n: (n, 0, 0, 0)),
        ),
        compiler_params=pltpu.CompilerParams(
            dimension_semantics=("parallel",),
            vmem_limit_bytes=32 * 1024 * 1024,
        ),
    )(xr)


# ------------------------- pure-JAX reference path -------------------------
def matmul_bias_act_ref(x, w, b, relu):
    # Same numerics as the kernel: bf16 operands, f32 accumulation/epilogue.
    y = jnp.dot(x.astype(jnp.bfloat16), w.astype(jnp.bfloat16),
                preferred_element_type=jnp.float32) + b.astype(jnp.float32)[None, :]
    return jnp.maximum(y, 0.0) if relu else y


def maxpool2x2_ref(x):
    N, H, W, C = x.shape
    return x.reshape(N, H // 2, 2, W // 2, 2, C).max(axis=(2, 4))


# ------------------------------- model glue --------------------------------
def _im2col(x, kh, kw, pad):
    """NHWC 'same' (stride-1) patch extraction -> (N*H*W, kh*kw*Cin)."""
    N, H, W, C = x.shape
    xp = jnp.pad(x, ((0, 0), (pad, pad), (pad, pad), (0, 0)))
    cols = [xp[:, i:i + H, j:j + W, :] for i in range(kh) for j in range(kw)]
    patches = jnp.concatenate(cols, axis=-1)            # (N, H, W, kh*kw*C)
    return patches.reshape(N * H * W, kh * kw * C)


def conv2d_relu(x, w, b, pad, matmul_fn):
    """Conv2d(stride=1, padding=pad) + ReLU via im2col + fused matmul kernel."""
    # TODO(synk): patches are still materialized by XLA (im2col); in-kernel
    # per-tap accumulation (and conv+pool epilogue fusion) not implemented.
    N, H, W, _ = x.shape
    KH, KW, Cin, Cout = w.shape
    patches = _im2col(x.astype(jnp.bfloat16), KH, KW, pad)
    out = matmul_fn(patches, w.reshape(KH * KW * Cin, Cout), b, True)
    return out.reshape(N, H, W, Cout)


def alexnet_forward(x_nchw, params, *, use_pallas=True):
    mm = matmul_bias_act_pallas if use_pallas else matmul_bias_act_ref
    pool = maxpool2x2_pallas if use_pallas else maxpool2x2_ref

    x = jnp.transpose(x_nchw, (0, 2, 3, 1)).astype(jnp.float32)  # NCHW -> NHWC

    # features
    x = conv2d_relu(x, params["conv1_w"], params["conv1_b"], 2, mm)   # 32x32x16
    x = pool(x)                                                       # 16x16x16
    x = conv2d_relu(x, params["conv2_w"], params["conv2_b"], 1, mm)   # 16x16x32
    x = pool(x)                                                       # 8x8x32
    x = conv2d_relu(x, params["conv3_w"], params["conv3_b"], 1, mm)   # 8x8x64
    x = conv2d_relu(x, params["conv4_w"], params["conv4_b"], 1, mm)   # 8x8x128
    x = conv2d_relu(x, params["conv5_w"], params["conv5_b"], 1, mm)   # 8x8x128
    x = pool(x)                                                       # 4x4x128

    # nn.AdaptiveAvgPool2d((4, 4)): with 32x32 CIFAR-10 input the feature map
    # is already 4x4 here, so the adaptive average pool is the identity.
    assert x.shape[1] == 4 and x.shape[2] == 4

    # NHWC flatten; fc1_w rows were permuted once in prepare_params, so this
    # equals torch.flatten(x, 1) on NCHW without a runtime transpose.
    N = x.shape[0]
    x = x.reshape(N, -1)                                              # (N, 2048)

    # classifier; nn.Dropout is the identity in eval/inference mode.
    # TODO(synk): train-mode dropout RNG masking is not implemented.
    x = mm(x, params["fc1_w"], params["fc1_b"], True)
    x = mm(x, params["fc2_w"], params["fc2_b"], True)
    x = mm(x, params["fc3_w"], params["fc3_b"], False)
    return x


def init_params(key):
    ks = iter(jax.random.split(key, 20))
    p = {}

    def conv(name, kh, kw, cin, cout):
        p[name + "_w"] = jax.random.normal(
            next(ks), (kh, kw, cin, cout), jnp.float32) / math.sqrt(kh * kw * cin)
        p[name + "_b"] = 0.01 * jax.random.normal(next(ks), (cout,), jnp.float32)

    def fc(name, fin, fout):
        p[name + "_w"] = jax.random.normal(
            next(ks), (fin, fout), jnp.float32) / math.sqrt(fin)
        p[name + "_b"] = 0.01 * jax.random.normal(next(ks), (fout,), jnp.float32)

    conv("conv1", 5, 5, 3, 16)
    conv("conv2", 3, 3, 16, 32)
    conv("conv3", 3, 3, 32, 64)
    conv("conv4", 3, 3, 64, 128)
    conv("conv5", 3, 3, 128, 128)
    fc("fc1", 128 * 4 * 4, 1024)   # rows in PyTorch CHW-flatten order
    fc("fc2", 1024, 512)
    fc("fc3", 512, 10)
    return p


def prepare_params(p):
    """One-time weight prep: permute fc1_w rows from PyTorch's CHW-flatten
    order to NHWC-flatten order (removes a runtime activation transpose) and
    pre-cast weight matrices to bf16 (MXU operand dtype); biases stay f32."""
    q = dict(p)
    C, Hs, Ws = 128, 4, 4
    fc1 = p["fc1_w"].reshape(C, Hs, Ws, -1).transpose(1, 2, 0, 3)
    q["fc1_w"] = fc1.reshape(Hs * Ws * C, -1)
    for name in ("conv1", "conv2", "conv3", "conv4", "conv5",
                 "fc1", "fc2", "fc3"):
        q[name + "_w"] = q[name + "_w"].astype(jnp.bfloat16)
        q[name + "_b"] = q[name + "_b"].astype(jnp.float32)
    return q


if __name__ == "__main__":
    key = jax.random.PRNGKey(0)
    pkey, xkey = jax.random.split(key)
    params = prepare_params(init_params(pkey))
    # CIFAR-10 sized input, NCHW like PyTorch.
    x = jax.random.normal(xkey, (2, 3, 32, 32), jnp.float32)

    fwd_pallas = jax.jit(functools.partial(alexnet_forward, use_pallas=True))
    fwd_ref = jax.jit(functools.partial(alexnet_forward, use_pallas=False))

    out = jax.block_until_ready(fwd_pallas(x, params))
    ref = jax.block_until_ready(fwd_ref(x, params))

    assert out.shape == (2, 10), out.shape
    assert bool(jnp.all(jnp.isfinite(out)))
    max_err = float(jnp.max(jnp.abs(out - ref)))
    assert max_err < 5e-2, f"mismatch vs reference: {max_err}"
    print("KERNEL_OK")
</pallas_src>

<mosaic_0001>
module attributes {stable_mosaic.version = 11 : i64} {
  func.func @_matmul_bias_act_kernel(%arg0: i32, %arg1: i32, %arg2: i32, %arg3: memref<512x128xbf16, #tpu.memory_space<vmem>>, %arg4: memref<128x128xbf16, #tpu.memory_space<vmem>>, %arg5: memref<1x128xf32, #tpu.memory_space<vmem>>, %arg6: memref<512x128xf32, #tpu.memory_space<vmem>>, %arg7: memref<512x128xf32, #tpu.memory_space<vmem>>) attributes {dimension_semantics = [#tpu.dimension_semantics<parallel>, #tpu.dimension_semantics<parallel>, #tpu.dimension_semantics<arbitrary>], iteration_bounds = array<i64: 4, 1, 1>, scalar_prefetch = 0 : i64, scratch_operands = 1 : i64, tpu.core_type = #tpu.core_type<tc>, window_params = [{transform_indices = @transform_0, window_bounds = array<i64: 512, 128>}, {transform_indices = @transform_1, window_bounds = array<i64: 128, 128>}, {transform_indices = @transform_2, window_bounds = array<i64: 1, 128>}, {transform_indices = @transform_3, window_bounds = array<i64: 512, 128>}]} {
    %c0_i32 = arith.constant 0 : i32
    %0 = arith.cmpi eq, %arg2, %c0_i32 : i32
    %1 = arith.extui %0 : i1 to i32
    %c0_i32_0 = arith.constant 0 : i32
    %2 = arith.cmpi ne, %1, %c0_i32_0 : i32
    scf.if %2 {
      %cst_10 = arith.constant 0.000000e+00 : f32
      %12 = vector.broadcast %cst_10 : f32 to vector<512x128xf32>
      %c0_11 = arith.constant 0 : index
      %c0_12 = arith.constant 0 : index
      %13 = vector.load %arg7[%c0_11, %c0_12] : memref<512x128xf32, #tpu.memory_space<vmem>>, vector<512x128xf32>
      tpu.vector_store %arg7[%c0_11, %c0_12], %12 {strides = array<i32>} : memref<512x128xf32, #tpu.memory_space<vmem>>, vector<512x128xf32>,
    } else {
    }
    %c0 = arith.constant 0 : index
    %c0_1 = arith.constant 0 : index
    %3 = vector.load %arg7[%c0, %c0_1] : memref<512x128xf32, #tpu.memory_space<vmem>>, vector<512x128xf32>
    %c0_2 = arith.constant 0 : index
    %c0_3 = arith.constant 0 : index
    %4 = vector.load %arg3[%c0_2, %c0_3] : memref<512x128xbf16, #tpu.memory_space<vmem>>, vector<512x128xbf16>
    %c0_4 = arith.constant 0 : index
    %c0_5 = arith.constant 0 : index
    %5 = vector.load %arg4[%c0_4, %c0_5] : memref<128x128xbf16, #tpu.memory_space<vmem>>, vector<128x128xbf16>
    %cst = arith.constant dense<0.000000e+00> : vector<512x128xf32>
    %6 = tpu.matmul %4, %5, %cst {dimension_numbers = #tpu.dot_dimension_numbers<[1], [0], [0], [1], [0, 0, 1, 1], [], []>} : vector<512x128xbf16>, vector<128x128xbf16>, vector<512x128xf32> -> vector<512x128xf32>
    %7 = arith.addf %3, %6 : vector<512x128xf32>
    %c0_6 = arith.constant 0 : index
    %c0_7 = arith.constant 0 : index
    %8 = vector.load %arg7[%c0_6, %c0_7] : memref<512x128xf32, #tpu.memory_space<vmem>>, vector<512x128xf32>
    tpu.vector_store %arg7[%c0_6, %c0_7], %7 {strides = array<i32>} : memref<512x128xf32, #tpu.memory_space<vmem>>, vector<512x128xf32>,
    %c0_i32_8 = arith.constant 0 : i32
    %9 = arith.cmpi eq, %arg2, %c0_i32_8 : i32
    %10 = arith.extui %9 : i1 to i32
    %c0_i32_9 = arith.constant 0 : i32
    %11 = arith.cmpi ne, %10, %c0_i32_9 : i32
    scf.if %11 {
      %c0_10 = arith.constant 0 : index
      %c0_11 = arith.constant 0 : index
      %12 = vector.load %arg7[%c0_10, %c0_11] : memref<512x128xf32, #tpu.memory_space<vmem>>, vector<512x128xf32>
      %c0_12 = arith.constant 0 : index
      %c0_13 = arith.constant 0 : index
      %13 = vector.load %arg5[%c0_12, %c0_13] : memref<1x128xf32, #tpu.memory_space<vmem>>, vector<1x128xf32>
      %14 = vector.broadcast %13 : vector<1x128xf32> to vector<512x128xf32>
      %15 = arith.addf %12, %14 : vector<512x128xf32>
      %cst_14 = arith.constant 0.000000e+00 : f32
      %16 = vector.broadcast %cst_14 : f32 to vector<512x128xf32>
      %17 = arith.maximumf %15, %16 : vector<512x128xf32>
      %c0_15 = arith.constant 0 : index
      %c0_16 = arith.constant 0 : index
      %18 = vector.load %arg6[%c0_15, %c0_16] : memref<512x128xf32, #tpu.memory_space<vmem>>, vector<512x128xf32>
      tpu.vector_store %arg6[%c0_15, %c0_16], %17 {strides = array<i32>} : memref<512x128xf32, #tpu.memory_space<vmem>>, vector<512x128xf32>,
    } else {
    }
    return
  }
  func.func @transform_0(%arg0: i32, %arg1: i32, %arg2: i32) -> (i32, i32) {
    %c0_i32 = arith.constant 0 : i32
    return %arg0, %arg2 : i32, i32
  }
  func.func @transform_1(%arg0: i32, %arg1: i32, %arg2: i32) -> (i32, i32) {
    %c0_i32 = arith.constant 0 : i32
    return %arg2, %arg1 : i32, i32
  }
  func.func @transform_2(%arg0: i32, %arg1: i32, %arg2: i32) -> (i32, i32) {
    %c0_i32 = arith.constant 0 : i32
    %c0_i32_0 = arith.constant 0 : i32
    return %c0_i32, %arg1 : i32, i32
  }
  func.func @transform_3(%arg0: i32, %arg1: i32, %arg2: i32) -> (i32, i32) {
    %c0_i32 = arith.constant 0 : i32
    return %arg0, %arg1 : i32, i32
  }
}

module attributes {stable_mosaic.version = 11 : i64} {
  func.func @_maxpool_kernel(%arg0: i32, %arg1: memref<1x16x2x16x32xf32, #tpu.memory_space<vmem>>, %arg2: memref<1x16x16x16xf32, #tpu.memory_space<vmem>>) attributes {dimension_semantics = [#tpu.dimension_semantics<parallel>], iteration_bounds = array<i64: 2>, scalar_prefetch = 0 : i64, scratch_operands = 0 : i64, tpu.core_type = #tpu.core_type<tc>, window_params = [{transform_indices = @transform_0, window_bounds = array<i64: 1, 16, 2, 16, 32>}, {transform_indices = @transform_1, window_bounds = array<i64: 1, 16, 16, 16>}]} {
    %c0 = arith.constant 0 : index
    %c0_0 = arith.constant 0 : index
    %c0_1 = arith.constant 0 : index
    %c0_2 = arith.constant 0 : index
    %c0_3 = arith.constant 0 : index
    %0 = vector.load %arg1[%c0, %c0_0, %c0_1, %c0_2, %c0_3] : memref<1x16x2x16x32xf32, #tpu.memory_space<vmem>>, vector<1x16x2x16x32xf32>
    %1 = vector.extract_strided_slice %0 {offsets = [0, 0, 0, 0, 0], sizes = [1, 16, 1, 16, 32], strides = [1, 1, 1, 1, 1]} : vector<1x16x2x16x32xf32> to vector<1x16x1x16x32xf32>
    %2 = vector.shape_cast %1 : vector<1x16x1x16x32xf32> to vector<1x16x16x32xf32>
    %3 = vector.extract_strided_slice %0 {offsets = [0, 0, 1, 0, 0], sizes = [1, 16, 1, 16, 32], strides = [1, 1, 1, 1, 1]} : vector<1x16x2x16x32xf32> to vector<1x16x1x16x32xf32>
    %4 = vector.shape_cast %3 : vector<1x16x1x16x32xf32> to vector<1x16x16x32xf32>
    %5 = arith.maximumf %2, %4 : vector<1x16x16x32xf32>
    %6 = vector.extract_strided_slice %5 {offsets = [0, 0, 0, 0], sizes = [1, 16, 16, 16], strides = [1, 1, 1, 1]} : vector<1x16x16x32xf32> to vector<1x16x16x16xf32>
    %7 = vector.extract_strided_slice %5 {offsets = [0, 0, 0, 16], sizes = [1, 16, 16, 16], strides = [1, 1, 1, 1]} : vector<1x16x16x32xf32> to vector<1x16x16x16xf32>
    %8 = arith.maximumf %6, %7 : vector<1x16x16x16xf32>
    %c0_4 = arith.constant 0 : index
    %c0_5 = arith.constant 0 : index
    %c0_6 = arith.constant 0 : index
    %c0_7 = arith.constant 0 : index
    %9 = vector.load %arg2[%c0_4, %c0_5, %c0_6, %c0_7] : memref<1x16x16x16xf32, #tpu.memory_space<vmem>>, vector<1x16x16x16xf32>
    tpu.vector_store %arg2[%c0_4, %c0_5, %c0_6, %c0_7], %8 {strides = array<i32>} : memref<1x16x16x16xf32, #tpu.memory_space<vmem>>, vector<1x16x16x16xf32>,
    return
  }
  func.func @transform_0(%arg0: i32) -> (i32, i32, i32, i32, i32) {
    %c0_i32 = arith.constant 0 : i32
    %c0_i32_0 = arith.constant 0 : i32
    %c0_i32_1 = arith.constant 0 : i32
    %c0_i32_2 = arith.constant 0 : i32
    %c0_i32_3 = arith.constant 0 : i32
    return %arg0, %c0_i32, %c0_i32_0, %c0_i32_1, %c0_i32_2 : i32, i32, i32, i32, i32
  }
  func.func @transform_1(%arg0: i32) -> (i32, i32, i32, i32) {
    %c0_i32 = arith.constant 0 : i32
    %c0_i32_0 = arith.constant 0 : i32
    %c0_i32_1 = arith.constant 0 : i32
    %c0_i32_2 = arith.constant 0 : i32
    return %arg0, %c0_i32, %c0_i32_0, %c0_i32_1 : i32, i32, i32, i32
  }
}

module attributes {stable_mosaic.version = 11 : i64} {
  func.func @_matmul_bias_act_kernel(%arg0: i32, %arg1: i32, %arg2: i32, %arg3: memref<512x256xbf16, #tpu.memory_space<vmem>>, %arg4: memref<256x128xbf16, #tpu.memory_space<vmem>>, %arg5: memref<1x128xf32, #tpu.memory_space<vmem>>, %arg6: memref<512x128xf32, #tpu.memory_space<vmem>>, %arg7: memref<512x128xf32, #tpu.memory_space<vmem>>) attributes {dimension_semantics = [#tpu.dimension_semantics<parallel>, #tpu.dimension_semantics<parallel>, #tpu.dimension_semantics<arbitrary>], iteration_bounds = array<i64: 1, 1, 1>, scalar_prefetch = 0 : i64, scratch_operands = 1 : i64, tpu.core_type = #tpu.core_type<tc>, window_params = [{transform_indices = @transform_0, window_bounds = array<i64: 512, 256>}, {transform_indices = @transform_1, window_bounds = array<i64: 256, 128>}, {transform_indices = @transform_2, window_bounds = array<i64: 1, 128>}, {transform_indices = @transform_3, window_bounds = array<i64: 512, 128>}]} {
    %c0_i32 = arith.constant 0 : i32
    %0 = arith.cmpi eq, %arg2, %c0_i32 : i32
    %1 = arith.extui %0 : i1 to i32
    %c0_i32_0 = arith.constant 0 : i32
    %2 = arith.cmpi ne, %1, %c0_i32_0 : i32
    scf.if %2 {
      %cst_10 = arith.constant 0.000000e+00 : f32
      %12 = vector.broadcast %cst_10 : f32 to vector<512x128xf32>
      %c0_11 = arith.constant 0 : index
      %c0_12 = arith.constant 0 : index
      %13 = vector.load %arg7[%c0_11, %c0_12] : memref<512x128xf32, #tpu.memory_space<vmem>>, vector<512x128xf32>
      tpu.vector_store %arg7[%c0_11, %c0_12], %12 {strides = array<i32>} : memref<512x128xf32, #tpu.memory_space<vmem>>, vector<512x128xf32>,
    } else {
    }
    %c0 = arith.constant 0 : index
    %c0_1 = arith.constant 0 : index
    %3 = vector.load %arg7[%c0, %c0_1] : memref<512x128xf32, #tpu.memory_space<vmem>>, vector<512x128xf32>
    %c0_2 = arith.constant 0 : index
    %c0_3 = arith.constant 0 : index
    %4 = vector.load %arg3[%c0_2, %c0_3] : memref<512x256xbf16, #tpu.memory_space<vmem>>, vector<512x256xbf16>
    %c0_4 = arith.constant 0 : index
    %c0_5 = arith.constant 0 : index
    %5 = vector.load %arg4[%c0_4, %c0_5] : memref<256x128xbf16, #tpu.memory_space<vmem>>, vector<256x128xbf16>
    %cst = arith.constant dense<0.000000e+00> : vector<512x128xf32>
    %6 = tpu.matmul %4, %5, %cst {dimension_numbers = #tpu.dot_dimension_numbers<[1], [0], [0], [1], [0, 0, 1, 1], [], []>} : vector<512x256xbf16>, vector<256x128xbf16>, vector<512x128xf32> -> vector<512x128xf32>
    %7 = arith.addf %3, %6 : vector<512x128xf32>
    %c0_6 = arith.constant 0 : index
    %c0_7 = arith.constant 0 : index
    %8 = vector.load %arg7[%c0_6, %c0_7] : memref<512x128xf32, #tpu.memory_space<vmem>>, vector<512x128xf32>
    tpu.vector_store %arg7[%c0_6, %c0_7], %7 {strides = array<i32>} : memref<512x128xf32, #tpu.memory_space<vmem>>, vector<512x128xf32>,
    %c0_i32_8 = arith.constant 0 : i32
    %9 = arith.cmpi eq, %arg2, %c0_i32_8 : i32
    %10 = arith.extui %9 : i1 to i32
    %c0_i32_9 = arith.constant 0 : i32
    %11 = arith.cmpi ne, %10, %c0_i32_9 : i32
    scf.if %11 {
      %c0_10 = arith.constant 0 : index
      %c0_11 = arith.constant 0 : index
      %12 = vector.load %arg7[%c0_10, %c0_11] : memref<512x128xf32, #tpu.memory_space<vmem>>, vector<512x128xf32>
      %c0_12 = arith.constant 0 : index
      %c0_13 = arith.constant 0 : index
      %13 = vector.load %arg5[%c0_12, %c0_13] : memref<1x128xf32, #tpu.memory_space<vmem>>, vector<1x128xf32>
      %14 = vector.broadcast %13 : vector<1x128xf32> to vector<512x128xf32>
      %15 = arith.addf %12, %14 : vector<512x128xf32>
      %cst_14 = arith.constant 0.000000e+00 : f32
      %16 = vector.broadcast %cst_14 : f32 to vector<512x128xf32>
      %17 = arith.maximumf %15, %16 : vector<512x128xf32>
      %c0_15 = arith.constant 0 : index
      %c0_16 = arith.constant 0 : index
      %18 = vector.load %arg6[%c0_15, %c0_16] : memref<512x128xf32, #tpu.memory_space<vmem>>, vector<512x128xf32>
      tpu.vector_store %arg6[%c0_15, %c0_16], %17 {strides = array<i32>} : memref<512x128xf32, #tpu.memory_space<vmem>>, vector<512x128xf32>,
    } else {
    }
    return
  }
  func.func @transform_0(%arg0: i32, %arg1: i32, %arg2: i32) -> (i32, i32) {
    %c0_i32 = arith.constant 0 : i32
    return %arg0, %arg2 : i32, i32
  }
  func.func @transform_1(%arg0: i32, %arg1: i32, %arg2: i32) -> (i32, i32) {
    %c0_i32 = arith.constant 0 : i32
    return %arg2, %arg1 : i32, i32
  }
  func.func @transform_2(%arg0: i32, %arg1: i32, %arg2: i32) -> (i32, i32) {
    %c0_i32 = arith.constant 0 : i32
    %c0_i32_0 = arith.constant 0 : i32
    return %c0_i32, %arg1 : i32, i32
  }
  func.func @transform_3(%arg0: i32, %arg1: i32, %arg2: i32) -> (i32, i32) {
    %c0_i32 = arith.constant 0 : i32
    return %arg0, %arg1 : i32, i32
  }
}

module attributes {stable_mosaic.version = 11 : i64} {
  func.func @_maxpool_kernel(%arg0: i32, %arg1: memref<1x8x2x8x64xf32, #tpu.memory_space<vmem>>, %arg2: memref<1x8x8x32xf32, #tpu.memory_space<vmem>>) attributes {dimension_semantics = [#tpu.dimension_semantics<parallel>], iteration_bounds = array<i64: 2>, scalar_prefetch = 0 : i64, scratch_operands = 0 : i64, tpu.core_type = #tpu.core_type<tc>, window_params = [{transform_indices = @transform_0, window_bounds = array<i64: 1, 8, 2, 8, 64>}, {transform_indices = @transform_1, window_bounds = array<i64: 1, 8, 8, 32>}]} {
    %c0 = arith.constant 0 : index
    %c0_0 = arith.constant 0 : index
    %c0_1 = arith.constant 0 : index
    %c0_2 = arith.constant 0 : index
    %c0_3 = arith.constant 0 : index
    %0 = vector.load %arg1[%c0, %c0_0, %c0_1, %c0_2, %c0_3] : memref<1x8x2x8x64xf32, #tpu.memory_space<vmem>>, vector<1x8x2x8x64xf32>
    %1 = vector.extract_strided_slice %0 {offsets = [0, 0, 0, 0, 0], sizes = [1, 8, 1, 8, 64], strides = [1, 1, 1, 1, 1]} : vector<1x8x2x8x64xf32> to vector<1x8x1x8x64xf32>
    %2 = vector.shape_cast %1 : vector<1x8x1x8x64xf32> to vector<1x8x8x64xf32>
    %3 = vector.extract_strided_slice %0 {offsets = [0, 0, 1, 0, 0], sizes = [1, 8, 1, 8, 64], strides = [1, 1, 1, 1, 1]} : vector<1x8x2x8x64xf32> to vector<1x8x1x8x64xf32>
    %4 = vector.shape_cast %3 : vector<1x8x1x8x64xf32> to vector<1x8x8x64xf32>
    %5 = arith.maximumf %2, %4 : vector<1x8x8x64xf32>
    %6 = vector.extract_strided_slice %5 {offsets = [0, 0, 0, 0], sizes = [1, 8, 8, 32], strides = [1, 1, 1, 1]} : vector<1x8x8x64xf32> to vector<1x8x8x32xf32>
    %7 = vector.extract_strided_slice %5 {offsets = [0, 0, 0, 32], sizes = [1, 8, 8, 32], strides = [1, 1, 1, 1]} : vector<1x8x8x64xf32> to vector<1x8x8x32xf32>
    %8 = arith.maximumf %6, %7 : vector<1x8x8x32xf32>
    %c0_4 = arith.constant 0 : index
    %c0_5 = arith.constant 0 : index
    %c0_6 = arith.constant 0 : index
    %c0_7 = arith.constant 0 : index
    %9 = vector.load %arg2[%c0_4, %c0_5, %c0_6, %c0_7] : memref<1x8x8x32xf32, #tpu.memory_space<vmem>>, vector<1x8x8x32xf32>
    tpu.vector_store %arg2[%c0_4, %c0_5, %c0_6, %c0_7], %8 {strides = array<i32>} : memref<1x8x8x32xf32, #tpu.memory_space<vmem>>, vector<1x8x8x32xf32>,
    return
  }
  func.func @transform_0(%arg0: i32) -> (i32, i32, i32, i32, i32) {
    %c0_i32 = arith.constant 0 : i32
    %c0_i32_0 = arith.constant 0 : i32
    %c0_i32_1 = arith.constant 0 : i32
    %c0_i32_2 = arith.constant 0 : i32
    %c0_i32_3 = arith.constant 0 : i32
    return %arg0, %c0_i32, %c0_i32_0, %c0_i32_1, %c0_i32_2 : i32, i32, i32, i32, i32
  }
  func.func @transform_1(%arg0: i32) -> (i32, i32, i32, i32) {
    %c0_i32 = arith.constant 0 : i32
    %c0_i32_0 = arith.constant 0 : i32
    %c0_i32_1 = arith.constant 0 : i32
    %c0_i32_2 = arith.constant 0 : i32
    return %arg0, %c0_i32, %c0_i32_0, %c0_i32_1 : i32, i32, i32, i32
  }
}

module attributes {stable_mosaic.version = 11 : i64} {
  func.func @_matmul_bias_act_kernel(%arg0: i32, %arg1: i32, %arg2: i32, %arg3: memref<128x128xbf16, #tpu.memory_space<vmem>>, %arg4: memref<128x128xbf16, #tpu.memory_space<vmem>>, %arg5: memref<1x128xf32, #tpu.memory_space<vmem>>, %arg6: memref<128x128xf32, #tpu.memory_space<vmem>>, %arg7: memref<128x128xf32, #tpu.memory_space<vmem>>) attributes {dimension_semantics = [#tpu.dimension_semantics<parallel>, #tpu.dimension_semantics<parallel>, #tpu.dimension_semantics<arbitrary>], iteration_bounds = array<i64: 1, 1, 3>, scalar_prefetch = 0 : i64, scratch_operands = 1 : i64, tpu.core_type = #tpu.core_type<tc>, window_params = [{transform_indices = @transform_0, window_bounds = array<i64: 128, 128>}, {transform_indices = @transform_1, window_bounds = array<i64: 128, 128>}, {transform_indices = @transform_2, window_bounds = array<i64: 1, 128>}, {transform_indices = @transform_3, window_bounds = array<i64: 128, 128>}]} {
    %c0_i32 = arith.constant 0 : i32
    %0 = arith.cmpi eq, %arg2, %c0_i32 : i32
    %1 = arith.extui %0 : i1 to i32
    %c0_i32_0 = arith.constant 0 : i32
    %2 = arith.cmpi ne, %1, %c0_i32_0 : i32
    scf.if %2 {
      %cst_9 = arith.constant 0.000000e+00 : f32
      %12 = vector.broadcast %cst_9 : f32 to vector<128x128xf32>
      %c0_10 = arith.constant 0 : index
      %c0_11 = arith.constant 0 : index
      %13 = vector.load %arg7[%c0_10, %c0_11] : memref<128x128xf32, #tpu.memory_space<vmem>>, vector<128x128xf32>
      tpu.vector_store %arg7[%c0_10, %c0_11], %12 {strides = array<i32>} : memref<128x128xf32, #tpu.memory_space<vmem>>, vector<128x128xf32>,
    } else {
    }
    %c0 = arith.constant 0 : index
    %c0_1 = arith.constant 0 : index
    %3 = vector.load %arg7[%c0, %c0_1] : memref<128x128xf32, #tpu.memory_space<vmem>>, vector<128x128xf32>
    %c0_2 = arith.constant 0 : index
    %c0_3 = arith.constant 0 : index
    %4 = vector.load %arg3[%c0_2, %c0_3] : memref<128x128xbf16, #tpu.memory_space<vmem>>, vector<128x128xbf16>
    %c0_4 = arith.constant 0 : index
    %c0_5 = arith.constant 0 : index
    %5 = vector.load %arg4[%c0_4, %c0_5] : memref<128x128xbf16, #tpu.memory_space<vmem>>, vector<128x128xbf16>
    %cst = arith.constant dense<0.000000e+00> : vector<128x128xf32>
    %6 = tpu.matmul %4, %5, %cst {dimension_numbers = #tpu.dot_dimension_numbers<[1], [0], [0], [1], [0, 0, 1, 1], [], []>} : vector<128x128xbf16>, vector<128x128xbf16>, vector<128x128xf32> -> vector<128x128xf32>
    %7 = arith.addf %3, %6 : vector<128x128xf32>
    %c0_6 = arith.constant 0 : index
    %c0_7 = arith.constant 0 : index
    %8 = vector.load %arg7[%c0_6, %c0_7] : memref<128x128xf32, #tpu.memory_space<vmem>>, vector<128x128xf32>
    tpu.vector_store %arg7[%c0_6, %c0_7], %7 {strides = array<i32>} : memref<128x128xf32, #tpu.memory_space<vmem>>, vector<128x128xf32>,
    %c2_i32 = arith.constant 2 : i32
    %9 = arith.cmpi eq, %arg2, %c2_i32 : i32
    %10 = arith.extui %9 : i1 to i32
    %c0_i32_8 = arith.constant 0 : i32
    %11 = arith.cmpi ne, %10, %c0_i32_8 : i32
    scf.if %11 {
      %c0_9 = arith.constant 0 : index
      %c0_10 = arith.constant 0 : index
      %12 = vector.load %arg7[%c0_9, %c0_10] : memref<128x128xf32, #tpu.memory_space<vmem>>, vector<128x128xf32>
      %c0_11 = arith.constant 0 : index
      %c0_12 = arith.constant 0 : index
      %13 = vector.load %arg5[%c0_11, %c0_12] : memref<1x128xf32, #tpu.memory_space<vmem>>, vector<1x128xf32>
      %14 = vector.broadcast %13 : vector<1x128xf32> to vector<128x128xf32>
      %15 = arith.addf %12, %14 : vector<128x128xf32>
      %cst_13 = arith.constant 0.000000e+00 : f32
      %16 = vector.broadcast %cst_13 : f32 to vector<128x128xf32>
      %17 = arith.maximumf %15, %16 : vector<128x128xf32>
      %c0_14 = arith.constant 0 : index
      %c0_15 = arith.constant 0 : index
      %18 = vector.load %arg6[%c0_14, %c0_15] : memref<128x128xf32, #tpu.memory_space<vmem>>, vector<128x128xf32>
      tpu.vector_store %arg6[%c0_14, %c0_15], %17 {strides = array<i32>} : memref<128x128xf32, #tpu.memory_space<vmem>>, vector<128x128xf32>,
    } else {
    }
    return
  }
  func.func @transform_0(%arg0: i32, %arg1: i32, %arg2: i32) -> (i32, i32) {
    %c0_i32 = arith.constant 0 : i32
    return %arg0, %arg2 : i32, i32
  }
  func.func @transform_1(%arg0: i32, %arg1: i32, %arg2: i32) -> (i32, i32) {
    %c0_i32 = arith.constant 0 : i32
    return %arg2, %arg1 : i32, i32
  }
  func.func @transform_2(%arg0: i32, %arg1: i32, %arg2: i32) -> (i32, i32) {
    %c0_i32 = arith.constant 0 : i32
    %c0_i32_0 = arith.constant 0 : i32
    return %c0_i32, %arg1 : i32, i32
  }
  func.func @transform_3(%arg0: i32, %arg1: i32, %arg2: i32) -> (i32, i32) {
    %c0_i32 = arith.constant 0 : i32
    return %arg0, %arg1 : i32, i32
  }
}

module attributes {stable_mosaic.version = 11 : i64} {
  func.func @_matmul_bias_act_kernel(%arg0: i32, %arg1: i32, %arg2: i32, %arg3: memref<128x128xbf16, #tpu.memory_space<vmem>>, %arg4: memref<128x128xbf16, #tpu.memory_space<vmem>>, %arg5: memref<1x128xf32, #tpu.memory_space<vmem>>, %arg6: memref<128x128xf32, #tpu.memory_space<vmem>>, %arg7: memref<128x128xf32, #tpu.memory_space<vmem>>) attributes {dimension_semantics = [#tpu.dimension_semantics<parallel>, #tpu.dimension_semantics<parallel>, #tpu.dimension_semantics<arbitrary>], iteration_bounds = array<i64: 1, 1, 5>, scalar_prefetch = 0 : i64, scratch_operands = 1 : i64, tpu.core_type = #tpu.core_type<tc>, window_params = [{transform_indices = @transform_0, window_bounds = array<i64: 128, 128>}, {transform_indices = @transform_1, window_bounds = array<i64: 128, 128>}, {transform_indices = @transform_2, window_bounds = array<i64: 1, 128>}, {transform_indices = @transform_3, window_bounds = array<i64: 128, 128>}]} {
    %c0_i32 = arith.constant 0 : i32
    %0 = arith.cmpi eq, %arg2, %c0_i32 : i32
    %1 = arith.extui %0 : i1 to i32
    %c0_i32_0 = arith.constant 0 : i32
    %2 = arith.cmpi ne, %1, %c0_i32_0 : i32
    scf.if %2 {
      %cst_9 = arith.constant 0.000000e+00 : f32
      %12 = vector.broadcast %cst_9 : f32 to vector<128x128xf32>
      %c0_10 = arith.constant 0 : index
      %c0_11 = arith.constant 0 : index
      %13 = vector.load %arg7[%c0_10, %c0_11] : memref<128x128xf32, #tpu.memory_space<vmem>>, vector<128x128xf32>
      tpu.vector_store %arg7[%c0_10, %c0_11], %12 {strides = array<i32>} : memref<128x128xf32, #tpu.memory_space<vmem>>, vector<128x128xf32>,
    } else {
    }
    %c0 = arith.constant 0 : index
    %c0_1 = arith.constant 0 : index
    %3 = vector.load %arg7[%c0, %c0_1] : memref<128x128xf32, #tpu.memory_space<vmem>>, vector<128x128xf32>
    %c0_2 = arith.constant 0 : index
    %c0_3 = arith.constant 0 : index
    %4 = vector.load %arg3[%c0_2, %c0_3] : memref<128x128xbf16, #tpu.memory_space<vmem>>, vector<128x128xbf16>
    %c0_4 = arith.constant 0 : index
    %c0_5 = arith.constant 0 : index
    %5 = vector.load %arg4[%c0_4, %c0_5] : memref<128x128xbf16, #tpu.memory_space<vmem>>, vector<128x128xbf16>
    %cst = arith.constant dense<0.000000e+00> : vector<128x128xf32>
    %6 = tpu.matmul %4, %5, %cst {dimension_numbers = #tpu.dot_dimension_numbers<[1], [0], [0], [1], [0, 0, 1, 1], [], []>} : vector<128x128xbf16>, vector<128x128xbf16>, vector<128x128xf32> -> vector<128x128xf32>
    %7 = arith.addf %3, %6 : vector<128x128xf32>
    %c0_6 = arith.constant 0 : index
    %c0_7 = arith.constant 0 : index
    %8 = vector.load %arg7[%c0_6, %c0_7] : memref<128x128xf32, #tpu.memory_space<vmem>>, vector<128x128xf32>
    tpu.vector_store %arg7[%c0_6, %c0_7], %7 {strides = array<i32>} : memref<128x128xf32, #tpu.memory_space<vmem>>, vector<128x128xf32>,
    %c4_i32 = arith.constant 4 : i32
    %9 = arith.cmpi eq, %arg2, %c4_i32 : i32
    %10 = arith.extui %9 : i1 to i32
    %c0_i32_8 = arith.constant 0 : i32
    %11 = arith.cmpi ne, %10, %c0_i32_8 : i32
    scf.if %11 {
      %c0_9 = arith.constant 0 : index
      %c0_10 = arith.constant 0 : index
      %12 = vector.load %arg7[%c0_9, %c0_10] : memref<128x128xf32, #tpu.memory_space<vmem>>, vector<128x128xf32>
      %c0_11 = arith.constant 0 : index
      %c0_12 = arith.constant 0 : index
      %13 = vector.load %arg5[%c0_11, %c0_12] : memref<1x128xf32, #tpu.memory_space<vmem>>, vector<1x128xf32>
      %14 = vector.broadcast %13 : vector<1x128xf32> to vector<128x128xf32>
      %15 = arith.addf %12, %14 : vector<128x128xf32>
      %cst_13 = arith.constant 0.000000e+00 : f32
      %16 = vector.broadcast %cst_13 : f32 to vector<128x128xf32>
      %17 = arith.maximumf %15, %16 : vector<128x128xf32>
      %c0_14 = arith.constant 0 : index
      %c0_15 = arith.constant 0 : index
      %18 = vector.load %arg6[%c0_14, %c0_15] : memref<128x128xf32, #tpu.memory_space<vmem>>, vector<128x128xf32>
      tpu.vector_store %arg6[%c0_14, %c0_15], %17 {strides = array<i32>} : memref<128x128xf32, #tpu.memory_space<vmem>>, vector<128x128xf32>,
    } else {
    }
    return
  }
  func.func @transform_0(%arg0: i32, %arg1: i32, %arg2: i32) -> (i32, i32) {
    %c0_i32 = arith.constant 0 : i32
    return %arg0, %arg2 : i32, i32
  }
  func.func @transform_1(%arg0: i32, %arg1: i32, %arg2: i32) -> (i32, i32) {
    %c0_i32 = arith.constant 0 : i32
    return %arg2, %arg1 : i32, i32
  }
  func.func @transform_2(%arg0: i32, %arg1: i32, %arg2: i32) -> (i32, i32) {
    %c0_i32 = arith.constant 0 : i32
    %c0_i32_0 = arith.constant 0 : i32
    return %c0_i32, %arg1 : i32, i32
  }
  func.func @transform_3(%arg0: i32, %arg1: i32, %arg2: i32) -> (i32, i32) {
    %c0_i32 = arith.constant 0 : i32
    return %arg0, %arg1 : i32, i32
  }
}

module attributes {stable_mosaic.version = 11 : i64} {
  func.func @_maxpool_kernel(%arg0: i32, %arg1: memref<1x4x2x4x256xf32, #tpu.memory_space<vmem>>, %arg2: memref<1x4x4x128xf32, #tpu.memory_space<vmem>>) attributes {dimension_semantics = [#tpu.dimension_semantics<parallel>], iteration_bounds = array<i64: 2>, scalar_prefetch = 0 : i64, scratch_operands = 0 : i64, tpu.core_type = #tpu.core_type<tc>, window_params = [{transform_indices = @transform_0, window_bounds = array<i64: 1, 4, 2, 4, 256>}, {transform_indices = @transform_1, window_bounds = array<i64: 1, 4, 4, 128>}]} {
    %c0 = arith.constant 0 : index
    %c0_0 = arith.constant 0 : index
    %c0_1 = arith.constant 0 : index
    %c0_2 = arith.constant 0 : index
    %c0_3 = arith.constant 0 : index
    %0 = vector.load %arg1[%c0, %c0_0, %c0_1, %c0_2, %c0_3] : memref<1x4x2x4x256xf32, #tpu.memory_space<vmem>>, vector<1x4x2x4x256xf32>
    %1 = vector.extract_strided_slice %0 {offsets = [0, 0, 0, 0, 0], sizes = [1, 4, 1, 4, 256], strides = [1, 1, 1, 1, 1]} : vector<1x4x2x4x256xf32> to vector<1x4x1x4x256xf32>
    %2 = vector.shape_cast %1 : vector<1x4x1x4x256xf32> to vector<1x4x4x256xf32>
    %3 = vector.extract_strided_slice %0 {offsets = [0, 0, 1, 0, 0], sizes = [1, 4, 1, 4, 256], strides = [1, 1, 1, 1, 1]} : vector<1x4x2x4x256xf32> to vector<1x4x1x4x256xf32>
    %4 = vector.shape_cast %3 : vector<1x4x1x4x256xf32> to vector<1x4x4x256xf32>
    %5 = arith.maximumf %2, %4 : vector<1x4x4x256xf32>
    %6 = vector.extract_strided_slice %5 {offsets = [0, 0, 0, 0], sizes = [1, 4, 4, 128], strides = [1, 1, 1, 1]} : vector<1x4x4x256xf32> to vector<1x4x4x128xf32>
    %7 = vector.extract_strided_slice %5 {offsets = [0, 0, 0, 128], sizes = [1, 4, 4, 128], strides = [1, 1, 1, 1]} : vector<1x4x4x256xf32> to vector<1x4x4x128xf32>
    %8 = arith.maximumf %6, %7 : vector<1x4x4x128xf32>
    %c0_4 = arith.constant 0 : index
    %c0_5 = arith.constant 0 : index
    %c0_6 = arith.constant 0 : index
    %c0_7 = arith.constant 0 : index
    %9 = vector.load %arg2[%c0_4, %c0_5, %c0_6, %c0_7] : memref<1x4x4x128xf32, #tpu.memory_space<vmem>>, vector<1x4x4x128xf32>
    tpu.vector_store %arg2[%c0_4, %c0_5, %c0_6, %c0_7], %8 {strides = array<i32>} : memref<1x4x4x128xf32, #tpu.memory_space<vmem>>, vector<1x4x4x128xf32>,
    return
  }
  func.func @transform_0(%arg0: i32) -> (i32, i32, i32, i32, i32) {
    %c0_i32 = arith.constant 0 : i32
    %c0_i32_0 = arith.constant 0 : i32
    %c0_i32_1 = arith.constant 0 : i32
    %c0_i32_2 = arith.constant 0 : i32
    %c0_i32_3 = arith.constant 0 : i32
    return %arg0, %c0_i32, %c0_i32_0, %c0_i32_1, %c0_i32_2 : i32, i32, i32, i32, i32
  }
  func.func @transform_1(%arg0: i32) -> (i32, i32, i32, i32) {
    %c0_i32 = arith.constant 0 : i32
    %c0_i32_0 = arith.constant 0 : i32
    %c0_i32_1 = arith.constant 0 : i32
    %c0_i32_2 = arith.constant 0 : i32
    return %arg0, %c0_i32, %c0_i32_0, %c0_i32_1 : i32, i32, i32, i32
  }
}

module attributes {stable_mosaic.version = 11 : i64} {
  func.func @_matmul_bias_act_kernel(%arg0: i32, %arg1: i32, %arg2: i32, %arg3: memref<128x128xbf16, #tpu.memory_space<vmem>>, %arg4: memref<128x128xbf16, #tpu.memory_space<vmem>>, %arg5: memref<1x128xf32, #tpu.memory_space<vmem>>, %arg6: memref<128x128xf32, #tpu.memory_space<vmem>>, %arg7: memref<128x128xf32, #tpu.memory_space<vmem>>) attributes {dimension_semantics = [#tpu.dimension_semantics<parallel>, #tpu.dimension_semantics<parallel>, #tpu.dimension_semantics<arbitrary>], iteration_bounds = array<i64: 1, 1, 9>, scalar_prefetch = 0 : i64, scratch_operands = 1 : i64, tpu.core_type = #tpu.core_type<tc>, window_params = [{transform_indices = @transform_0, window_bounds = array<i64: 128, 128>}, {transform_indices = @transform_1, window_bounds = array<i64: 128, 128>}, {transform_indices = @transform_2, window_bounds = array<i64: 1, 128>}, {transform_indices = @transform_3, window_bounds = array<i64: 128, 128>}]} {
    %c0_i32 = arith.constant 0 : i32
    %0 = arith.cmpi eq, %arg2, %c0_i32 : i32
    %1 = arith.extui %0 : i1 to i32
    %c0_i32_0 = arith.constant 0 : i32
    %2 = arith.cmpi ne, %1, %c0_i32_0 : i32
    scf.if %2 {
      %cst_9 = arith.constant 0.000000e+00 : f32
      %12 = vector.broadcast %cst_9 : f32 to vector<128x128xf32>
      %c0_10 = arith.constant 0 : index
      %c0_11 = arith.constant 0 : index
      %13 = vector.load %arg7[%c0_10, %c0_11] : memref<128x128xf32, #tpu.memory_space<vmem>>, vector<128x128xf32>
      tpu.vector_store %arg7[%c0_10, %c0_11], %12 {strides = array<i32>} : memref<128x128xf32, #tpu.memory_space<vmem>>, vector<128x128xf32>,
    } else {
    }
    %c0 = arith.constant 0 : index
    %c0_1 = arith.constant 0 : index
    %3 = vector.load %arg7[%c0, %c0_1] : memref<128x128xf32, #tpu.memory_space<vmem>>, vector<128x128xf32>
    %c0_2 = arith.constant 0 : index
    %c0_3 = arith.constant 0 : index
    %4 = vector.load %arg3[%c0_2, %c0_3] : memref<128x128xbf16, #tpu.memory_space<vmem>>, vector<128x128xbf16>
    %c0_4 = arith.constant 0 : index
    %c0_5 = arith.constant 0 : index
    %5 = vector.load %arg4[%c0_4, %c0_5] : memref<128x128xbf16, #tpu.memory_space<vmem>>, vector<128x128xbf16>
    %cst = arith.constant dense<0.000000e+00> : vector<128x128xf32>
    %6 = tpu.matmul %4, %5, %cst {dimension_numbers = #tpu.dot_dimension_numbers<[1], [0], [0], [1], [0, 0, 1, 1], [], []>} : vector<128x128xbf16>, vector<128x128xbf16>, vector<128x128xf32> -> vector<128x128xf32>
    %7 = arith.addf %3, %6 : vector<128x128xf32>
    %c0_6 = arith.constant 0 : index
    %c0_7 = arith.constant 0 : index
    %8 = vector.load %arg7[%c0_6, %c0_7] : memref<128x128xf32, #tpu.memory_space<vmem>>, vector<128x128xf32>
    tpu.vector_store %arg7[%c0_6, %c0_7], %7 {strides = array<i32>} : memref<128x128xf32, #tpu.memory_space<vmem>>, vector<128x128xf32>,
    %c8_i32 = arith.constant 8 : i32
    %9 = arith.cmpi eq, %arg2, %c8_i32 : i32
    %10 = arith.extui %9 : i1 to i32
    %c0_i32_8 = arith.constant 0 : i32
    %11 = arith.cmpi ne, %10, %c0_i32_8 : i32
    scf.if %11 {
      %c0_9 = arith.constant 0 : index
      %c0_10 = arith.constant 0 : index
      %12 = vector.load %arg7[%c0_9, %c0_10] : memref<128x128xf32, #tpu.memory_space<vmem>>, vector<128x128xf32>
      %c0_11 = arith.constant 0 : index
      %c0_12 = arith.constant 0 : index
      %13 = vector.load %arg5[%c0_11, %c0_12] : memref<1x128xf32, #tpu.memory_space<vmem>>, vector<1x128xf32>
      %14 = vector.broadcast %13 : vector<1x128xf32> to vector<128x128xf32>
      %15 = arith.addf %12, %14 : vector<128x128xf32>
      %cst_13 = arith.constant 0.000000e+00 : f32
      %16 = vector.broadcast %cst_13 : f32 to vector<128x128xf32>
      %17 = arith.maximumf %15, %16 : vector<128x128xf32>
      %c0_14 = arith.constant 0 : index
      %c0_15 = arith.constant 0 : index
      %18 = vector.load %arg6[%c0_14, %c0_15] : memref<128x128xf32, #tpu.memory_space<vmem>>, vector<128x128xf32>
      tpu.vector_store %arg6[%c0_14, %c0_15], %17 {strides = array<i32>} : memref<128x128xf32, #tpu.memory_space<vmem>>, vector<128x128xf32>,
    } else {
    }
    return
  }
  func.func @transform_0(%arg0: i32, %arg1: i32, %arg2: i32) -> (i32, i32) {
    %c0_i32 = arith.constant 0 : i32
    return %arg0, %arg2 : i32, i32
  }
  func.func @transform_1(%arg0: i32, %arg1: i32, %arg2: i32) -> (i32, i32) {
    %c0_i32 = arith.constant 0 : i32
    return %arg2, %arg1 : i32, i32
  }
  func.func @transform_2(%arg0: i32, %arg1: i32, %arg2: i32) -> (i32, i32) {
    %c0_i32 = arith.constant 0 : i32
    %c0_i32_0 = arith.constant 0 : i32
    return %c0_i32, %arg1 : i32, i32
  }
  func.func @transform_3(%arg0: i32, %arg1: i32, %arg2: i32) -> (i32, i32) {
    %c0_i32 = arith.constant 0 : i32
    return %arg0, %arg1 : i32, i32
  }
}

module attributes {stable_mosaic.version = 11 : i64} {
  func.func @_matmul_bias_act_kernel(%arg0: i32, %arg1: i32, %arg2: i32, %arg3: memref<8x512xbf16, #tpu.memory_space<vmem>>, %arg4: memref<512x512xbf16, #tpu.memory_space<vmem>>, %arg5: memref<1x512xf32, #tpu.memory_space<vmem>>, %arg6: memref<8x512xf32, #tpu.memory_space<vmem>>, %arg7: memref<8x512xf32, #tpu.memory_space<vmem>>) attributes {dimension_semantics = [#tpu.dimension_semantics<parallel>, #tpu.dimension_semantics<parallel>, #tpu.dimension_semantics<arbitrary>], iteration_bounds = array<i64: 1, 2, 4>, scalar_prefetch = 0 : i64, scratch_operands = 1 : i64, tpu.core_type = #tpu.core_type<tc>, window_params = [{transform_indices = @transform_0, window_bounds = array<i64: 8, 512>}, {transform_indices = @transform_1, window_bounds = array<i64: 512, 512>}, {transform_indices = @transform_2, window_bounds = array<i64: 1, 512>}, {transform_indices = @transform_3, window_bounds = array<i64: 8, 512>}]} {
    %c0_i32 = arith.constant 0 : i32
    %0 = arith.cmpi eq, %arg2, %c0_i32 : i32
    %1 = arith.extui %0 : i1 to i32
    %c0_i32_0 = arith.constant 0 : i32
    %2 = arith.cmpi ne, %1, %c0_i32_0 : i32
    scf.if %2 {
      %cst_9 = arith.constant 0.000000e+00 : f32
      %12 = vector.broadcast %cst_9 : f32 to vector<8x512xf32>
      %c0_10 = arith.constant 0 : index
      %c0_11 = arith.constant 0 : index
      %13 = vector.load %arg7[%c0_10, %c0_11] : memref<8x512xf32, #tpu.memory_space<vmem>>, vector<8x512xf32>
      tpu.vector_store %arg7[%c0_10, %c0_11], %12 {strides = array<i32>} : memref<8x512xf32, #tpu.memory_space<vmem>>, vector<8x512xf32>,
    } else {
    }
    %c0 = arith.constant 0 : index
    %c0_1 = arith.constant 0 : index
    %3 = vector.load %arg7[%c0, %c0_1] : memref<8x512xf32, #tpu.memory_space<vmem>>, vector<8x512xf32>
    %c0_2 = arith.constant 0 : index
    %c0_3 = arith.constant 0 : index
    %4 = vector.load %arg3[%c0_2, %c0_3] : memref<8x512xbf16, #tpu.memory_space<vmem>>, vector<8x512xbf16>
    %c0_4 = arith.constant 0 : index
    %c0_5 = arith.constant 0 : index
    %5 = vector.load %arg4[%c0_4, %c0_5] : memref<512x512xbf16, #tpu.memory_space<vmem>>, vector<512x512xbf16>
    %cst = arith.constant dense<0.000000e+00> : vector<8x512xf32>
    %6 = tpu.matmul %4, %5, %cst {dimension_numbers = #tpu.dot_dimension_numbers<[1], [0], [0], [1], [0, 0, 1, 1], [], []>} : vector<8x512xbf16>, vector<512x512xbf16>, vector<8x512xf32> -> vector<8x512xf32>
    %7 = arith.addf %3, %6 : vector<8x512xf32>
    %c0_6 = arith.constant 0 : index
    %c0_7 = arith.constant 0 : index
    %8 = vector.load %arg7[%c0_6, %c0_7] : memref<8x512xf32, #tpu.memory_space<vmem>>, vector<8x512xf32>
    tpu.vector_store %arg7[%c0_6, %c0_7], %7 {strides = array<i32>} : memref<8x512xf32, #tpu.memory_space<vmem>>, vector<8x512xf32>,
    %c3_i32 = arith.constant 3 : i32
    %9 = arith.cmpi eq, %arg2, %c3_i32 : i32
    %10 = arith.extui %9 : i1 to i32
    %c0_i32_8 = arith.constant 0 : i32
    %11 = arith.cmpi ne, %10, %c0_i32_8 : i32
    scf.if %11 {
      %c0_9 = arith.constant 0 : index
      %c0_10 = arith.constant 0 : index
      %12 = vector.load %arg7[%c0_9, %c0_10] : memref<8x512xf32, #tpu.memory_space<vmem>>, vector<8x512xf32>
      %c0_11 = arith.constant 0 : index
      %c0_12 = arith.constant 0 : index
      %13 = vector.load %arg5[%c0_11, %c0_12] : memref<1x512xf32, #tpu.memory_space<vmem>>, vector<1x512xf32>
      %14 = vector.broadcast %13 : vector<1x512xf32> to vector<8x512xf32>
      %15 = arith.addf %12, %14 : vector<8x512xf32>
      %cst_13 = arith.constant 0.000000e+00 : f32
      %16 = vector.broadcast %cst_13 : f32 to vector<8x512xf32>
      %17 = arith.maximumf %15, %16 : vector<8x512xf32>
      %c0_14 = arith.constant 0 : index
      %c0_15 = arith.constant 0 : index
      %18 = vector.load %arg6[%c0_14, %c0_15] : memref<8x512xf32, #tpu.memory_space<vmem>>, vector<8x512xf32>
      tpu.vector_store %arg6[%c0_14, %c0_15], %17 {strides = array<i32>} : memref<8x512xf32, #tpu.memory_space<vmem>>, vector<8x512xf32>,
    } else {
    }
    return
  }
  func.func @transform_0(%arg0: i32, %arg1: i32, %arg2: i32) -> (i32, i32) {
    %c0_i32 = arith.constant 0 : i32
    return %arg0, %arg2 : i32, i32
  }
  func.func @transform_1(%arg0: i32, %arg1: i32, %arg2: i32) -> (i32, i32) {
    %c0_i32 = arith.constant 0 : i32
    return %arg2, %arg1 : i32, i32
  }
  func.func @transform_2(%arg0: i32, %arg1: i32, %arg2: i32) -> (i32, i32) {
    %c0_i32 = arith.constant 0 : i32
    %c0_i32_0 = arith.constant 0 : i32
    return %c0_i32, %arg1 : i32, i32
  }
  func.func @transform_3(%arg0: i32, %arg1: i32, %arg2: i32) -> (i32, i32) {
    %c0_i32 = arith.constant 0 : i32
    return %arg0, %arg1 : i32, i32
  }
}

module attributes {stable_mosaic.version = 11 : i64} {
  func.func @_matmul_bias_act_kernel(%arg0: i32, %arg1: i32, %arg2: i32, %arg3: memref<8x512xbf16, #tpu.memory_space<vmem>>, %arg4: memref<512x512xbf16, #tpu.memory_space<vmem>>, %arg5: memref<1x512xf32, #tpu.memory_space<vmem>>, %arg6: memref<8x512xf32, #tpu.memory_space<vmem>>, %arg7: memref<8x512xf32, #tpu.memory_space<vmem>>) attributes {dimension_semantics = [#tpu.dimension_semantics<parallel>, #tpu.dimension_semantics<parallel>, #tpu.dimension_semantics<arbitrary>], iteration_bounds = array<i64: 1, 1, 2>, scalar_prefetch = 0 : i64, scratch_operands = 1 : i64, tpu.core_type = #tpu.core_type<tc>, window_params = [{transform_indices = @transform_0, window_bounds = array<i64: 8, 512>}, {transform_indices = @transform_1, window_bounds = array<i64: 512, 512>}, {transform_indices = @transform_2, window_bounds = array<i64: 1, 512>}, {transform_indices = @transform_3, window_bounds = array<i64: 8, 512>}]} {
    %c0_i32 = arith.constant 0 : i32
    %0 = arith.cmpi eq, %arg2, %c0_i32 : i32
    %1 = arith.extui %0 : i1 to i32
    %c0_i32_0 = arith.constant 0 : i32
    %2 = arith.cmpi ne, %1, %c0_i32_0 : i32
    scf.if %2 {
      %cst_9 = arith.constant 0.000000e+00 : f32
      %12 = vector.broadcast %cst_9 : f32 to vector<8x512xf32>
      %c0_10 = arith.constant 0 : index
      %c0_11 = arith.constant 0 : index
      %13 = vector.load %arg7[%c0_10, %c0_11] : memref<8x512xf32, #tpu.memory_space<vmem>>, vector<8x512xf32>
      tpu.vector_store %arg7[%c0_10, %c0_11], %12 {strides = array<i32>} : memref<8x512xf32, #tpu.memory_space<vmem>>, vector<8x512xf32>,
    } else {
    }
    %c0 = arith.constant 0 : index
    %c0_1 = arith.constant 0 : index
    %3 = vector.load %arg7[%c0, %c0_1] : memref<8x512xf32, #tpu.memory_space<vmem>>, vector<8x512xf32>
    %c0_2 = arith.constant 0 : index
    %c0_3 = arith.constant 0 : index
    %4 = vector.load %arg3[%c0_2, %c0_3] : memref<8x512xbf16, #tpu.memory_space<vmem>>, vector<8x512xbf16>
    %c0_4 = arith.constant 0 : index
    %c0_5 = arith.constant 0 : index
    %5 = vector.load %arg4[%c0_4, %c0_5] : memref<512x512xbf16, #tpu.memory_space<vmem>>, vector<512x512xbf16>
    %cst = arith.constant dense<0.000000e+00> : vector<8x512xf32>
    %6 = tpu.matmul %4, %5, %cst {dimension_numbers = #tpu.dot_dimension_numbers<[1], [0], [0], [1], [0, 0, 1, 1], [], []>} : vector<8x512xbf16>, vector<512x512xbf16>, vector<8x512xf32> -> vector<8x512xf32>
    %7 = arith.addf %3, %6 : vector<8x512xf32>
    %c0_6 = arith.constant 0 : index
    %c0_7 = arith.constant 0 : index
    %8 = vector.load %arg7[%c0_6, %c0_7] : memref<8x512xf32, #tpu.memory_space<vmem>>, vector<8x512xf32>
    tpu.vector_store %arg7[%c0_6, %c0_7], %7 {strides = array<i32>} : memref<8x512xf32, #tpu.memory_space<vmem>>, vector<8x512xf32>,
    %c1_i32 = arith.constant 1 : i32
    %9 = arith.cmpi eq, %arg2, %c1_i32 : i32
    %10 = arith.extui %9 : i1 to i32
    %c0_i32_8 = arith.constant 0 : i32
    %11 = arith.cmpi ne, %10, %c0_i32_8 : i32
    scf.if %11 {
      %c0_9 = arith.constant 0 : index
      %c0_10 = arith.constant 0 : index
      %12 = vector.load %arg7[%c0_9, %c0_10] : memref<8x512xf32, #tpu.memory_space<vmem>>, vector<8x512xf32>
      %c0_11 = arith.constant 0 : index
      %c0_12 = arith.constant 0 : index
      %13 = vector.load %arg5[%c0_11, %c0_12] : memref<1x512xf32, #tpu.memory_space<vmem>>, vector<1x512xf32>
      %14 = vector.broadcast %13 : vector<1x512xf32> to vector<8x512xf32>
      %15 = arith.addf %12, %14 : vector<8x512xf32>
      %cst_13 = arith.constant 0.000000e+00 : f32
      %16 = vector.broadcast %cst_13 : f32 to vector<8x512xf32>
      %17 = arith.maximumf %15, %16 : vector<8x512xf32>
      %c0_14 = arith.constant 0 : index
      %c0_15 = arith.constant 0 : index
      %18 = vector.load %arg6[%c0_14, %c0_15] : memref<8x512xf32, #tpu.memory_space<vmem>>, vector<8x512xf32>
      tpu.vector_store %arg6[%c0_14, %c0_15], %17 {strides = array<i32>} : memref<8x512xf32, #tpu.memory_space<vmem>>, vector<8x512xf32>,
    } else {
    }
    return
  }
  func.func @transform_0(%arg0: i32, %arg1: i32, %arg2: i32) -> (i32, i32) {
    %c0_i32 = arith.constant 0 : i32
    return %arg0, %arg2 : i32, i32
  }
  func.func @transform_1(%arg0: i32, %arg1: i32, %arg2: i32) -> (i32, i32) {
    %c0_i32 = arith.constant 0 : i32
    return %arg2, %arg1 : i32, i32
  }
  func.func @transform_2(%arg0: i32, %arg1: i32, %arg2: i32) -> (i32, i32) {
    %c0_i32 = arith.constant 0 : i32
    %c0_i32_0 = arith.constant 0 : i32
    return %c0_i32, %arg1 : i32, i32
  }
  func.func @transform_3(%arg0: i32, %arg1: i32, %arg2: i32) -> (i32, i32) {
    %c0_i32 = arith.constant 0 : i32
    return %arg0, %arg1 : i32, i32
  }
}

module attributes {stable_mosaic.version = 11 : i64} {
  func.func @_matmul_bias_act_kernel(%arg0: i32, %arg1: i32, %arg2: i32, %arg3: memref<8x512xbf16, #tpu.memory_space<vmem>>, %arg4: memref<512x128xbf16, #tpu.memory_space<vmem>>, %arg5: memref<1x128xf32, #tpu.memory_space<vmem>>, %arg6: memref<8x128xf32, #tpu.memory_space<vmem>>, %arg7: memref<8x128xf32, #tpu.memory_space<vmem>>) attributes {dimension_semantics = [#tpu.dimension_semantics<parallel>, #tpu.dimension_semantics<parallel>, #tpu.dimension_semantics<arbitrary>], iteration_bounds = array<i64: 1, 1, 1>, scalar_prefetch = 0 : i64, scratch_operands = 1 : i64, tpu.core_type = #tpu.core_type<tc>, window_params = [{transform_indices = @transform_0, window_bounds = array<i64: 8, 512>}, {transform_indices = @transform_1, window_bounds = array<i64: 512, 128>}, {transform_indices = @transform_2, window_bounds = array<i64: 1, 128>}, {transform_indices = @transform_3, window_bounds = array<i64: 8, 128>}]} {
    %c0_i32 = arith.constant 0 : i32
    %0 = arith.cmpi eq, %arg2, %c0_i32 : i32
    %1 = arith.extui %0 : i1 to i32
    %c0_i32_0 = arith.constant 0 : i32
    %2 = arith.cmpi ne, %1, %c0_i32_0 : i32
    scf.if %2 {
      %cst_10 = arith.constant 0.000000e+00 : f32
      %12 = vector.broadcast %cst_10 : f32 to vector<8x128xf32>
      %c0_11 = arith.constant 0 : index
      %c0_12 = arith.constant 0 : index
      %13 = vector.load %arg7[%c0_11, %c0_12] : memref<8x128xf32, #tpu.memory_space<vmem>>, vector<8x128xf32>
      tpu.vector_store %arg7[%c0_11, %c0_12], %12 {strides = array<i32>} : memref<8x128xf32, #tpu.memory_space<vmem>>, vector<8x128xf32>,
    } else {
    }
    %c0 = arith.constant 0 : index
    %c0_1 = arith.constant 0 : index
    %3 = vector.load %arg7[%c0, %c0_1] : memref<8x128xf32, #tpu.memory_space<vmem>>, vector<8x128xf32>
    %c0_2 = arith.constant 0 : index
    %c0_3 = arith.constant 0 : index
    %4 = vector.load %arg3[%c0_2, %c0_3] : memref<8x512xbf16, #tpu.memory_space<vmem>>, vector<8x512xbf16>
    %c0_4 = arith.constant 0 : index
    %c0_5 = arith.constant 0 : index
    %5 = vector.load %arg4[%c0_4, %c0_5] : memref<512x128xbf16, #tpu.memory_space<vmem>>, vector<512x128xbf16>
    %cst = arith.constant dense<0.000000e+00> : vector<8x128xf32>
    %6 = tpu.matmul %4, %5, %cst {dimension_numbers = #tpu.dot_dimension_numbers<[1], [0], [0], [1], [0, 0, 1, 1], [], []>} : vector<8x512xbf16>, vector<512x128xbf16>, vector<8x128xf32> -> vector<8x128xf32>
    %7 = arith.addf %3, %6 : vector<8x128xf32>
    %c0_6 = arith.constant 0 : index
    %c0_7 = arith.constant 0 : index
    %8 = vector.load %arg7[%c0_6, %c0_7] : memref<8x128xf32, #tpu.memory_space<vmem>>, vector<8x128xf32>
    tpu.vector_store %arg7[%c0_6, %c0_7], %7 {strides = array<i32>} : memref<8x128xf32, #tpu.memory_space<vmem>>, vector<8x128xf32>,
    %c0_i32_8 = arith.constant 0 : i32
    %9 = arith.cmpi eq, %arg2, %c0_i32_8 : i32
    %10 = arith.extui %9 : i1 to i32
    %c0_i32_9 = arith.constant 0 : i32
    %11 = arith.cmpi ne, %10, %c0_i32_9 : i32
    scf.if %11 {
      %c0_10 = arith.constant 0 : index
      %c0_11 = arith.constant 0 : index
      %12 = vector.load %arg7[%c0_10, %c0_11] : memref<8x128xf32, #tpu.memory_space<vmem>>, vector<8x128xf32>
      %c0_12 = arith.constant 0 : index
      %c0_13 = arith.constant 0 : index
      %13 = vector.load %arg5[%c0_12, %c0_13] : memref<1x128xf32, #tpu.memory_space<vmem>>, vector<1x128xf32>
      %14 = vector.broadcast %13 : vector<1x128xf32> to vector<8x128xf32>
      %15 = arith.addf %12, %14 : vector<8x128xf32>
      %c0_14 = arith.constant 0 : index
      %c0_15 = arith.constant 0 : index
      %16 = vector.load %arg6[%c0_14, %c0_15] : memref<8x128xf32, #tpu.memory_space<vmem>>, vector<8x128xf32>
      tpu.vector_store %arg6[%c0_14, %c0_15], %15 {strides = array<i32>} : memref<8x128xf32, #tpu.memory_space<vmem>>, vector<8x128xf32>,
    } else {
    }
    return
  }
  func.func @transform_0(%arg0: i32, %arg1: i32, %arg2: i32) -> (i32, i32) {
    %c0_i32 = arith.constant 0 : i32
    return %arg0, %arg2 : i32, i32
  }
  func.func @transform_1(%arg0: i32, %arg1: i32, %arg2: i32) -> (i32, i32) {
    %c0_i32 = arith.constant 0 : i32
    return %arg2, %arg1 : i32, i32
  }
  func.func @transform_2(%arg0: i32, %arg1: i32, %arg2: i32) -> (i32, i32) {
    %c0_i32 = arith.constant 0 : i32
    %c0_i32_0 = arith.constant 0 : i32
    return %c0_i32, %arg1 : i32, i32
  }
  func.func @transform_3(%arg0: i32, %arg1: i32, %arg2: i32) -> (i32, i32) {
    %c0_i32 = arith.constant 0 : i32
    return %arg0, %arg1 : i32, i32
  }
}

</mosaic_0001>

<llo_original>
// kernel: alexnet_forward.11
$region0: #{alexnet_forward.11}
  #allocation0 [shape = 'u32[]', space=smem, size = 0x4, offset = 0x4, fixed_abs, tag = 'smem constant byte address 0x4 - core index']
  #allocation1 [shape = 'u32[144,128]{1,0:T(1,128)}', space=vmem, size = 0x12000, scoped, tag = 'internal scratch']
  #allocation2 [shape = 'f32[512,128]{1,0:T(8,128)}', space=vmem, size = 0x40000, scoped, tag = 'scratch operand']
  %s0 = inlined_call_operand.vmem [shape: bf16[2048,128], index: 0, kind: input, shape index: {}]
  %s1 = inlined_call_operand.vmem [shape: bf16[128,128], index: 1, kind: input, shape index: {}]
  %s2 = inlined_call_operand.vmem [shape: f32[1,128], index: 2, kind: input, shape index: {}]
  %s3 = inlined_call_operand.vmem [shape: f32[2048,128], index: 3, kind: output, shape index: {}]
  %s4 = sld [smem:[#allocation0]]
  $region53: #{alexnet_forward.11} parent=0
    _
  %s6 = ssub.s32 1, %s4
  %s7 = scalar_select 0, %s6, %s4
  loop: start=0, step=1, limit=6
  $region2: #{alexnet_forward.11} parent=0 // loop_pre_header
    _
  $region3: #{alexnet_forward.11} parent=0 // loop_header
    %s9 = sphi 0, %s13
    %p10 = scmp.ge.s32.totalorder %s9, 6
    %s16 = sphi 0, %s35
    %s17 = sphi 0, %s31
    %s18 = sphi 0, %s27
    %s19 = sphi 0, %s16
    %s20 = sphi 0, %s17
    %s21 = sphi 0, %s18
    %s22 = sphi 0, %s19
    %s23 = sphi 0, %s20
    %s24 = sphi 0, %s21
    %s40 = sphi 0, %s42
    %s43 = sphi 0, %s40
    %s44 = sphi 0, %s43
    %s60 = sphi 0, %s44
    %s68 = sphi 0, %s70
    %s71 = sphi 0, %s68
    %s72 = sphi 0, %s71
    %s88 = sphi 0, %s72
    %s94 = sphi 0, %s96
    %s97 = sphi 0, %s94
    %s98 = sphi 0, %s97
    %s114 = sphi 0, %s98
    %s122 = sphi 0, %s124
    %s125 = sphi 0, %s122
    %s126 = sphi 0, %s125
    %s142 = sphi 0, %s126
  $region4: #{alexnet_forward.11} parent=0 // loop_header_branch
    %12 = sbr.rel (%p10) target = $region8
  $region5: #{alexnet_forward.11} parent=0 // loop_body
    %s14 = ssub.s32 %s9, 1
    %s15 = ssub.s32 %s9, 2
    %s25 = sadd.s32 1, %s18
    %p26 = scmp.ge.s32.totalorder %s25, 1
    %s27 = scalar_select %p26, 0, %s25
    %s28 = sadd.s32 1, %s17
    %s29 = scalar_select %p26, %s28, %s17
    %p30 = scmp.ge.s32.totalorder %s29, 1
    %s31 = scalar_select %p30, 0, %s29
    %s32 = sadd.s32 1, %s16
    %s33 = scalar_select %p30, %s32, %s16
    %p34 = scmp.ge.s32.totalorder %s33, 4
    %s35 = scalar_select %p34, 0, %s33
    %s36 = ssub.s32 %s16, %s35
    %s37 = ssub.s32 %s18, %s27
    %s38 = sor.u32 %s36, %s37
    %p39 = scmp.eq.s32.totalorder %s38, 0
    %s41 = sadd.s32 %s40, 1
    %s42 = scalar_select %p39, %s40, %s41
    %p45 = pneg %p39
    %p46 = scmp.eq.s32.totalorder %s9, 3
    %p47 = por %p45, %p46
    %p48 = scmp.ne.s32.totalorder %s40, %s43
    %p49 = scmp.eq.s32.totalorder %s9, 0
    %p50 = por %p48, %p49
    %p51 = scmp.ne.s32.totalorder %s40, %s43
    %p52 = scmp.eq.s32.totalorder %s14, 3
    %p53 = por %p51, %p52
    %p54 = scmp.ne.s32.totalorder %s43, %s44
    %p55 = scmp.eq.s32.totalorder %s14, 0
    %p56 = por %p54, %p55
    %p57 = scmp.ne.s32.totalorder %s43, %s44
    %p58 = scmp.eq.s32.totalorder %s15, 3
    %p59 = por %p57, %p58
    %p61 = scmp.ne.s32.totalorder %s44, %s60
    %p62 = scmp.eq.s32.totalorder %s15, 0
    %p63 = por %p61, %p62
    %s64 = ssub.s32 %s18, %s27
    %s65 = ssub.s32 %s17, %s31
    %s66 = sor.u32 %s64, %s65
    %p67 = scmp.eq.s32.totalorder %s66, 0
    %s69 = sadd.s32 %s68, 1
    %s70 = scalar_select %p67, %s68, %s69
    %p73 = pneg %p67
    %p74 = scmp.eq.s32.totalorder %s9, 3
    %p75 = por %p73, %p74
    %p76 = scmp.ne.s32.totalorder %s68, %s71
    %p77 = scmp.eq.s32.totalorder %s9, 0
    %p78 = por %p76, %p77
    %p79 = scmp.ne.s32.totalorder %s68, %s71
    %p80 = scmp.eq.s32.totalorder %s14, 3
    %p81 = por %p79, %p80
    %p82 = scmp.ne.s32.totalorder %s71, %s72
    %p83 = scmp.eq.s32.totalorder %s14, 0
    %p84 = por %p82, %p83
    %p85 = scmp.ne.s32.totalorder %s71, %s72
    %p86 = scmp.eq.s32.totalorder %s15, 3
    %p87 = por %p85, %p86
    %p89 = scmp.ne.s32.totalorder %s72, %s88
    %p90 = scmp.eq.s32.totalorder %s15, 0
    %p91 = por %p89, %p90
    %s92 = ssub.s32 %s17, %s31
    %p93 = scmp.eq.s32.totalorder %s92, 0
    %s95 = sadd.s32 %s94, 1
    %s96 = scalar_select %p93, %s94, %s95
    %p99 = pneg %p93
    %p100 = scmp.eq.s32.totalorder %s9, 3
    %p101 = por %p99, %p100
    %p102 = scmp.ne.s32.totalorder %s94, %s97
    %p103 = scmp.eq.s32.totalorder %s9, 0
    %p104 = por %p102, %p103
    %p105 = scmp.ne.s32.totalorder %s94, %s97
    %p106 = scmp.eq.s32.totalorder %s14, 3
    %p107 = por %p105, %p106
    %p108 = scmp.ne.s32.totalorder %s97, %s98
    %p109 = scmp.eq.s32.totalorder %s14, 0
    %p110 = por %p108, %p109
    %p111 = scmp.ne.s32.totalorder %s97, %s98
    %p112 = scmp.eq.s32.totalorder %s15, 3
    %p113 = por %p111, %p112
    %p115 = scmp.ne.s32.totalorder %s98, %s114
    %p116 = scmp.eq.s32.totalorder %s15, 0
    %p117 = por %p115, %p116
    %s118 = ssub.s32 %s16, %s35
    %s119 = ssub.s32 %s17, %s31
    %s120 = sor.u32 %s118, %s119
    %p121 = scmp.eq.s32.totalorder %s120, 0
    %s123 = sadd.s32 %s122, 1
    %s124 = scalar_select %p121, %s122, %s123
    %p127 = pneg %p121
    %p128 = scmp.eq.s32.totalorder %s9, 3
    %p129 = por %p127, %p128
    %p130 = scmp.ne.s32.totalorder %s122, %s125
    %p131 = scmp.eq.s32.totalorder %s9, 0
    %p132 = por %p130, %p131
    %p133 = scmp.ne.s32.totalorder %s122, %s125
    %p134 = scmp.eq.s32.totalorder %s14, 3
    %p135 = por %p133, %p134
    %p136 = scmp.ne.s32.totalorder %s125, %s126
    %p137 = scmp.eq.s32.totalorder %s14, 0
    %p138 = por %p136, %p137
    %p139 = scmp.ne.s32.totalorder %s125, %s126
    %p140 = scmp.eq.s32.totalorder %s15, 3
    %p141 = por %p139, %p140
    %p143 = scmp.ne.s32.totalorder %s126, %s142
    %p144 = scmp.eq.s32.totalorder %s15, 0
    %p145 = por %p143, %p144
    %p146 = scmp.le.s32.totalorder 1, %s9
    %p147 = scmp.lt.s32.totalorder %s9, 5
    %p148 = pnand %p146, %p147
    %p149 = pneg %p148
    // Predicated region
    $region9: #{alexnet_forward.11} parent=5 // pred_check
      _
    $region10: #{alexnet_forward.11} parent=5 // pred_check_branch
      %151 = sbr.rel (%p148) target = $region12
    $region11: #{alexnet_forward.11} parent=5 // pred_region
      %s152 = ssub.s32 %s9, 1
      // Predicated region
      $region13: #{alexnet_forward.11} parent=11 // pred_check
        %p153 = pneg %p84
      $region14: #{alexnet_forward.11} parent=11 // pred_check_branch
        %155 = sbr.rel (%p153) target = $region16
      $region15: #{alexnet_forward.11} parent=11 // pred_region
        %s156 = smul.u32 16, %s21
        %p157 = scmp.lt.s32.totalorder %s156, 15
        %s158 = scalar_select %p157, %s156, 15
        %p159 = scmp.lt.s32.totalorder %s20, 0
        %s160 = scalar_select %p159, %s20, 0
        %s161 = sadd.s32 %s160, %s158
        %s162 = smul.addr %s161, 4
        %s163 = scalar_lea.vmem %s1, %s162
        %s164 = smul.u32 16, %s21
      $region16: #{alexnet_forward.11} parent=11 // pred_fallthru
        _
      // Predicated region
      $region17: #{alexnet_forward.11} parent=11 // pred_check
        %p165 = pneg %p110
      $region18: #{alexnet_forward.11} parent=11 // pred_check_branch
        %167 = sbr.rel (%p165) target = $region20
      $region19: #{alexnet_forward.11} parent=11 // pred_region
        %p168 = scmp.lt.s32.totalorder %s20, 0
        %s169 = scalar_select %p168, %s20, 0
        %s170 = scalar_lea.vmem %s2, %s169
      $region20: #{alexnet_forward.11} parent=11 // pred_fallthru
        _
    $region12: #{alexnet_forward.11} parent=5 // pred_fallthru
      _
    %p171 = scmp.lt.s32.totalorder %s9, 4
    // Predicated region
    $region21: #{alexnet_forward.11} parent=5 // pred_check
      %p172 = pneg %p171
    $region22: #{alexnet_forward.11} parent=5 // pred_check_branch
      %174 = sbr.rel (%p172) target = $region24
    $region23: #{alexnet_forward.11} parent=5 // pred_region
      // Predicated region
      $region25: #{alexnet_forward.11} parent=23 // pred_check
        %p175 = pneg %p50
      $region26: #{alexnet_forward.11} parent=23 // pred_check_branch
        %177 = sbr.rel (%p175) target = $region28
      $region27: #{alexnet_forward.11} parent=23 // pred_region
        %s178 = smul.u32 64, %s16
        %p179 = scmp.lt.s32.totalorder %s178, 255
        %s180 = scalar_select %p179, %s178, 255
        %p181 = scmp.lt.s32.totalorder %s18, 0
        %s182 = scalar_select %p181, %s18, 0
        %s183 = sadd.s32 %s182, %s180
        %s184 = smul.addr %s183, 4
        %s185 = scalar_lea.vmem %s0, %s184
        %s186 = smul.u32 64, %s16
      $region28: #{alexnet_forward.11} parent=23 // pred_fallthru
        _
    $region24: #{alexnet_forward.11} parent=5 // pred_fallthru
      _
    %p187 = scmp.le.s32.totalorder 1, %s9
    %p188 = scmp.lt.s32.totalorder %s9, 5
    %p189 = pnand %p187, %p188
    %p190 = pneg %p189
    // Predicated region
    $region29: #{alexnet_forward.11} parent=5 // pred_check
      _
    $region30: #{alexnet_forward.11} parent=5 // pred_check_branch
      %192 = sbr.rel (%p189) target = $region32
    $region31: #{alexnet_forward.11} parent=5 // pred_region
      %s193 = ssub.s32 %s9, 1
      %s194 = smul.u32 64, %s19
      %p195 = scmp.lt.s32.totalorder %s194, 255
      %s196 = scalar_select %p195, %s194, 255
      %p197 = scmp.lt.s32.totalorder %s21, 0
      %s198 = scalar_select %p197, %s21, 0
      %s199 = sadd.s32 %s198, %s196
      %s200 = smul.addr %s199, 4
      %s201 = scalar_lea.vmem %s0, %s200
      %p202 = pneg %p56
      %p203 = pneg %p53
      %s204 = smul.u32 16, %s21
      %p205 = scmp.lt.s32.totalorder %s204, 15
      %s206 = scalar_select %p205, %s204, 15
      %p207 = scmp.lt.s32.totalorder %s20, 0
      %s208 = scalar_select %p207, %s20, 0
      %s209 = sadd.s32 %s208, %s206
      %s210 = smul.addr %s209, 4
      %s211 = scalar_lea.vmem %s1, %s210
      %p212 = pneg %p84
      %p213 = pneg %p81
      %p214 = scmp.lt.s32.totalorder %s20, 0
      %s215 = scalar_select %p214, %s20, 0
      %s216 = scalar_lea.vmem %s2, %s215
      %p217 = pneg %p110
      %p218 = pneg %p107
      %p219 = pneg %p138
      %p220 = pneg %p135
      %s221 = smul.u32 64, %s19
      %p222 = scmp.lt.s32.totalorder %s221, 255
      %s223 = scalar_select %p222, %s221, 255
      %p224 = scmp.lt.s32.totalorder %s20, 0
      %s225 = scalar_select %p224, %s20, 0
      %s226 = sadd.s32 %s225, %s223
      %s227 = smul.addr %s226, 8
      %s228 = scalar_lea.vmem %s3, %s227
      %s229 = smul.u32 64, %s19
      %p230 = scmp.lt.s32.totalorder %s229, 255
      %s231 = scalar_select %p230, %s229, 255
      %p232 = scmp.lt.s32.totalorder %s21, 0
      %s233 = scalar_select %p232, %s21, 0
      %s234 = sadd.s32 %s233, %s231
      %s235 = smul.addr %s234, 4
      %s236 = scalar_lea.vmem %s0, %s235
      %s237 = smul.u32 64, %s19
      %s238 = smul.u32 16, %s21
      %p239 = scmp.lt.s32.totalorder %s238, 15
      %s240 = scalar_select %p239, %s238, 15
      %p241 = scmp.lt.s32.totalorder %s20, 0
      %s242 = scalar_select %p241, %s20, 0
      %s243 = sadd.s32 %s242, %s240
      %s244 = smul.addr %s243, 4
      %s245 = scalar_lea.vmem %s1, %s244
      %s246 = smul.u32 16, %s21
      %p247 = scmp.lt.s32.totalorder %s20, 0
      %s248 = scalar_select %p247, %s20, 0
      %s249 = scalar_lea.vmem %s2, %s248
      %s250 = smul.u32 64, %s19
      %p251 = scmp.lt.s32.totalorder %s250, 255
      %s252 = scalar_select %p251, %s250, 255
      %p253 = scmp.lt.s32.totalorder %s20, 0
      %s254 = scalar_select %p253, %s20, 0
      %s255 = sadd.s32 %s254, %s252
      %s256 = smul.addr %s255, 8
      %s257 = scalar_lea.vmem %s3, %s256
      %s258 = smul.u32 64, %s19
      %p260 = scmp.eq.s32.totalorder %s21, 0
      // Predicated region
      $region33: #{alexnet_forward.11} parent=31 // pred_check
        %p261 = pneg %p260
      $region34: #{alexnet_forward.11} parent=31 // pred_check_branch
        %263 = sbr.rel (%p261) target = $region36
      $region35: #{alexnet_forward.11} parent=31 // pred_region
        %264 = vst [vmem:[#allocation2] sm:$0xff] 0.0
        %265 = vst [vmem:[#allocation2 + $0x8] sm:$0xff] 0.0
        %266 = vst [vmem:[#allocation2 + $0x10] sm:$0xff] 0.0
        %267 = vst [vmem:[#allocation2 + $0x18] sm:$0xff] 0.0
        %268 = vst [vmem:[#allocation2 + $0x20] sm:$0xff] 0.0
        %269 = vst [vmem:[#allocation2 + $0x28] sm:$0xff] 0.0
        %270 = vst [vmem:[#allocation2 + $0x30] sm:$0xff] 0.0
        %271 = vst [vmem:[#allocation2 + $0x38] sm:$0xff] 0.0
        %272 = vst [vmem:[#allocation2 + $0x40] sm:$0xff] 0.0
        %273 = vst [vmem:[#allocation2 + $0x48] sm:$0xff] 0.0
        %274 = vst [vmem:[#allocation2 + $0x50] sm:$0xff] 0.0
        %275 = vst [vmem:[#allocation2 + $0x58] sm:$0xff] 0.0
        %276 = vst [vmem:[#allocation2 + $0x60] sm:$0xff] 0.0
        %277 = vst [vmem:[#allocation2 + $0x68] sm:$0xff] 0.0
        %278 = vst [vmem:[#allocation2 + $0x70] sm:$0xff] 0.0
        %279 = vst [vmem:[#allocation2 + $0x78] sm:$0xff] 0.0
        %280 = vst [vmem:[#allocation2 + $0x80] sm:$0xff] 0.0
        %281 = vst [vmem:[#allocation2 + $0x88] sm:$0xff] 0.0
        %282 = vst [vmem:[#allocation2 + $0x90] sm:$0xff] 0.0
        %283 = vst [vmem:[#allocation2 + $0x98] sm:$0xff] 0.0
        %284 = vst [vmem:[#allocation2 + $0xa0] sm:$0xff] 0.0
        %285 = vst [vmem:[#allocation2 + $0xa8] sm:$0xff] 0.0
        %286 = vst [vmem:[#allocation2 + $0xb0] sm:$0xff] 0.0
        %287 = vst [vmem:[#allocation2 + $0xb8] sm:$0xff] 0.0
        %288 = vst [vmem:[#allocation2 + $0xc0] sm:$0xff] 0.0
        %289 = vst [vmem:[#allocation2 + $0xc8] sm:$0xff] 0.0
        %290 = vst [vmem:[#allocation2 + $0xd0] sm:$0xff] 0.0
        %291 = vst [vmem:[#allocation2 + $0xd8] sm:$0xff] 0.0
        %292 = vst [vmem:[#allocation2 + $0xe0] sm:$0xff] 0.0
        %293 = vst [vmem:[#allocation2 + $0xe8] sm:$0xff] 0.0
        %294 = vst [vmem:[#allocation2 + $0xf0] sm:$0xff] 0.0
        %295 = vst [vmem:[#allocation2 + $0xf8] sm:$0xff] 0.0
        %296 = vst [vmem:[#allocation2 + $0x100] sm:$0xff] 0.0
        %297 = vst [vmem:[#allocation2 + $0x108] sm:$0xff] 0.0
        %298 = vst [vmem:[#allocation2 + $0x110] sm:$0xff] 0.0
        %299 = vst [vmem:[#allocation2 + $0x118] sm:$0xff] 0.0
        %300 = vst [vmem:[#allocation2 + $0x120] sm:$0xff] 0.0
        %301 = vst [vmem:[#allocation2 + $0x128] sm:$0xff] 0.0
        %302 = vst [vmem:[#allocation2 + $0x130] sm:$0xff] 0.0
        %303 = vst [vmem:[#allocation2 + $0x138] sm:$0xff] 0.0
        %304 = vst [vmem:[#allocation2 + $0x140] sm:$0xff] 0.0
        %305 = vst [vmem:[#allocation2 + $0x148] sm:$0xff] 0.0
        %306 = vst [vmem:[#allocation2 + $0x150] sm:$0xff] 0.0
        %307 = vst [vmem:[#allocation2 + $0x158] sm:$0xff] 0.0
        %308 = vst [vmem:[#allocation2 + $0x160] sm:$0xff] 0.0
        %309 = vst [vmem:[#allocation2 + $0x168] sm:$0xff] 0.0
        %310 = vst [vmem:[#allocation2 + $0x170] sm:$0xff] 0.0
        %311 = vst [vmem:[#allocation2 + $0x178] sm:$0xff] 0.0
        %312 = vst [vmem:[#allocation2 + $0x180] sm:$0xff] 0.0
        %313 = vst [vmem:[#allocation2 + $0x188] sm:$0xff] 0.0
        %314 = vst [vmem:[#allocation2 + $0x190] sm:$0xff] 0.0
        %315 = vst [vmem:[#allocation2 + $0x198] sm:$0xff] 0.0
        %316 = vst [vmem:[#allocation2 + $0x1a0] sm:$0xff] 0.0
        %317 = vst [vmem:[#allocation2 + $0x1a8] sm:$0xff] 0.0
        %318 = vst [vmem:[#allocation2 + $0x1b0] sm:$0xff] 0.0
        %319 = vst [vmem:[#allocation2 + $0x1b8] sm:$0xff] 0.0
        %320 = vst [vmem:[#allocation2 + $0x1c0] sm:$0xff] 0.0
        %321 = vst [vmem:[#allocation2 + $0x1c8] sm:$0xff] 0.0
        %322 = vst [vmem:[#allocation2 + $0x1d0] sm:$0xff] 0.0
        %323 = vst [vmem:[#allocation2 + $0x1d8] sm:$0xff] 0.0
        %324 = vst [vmem:[#allocation2 + $0x1e0] sm:$0xff] 0.0
        %325 = vst [vmem:[#allocation2 + $0x1e8] sm:$0xff] 0.0
        %326 = vst [vmem:[#allocation2 + $0x1f0] sm:$0xff] 0.0
        %327 = vst [vmem:[#allocation2 + $0x1f8] sm:$0xff] 0.0
      $region36: #{alexnet_forward.11} parent=31 // pred_fallthru
        _
      %v328 = vld [vmem:[#allocation2] sm:$0xff]
      %v329 = vld [vmem:[#allocation2 + $0x8] sm:$0xff]
      %v330 = vld [vmem:[#allocation2 + $0x10] sm:$0xff]
      %v331 = vld [vmem:[#allocation2 + $0x18] sm:$0xff]
      %v332 = vld [vmem:[#allocation2 + $0x20] sm:$0xff]
      %v333 = vld [vmem:[#allocation2 + $0x28] sm:$0xff]
      %v334 = vld [vmem:[#allocation2 + $0x30] sm:$0xff]
      %v335 = vld [vmem:[#allocation2 + $0x38] sm:$0xff]
      %v336 = vld [vmem:[#allocation2 + $0x40] sm:$0xff]
      %v337 = vld [vmem:[#allocation2 + $0x48] sm:$0xff]
      %v338 = vld [vmem:[#allocation2 + $0x50] sm:$0xff]
      %v339 = vld [vmem:[#allocation2 + $0x58] sm:$0xff]
      %v340 = vld [vmem:[#allocation2 + $0x60] sm:$0xff]
      %v341 = vld [vmem:[#allocation2 + $0x68] sm:$0xff]
      %v342 = vld [vmem:[#allocation2 + $0x70] sm:$0xff]
      %v343 = vld [vmem:[#allocation2 + $0x78] sm:$0xff]
      %v344 = vld [vmem:[#allocation2 + $0x80] sm:$0xff]
      %v345 = vld [vmem:[#allocation2 + $0x88] sm:$0xff]
      %v346 = vld [vmem:[#allocation2 + $0x90] sm:$0xff]
      %v347 = vld [vmem:[#allocation2 + $0x98] sm:$0xff]
      %v348 = vld [vmem:[#allocation2 + $0xa0] sm:$0xff]
      %v349 = vld [vmem:[#allocation2 + $0xa8] sm:$0xff]
      %v350 = vld [vmem:[#allocation2 + $0xb0] sm:$0xff]
      %v351 = vld [vmem:[#allocation2 + $0xb8] sm:$0xff]
      %v352 = vld [vmem:[#allocation2 + $0xc0] sm:$0xff]
      %v353 = vld [vmem:[#allocation2 + $0xc8] sm:$0xff]
      %v354 = vld [vmem:[#allocation2 + $0xd0] sm:$0xff]
      %v355 = vld [vmem:[#allocation2 + $0xd8] sm:$0xff]
      %v356 = vld [vmem:[#allocation2 + $0xe0] sm:$0xff]
      %v357 = vld [vmem:[#allocation2 + $0xe8] sm:$0xff]
      %v358 = vld [vmem:[#allocation2 + $0xf0] sm:$0xff]
      %v359 = vld [vmem:[#allocation2 + $0xf8] sm:$0xff]
      %v360 = vld [vmem:[#allocation2 + $0x100] sm:$0xff]
      %v361 = vld [vmem:[#allocation2 + $0x108] sm:$0xff]
      %v362 = vld [vmem:[#allocation2 + $0x110] sm:$0xff]
      %v363 = vld [vmem:[#allocation2 + $0x118] sm:$0xff]
      %v364 = vld [vmem:[#allocation2 + $0x120] sm:$0xff]
      %v365 = vld [vmem:[#allocation2 + $0x128] sm:$0xff]
      %v366 = vld [vmem:[#allocation2 + $0x130] sm:$0xff]
      %v367 = vld [vmem:[#allocation2 + $0x138] sm:$0xff]
      %v368 = vld [vmem:[#allocation2 + $0x140] sm:$0xff]
      %v369 = vld [vmem:[#allocation2 + $0x148] sm:$0xff]
      %v370 = vld [vmem:[#allocation2 + $0x150] sm:$0xff]
      %v371 = vld [vmem:[#allocation2 + $0x158] sm:$0xff]
      %v372 = vld [vmem:[#allocation2 + $0x160] sm:$0xff]
      %v373 = vld [vmem:[#allocation2 + $0x168] sm:$0xff]
      %v374 = vld [vmem:[#allocation2 + $0x170] sm:$0xff]
      %v375 = vld [vmem:[#allocation2 + $0x178] sm:$0xff]
      %v376 = vld [vmem:[#allocation2 + $0x180] sm:$0xff]
      %v377 = vld [vmem:[#allocation2 + $0x188] sm:$0xff]
      %v378 = vld [vmem:[#allocation2 + $0x190] sm:$0xff]
      %v379 = vld [vmem:[#allocation2 + $0x198] sm:$0xff]
      %v380 = vld [vmem:[#allocation2 + $0x1a0] sm:$0xff]
      %v381 = vld [vmem:[#allocation2 + $0x1a8] sm:$0xff]
      %v382 = vld [vmem:[#allocation2 + $0x1b0] sm:$0xff]
      %v383 = vld [vmem:[#allocation2 + $0x1b8] sm:$0xff]
      %v384 = vld [vmem:[#allocation2 + $0x1c0] sm:$0xff]
      %v385 = vld [vmem:[#allocation2 + $0x1c8] sm:$0xff]
      %v386 = vld [vmem:[#allocation2 + $0x1d0] sm:$0xff]
      %v387 = vld [vmem:[#allocation2 + $0x1d8] sm:$0xff]
      %v388 = vld [vmem:[#allocation2 + $0x1e0] sm:$0xff]
      %v389 = vld [vmem:[#allocation2 + $0x1e8] sm:$0xff]
      %v390 = vld [vmem:[#allocation2 + $0x1f0] sm:$0xff]
      %v391 = vld [vmem:[#allocation2 + $0x1f8] sm:$0xff]
      %v392 = vld [vmem:[%s236] sm:$0xf]
      %v393 = vld [vmem:[%s236 + $0x4] sm:$0xf]
      %v394 = vld [vmem:[%s236 + $0x8] sm:$0xf]
      %v395 = vld [vmem:[%s236 + $0xc] sm:$0xf]
      %v396 = vld [vmem:[%s236 + $0x10] sm:$0xf]
      %v397 = vld [vmem:[%s236 + $0x14] sm:$0xf]
      %v398 = vld [vmem:[%s236 + $0x18] sm:$0xf]
      %v399 = vld [vmem:[%s236 + $0x1c] sm:$0xf]
      %v400 = vld [vmem:[%s236 + $0x20] sm:$0xf]
      %v401 = vld [vmem:[%s236 + $0x24] sm:$0xf]
      %v402 = vld [vmem:[%s236 + $0x28] sm:$0xf]
      %v403 = vld [vmem:[%s236 + $0x2c] sm:$0xf]
      %v404 = vld [vmem:[%s236 + $0x30] sm:$0xf]
      %v405 = vld [vmem:[%s236 + $0x34] sm:$0xf]
      %v406 = vld [vmem:[%s236 + $0x38] sm:$0xf]
      %v407 = vld [vmem:[%s236 + $0x3c] sm:$0xf]
      %v408 = vld [vmem:[%s236 + $0x40] sm:$0xf]
      %v409 = vld [vmem:[%s236 + $0x44] sm:$0xf]
      %v410 = vld [vmem:[%s236 + $0x48] sm:$0xf]
      %v411 = vld [vmem:[%s236 + $0x4c] sm:$0xf]
      %v412 = vld [vmem:[%s236 + $0x50] sm:$0xf]
      %v413 = vld [vmem:[%s236 + $0x54] sm:$0xf]
      %v414 = vld [vmem:[%s236 + $0x58] sm:$0xf]
      %v415 = vld [vmem:[%s236 + $0x5c] sm:$0xf]
      %v416 = vld [vmem:[%s236 + $0x60] sm:$0xf]
      %v417 = vld [vmem:[%s236 + $0x64] sm:$0xf]
      %v418 = vld [vmem:[%s236 + $0x68] sm:$0xf]
      %v419 = vld [vmem:[%s236 + $0x6c] sm:$0xf]
      %v420 = vld [vmem:[%s236 + $0x70] sm:$0xf]
      %v421 = vld [vmem:[%s236 + $0x74] sm:$0xf]
      %v422 = vld [vmem:[%s236 + $0x78] sm:$0xf]
      %v423 = vld [vmem:[%s236 + $0x7c] sm:$0xf]
      %v424 = vld [vmem:[%s236 + $0x80] sm:$0xf]
      %v425 = vld [vmem:[%s236 + $0x84] sm:$0xf]
      %v426 = vld [vmem:[%s236 + $0x88] sm:$0xf]
      %v427 = vld [vmem:[%s236 + $0x8c] sm:$0xf]
      %v428 = vld [vmem:[%s236 + $0x90] sm:$0xf]
      %v429 = vld [vmem:[%s236 + $0x94] sm:$0xf]
      %v430 = vld [vmem:[%s236 + $0x98] sm:$0xf]
      %v431 = vld [vmem:[%s236 + $0x9c] sm:$0xf]
      %v432 = vld [vmem:[%s236 + $0xa0] sm:$0xf]
      %v433 = vld [vmem:[%s236 + $0xa4] sm:$0xf]
      %v434 = vld [vmem:[%s236 + $0xa8] sm:$0xf]
      %v435 = vld [vmem:[%s236 + $0xac] sm:$0xf]
      %v436 = vld [vmem:[%s236 + $0xb0] sm:$0xf]
      %v437 = vld [vmem:[%s236 + $0xb4] sm:$0xf]
      %v438 = vld [vmem:[%s236 + $0xb8] sm:$0xf]
      %v439 = vld [vmem:[%s236 + $0xbc] sm:$0xf]
      %v440 = vld [vmem:[%s236 + $0xc0] sm:$0xf]
      %v441 = vld [vmem:[%s236 + $0xc4] sm:$0xf]
      %v442 = vld [vmem:[%s236 + $0xc8] sm:$0xf]
      %v443 = vld [vmem:[%s236 + $0xcc] sm:$0xf]
      %v444 = vld [vmem:[%s236 + $0xd0] sm:$0xf]
      %v445 = vld [vmem:[%s236 + $0xd4] sm:$0xf]
      %v446 = vld [vmem:[%s236 + $0xd8] sm:$0xf]
      %v447 = vld [vmem:[%s236 + $0xdc] sm:$0xf]
      %v448 = vld [vmem:[%s236 + $0xe0] sm:$0xf]
      %v449 = vld [vmem:[%s236 + $0xe4] sm:$0xf]
      %v450 = vld [vmem:[%s236 + $0xe8] sm:$0xf]
      %v451 = vld [vmem:[%s236 + $0xec] sm:$0xf]
      %v452 = vld [vmem:[%s236 + $0xf0] sm:$0xf]
      %v453 = vld [vmem:[%s236 + $0xf4] sm:$0xf]
      %v454 = vld [vmem:[%s236 + $0xf8] sm:$0xf]
      %v455 = vld [vmem:[%s236 + $0xfc] sm:$0xf]
      %v456 = vld [vmem:[%s245] sm:$0xf]
      %v457 = vld [vmem:[%s245 + $0x4] sm:$0xf]
      %v458 = vld [vmem:[%s245 + $0x8] sm:$0xf]
      %v459 = vld [vmem:[%s245 + $0xc] sm:$0xf]
      %v460 = vld [vmem:[%s245 + $0x10] sm:$0xf]
      %v461 = vld [vmem:[%s245 + $0x14] sm:$0xf]
      %v462 = vld [vmem:[%s245 + $0x18] sm:$0xf]
      %v463 = vld [vmem:[%s245 + $0x1c] sm:$0xf]
      %v464 = vld [vmem:[%s245 + $0x20] sm:$0xf]
      %v465 = vld [vmem:[%s245 + $0x24] sm:$0xf]
      %v466 = vld [vmem:[%s245 + $0x28] sm:$0xf]
      %v467 = vld [vmem:[%s245 + $0x2c] sm:$0xf]
      %v468 = vld [vmem:[%s245 + $0x30] sm:$0xf]
      %v469 = vld [vmem:[%s245 + $0x34] sm:$0xf]
      %v470 = vld [vmem:[%s245 + $0x38] sm:$0xf]
      %v471 = vld [vmem:[%s245 + $0x3c] sm:$0xf]
      %v536 = vunpack.c.l.b16 %v392
      %v537 = vunpack.c.l.b16 %v393
      %v538 = vunpack.c.l.b16 %v394
      %v539 = vunpack.c.l.b16 %v395
      %v540 = vunpack.c.l.b16 %v396
      %v541 = vunpack.c.l.b16 %v397
      %v542 = vunpack.c.l.b16 %v398
      %v543 = vunpack.c.l.b16 %v399
      %v544 = vunpack.c.l.b16 %v400
      %v545 = vunpack.c.l.b16 %v401
      %v546 = vunpack.c.l.b16 %v402
      %v547 = vunpack.c.l.b16 %v403
      %v548 = vunpack.c.l.b16 %v404
      %v549 = vunpack.c.l.b16 %v405
      %v550 = vunpack.c.l.b16 %v406
      %v551 = vunpack.c.l.b16 %v407
      %v552 = vunpack.c.l.b16 %v408
      %v553 = vunpack.c.l.b16 %v409
      %v554 = vunpack.c.l.b16 %v410
      %v555 = vunpack.c.l.b16 %v411
      %v556 = vunpack.c.l.b16 %v412
      %v557 = vunpack.c.l.b16 %v413
      %v558 = vunpack.c.l.b16 %v414
      %v559 = vunpack.c.l.b16 %v415
      %v560 = vunpack.c.l.b16 %v416
      %v561 = vunpack.c.l.b16 %v417
      %v562 = vunpack.c.l.b16 %v418
      %v563 = vunpack.c.l.b16 %v419
      %v564 = vunpack.c.l.b16 %v420
      %v565 = vunpack.c.l.b16 %v421
      %v566 = vunpack.c.l.b16 %v422
      %v567 = vunpack.c.l.b16 %v423
      %v568 = vunpack.c.l.b16 %v424
      %v569 = vunpack.c.l.b16 %v425
      %v570 = vunpack.c.l.b16 %v426
      %v571 = vunpack.c.l.b16 %v427
      %v572 = vunpack.c.l.b16 %v428
      %v573 = vunpack.c.l.b16 %v429
      %v574 = vunpack.c.l.b16 %v430
      %v575 = vunpack.c.l.b16 %v431
      %v576 = vunpack.c.l.b16 %v432
      %v577 = vunpack.c.l.b16 %v433
      %v578 = vunpack.c.l.b16 %v434
      %v579 = vunpack.c.l.b16 %v435
      %v580 = vunpack.c.l.b16 %v436
      %v581 = vunpack.c.l.b16 %v437
      %v582 = vunpack.c.l.b16 %v438
      %v583 = vunpack.c.l.b16 %v439
      %v584 = vunpack.c.l.b16 %v440
      %v585 = vunpack.c.l.b16 %v441
      %v586 = vunpack.c.l.b16 %v442
      %v587 = vunpack.c.l.b16 %v443
      %v588 = vunpack.c.l.b16 %v444
      %v589 = vunpack.c.l.b16 %v445
      %v590 = vunpack.c.l.b16 %v446
      %v591 = vunpack.c.l.b16 %v447
      %v592 = vunpack.c.l.b16 %v448
      %v593 = vunpack.c.l.b16 %v449
      %v594 = vunpack.c.l.b16 %v450
      %v595 = vunpack.c.l.b16 %v451
      %v596 = vunpack.c.l.b16 %v452
      %v597 = vunpack.c.l.b16 %v453
      %v598 = vunpack.c.l.b16 %v454
      %v599 = vunpack.c.l.b16 %v455
      %v600 = vpack.c.b16 %v537, %v536
      %v601 = vpack.c.b16 %v539, %v538
      %v602 = vpack.c.b16 %v541, %v540
      %v603 = vpack.c.b16 %v543, %v542
      %v604 = vpack.c.b16 %v545, %v544
      %v605 = vpack.c.b16 %v547, %v546
      %v606 = vpack.c.b16 %v549, %v548
      %v607 = vpack.c.b16 %v551, %v550
      %v608 = vpack.c.b16 %v553, %v552
      %v609 = vpack.c.b16 %v555, %v554
      %v610 = vpack.c.b16 %v557, %v556
      %v611 = vpack.c.b16 %v559, %v558
      %v612 = vpack.c.b16 %v561, %v560
      %v613 = vpack.c.b16 %v563, %v562
      %v614 = vpack.c.b16 %v565, %v564
      %v615 = vpack.c.b16 %v567, %v566
      %v616 = vpack.c.b16 %v569, %v568
      %v617 = vpack.c.b16 %v571, %v570
      %v618 = vpack.c.b16 %v573, %v572
      %v619 = vpack.c.b16 %v575, %v574
      %v620 = vpack.c.b16 %v577, %v576
      %v621 = vpack.c.b16 %v579, %v578
      %v622 = vpack.c.b16 %v581, %v580
      %v623 = vpack.c.b16 %v583, %v582
      %v624 = vpack.c.b16 %v585, %v584
      %v625 = vpack.c.b16 %v587, %v586
      %v626 = vpack.c.b16 %v589, %v588
      %v627 = vpack.c.b16 %v591, %v590
      %v628 = vpack.c.b16 %v593, %v592
      %v629 = vpack.c.b16 %v595, %v594
      %v630 = vpack.c.b16 %v597, %v596
      %v631 = vpack.c.b16 %v599, %v598
      %v680 = vunpack.c.l.b16 %v456
      %v681 = vunpack.c.l.b16 %v457
      %v682 = vunpack.c.l.b16 %v458
      %v683 = vunpack.c.l.b16 %v459
      %v684 = vunpack.c.l.b16 %v460
      %v685 = vunpack.c.l.b16 %v461
      %v686 = vunpack.c.l.b16 %v462
      %v687 = vunpack.c.l.b16 %v463
      %v688 = vunpack.c.l.b16 %v464
      %v689 = vunpack.c.l.b16 %v465
      %v690 = vunpack.c.l.b16 %v466
      %v691 = vunpack.c.l.b16 %v467
      %v692 = vunpack.c.l.b16 %v468
      %v693 = vunpack.c.l.b16 %v469
      %v694 = vunpack.c.l.b16 %v470
      %v695 = vunpack.c.l.b16 %v471
      %v696 = vpack.c.b16 %v681, %v680
      %v697 = vpack.c.b16 %v683, %v682
      %v698 = vpack.c.b16 %v685, %v684
      %v699 = vpack.c.b16 %v687, %v686
      %v700 = vpack.c.b16 %v689, %v688
      %v701 = vpack.c.b16 %v691, %v690
      %v702 = vpack.c.b16 %v693, %v692
      %v703 = vpack.c.b16 %v695, %v694
      %712 = vmatprep.subr.bf16.mxu0 0
      %713 = vmatpush1.bf16.msra.mxu0 %v703
      %714 = vmatprep.subr.bf16.mxu0 0
      %715 = vmatpush1.bf16.msra.mxu0 %v702
      %716 = vmatprep.subr.bf16.mxu0 0
      %717 = vmatpush1.bf16.msra.mxu0 %v701
      %718 = vmatprep.subr.bf16.mxu0 0
      %719 = vmatpush1.bf16.msra.mxu0 %v700
      %720 = vmatprep.subr.bf16.mxu0 0
      %721 = vmatpush1.bf16.msra.mxu0 %v699
      %722 = vmatprep.subr.bf16.mxu0 0
      %723 = vmatpush1.bf16.msra.mxu0 %v698
      %724 = vmatprep.subr.bf16.mxu0 0
      %725 = vmatpush1.bf16.msra.mxu0 %v697
      %726 = vmatprep.subr.bf16.mxu0 0
      %727 = vmatpush1.bf16.msra.mxu0 %v696
      %728 = vmatprep.subr.bf16.mxu0 0
      %729 = vmatpush2.bf16.msra.mxu0 0
      %730 = vmatprep.subr.bf16.mxu0 0
      %731 = vmatpush2.bf16.msra.mxu0 0
      %732 = vmatprep.subr.bf16.mxu0 0
      %733 = vmatpush2.bf16.msra.mxu0 0
      %734 = vmatprep.subr.bf16.mxu0 0
      %735 = vmatpush2.bf16.msra.mxu0 0
      %736 = vmatprep.subr.bf16.mxu0 0
      %737 = vmatpush2.bf16.msra.mxu0 0
      %738 = vmatprep.subr.bf16.mxu0 0
      %739 = vmatpush2.bf16.msra.mxu0 0
      %740 = vmatprep.subr.bf16.mxu0 0
      %741 = vmatpush2.bf16.msra.mxu0 0
      %742 = vmatprep.subr.bf16.mxu0 0
      %743 = vmatpush2.bf16.msra.mxu0 0
      %744 = vmatprep.mubr.bf16.mxu0 0
      %745 = vmatmul.mubr.bf16.gmra.mxu0 %v600
      %v746 = vpop.f32.mrf.mxu0
      %v747 = vadd.f32 0.0, %v746
      %v748 = vpop.f32.mrf.mxu0
      %v749 = vpop.f32.mrf.mxu0
      %v750 = vadd.f32 0.0, %v749
      %v751 = vpop.f32.mrf.mxu0
      %752 = vmatprep.mubr.bf16.mxu0 0
      %753 = vmatmul.mubr.bf16.gmra.mxu0 %v601
      %v754 = vpop.f32.mrf.mxu0
      %v755 = vadd.f32 0.0, %v754
      %v756 = vpop.f32.mrf.mxu0
      %v757 = vpop.f32.mrf.mxu0
      %v758 = vadd.f32 0.0, %v757
      %v759 = vpop.f32.mrf.mxu0
      %760 = vmatprep.mubr.bf16.mxu0 0
      %761 = vmatmul.mubr.bf16.gmra.mxu0 %v602
      %v762 = vpop.f32.mrf.mxu0
      %v763 = vadd.f32 0.0, %v762
      %v764 = vpop.f32.mrf.mxu0
      %v765 = vpop.f32.mrf.mxu0
      %v766 = vadd.f32 0.0, %v765
      %v767 = vpop.f32.mrf.mxu0
      %768 = vmatprep.mubr.bf16.mxu0 0
      %769 = vmatmul.mubr.bf16.gmra.mxu0 %v603
      %v770 = vpop.f32.mrf.mxu0
      %v771 = vadd.f32 0.0, %v770
      %v772 = vpop.f32.mrf.mxu0
      %v773 = vpop.f32.mrf.mxu0
      %v774 = vadd.f32 0.0, %v773
      %v775 = vpop.f32.mrf.mxu0
      %776 = vmatprep.mubr.bf16.mxu0 0
      %777 = vmatmul.mubr.bf16.gmra.mxu0 %v604
      %v778 = vpop.f32.mrf.mxu0
      %v779 = vadd.f32 0.0, %v778
      %v780 = vpop.f32.mrf.mxu0
      %v781 = vpop.f32.mrf.mxu0
      %v782 = vadd.f32 0.0, %v781
      %v783 = vpop.f32.mrf.mxu0
      %784 = vmatprep.mubr.bf16.mxu0 0
      %785 = vmatmul.mubr.bf16.gmra.mxu0 %v605
      %v786 = vpop.f32.mrf.mxu0
      %v787 = vadd.f32 0.0, %v786
      %v788 = vpop.f32.mrf.mxu0
      %v789 = vpop.f32.mrf.mxu0
      %v790 = vadd.f32 0.0, %v789
      %v791 = vpop.f32.mrf.mxu0
      %792 = vmatprep.mubr.bf16.mxu0 0
      %793 = vmatmul.mubr.bf16.gmra.mxu0 %v606
      %v794 = vpop.f32.mrf.mxu0
      %v795 = vadd.f32 0.0, %v794
      %v796 = vpop.f32.mrf.mxu0
      %v797 = vpop.f32.mrf.mxu0
      %v798 = vadd.f32 0.0, %v797
      %v799 = vpop.f32.mrf.mxu0
      %800 = vmatprep.mubr.bf16.mxu0 0
      %801 = vmatmul.mubr.bf16.gmra.mxu0 %v607
      %v802 = vpop.f32.mrf.mxu0
      %v803 = vadd.f32 0.0, %v802
      %v804 = vpop.f32.mrf.mxu0
      %v805 = vpop.f32.mrf.mxu0
      %v806 = vadd.f32 0.0, %v805
      %v807 = vpop.f32.mrf.mxu0
      %808 = vmatprep.mubr.bf16.mxu0 0
      %809 = vmatmul.mubr.bf16.gmra.mxu0 %v608
      %v810 = vpop.f32.mrf.mxu0
      %v811 = vadd.f32 0.0, %v810
      %v812 = vpop.f32.mrf.mxu0
      %v813 = vpop.f32.mrf.mxu0
      %v814 = vadd.f32 0.0, %v813
      %v815 = vpop.f32.mrf.mxu0
      %816 = vmatprep.mubr.bf16.mxu0 0
      %817 = vmatmul.mubr.bf16.gmra.mxu0 %v609
      %v818 = vpop.f32.mrf.mxu0
      %v819 = vadd.f32 0.0, %v818
      %v820 = vpop.f32.mrf.mxu0
      %v821 = vpop.f32.mrf.mxu0
      %v822 = vadd.f32 0.0, %v821
      %v823 = vpop.f32.mrf.mxu0
      %824 = vmatprep.mubr.bf16.mxu0 0
      %825 = vmatmul.mubr.bf16.gmra.mxu0 %v610
      %v826 = vpop.f32.mrf.mxu0
      %v827 = vadd.f32 0.0, %v826
      %v828 = vpop.f32.mrf.mxu0
      %v829 = vpop.f32.mrf.mxu0
      %v830 = vadd.f32 0.0, %v829
      %v831 = vpop.f32.mrf.mxu0
      %832 = vmatprep.mubr.bf16.mxu0 0
      %833 = vmatmul.mubr.bf16.gmra.mxu0 %v611
      %v834 = vpop.f32.mrf.mxu0
      %v835 = vadd.f32 0.0, %v834
      %v836 = vpop.f32.mrf.mxu0
      %v837 = vpop.f32.mrf.mxu0
      %v838 = vadd.f32 0.0, %v837
      %v839 = vpop.f32.mrf.mxu0
      %840 = vmatprep.mubr.bf16.mxu0 0
      %841 = vmatmul.mubr.bf16.gmra.mxu0 %v612
      %v842 = vpop.f32.mrf.mxu0
      %v843 = vadd.f32 0.0, %v842
      %v844 = vpop.f32.mrf.mxu0
      %v845 = vpop.f32.mrf.mxu0
      %v846 = vadd.f32 0.0, %v845
      %v847 = vpop.f32.mrf.mxu0
      %848 = vmatprep.mubr.bf16.mxu0 0
      %849 = vmatmul.mubr.bf16.gmra.mxu0 %v613
      %v850 = vpop.f32.mrf.mxu0
      %v851 = vadd.f32 0.0, %v850
      %v852 = vpop.f32.mrf.mxu0
      %v853 = vpop.f32.mrf.mxu0
      %v854 = vadd.f32 0.0, %v853
      %v855 = vpop.f32.mrf.mxu0
      %856 = vmatprep.mubr.bf16.mxu0 0
      %857 = vmatmul.mubr.bf16.gmra.mxu0 %v614
      %v858 = vpop.f32.mrf.mxu0
      %v859 = vadd.f32 0.0, %v858
      %v860 = vpop.f32.mrf.mxu0
      %v861 = vpop.f32.mrf.mxu0
      %v862 = vadd.f32 0.0, %v861
      %v863 = vpop.f32.mrf.mxu0
      %864 = vmatprep.mubr.bf16.mxu0 0
      %865 = vmatmul.mubr.bf16.gmra.mxu0 %v615
      %v866 = vpop.f32.mrf.mxu0
      %v867 = vadd.f32 0.0, %v866
      %v868 = vpop.f32.mrf.mxu0
      %v869 = vpop.f32.mrf.mxu0
      %v870 = vadd.f32 0.0, %v869
      %v871 = vpop.f32.mrf.mxu0
      %872 = vmatprep.mubr.bf16.mxu0 0
      %873 = vmatmul.mubr.bf16.gmra.mxu0 %v616
      %v874 = vpop.f32.mrf.mxu0
      %v875 = vadd.f32 0.0, %v874
      %v876 = vpop.f32.mrf.mxu0
      %v877 = vpop.f32.mrf.mxu0
      %v878 = vadd.f32 0.0, %v877
      %v879 = vpop.f32.mrf.mxu0
      %880 = vmatprep.mubr.bf16.mxu0 0
      %881 = vmatmul.mubr.bf16.gmra.mxu0 %v617
      %v882 = vpop.f32.mrf.mxu0
      %v883 = vadd.f32 0.0, %v882
      %v884 = vpop.f32.mrf.mxu0
      %v885 = vpop.f32.mrf.mxu0
      %v886 = vadd.f32 0.0, %v885
      %v887 = vpop.f32.mrf.mxu0
      %888 = vmatprep.mubr.bf16.mxu0 0
      %889 = vmatmul.mubr.bf16.gmra.mxu0 %v618
      %v890 = vpop.f32.mrf.mxu0
      %v891 = vadd.f32 0.0, %v890
      %v892 = vpop.f32.mrf.mxu0
      %v893 = vpop.f32.mrf.mxu0
      %v894 = vadd.f32 0.0, %v893
      %v895 = vpop.f32.mrf.mxu0
      %896 = vmatprep.mubr.bf16.mxu0 0
      %897 = vmatmul.mubr.bf16.gmra.mxu0 %v619
      %v898 = vpop.f32.mrf.mxu0
      %v899 = vadd.f32 0.0, %v898
      %v900 = vpop.f32.mrf.mxu0
      %v901 = vpop.f32.mrf.mxu0
      %v902 = vadd.f32 0.0, %v901
      %v903 = vpop.f32.mrf.mxu0
      %904 = vmatprep.mubr.bf16.mxu0 0
      %905 = vmatmul.mubr.bf16.gmra.mxu0 %v620
      %v906 = vpop.f32.mrf.mxu0
      %v907 = vadd.f32 0.0, %v906
      %v908 = vpop.f32.mrf.mxu0
      %v909 = vpop.f32.mrf.mxu0
      %v910 = vadd.f32 0.0, %v909
      %v911 = vpop.f32.mrf.mxu0
      %912 = vmatprep.mubr.bf16.mxu0 0
      %913 = vmatmul.mubr.bf16.gmra.mxu0 %v621
      %v914 = vpop.f32.mrf.mxu0
      %v915 = vadd.f32 0.0, %v914
      %v916 = vpop.f32.mrf.mxu0
      %v917 = vpop.f32.mrf.mxu0
      %v918 = vadd.f32 0.0, %v917
      %v919 = vpop.f32.mrf.mxu0
      %920 = vmatprep.mubr.bf16.mxu0 0
      %921 = vmatmul.mubr.bf16.gmra.mxu0 %v622
      %v922 = vpop.f32.mrf.mxu0
      %v923 = vadd.f32 0.0, %v922
      %v924 = vpop.f32.mrf.mxu0
      %v925 = vpop.f32.mrf.mxu0
      %v926 = vadd.f32 0.0, %v925
      %v927 = vpop.f32.mrf.mxu0
      %928 = vmatprep.mubr.bf16.mxu0 0
      %929 = vmatmul.mubr.bf16.gmra.mxu0 %v623
      %v930 = vpop.f32.mrf.mxu0
      %v931 = vadd.f32 0.0, %v930
      %v932 = vpop.f32.mrf.mxu0
      %v933 = vpop.f32.mrf.mxu0
      %v934 = vadd.f32 0.0, %v933
      %v935 = vpop.f32.mrf.mxu0
      %936 = vmatprep.mubr.bf16.mxu0 0
      %937 = vmatmul.mubr.bf16.gmra.mxu0 %v624
      %v938 = vpop.f32.mrf.mxu0
      %v939 = vadd.f32 0.0, %v938
      %v940 = vpop.f32.mrf.mxu0
      %v941 = vpop.f32.mrf.mxu0
      %v942 = vadd.f32 0.0, %v941
      %v943 = vpop.f32.mrf.mxu0
      %944 = vmatprep.mubr.bf16.mxu0 0
      %945 = vmatmul.mubr.bf16.gmra.mxu0 %v625
      %v946 = vpop.f32.mrf.mxu0
      %v947 = vadd.f32 0.0, %v946
      %v948 = vpop.f32.mrf.mxu0
      %v949 = vpop.f32.mrf.mxu0
      %v950 = vadd.f32 0.0, %v949
      %v951 = vpop.f32.mrf.mxu0
      %952 = vmatprep.mubr.bf16.mxu0 0
      %953 = vmatmul.mubr.bf16.gmra.mxu0 %v626
      %v954 = vpop.f32.mrf.mxu0
      %v955 = vadd.f32 0.0, %v954
      %v956 = vpop.f32.mrf.mxu0
      %v957 = vpop.f32.mrf.mxu0
      %v958 = vadd.f32 0.0, %v957
      %v959 = vpop.f32.mrf.mxu0
      %960 = vmatprep.mubr.bf16.mxu0 0
      %961 = vmatmul.mubr.bf16.gmra.mxu0 %v627
      %v962 = vpop.f32.mrf.mxu0
      %v963 = vadd.f32 0.0, %v962
      %v964 = vpop.f32.mrf.mxu0
      %v965 = vpop.f32.mrf.mxu0
      %v966 = vadd.f32 0.0, %v965
      %v967 = vpop.f32.mrf.mxu0
      %968 = vmatprep.mubr.bf16.mxu0 0
      %969 = vmatmul.mubr.bf16.gmra.mxu0 %v628
      %v970 = vpop.f32.mrf.mxu0
      %v971 = vadd.f32 0.0, %v970
      %v972 = vpop.f32.mrf.mxu0
      %v973 = vpop.f32.mrf.mxu0
      %v974 = vadd.f32 0.0, %v973
      %v975 = vpop.f32.mrf.mxu0
      %976 = vmatprep.mubr.bf16.mxu0 0
      %977 = vmatmul.mubr.bf16.gmra.mxu0 %v629
      %v978 = vpop.f32.mrf.mxu0
      %v979 = vadd.f32 0.0, %v978
      %v980 = vpop.f32.mrf.mxu0
      %v981 = vpop.f32.mrf.mxu0
      %v982 = vadd.f32 0.0, %v981
      %v983 = vpop.f32.mrf.mxu0
      %984 = vmatprep.mubr.bf16.mxu0 0
      %985 = vmatmul.mubr.bf16.gmra.mxu0 %v630
      %v986 = vpop.f32.mrf.mxu0
      %v987 = vadd.f32 0.0, %v986
      %v988 = vpop.f32.mrf.mxu0
      %v989 = vpop.f32.mrf.mxu0
      %v990 = vadd.f32 0.0, %v989
      %v991 = vpop.f32.mrf.mxu0
      %992 = vmatprep.mubr.bf16.mxu0 0
      %993 = vmatmul.mubr.bf16.gmra.mxu0 %v631
      %v994 = vpop.f32.mrf.mxu0
      %v995 = vadd.f32 0.0, %v994
      %v996 = vpop.f32.mrf.mxu0
      %v997 = vpop.f32.mrf.mxu0
      %v998 = vadd.f32 0.0, %v997
      %v999 = vpop.f32.mrf.mxu0
      %1000 = vdwg.mxu0
      %v1001 = vadd.f32 %v328, %v747
      %v1002 = vadd.f32 %v329, %v750
      %v1003 = vadd.f32 %v330, %v755
      %v1004 = vadd.f32 %v331, %v758
      %v1005 = vadd.f32 %v332, %v763
      %v1006 = vadd.f32 %v333, %v766
      %v1007 = vadd.f32 %v334, %v771
      %v1008 = vadd.f32 %v335, %v774
      %v1009 = vadd.f32 %v336, %v779
      %v1010 = vadd.f32 %v337, %v782
      %v1011 = vadd.f32 %v338, %v787
      %v1012 = vadd.f32 %v339, %v790
      %v1013 = vadd.f32 %v340, %v795
      %v1014 = vadd.f32 %v341, %v798
      %v1015 = vadd.f32 %v342, %v803
      %v1016 = vadd.f32 %v343, %v806
      %v1017 = vadd.f32 %v344, %v811
      %v1018 = vadd.f32 %v345, %v814
      %v1019 = vadd.f32 %v346, %v819
      %v1020 = vadd.f32 %v347, %v822
      %v1021 = vadd.f32 %v348, %v827
      %v1022 = vadd.f32 %v349, %v830
      %v1023 = vadd.f32 %v350, %v835
      %v1024 = vadd.f32 %v351, %v838
      %v1025 = vadd.f32 %v352, %v843
      %v1026 = vadd.f32 %v353, %v846
      %v1027 = vadd.f32 %v354, %v851
      %v1028 = vadd.f32 %v355, %v854
      %v1029 = vadd.f32 %v356, %v859
      %v1030 = vadd.f32 %v357, %v862
      %v1031 = vadd.f32 %v358, %v867
      %v1032 = vadd.f32 %v359, %v870
      %v1033 = vadd.f32 %v360, %v875
      %v1034 = vadd.f32 %v361, %v878
      %v1035 = vadd.f32 %v362, %v883
      %v1036 = vadd.f32 %v363, %v886
      %v1037 = vadd.f32 %v364, %v891
      %v1038 = vadd.f32 %v365, %v894
      %v1039 = vadd.f32 %v366, %v899
      %v1040 = vadd.f32 %v367, %v902
      %v1041 = vadd.f32 %v368, %v907
      %v1042 = vadd.f32 %v369, %v910
      %v1043 = vadd.f32 %v370, %v915
      %v1044 = vadd.f32 %v371, %v918
      %v1045 = vadd.f32 %v372, %v923
      %v1046 = vadd.f32 %v373, %v926
      %v1047 = vadd.f32 %v374, %v931
      %v1048 = vadd.f32 %v375, %v934
      %v1049 = vadd.f32 %v376, %v939
      %v1050 = vadd.f32 %v377, %v942
      %v1051 = vadd.f32 %v378, %v947
      %v1052 = vadd.f32 %v379, %v950
      %v1053 = vadd.f32 %v380, %v955
      %v1054 = vadd.f32 %v381, %v958
      %v1055 = vadd.f32 %v382, %v963
      %v1056 = vadd.f32 %v383, %v966
      %v1057 = vadd.f32 %v384, %v971
      %v1058 = vadd.f32 %v385, %v974
      %v1059 = vadd.f32 %v386, %v979
      %v1060 = vadd.f32 %v387, %v982
      %v1061 = vadd.f32 %v388, %v987
      %v1062 = vadd.f32 %v389, %v990
      %v1063 = vadd.f32 %v390, %v995
      %v1064 = vadd.f32 %v391, %v998
      %1065 = vst [vmem:[#allocation2] sm:$0xff] %v1001
      %1066 = vst [vmem:[#allocation2 + $0x8] sm:$0xff] %v1002
      %1067 = vst [vmem:[#allocation2 + $0x10] sm:$0xff] %v1003
      %1068 = vst [vmem:[#allocation2 + $0x18] sm:$0xff] %v1004
      %1069 = vst [vmem:[#allocation2 + $0x20] sm:$0xff] %v1005
      %1070 = vst [vmem:[#allocation2 + $0x28] sm:$0xff] %v1006
      %1071 = vst [vmem:[#allocation2 + $0x30] sm:$0xff] %v1007
      %1072 = vst [vmem:[#allocation2 + $0x38] sm:$0xff] %v1008
      %1073 = vst [vmem:[#allocation2 + $0x40] sm:$0xff] %v1009
      %1074 = vst [vmem:[#allocation2 + $0x48] sm:$0xff] %v1010
      %1075 = vst [vmem:[#allocation2 + $0x50] sm:$0xff] %v1011
      %1076 = vst [vmem:[#allocation2 + $0x58] sm:$0xff] %v1012
      %1077 = vst [vmem:[#allocation2 + $0x60] sm:$0xff] %v1013
      %1078 = vst [vmem:[#allocation2 + $0x68] sm:$0xff] %v1014
      %1079 = vst [vmem:[#allocation2 + $0x70] sm:$0xff] %v1015
      %1080 = vst [vmem:[#allocation2 + $0x78] sm:$0xff] %v1016
      %1081 = vst [vmem:[#allocation2 + $0x80] sm:$0xff] %v1017
      %1082 = vst [vmem:[#allocation2 + $0x88] sm:$0xff] %v1018
      %1083 = vst [vmem:[#allocation2 + $0x90] sm:$0xff] %v1019
      %1084 = vst [vmem:[#allocation2 + $0x98] sm:$0xff] %v1020
      %1085 = vst [vmem:[#allocation2 + $0xa0] sm:$0xff] %v1021
      %1086 = vst [vmem:[#allocation2 + $0xa8] sm:$0xff] %v1022
      %1087 = vst [vmem:[#allocation2 + $0xb0] sm:$0xff] %v1023
      %1088 = vst [vmem:[#allocation2 + $0xb8] sm:$0xff] %v1024
      %1089 = vst [vmem:[#allocation2 + $0xc0] sm:$0xff] %v1025
      %1090 = vst [vmem:[#allocation2 + $0xc8] sm:$0xff] %v1026
      %1091 = vst [vmem:[#allocation2 + $0xd0] sm:$0xff] %v1027
      %1092 = vst [vmem:[#allocation2 + $0xd8] sm:$0xff] %v1028
      %1093 = vst [vmem:[#allocation2 + $0xe0] sm:$0xff] %v1029
      %1094 = vst [vmem:[#allocation2 + $0xe8] sm:$0xff] %v1030
      %1095 = vst [vmem:[#allocation2 + $0xf0] sm:$0xff] %v1031
      %1096 = vst [vmem:[#allocation2 + $0xf8] sm:$0xff] %v1032
      %1097 = vst [vmem:[#allocation2 + $0x100] sm:$0xff] %v1033
      %1098 = vst [vmem:[#allocation2 + $0x108] sm:$0xff] %v1034
      %1099 = vst [vmem:[#allocation2 + $0x110] sm:$0xff] %v1035
      %1100 = vst [vmem:[#allocation2 + $0x118] sm:$0xff] %v1036
      %1101 = vst [vmem:[#allocation2 + $0x120] sm:$0xff] %v1037
      %1102 = vst [vmem:[#allocation2 + $0x128] sm:$0xff] %v1038
      %1103 = vst [vmem:[#allocation2 + $0x130] sm:$0xff] %v1039
      %1104 = vst [vmem:[#allocation2 + $0x138] sm:$0xff] %v1040
      %1105 = vst [vmem:[#allocation2 + $0x140] sm:$0xff] %v1041
      %1106 = vst [vmem:[#allocation2 + $0x148] sm:$0xff] %v1042
      %1107 = vst [vmem:[#allocation2 + $0x150] sm:$0xff] %v1043
      %1108 = vst [vmem:[#allocation2 + $0x158] sm:$0xff] %v1044
      %1109 = vst [vmem:[#allocation2 + $0x160] sm:$0xff] %v1045
      %1110 = vst [vmem:[#allocation2 + $0x168] sm:$0xff] %v1046
      %1111 = vst [vmem:[#allocation2 + $0x170] sm:$0xff] %v1047
      %1112 = vst [vmem:[#allocation2 + $0x178] sm:$0xff] %v1048
      %1113 = vst [vmem:[#allocation2 + $0x180] sm:$0xff] %v1049
      %1114 = vst [vmem:[#allocation2 + $0x188] sm:$0xff] %v1050
      %1115 = vst [vmem:[#allocation2 + $0x190] sm:$0xff] %v1051
      %1116 = vst [vmem:[#allocation2 + $0x198] sm:$0xff] %v1052
      %1117 = vst [vmem:[#allocation2 + $0x1a0] sm:$0xff] %v1053
      %1118 = vst [vmem:[#allocation2 + $0x1a8] sm:$0xff] %v1054
      %1119 = vst [vmem:[#allocation2 + $0x1b0] sm:$0xff] %v1055
      %1120 = vst [vmem:[#allocation2 + $0x1b8] sm:$0xff] %v1056
      %1121 = vst [vmem:[#allocation2 + $0x1c0] sm:$0xff] %v1057
      %1122 = vst [vmem:[#allocation2 + $0x1c8] sm:$0xff] %v1058
      %1123 = vst [vmem:[#allocation2 + $0x1d0] sm:$0xff] %v1059
      %1124 = vst [vmem:[#allocation2 + $0x1d8] sm:$0xff] %v1060
      %1125 = vst [vmem:[#allocation2 + $0x1e0] sm:$0xff] %v1061
      %1126 = vst [vmem:[#allocation2 + $0x1e8] sm:$0xff] %v1062
      %1127 = vst [vmem:[#allocation2 + $0x1f0] sm:$0xff] %v1063
      %1128 = vst [vmem:[#allocation2 + $0x1f8] sm:$0xff] %v1064
      // Predicated region
      $region37: #{alexnet_forward.11} parent=31 // pred_check
        %p1129 = pneg %p260
      $region38: #{alexnet_forward.11} parent=31 // pred_check_branch
        %1131 = sbr.rel (%p1129) target = $region40
      $region39: #{alexnet_forward.11} parent=31 // pred_region
        %v1132 = vld [vmem:[#allocation2] sm:$0xff]
        %v1133 = vld [vmem:[#allocation2 + $0x8] sm:$0xff]
        %v1134 = vld [vmem:[#allocation2 + $0x10] sm:$0xff]
        %v1135 = vld [vmem:[#allocation2 + $0x18] sm:$0xff]
        %v1136 = vld [vmem:[#allocation2 + $0x20] sm:$0xff]
        %v1137 = vld [vmem:[#allocation2 + $0x28] sm:$0xff]
        %v1138 = vld [vmem:[#allocation2 + $0x30] sm:$0xff]
        %v1139 = vld [vmem:[#allocation2 + $0x38] sm:$0xff]
        %v1140 = vld [vmem:[#allocation2 + $0x40] sm:$0xff]
        %v1141 = vld [vmem:[#allocation2 + $0x48] sm:$0xff]
        %v1142 = vld [vmem:[#allocation2 + $0x50] sm:$0xff]
        %v1143 = vld [vmem:[#allocation2 + $0x58] sm:$0xff]
        %v1144 = vld [vmem:[#allocation2 + $0x60] sm:$0xff]
        %v1145 = vld [vmem:[#allocation2 + $0x68] sm:$0xff]
        %v1146 = vld [vmem:[#allocation2 + $0x70] sm:$0xff]
        %v1147 = vld [vmem:[#allocation2 + $0x78] sm:$0xff]
        %v1148 = vld [vmem:[#allocation2 + $0x80] sm:$0xff]
        %v1149 = vld [vmem:[#allocation2 + $0x88] sm:$0xff]
        %v1150 = vld [vmem:[#allocation2 + $0x90] sm:$0xff]
        %v1151 = vld [vmem:[#allocation2 + $0x98] sm:$0xff]
        %v1152 = vld [vmem:[#allocation2 + $0xa0] sm:$0xff]
        %v1153 = vld [vmem:[#allocation2 + $0xa8] sm:$0xff]
        %v1154 = vld [vmem:[#allocation2 + $0xb0] sm:$0xff]
        %v1155 = vld [vmem:[#allocation2 + $0xb8] sm:$0xff]
        %v1156 = vld [vmem:[#allocation2 + $0xc0] sm:$0xff]
        %v1157 = vld [vmem:[#allocation2 + $0xc8] sm:$0xff]
        %v1158 = vld [vmem:[#allocation2 + $0xd0] sm:$0xff]
        %v1159 = vld [vmem:[#allocation2 + $0xd8] sm:$0xff]
        %v1160 = vld [vmem:[#allocation2 + $0xe0] sm:$0xff]
        %v1161 = vld [vmem:[#allocation2 + $0xe8] sm:$0xff]
        %v1162 = vld [vmem:[#allocation2 + $0xf0] sm:$0xff]
        %v1163 = vld [vmem:[#allocation2 + $0xf8] sm:$0xff]
        %v1164 = vld [vmem:[#allocation2 + $0x100] sm:$0xff]
        %v1165 = vld [vmem:[#allocation2 + $0x108] sm:$0xff]
        %v1166 = vld [vmem:[#allocation2 + $0x110] sm:$0xff]
        %v1167 = vld [vmem:[#allocation2 + $0x118] sm:$0xff]
        %v1168 = vld [vmem:[#allocation2 + $0x120] sm:$0xff]
        %v1169 = vld [vmem:[#allocation2 + $0x128] sm:$0xff]
        %v1170 = vld [vmem:[#allocation2 + $0x130] sm:$0xff]
        %v1171 = vld [vmem:[#allocation2 + $0x138] sm:$0xff]
        %v1172 = vld [vmem:[#allocation2 + $0x140] sm:$0xff]
        %v1173 = vld [vmem:[#allocation2 + $0x148] sm:$0xff]
        %v1174 = vld [vmem:[#allocation2 + $0x150] sm:$0xff]
        %v1175 = vld [vmem:[#allocation2 + $0x158] sm:$0xff]
        %v1176 = vld [vmem:[#allocation2 + $0x160] sm:$0xff]
        %v1177 = vld [vmem:[#allocation2 + $0x168] sm:$0xff]
        %v1178 = vld [vmem:[#allocation2 + $0x170] sm:$0xff]
        %v1179 = vld [vmem:[#allocation2 + $0x178] sm:$0xff]
        %v1180 = vld [vmem:[#allocation2 + $0x180] sm:$0xff]
        %v1181 = vld [vmem:[#allocation2 + $0x188] sm:$0xff]
        %v1182 = vld [vmem:[#allocation2 + $0x190] sm:$0xff]
        %v1183 = vld [vmem:[#allocation2 + $0x198] sm:$0xff]
        %v1184 = vld [vmem:[#allocation2 + $0x1a0] sm:$0xff]
        %v1185 = vld [vmem:[#allocation2 + $0x1a8] sm:$0xff]
        %v1186 = vld [vmem:[#allocation2 + $0x1b0] sm:$0xff]
        %v1187 = vld [vmem:[#allocation2 + $0x1b8] sm:$0xff]
        %v1188 = vld [vmem:[#allocation2 + $0x1c0] sm:$0xff]
        %v1189 = vld [vmem:[#allocation2 + $0x1c8] sm:$0xff]
        %v1190 = vld [vmem:[#allocation2 + $0x1d0] sm:$0xff]
        %v1191 = vld [vmem:[#allocation2 + $0x1d8] sm:$0xff]
        %v1192 = vld [vmem:[#allocation2 + $0x1e0] sm:$0xff]
        %v1193 = vld [vmem:[#allocation2 + $0x1e8] sm:$0xff]
        %v1194 = vld [vmem:[#allocation2 + $0x1f0] sm:$0xff]
        %v1195 = vld [vmem:[#allocation2 + $0x1f8] sm:$0xff]
        %v1196 = vld [vmem:[%s249] sm:$0x1]
        %v1198 = vlaneseq
        %v1199 = vshrl.u32 %v1198, 7
        %v1200 = vsub.s32 0, %v1199
        %v1201 = vrot.slane %v1196, %v1200
        %v1203 = vadd.f32 %v1132, %v1201
        %v1204 = vadd.f32 %v1133, %v1201
        %v1205 = vadd.f32 %v1134, %v1201
        %v1206 = vadd.f32 %v1135, %v1201
        %v1207 = vadd.f32 %v1136, %v1201
        %v1208 = vadd.f32 %v1137, %v1201
        %v1209 = vadd.f32 %v1138, %v1201
        %v1210 = vadd.f32 %v1139, %v1201
        %v1211 = vadd.f32 %v1140, %v1201
        %v1212 = vadd.f32 %v1141, %v1201
        %v1213 = vadd.f32 %v1142, %v1201
        %v1214 = vadd.f32 %v1143, %v1201
        %v1215 = vadd.f32 %v1144, %v1201
        %v1216 = vadd.f32 %v1145, %v1201
        %v1217 = vadd.f32 %v1146, %v1201
        %v1218 = vadd.f32 %v1147, %v1201
        %v1219 = vadd.f32 %v1148, %v1201
        %v1220 = vadd.f32 %v1149, %v1201
        %v1221 = vadd.f32 %v1150, %v1201
        %v1222 = vadd.f32 %v1151, %v1201
        %v1223 = vadd.f32 %v1152, %v1201
        %v1224 = vadd.f32 %v1153, %v1201
        %v1225 = vadd.f32 %v1154, %v1201
        %v1226 = vadd.f32 %v1155, %v1201
        %v1227 = vadd.f32 %v1156, %v1201
        %v1228 = vadd.f32 %v1157, %v1201
        %v1229 = vadd.f32 %v1158, %v1201
        %v1230 = vadd.f32 %v1159, %v1201
        %v1231 = vadd.f32 %v1160, %v1201
        %v1232 = vadd.f32 %v1161, %v1201
        %v1233 = vadd.f32 %v1162, %v1201
        %v1234 = vadd.f32 %v1163, %v1201
        %v1235 = vadd.f32 %v1164, %v1201
        %v1236 = vadd.f32 %v1165, %v1201
        %v1237 = vadd.f32 %v1166, %v1201
        %v1238 = vadd.f32 %v1167, %v1201
        %v1239 = vadd.f32 %v1168, %v1201
        %v1240 = vadd.f32 %v1169, %v1201
        %v1241 = vadd.f32 %v1170, %v1201
        %v1242 = vadd.f32 %v1171, %v1201
        %v1243 = vadd.f32 %v1172, %v1201
        %v1244 = vadd.f32 %v1173, %v1201
        %v1245 = vadd.f32 %v1174, %v1201
        %v1246 = vadd.f32 %v1175, %v1201
        %v1247 = vadd.f32 %v1176, %v1201
        %v1248 = vadd.f32 %v1177, %v1201
        %v1249 = vadd.f32 %v1178, %v1201
        %v1250 = vadd.f32 %v1179, %v1201
        %v1251 = vadd.f32 %v1180, %v1201
        %v1252 = vadd.f32 %v1181, %v1201
        %v1253 = vadd.f32 %v1182, %v1201
        %v1254 = vadd.f32 %v1183, %v1201
        %v1255 = vadd.f32 %v1184, %v1201
        %v1256 = vadd.f32 %v1185, %v1201
        %v1257 = vadd.f32 %v1186, %v1201
        %v1258 = vadd.f32 %v1187, %v1201
        %v1259 = vadd.f32 %v1188, %v1201
        %v1260 = vadd.f32 %v1189, %v1201
        %v1261 = vadd.f32 %v1190, %v1201
        %v1262 = vadd.f32 %v1191, %v1201
        %v1263 = vadd.f32 %v1192, %v1201
        %v1264 = vadd.f32 %v1193, %v1201
        %v1265 = vadd.f32 %v1194, %v1201
        %v1266 = vadd.f32 %v1195, %v1201
        %v1267 = vmax.f32 %v1203, 0.0
        %v1268 = vmax.f32 %v1204, 0.0
        %v1269 = vmax.f32 %v1205, 0.0
        %v1270 = vmax.f32 %v1206, 0.0
        %v1271 = vmax.f32 %v1207, 0.0
        %v1272 = vmax.f32 %v1208, 0.0
        %v1273 = vmax.f32 %v1209, 0.0
        %v1274 = vmax.f32 %v1210, 0.0
        %v1275 = vmax.f32 %v1211, 0.0
        %v1276 = vmax.f32 %v1212, 0.0
        %v1277 = vmax.f32 %v1213, 0.0
        %v1278 = vmax.f32 %v1214, 0.0
        %v1279 = vmax.f32 %v1215, 0.0
        %v1280 = vmax.f32 %v1216, 0.0
        %v1281 = vmax.f32 %v1217, 0.0
        %v1282 = vmax.f32 %v1218, 0.0
        %v1283 = vmax.f32 %v1219, 0.0
        %v1284 = vmax.f32 %v1220, 0.0
        %v1285 = vmax.f32 %v1221, 0.0
        %v1286 = vmax.f32 %v1222, 0.0
        %v1287 = vmax.f32 %v1223, 0.0
        %v1288 = vmax.f32 %v1224, 0.0
        %v1289 = vmax.f32 %v1225, 0.0
        %v1290 = vmax.f32 %v1226, 0.0
        %v1291 = vmax.f32 %v1227, 0.0
        %v1292 = vmax.f32 %v1228, 0.0
        %v1293 = vmax.f32 %v1229, 0.0
        %v1294 = vmax.f32 %v1230, 0.0
        %v1295 = vmax.f32 %v1231, 0.0
        %v1296 = vmax.f32 %v1232, 0.0
        %v1297 = vmax.f32 %v1233, 0.0
        %v1298 = vmax.f32 %v1234, 0.0
        %v1299 = vmax.f32 %v1235, 0.0
        %v1300 = vmax.f32 %v1236, 0.0
        %v1301 = vmax.f32 %v1237, 0.0
        %v1302 = vmax.f32 %v1238, 0.0
        %v1303 = vmax.f32 %v1239, 0.0
        %v1304 = vmax.f32 %v1240, 0.0
        %v1305 = vmax.f32 %v1241, 0.0
        %v1306 = vmax.f32 %v1242, 0.0
        %v1307 = vmax.f32 %v1243, 0.0
        %v1308 = vmax.f32 %v1244, 0.0
        %v1309 = vmax.f32 %v1245, 0.0
        %v1310 = vmax.f32 %v1246, 0.0
        %v1311 = vmax.f32 %v1247, 0.0
        %v1312 = vmax.f32 %v1248, 0.0
        %v1313 = vmax.f32 %v1249, 0.0
        %v1314 = vmax.f32 %v1250, 0.0
        %v1315 = vmax.f32 %v1251, 0.0
        %v1316 = vmax.f32 %v1252, 0.0
        %v1317 = vmax.f32 %v1253, 0.0
        %v1318 = vmax.f32 %v1254, 0.0
        %v1319 = vmax.f32 %v1255, 0.0
        %v1320 = vmax.f32 %v1256, 0.0
        %v1321 = vmax.f32 %v1257, 0.0
        %v1322 = vmax.f32 %v1258, 0.0
        %v1323 = vmax.f32 %v1259, 0.0
        %v1324 = vmax.f32 %v1260, 0.0
        %v1325 = vmax.f32 %v1261, 0.0
        %v1326 = vmax.f32 %v1262, 0.0
        %v1327 = vmax.f32 %v1263, 0.0
        %v1328 = vmax.f32 %v1264, 0.0
        %v1329 = vmax.f32 %v1265, 0.0
        %v1330 = vmax.f32 %v1266, 0.0
        %1331 = vst [vmem:[%s257] sm:$0xff] %v1267
        %1332 = vst [vmem:[%s257 + $0x8] sm:$0xff] %v1268
        %1333 = vst [vmem:[%s257 + $0x10] sm:$0xff] %v1269
        %1334 = vst [vmem:[%s257 + $0x18] sm:$0xff] %v1270
        %1335 = vst [vmem:[%s257 + $0x20] sm:$0xff] %v1271
        %1336 = vst [vmem:[%s257 + $0x28] sm:$0xff] %v1272
        %1337 = vst [vmem:[%s257 + $0x30] sm:$0xff] %v1273
        %1338 = vst [vmem:[%s257 + $0x38] sm:$0xff] %v1274
        %1339 = vst [vmem:[%s257 + $0x40] sm:$0xff] %v1275
        %1340 = vst [vmem:[%s257 + $0x48] sm:$0xff] %v1276
        %1341 = vst [vmem:[%s257 + $0x50] sm:$0xff] %v1277
        %1342 = vst [vmem:[%s257 + $0x58] sm:$0xff] %v1278
        %1343 = vst [vmem:[%s257 + $0x60] sm:$0xff] %v1279
        %1344 = vst [vmem:[%s257 + $0x68] sm:$0xff] %v1280
        %1345 = vst [vmem:[%s257 + $0x70] sm:$0xff] %v1281
        %1346 = vst [vmem:[%s257 + $0x78] sm:$0xff] %v1282
        %1347 = vst [vmem:[%s257 + $0x80] sm:$0xff] %v1283
        %1348 = vst [vmem:[%s257 + $0x88] sm:$0xff] %v1284
        %1349 = vst [vmem:[%s257 + $0x90] sm:$0xff] %v1285
        %1350 = vst [vmem:[%s257 + $0x98] sm:$0xff] %v1286
        %1351 = vst [vmem:[%s257 + $0xa0] sm:$0xff] %v1287
        %1352 = vst [vmem:[%s257 + $0xa8] sm:$0xff] %v1288
        %1353 = vst [vmem:[%s257 + $0xb0] sm:$0xff] %v1289
        %1354 = vst [vmem:[%s257 + $0xb8] sm:$0xff] %v1290
        %1355 = vst [vmem:[%s257 + $0xc0] sm:$0xff] %v1291
        %1356 = vst [vmem:[%s257 + $0xc8] sm:$0xff] %v1292
        %1357 = vst [vmem:[%s257 + $0xd0] sm:$0xff] %v1293
        %1358 = vst [vmem:[%s257 + $0xd8] sm:$0xff] %v1294
        %1359 = vst [vmem:[%s257 + $0xe0] sm:$0xff] %v1295
        %1360 = vst [vmem:[%s257 + $0xe8] sm:$0xff] %v1296
        %1361 = vst [vmem:[%s257 + $0xf0] sm:$0xff] %v1297
        %1362 = vst [vmem:[%s257 + $0xf8] sm:$0xff] %v1298
        %1363 = vst [vmem:[%s257 + $0x100] sm:$0xff] %v1299
        %1364 = vst [vmem:[%s257 + $0x108] sm:$0xff] %v1300
        %1365 = vst [vmem:[%s257 + $0x110] sm:$0xff] %v1301
        %1366 = vst [vmem:[%s257 + $0x118] sm:$0xff] %v1302
        %1367 = vst [vmem:[%s257 + $0x120] sm:$0xff] %v1303
        %1368 = vst [vmem:[%s257 + $0x128] sm:$0xff] %v1304
        %1369 = vst [vmem:[%s257 + $0x130] sm:$0xff] %v1305
        %1370 = vst [vmem:[%s257 + $0x138] sm:$0xff] %v1306
        %1371 = vst [vmem:[%s257 + $0x140] sm:$0xff] %v1307
        %1372 = vst [vmem:[%s257 + $0x148] sm:$0xff] %v1308
        %1373 = vst [vmem:[%s257 + $0x150] sm:$0xff] %v1309
        %1374 = vst [vmem:[%s257 + $0x158] sm:$0xff] %v1310
        %1375 = vst [vmem:[%s257 + $0x160] sm:$0xff] %v1311
        %1376 = vst [vmem:[%s257 + $0x168] sm:$0xff] %v1312
        %1377 = vst [vmem:[%s257 + $0x170] sm:$0xff] %v1313
        %1378 = vst [vmem:[%s257 + $0x178] sm:$0xff] %v1314
        %1379 = vst [vmem:[%s257 + $0x180] sm:$0xff] %v1315
        %1380 = vst [vmem:[%s257 + $0x188] sm:$0xff] %v1316
        %1381 = vst [vmem:[%s257 + $0x190] sm:$0xff] %v1317
        %1382 = vst [vmem:[%s257 + $0x198] sm:$0xff] %v1318
        %1383 = vst [vmem:[%s257 + $0x1a0] sm:$0xff] %v1319
        %1384 = vst [vmem:[%s257 + $0x1a8] sm:$0xff] %v1320
        %1385 = vst [vmem:[%s257 + $0x1b0] sm:$0xff] %v1321
        %1386 = vst [vmem:[%s257 + $0x1b8] sm:$0xff] %v1322
        %1387 = vst [vmem:[%s257 + $0x1c0] sm:$0xff] %v1323
        %1388 = vst [vmem:[%s257 + $0x1c8] sm:$0xff] %v1324
        %1389 = vst [vmem:[%s257 + $0x1d0] sm:$0xff] %v1325
        %1390 = vst [vmem:[%s257 + $0x1d8] sm:$0xff] %v1326
        %1391 = vst [vmem:[%s257 + $0x1e0] sm:$0xff] %v1327
        %1392 = vst [vmem:[%s257 + $0x1e8] sm:$0xff] %v1328
        %1393 = vst [vmem:[%s257 + $0x1f0] sm:$0xff] %v1329
        %1394 = vst [vmem:[%s257 + $0x1f8] sm:$0xff] %v1330
      $region40: #{alexnet_forward.11} parent=31 // pred_fallthru
        _
      %s1395 = smul.u32 64, %s19
      %p1396 = scmp.lt.s32.totalorder %s1395, 255
      %s1397 = scalar_select %p1396, %s1395, 255
      %p1398 = scmp.lt.s32.totalorder %s20, 0
      %s1399 = scalar_select %p1398, %s20, 0
      %s1400 = sadd.s32 %s1399, %s1397
      %s1401 = smul.addr %s1400, 8
      %s1402 = scalar_lea.vmem %s3, %s1401
      // Predicated region
      $region41: #{alexnet_forward.11} parent=31 // pred_check
        %p1403 = pneg %p135
      $region42: #{alexnet_forward.11} parent=31 // pred_check_branch
        %1405 = sbr.rel (%p1403) target = $region44
      $region43: #{alexnet_forward.11} parent=31 // pred_region
        %s1406 = smul.u32 64, %s19
      $region44: #{alexnet_forward.11} parent=31 // pred_fallthru
        _
    $region32: #{alexnet_forward.11} parent=5 // pred_fallthru
      _
    %p1407 = scmp.le.s32.totalorder 2, %s9
    // Predicated region
    $region45: #{alexnet_forward.11} parent=5 // pred_check
      %p1408 = pneg %p1407
    $region46: #{alexnet_forward.11} parent=5 // pred_check_branch
      %1410 = sbr.rel (%p1408) target = $region48
    $region47: #{alexnet_forward.11} parent=5 // pred_region
      %s1411 = ssub.s32 %s9, 2
      // Predicated region
      $region49: #{alexnet_forward.11} parent=47 // pred_check
        %p1412 = pneg %p141
      $region50: #{alexnet_forward.11} parent=47 // pred_check_branch
        %1414 = sbr.rel (%p1412) target = $region52
      $region51: #{alexnet_forward.11} parent=47 // pred_region
        %s1415 = smul.u32 64, %s22
        %p1416 = scmp.lt.s32.totalorder %s1415, 255
        %s1417 = scalar_select %p1416, %s1415, 255
        %p1418 = scmp.lt.s32.totalorder %s23, 0
        %s1419 = scalar_select %p1418, %s23, 0
        %s1420 = sadd.s32 %s1419, %s1417
        %s1421 = smul.addr %s1420, 8
        %s1422 = scalar_lea.vmem %s3, %s1421
      $region52: #{alexnet_forward.11} parent=47 // pred_fallthru
        _
    $region48: #{alexnet_forward.11} parent=5 // pred_fallthru
      _
  $region6: #{alexnet_forward.11} parent=0 // loop_footer
    %s13 = sadd.s32 1, %s9
  $region7: #{alexnet_forward.11} parent=0 // loop_footer_branch
    %8 = sbr.rel target = $region3
  $region8: #{alexnet_forward.11} parent=0 // loop_exit
    _

// kernel: alexnet_forward.12
$region0: #{alexnet_forward.12}
  #allocation0 [shape = 'u32[]', space=smem, size = 0x4, offset = 0x4, fixed_abs, tag = 'smem constant byte address 0x4 - core index']
  #allocation1 [shape = 'u32[144,128]{1,0:T(1,128)}', space=vmem, size = 0x12000, scoped, tag = 'internal scratch']
  %s0 = inlined_call_operand.vmem [shape: f32[2,16,2,16,32], index: 0, kind: input, shape index: {}]
  %s1 = inlined_call_operand.vmem [shape: f32[2,16,16,16], index: 1, kind: output, shape index: {}]
  %s2 = sld [smem:[#allocation0]]
  $region37: #{alexnet_forward.12} parent=0
    _
  %s4 = ssub.s32 1, %s2
  %s5 = scalar_select 0, %s4, %s2
  loop: start=0, step=1, limit=4
  $region2: #{alexnet_forward.12} parent=0 // loop_pre_header
    _
  $region3: #{alexnet_forward.12} parent=0 // loop_header
    %s7 = sphi 0, %s11
    %p8 = scmp.ge.s32.totalorder %s7, 4
    %s17 = sphi 0, %s19
    %s20 = sphi 0, %s17
    %s21 = sphi 0, %s20
    %s37 = sphi 0, %s21
    %s43 = sphi 0, %s45
    %s46 = sphi 0, %s43
    %s47 = sphi 0, %s46
    %s63 = sphi 0, %s47
  $region4: #{alexnet_forward.12} parent=0 // loop_header_branch
    %10 = sbr.rel (%p8) target = $region8
  $region5: #{alexnet_forward.12} parent=0 // loop_body
    %s12 = ssub.s32 %s7, 1
    %s13 = ssub.s32 %s7, 2
    %s14 = sadd.s32 %s7, 1
    %s15 = ssub.s32 %s7, %s14
    %p16 = scmp.eq.s32.totalorder %s15, 0
    %s18 = sadd.s32 %s17, 1
    %s19 = scalar_select %p16, %s17, %s18
    %p22 = pneg %p16
    %p23 = scmp.eq.s32.totalorder %s7, 1
    %p24 = por %p22, %p23
    %p25 = scmp.ne.s32.totalorder %s17, %s20
    %p26 = scmp.eq.s32.totalorder %s7, 0
    %p27 = por %p25, %p26
    %p28 = scmp.ne.s32.totalorder %s17, %s20
    %p29 = scmp.eq.s32.totalorder %s12, 1
    %p30 = por %p28, %p29
    %p31 = scmp.ne.s32.totalorder %s20, %s21
    %p32 = scmp.eq.s32.totalorder %s12, 0
    %p33 = por %p31, %p32
    %p34 = scmp.ne.s32.totalorder %s20, %s21
    %p35 = scmp.eq.s32.totalorder %s13, 1
    %p36 = por %p34, %p35
    %p38 = scmp.ne.s32.totalorder %s21, %s37
    %p39 = scmp.eq.s32.totalorder %s13, 0
    %p40 = por %p38, %p39
    %s41 = ssub.s32 %s7, %s14
    %p42 = scmp.eq.s32.totalorder %s41, 0
    %s44 = sadd.s32 %s43, 1
    %s45 = scalar_select %p42, %s43, %s44
    %p48 = pneg %p42
    %p49 = scmp.eq.s32.totalorder %s7, 1
    %p50 = por %p48, %p49
    %p51 = scmp.ne.s32.totalorder %s43, %s46
    %p52 = scmp.eq.s32.totalorder %s7, 0
    %p53 = por %p51, %p52
    %p54 = scmp.ne.s32.totalorder %s43, %s46
    %p55 = scmp.eq.s32.totalorder %s12, 1
    %p56 = por %p54, %p55
    %p57 = scmp.ne.s32.totalorder %s46, %s47
    %p58 = scmp.eq.s32.totalorder %s12, 0
    %p59 = por %p57, %p58
    %p60 = scmp.ne.s32.totalorder %s46, %s47
    %p61 = scmp.eq.s32.totalorder %s13, 1
    %p62 = por %p60, %p61
    %p64 = scmp.ne.s32.totalorder %s47, %s63
    %p65 = scmp.eq.s32.totalorder %s13, 0
    %p66 = por %p64, %p65
    %p67 = scmp.le.s32.totalorder 1, %s7
    %p68 = scmp.lt.s32.totalorder %s7, 3
    %p69 = pnand %p67, %p68
    %p70 = pneg %p69
    // Predicated region
    $region9: #{alexnet_forward.12} parent=5 // pred_check
      _
    $region10: #{alexnet_forward.12} parent=5 // pred_check_branch
      %72 = sbr.rel (%p69) target = $region12
    $region11: #{alexnet_forward.12} parent=5 // pred_region
      %s73 = ssub.s32 %s7, 1
    $region12: #{alexnet_forward.12} parent=5 // pred_fallthru
      _
    %p74 = scmp.lt.s32.totalorder %s7, 2
    // Predicated region
    $region13: #{alexnet_forward.12} parent=5 // pred_check
      %p75 = pneg %p74
    $region14: #{alexnet_forward.12} parent=5 // pred_check_branch
      %77 = sbr.rel (%p75) target = $region16
    $region15: #{alexnet_forward.12} parent=5 // pred_region
      // Predicated region
      $region17: #{alexnet_forward.12} parent=15 // pred_check
        %p78 = pneg %p27
      $region18: #{alexnet_forward.12} parent=15 // pred_check_branch
        %80 = sbr.rel (%p78) target = $region20
      $region19: #{alexnet_forward.12} parent=15 // pred_region
        %p81 = scmp.lt.s32.totalorder %s7, 1
        %s82 = scalar_select %p81, %s7, 1
        %s83 = smul.addr %s82, 64
        %s84 = smul.addr %s83, 8
        %s85 = scalar_lea.vmem %s0, %s84
      $region20: #{alexnet_forward.12} parent=15 // pred_fallthru
        _
    $region16: #{alexnet_forward.12} parent=5 // pred_fallthru
      _
    %p86 = scmp.le.s32.totalorder 1, %s7
    %p87 = scmp.lt.s32.totalorder %s7, 3
    %p88 = pnand %p86, %p87
    %p89 = pneg %p88
    // Predicated region
    $region21: #{alexnet_forward.12} parent=5 // pred_check
      _
    $region22: #{alexnet_forward.12} parent=5 // pred_check_branch
      %91 = sbr.rel (%p88) target = $region24
    $region23: #{alexnet_forward.12} parent=5 // pred_region
      %s92 = ssub.s32 %s7, 1
      %p93 = scmp.lt.s32.totalorder %s12, 1
      %s94 = scalar_select %p93, %s12, 1
      %s95 = smul.addr %s94, 64
      %s96 = smul.addr %s95, 8
      %s97 = scalar_lea.vmem %s0, %s96
      %p98 = pneg %p33
      %p99 = pneg %p30
      %p100 = pneg %p59
      %p101 = pneg %p56
      %p102 = scmp.lt.s32.totalorder %s12, 1
      %s103 = scalar_select %p102, %s12, 1
      %s104 = smul.addr %s103, 32
      %s105 = smul.addr %s104, 8
      %s106 = scalar_lea.vmem %s1, %s105
      %p107 = scmp.lt.s32.totalorder %s12, 1
      %s108 = scalar_select %p107, %s12, 1
      %s109 = smul.addr %s108, 64
      %s110 = smul.addr %s109, 8
      %s111 = scalar_lea.vmem %s0, %s110
      %p112 = scmp.lt.s32.totalorder %s12, 1
      %s113 = scalar_select %p112, %s12, 1
      %s114 = smul.addr %s113, 32
      %s115 = smul.addr %s114, 8
      %s116 = scalar_lea.vmem %s1, %s115
      %v117 = vld [vmem:[%s111] sm:$0xff]
      %v118 = vld [vmem:[%s111 + $0x8] sm:$0xff]
      %v119 = vld [vmem:[%s111 + $0x10] sm:$0xff]
      %v120 = vld [vmem:[%s111 + $0x18] sm:$0xff]
      %v121 = vld [vmem:[%s111 + $0x20] sm:$0xff]
      %v122 = vld [vmem:[%s111 + $0x28] sm:$0xff]
      %v123 = vld [vmem:[%s111 + $0x30] sm:$0xff]
      %v124 = vld [vmem:[%s111 + $0x38] sm:$0xff]
      %v125 = vld [vmem:[%s111 + $0x40] sm:$0xff]
      %v126 = vld [vmem:[%s111 + $0x48] sm:$0xff]
      %v127 = vld [vmem:[%s111 + $0x50] sm:$0xff]
      %v128 = vld [vmem:[%s111 + $0x58] sm:$0xff]
      %v129 = vld [vmem:[%s111 + $0x60] sm:$0xff]
      %v130 = vld [vmem:[%s111 + $0x68] sm:$0xff]
      %v131 = vld [vmem:[%s111 + $0x70] sm:$0xff]
      %v132 = vld [vmem:[%s111 + $0x78] sm:$0xff]
      %v133 = vld [vmem:[%s111 + $0x80] sm:$0xff]
      %v134 = vld [vmem:[%s111 + $0x88] sm:$0xff]
      %v135 = vld [vmem:[%s111 + $0x90] sm:$0xff]
      %v136 = vld [vmem:[%s111 + $0x98] sm:$0xff]
      %v137 = vld [vmem:[%s111 + $0xa0] sm:$0xff]
      %v138 = vld [vmem:[%s111 + $0xa8] sm:$0xff]
      %v139 = vld [vmem:[%s111 + $0xb0] sm:$0xff]
      %v140 = vld [vmem:[%s111 + $0xb8] sm:$0xff]
      %v141 = vld [vmem:[%s111 + $0xc0] sm:$0xff]
      %v142 = vld [vmem:[%s111 + $0xc8] sm:$0xff]
      %v143 = vld [vmem:[%s111 + $0xd0] sm:$0xff]
      %v144 = vld [vmem:[%s111 + $0xd8] sm:$0xff]
      %v145 = vld [vmem:[%s111 + $0xe0] sm:$0xff]
      %v146 = vld [vmem:[%s111 + $0xe8] sm:$0xff]
      %v147 = vld [vmem:[%s111 + $0xf0] sm:$0xff]
      %v148 = vld [vmem:[%s111 + $0xf8] sm:$0xff]
      %v149 = vld [vmem:[%s111 + $0x100] sm:$0xff]
      %v150 = vld [vmem:[%s111 + $0x108] sm:$0xff]
      %v151 = vld [vmem:[%s111 + $0x110] sm:$0xff]
      %v152 = vld [vmem:[%s111 + $0x118] sm:$0xff]
      %v153 = vld [vmem:[%s111 + $0x120] sm:$0xff]
      %v154 = vld [vmem:[%s111 + $0x128] sm:$0xff]
      %v155 = vld [vmem:[%s111 + $0x130] sm:$0xff]
      %v156 = vld [vmem:[%s111 + $0x138] sm:$0xff]
      %v157 = vld [vmem:[%s111 + $0x140] sm:$0xff]
      %v158 = vld [vmem:[%s111 + $0x148] sm:$0xff]
      %v159 = vld [vmem:[%s111 + $0x150] sm:$0xff]
      %v160 = vld [vmem:[%s111 + $0x158] sm:$0xff]
      %v161 = vld [vmem:[%s111 + $0x160] sm:$0xff]
      %v162 = vld [vmem:[%s111 + $0x168] sm:$0xff]
      %v163 = vld [vmem:[%s111 + $0x170] sm:$0xff]
      %v164 = vld [vmem:[%s111 + $0x178] sm:$0xff]
      %v165 = vld [vmem:[%s111 + $0x180] sm:$0xff]
      %v166 = vld [vmem:[%s111 + $0x188] sm:$0xff]
      %v167 = vld [vmem:[%s111 + $0x190] sm:$0xff]
      %v168 = vld [vmem:[%s111 + $0x198] sm:$0xff]
      %v169 = vld [vmem:[%s111 + $0x1a0] sm:$0xff]
      %v170 = vld [vmem:[%s111 + $0x1a8] sm:$0xff]
      %v171 = vld [vmem:[%s111 + $0x1b0] sm:$0xff]
      %v172 = vld [vmem:[%s111 + $0x1b8] sm:$0xff]
      %v173 = vld [vmem:[%s111 + $0x1c0] sm:$0xff]
      %v174 = vld [vmem:[%s111 + $0x1c8] sm:$0xff]
      %v175 = vld [vmem:[%s111 + $0x1d0] sm:$0xff]
      %v176 = vld [vmem:[%s111 + $0x1d8] sm:$0xff]
      %v177 = vld [vmem:[%s111 + $0x1e0] sm:$0xff]
      %v178 = vld [vmem:[%s111 + $0x1e8] sm:$0xff]
      %v179 = vld [vmem:[%s111 + $0x1f0] sm:$0xff]
      %v180 = vld [vmem:[%s111 + $0x1f8] sm:$0xff]
      %v181 = vmax.f32 %v117, %v119
      %v182 = vmax.f32 %v118, %v120
      %v183 = vmax.f32 %v121, %v123
      %v184 = vmax.f32 %v122, %v124
      %v185 = vmax.f32 %v125, %v127
      %v186 = vmax.f32 %v126, %v128
      %v187 = vmax.f32 %v129, %v131
      %v188 = vmax.f32 %v130, %v132
      %v189 = vmax.f32 %v133, %v135
      %v190 = vmax.f32 %v134, %v136
      %v191 = vmax.f32 %v137, %v139
      %v192 = vmax.f32 %v138, %v140
      %v193 = vmax.f32 %v141, %v143
      %v194 = vmax.f32 %v142, %v144
      %v195 = vmax.f32 %v145, %v147
      %v196 = vmax.f32 %v146, %v148
      %v197 = vmax.f32 %v149, %v151
      %v198 = vmax.f32 %v150, %v152
      %v199 = vmax.f32 %v153, %v155
      %v200 = vmax.f32 %v154, %v156
      %v201 = vmax.f32 %v157, %v159
      %v202 = vmax.f32 %v158, %v160
      %v203 = vmax.f32 %v161, %v163
      %v204 = vmax.f32 %v162, %v164
      %v205 = vmax.f32 %v165, %v167
      %v206 = vmax.f32 %v166, %v168
      %v207 = vmax.f32 %v169, %v171
      %v208 = vmax.f32 %v170, %v172
      %v209 = vmax.f32 %v173, %v175
      %v210 = vmax.f32 %v174, %v176
      %v211 = vmax.f32 %v177, %v179
      %v212 = vmax.f32 %v178, %v180
      %245 = vrot.lane.b32.xlu0 %v181, 112
      %v246 = vpop.permute.xlu0 %245
      %247 = vrot.lane.b32.xlu0 %v182, 112
      %v248 = vpop.permute.xlu0 %247
      %249 = vrot.lane.b32.xlu0 %v183, 112
      %v250 = vpop.permute.xlu0 %249
      %251 = vrot.lane.b32.xlu0 %v184, 112
      %v252 = vpop.permute.xlu0 %251
      %253 = vrot.lane.b32.xlu0 %v185, 112
      %v254 = vpop.permute.xlu0 %253
      %255 = vrot.lane.b32.xlu0 %v186, 112
      %v256 = vpop.permute.xlu0 %255
      %257 = vrot.lane.b32.xlu0 %v187, 112
      %v258 = vpop.permute.xlu0 %257
      %259 = vrot.lane.b32.xlu0 %v188, 112
      %v260 = vpop.permute.xlu0 %259
      %261 = vrot.lane.b32.xlu0 %v189, 112
      %v262 = vpop.permute.xlu0 %261
      %263 = vrot.lane.b32.xlu0 %v190, 112
      %v264 = vpop.permute.xlu0 %263
      %265 = vrot.lane.b32.xlu0 %v191, 112
      %v266 = vpop.permute.xlu0 %265
      %267 = vrot.lane.b32.xlu0 %v192, 112
      %v268 = vpop.permute.xlu0 %267
      %269 = vrot.lane.b32.xlu0 %v193, 112
      %v270 = vpop.permute.xlu0 %269
      %271 = vrot.lane.b32.xlu0 %v194, 112
      %v272 = vpop.permute.xlu0 %271
      %273 = vrot.lane.b32.xlu0 %v195, 112
      %v274 = vpop.permute.xlu0 %273
      %275 = vrot.lane.b32.xlu0 %v196, 112
      %v276 = vpop.permute.xlu0 %275
      %277 = vrot.lane.b32.xlu0 %v197, 112
      %v278 = vpop.permute.xlu0 %277
      %279 = vrot.lane.b32.xlu0 %v198, 112
      %v280 = vpop.permute.xlu0 %279
      %281 = vrot.lane.b32.xlu0 %v199, 112
      %v282 = vpop.permute.xlu0 %281
      %283 = vrot.lane.b32.xlu0 %v200, 112
      %v284 = vpop.permute.xlu0 %283
      %285 = vrot.lane.b32.xlu0 %v201, 112
      %v286 = vpop.permute.xlu0 %285
      %287 = vrot.lane.b32.xlu0 %v202, 112
      %v288 = vpop.permute.xlu0 %287
      %289 = vrot.lane.b32.xlu0 %v203, 112
      %v290 = vpop.permute.xlu0 %289
      %291 = vrot.lane.b32.xlu0 %v204, 112
      %v292 = vpop.permute.xlu0 %291
      %293 = vrot.lane.b32.xlu0 %v205, 112
      %v294 = vpop.permute.xlu0 %293
      %295 = vrot.lane.b32.xlu0 %v206, 112
      %v296 = vpop.permute.xlu0 %295
      %297 = vrot.lane.b32.xlu0 %v207, 112
      %v298 = vpop.permute.xlu0 %297
      %299 = vrot.lane.b32.xlu0 %v208, 112
      %v300 = vpop.permute.xlu0 %299
      %301 = vrot.lane.b32.xlu0 %v209, 112
      %v302 = vpop.permute.xlu0 %301
      %303 = vrot.lane.b32.xlu0 %v210, 112
      %v304 = vpop.permute.xlu0 %303
      %305 = vrot.lane.b32.xlu0 %v211, 112
      %v306 = vpop.permute.xlu0 %305
      %307 = vrot.lane.b32.xlu0 %v212, 112
      %v308 = vpop.permute.xlu0 %307
      %v341 = vmax.f32 %v181, %v246
      %v342 = vmax.f32 %v182, %v248
      %v343 = vmax.f32 %v183, %v250
      %v344 = vmax.f32 %v184, %v252
      %v345 = vmax.f32 %v185, %v254
      %v346 = vmax.f32 %v186, %v256
      %v347 = vmax.f32 %v187, %v258
      %v348 = vmax.f32 %v188, %v260
      %v349 = vmax.f32 %v189, %v262
      %v350 = vmax.f32 %v190, %v264
      %v351 = vmax.f32 %v191, %v266
      %v352 = vmax.f32 %v192, %v268
      %v353 = vmax.f32 %v193, %v270
      %v354 = vmax.f32 %v194, %v272
      %v355 = vmax.f32 %v195, %v274
      %v356 = vmax.f32 %v196, %v276
      %v357 = vmax.f32 %v197, %v278
      %v358 = vmax.f32 %v198, %v280
      %v359 = vmax.f32 %v199, %v282
      %v360 = vmax.f32 %v200, %v284
      %v361 = vmax.f32 %v201, %v286
      %v362 = vmax.f32 %v202, %v288
      %v363 = vmax.f32 %v203, %v290
      %v364 = vmax.f32 %v204, %v292
      %v365 = vmax.f32 %v205, %v294
      %v366 = vmax.f32 %v206, %v296
      %v367 = vmax.f32 %v207, %v298
      %v368 = vmax.f32 %v208, %v300
      %v369 = vmax.f32 %v209, %v302
      %v370 = vmax.f32 %v210, %v304
      %v371 = vmax.f32 %v211, %v306
      %v372 = vmax.f32 %v212, %v308
      %vm373 = vcmask 130048
      %374 = vst.msk [vmem:[%s116] sm:$0xff] %vm373, %v341
      %375 = vst.msk [vmem:[%s116 + $0x8] sm:$0xff] %vm373, %v342
      %376 = vst.msk [vmem:[%s116 + $0x10] sm:$0xff] %vm373, %v343
      %377 = vst.msk [vmem:[%s116 + $0x18] sm:$0xff] %vm373, %v344
      %378 = vst.msk [vmem:[%s116 + $0x20] sm:$0xff] %vm373, %v345
      %379 = vst.msk [vmem:[%s116 + $0x28] sm:$0xff] %vm373, %v346
      %380 = vst.msk [vmem:[%s116 + $0x30] sm:$0xff] %vm373, %v347
      %381 = vst.msk [vmem:[%s116 + $0x38] sm:$0xff] %vm373, %v348
      %382 = vst.msk [vmem:[%s116 + $0x40] sm:$0xff] %vm373, %v349
      %383 = vst.msk [vmem:[%s116 + $0x48] sm:$0xff] %vm373, %v350
      %384 = vst.msk [vmem:[%s116 + $0x50] sm:$0xff] %vm373, %v351
      %385 = vst.msk [vmem:[%s116 + $0x58] sm:$0xff] %vm373, %v352
      %386 = vst.msk [vmem:[%s116 + $0x60] sm:$0xff] %vm373, %v353
      %387 = vst.msk [vmem:[%s116 + $0x68] sm:$0xff] %vm373, %v354
      %388 = vst.msk [vmem:[%s116 + $0x70] sm:$0xff] %vm373, %v355
      %389 = vst.msk [vmem:[%s116 + $0x78] sm:$0xff] %vm373, %v356
      %390 = vst.msk [vmem:[%s116 + $0x80] sm:$0xff] %vm373, %v357
      %391 = vst.msk [vmem:[%s116 + $0x88] sm:$0xff] %vm373, %v358
      %392 = vst.msk [vmem:[%s116 + $0x90] sm:$0xff] %vm373, %v359
      %393 = vst.msk [vmem:[%s116 + $0x98] sm:$0xff] %vm373, %v360
      %394 = vst.msk [vmem:[%s116 + $0xa0] sm:$0xff] %vm373, %v361
      %395 = vst.msk [vmem:[%s116 + $0xa8] sm:$0xff] %vm373, %v362
      %396 = vst.msk [vmem:[%s116 + $0xb0] sm:$0xff] %vm373, %v363
      %397 = vst.msk [vmem:[%s116 + $0xb8] sm:$0xff] %vm373, %v364
      %398 = vst.msk [vmem:[%s116 + $0xc0] sm:$0xff] %vm373, %v365
      %399 = vst.msk [vmem:[%s116 + $0xc8] sm:$0xff] %vm373, %v366
      %400 = vst.msk [vmem:[%s116 + $0xd0] sm:$0xff] %vm373, %v367
      %401 = vst.msk [vmem:[%s116 + $0xd8] sm:$0xff] %vm373, %v368
      %402 = vst.msk [vmem:[%s116 + $0xe0] sm:$0xff] %vm373, %v369
      %403 = vst.msk [vmem:[%s116 + $0xe8] sm:$0xff] %vm373, %v370
      %404 = vst.msk [vmem:[%s116 + $0xf0] sm:$0xff] %vm373, %v371
      %405 = vst.msk [vmem:[%s116 + $0xf8] sm:$0xff] %vm373, %v372
      %p406 = scmp.lt.s32.totalorder %s12, 1
      %s407 = scalar_select %p406, %s12, 1
      %s408 = smul.addr %s407, 32
      %s409 = smul.addr %s408, 8
      %s410 = scalar_lea.vmem %s1, %s409
      // Predicated region
      $region25: #{alexnet_forward.12} parent=23 // pred_check
        %p411 = pneg %p56
      $region26: #{alexnet_forward.12} parent=23 // pred_check_branch
        %413 = sbr.rel (%p411) target = $region28
      $region27: #{alexnet_forward.12} parent=23 // pred_region
        _
      $region28: #{alexnet_forward.12} parent=23 // pred_fallthru
        _
    $region24: #{alexnet_forward.12} parent=5 // pred_fallthru
      _
    %p414 = scmp.le.s32.totalorder 2, %s7
    // Predicated region
    $region29: #{alexnet_forward.12} parent=5 // pred_check
      %p415 = pneg %p414
    $region30: #{alexnet_forward.12} parent=5 // pred_check_branch
      %417 = sbr.rel (%p415) target = $region32
    $region31: #{alexnet_forward.12} parent=5 // pred_region
      %s418 = ssub.s32 %s7, 2
      // Predicated region
      $region33: #{alexnet_forward.12} parent=31 // pred_check
        %p419 = pneg %p62
      $region34: #{alexnet_forward.12} parent=31 // pred_check_branch
        %421 = sbr.rel (%p419) target = $region36
      $region35: #{alexnet_forward.12} parent=31 // pred_region
        %p422 = scmp.lt.s32.totalorder %s13, 1
        %s423 = scalar_select %p422, %s13, 1
        %s424 = smul.addr %s423, 32
        %s425 = smul.addr %s424, 8
        %s426 = scalar_lea.vmem %s1, %s425
      $region36: #{alexnet_forward.12} parent=31 // pred_fallthru
        _
    $region32: #{alexnet_forward.12} parent=5 // pred_fallthru
      _
  $region6: #{alexnet_forward.12} parent=0 // loop_footer
    %s11 = sadd.s32 1, %s7
  $region7: #{alexnet_forward.12} parent=0 // loop_footer_branch
    %6 = sbr.rel target = $region3
  $region8: #{alexnet_forward.12} parent=0 // loop_exit
    _

// kernel: alexnet_forward.14
$region0: #{alexnet_forward.14}
  #allocation0 [shape = 'u32[]', space=smem, size = 0x4, offset = 0x4, fixed_abs, tag = 'smem constant byte address 0x4 - core index']
  #allocation1 [shape = 'u32[144,128]{1,0:T(1,128)}', space=vmem, size = 0x12000, scoped, tag = 'internal scratch']
  %s0 = inlined_call_operand.vmem [shape: f32[2,8,2,8,64], index: 0, kind: input, shape index: {}]
  %s1 = inlined_call_operand.vmem [shape: f32[2,8,8,32], index: 1, kind: output, shape index: {}]
  %s2 = sld [smem:[#allocation0]]
  $region37: #{alexnet_forward.14} parent=0
    _
  %s4 = ssub.s32 1, %s2
  %s5 = scalar_select 0, %s4, %s2
  loop: start=0, step=1, limit=4
  $region2: #{alexnet_forward.14} parent=0 // loop_pre_header
    _
  $region3: #{alexnet_forward.14} parent=0 // loop_header
    %s7 = sphi 0, %s11
    %p8 = scmp.ge.s32.totalorder %s7, 4
    %s17 = sphi 0, %s19
    %s20 = sphi 0, %s17
    %s21 = sphi 0, %s20
    %s37 = sphi 0, %s21
    %s43 = sphi 0, %s45
    %s46 = sphi 0, %s43
    %s47 = sphi 0, %s46
    %s63 = sphi 0, %s47
  $region4: #{alexnet_forward.14} parent=0 // loop_header_branch
    %10 = sbr.rel (%p8) target = $region8
  $region5: #{alexnet_forward.14} parent=0 // loop_body
    %s12 = ssub.s32 %s7, 1
    %s13 = ssub.s32 %s7, 2
    %s14 = sadd.s32 %s7, 1
    %s15 = ssub.s32 %s7, %s14
    %p16 = scmp.eq.s32.totalorder %s15, 0
    %s18 = sadd.s32 %s17, 1
    %s19 = scalar_select %p16, %s17, %s18
    %p22 = pneg %p16
    %p23 = scmp.eq.s32.totalorder %s7, 1
    %p24 = por %p22, %p23
    %p25 = scmp.ne.s32.totalorder %s17, %s20
    %p26 = scmp.eq.s32.totalorder %s7, 0
    %p27 = por %p25, %p26
    %p28 = scmp.ne.s32.totalorder %s17, %s20
    %p29 = scmp.eq.s32.totalorder %s12, 1
    %p30 = por %p28, %p29
    %p31 = scmp.ne.s32.totalorder %s20, %s21
    %p32 = scmp.eq.s32.totalorder %s12, 0
    %p33 = por %p31, %p32
    %p34 = scmp.ne.s32.totalorder %s20, %s21
    %p35 = scmp.eq.s32.totalorder %s13, 1
    %p36 = por %p34, %p35
    %p38 = scmp.ne.s32.totalorder %s21, %s37
    %p39 = scmp.eq.s32.totalorder %s13, 0
    %p40 = por %p38, %p39
    %s41 = ssub.s32 %s7, %s14
    %p42 = scmp.eq.s32.totalorder %s41, 0
    %s44 = sadd.s32 %s43, 1
    %s45 = scalar_select %p42, %s43, %s44
    %p48 = pneg %p42
    %p49 = scmp.eq.s32.totalorder %s7, 1
    %p50 = por %p48, %p49
    %p51 = scmp.ne.s32.totalorder %s43, %s46
    %p52 = scmp.eq.s32.totalorder %s7, 0
    %p53 = por %p51, %p52
    %p54 = scmp.ne.s32.totalorder %s43, %s46
    %p55 = scmp.eq.s32.totalorder %s12, 1
    %p56 = por %p54, %p55
    %p57 = scmp.ne.s32.totalorder %s46, %s47
    %p58 = scmp.eq.s32.totalorder %s12, 0
    %p59 = por %p57, %p58
    %p60 = scmp.ne.s32.totalorder %s46, %s47
    %p61 = scmp.eq.s32.totalorder %s13, 1
    %p62 = por %p60, %p61
    %p64 = scmp.ne.s32.totalorder %s47, %s63
    %p65 = scmp.eq.s32.totalorder %s13, 0
    %p66 = por %p64, %p65
    %p67 = scmp.le.s32.totalorder 1, %s7
    %p68 = scmp.lt.s32.totalorder %s7, 3
    %p69 = pnand %p67, %p68
    %p70 = pneg %p69
    // Predicated region
    $region9: #{alexnet_forward.14} parent=5 // pred_check
      _
    $region10: #{alexnet_forward.14} parent=5 // pred_check_branch
      %72 = sbr.rel (%p69) target = $region12
    $region11: #{alexnet_forward.14} parent=5 // pred_region
      %s73 = ssub.s32 %s7, 1
    $region12: #{alexnet_forward.14} parent=5 // pred_fallthru
      _
    %p74 = scmp.lt.s32.totalorder %s7, 2
    // Predicated region
    $region13: #{alexnet_forward.14} parent=5 // pred_check
      %p75 = pneg %p74
    $region14: #{alexnet_forward.14} parent=5 // pred_check_branch
      %77 = sbr.rel (%p75) target = $region16
    $region15: #{alexnet_forward.14} parent=5 // pred_region
      // Predicated region
      $region17: #{alexnet_forward.14} parent=15 // pred_check
        %p78 = pneg %p27
      $region18: #{alexnet_forward.14} parent=15 // pred_check_branch
        %80 = sbr.rel (%p78) target = $region20
      $region19: #{alexnet_forward.14} parent=15 // pred_region
        %p81 = scmp.lt.s32.totalorder %s7, 1
        %s82 = scalar_select %p81, %s7, 1
        %s83 = smul.addr %s82, 16
        %s84 = smul.addr %s83, 8
        %s85 = scalar_lea.vmem %s0, %s84
      $region20: #{alexnet_forward.14} parent=15 // pred_fallthru
        _
    $region16: #{alexnet_forward.14} parent=5 // pred_fallthru
      _
    %p86 = scmp.le.s32.totalorder 1, %s7
    %p87 = scmp.lt.s32.totalorder %s7, 3
    %p88 = pnand %p86, %p87
    %p89 = pneg %p88
    // Predicated region
    $region21: #{alexnet_forward.14} parent=5 // pred_check
      _
    $region22: #{alexnet_forward.14} parent=5 // pred_check_branch
      %91 = sbr.rel (%p88) target = $region24
    $region23: #{alexnet_forward.14} parent=5 // pred_region
      %s92 = ssub.s32 %s7, 1
      %p93 = scmp.lt.s32.totalorder %s12, 1
      %s94 = scalar_select %p93, %s12, 1
      %s95 = smul.addr %s94, 16
      %s96 = smul.addr %s95, 8
      %s97 = scalar_lea.vmem %s0, %s96
      %p98 = pneg %p33
      %p99 = pneg %p30
      %p100 = pneg %p59
      %p101 = pneg %p56
      %p102 = scmp.lt.s32.totalorder %s12, 1
      %s103 = scalar_select %p102, %s12, 1
      %s104 = smul.addr %s103, 8
      %s105 = smul.addr %s104, 8
      %s106 = scalar_lea.vmem %s1, %s105
      %p107 = scmp.lt.s32.totalorder %s12, 1
      %s108 = scalar_select %p107, %s12, 1
      %s109 = smul.addr %s108, 16
      %s110 = smul.addr %s109, 8
      %s111 = scalar_lea.vmem %s0, %s110
      %p112 = scmp.lt.s32.totalorder %s12, 1
      %s113 = scalar_select %p112, %s12, 1
      %s114 = smul.addr %s113, 8
      %s115 = smul.addr %s114, 8
      %s116 = scalar_lea.vmem %s1, %s115
      %v117 = vld [vmem:[%s111] sm:$0xff]
      %v118 = vld [vmem:[%s111 + $0x8] sm:$0xff]
      %v119 = vld [vmem:[%s111 + $0x10] sm:$0xff]
      %v120 = vld [vmem:[%s111 + $0x18] sm:$0xff]
      %v121 = vld [vmem:[%s111 + $0x20] sm:$0xff]
      %v122 = vld [vmem:[%s111 + $0x28] sm:$0xff]
      %v123 = vld [vmem:[%s111 + $0x30] sm:$0xff]
      %v124 = vld [vmem:[%s111 + $0x38] sm:$0xff]
      %v125 = vld [vmem:[%s111 + $0x40] sm:$0xff]
      %v126 = vld [vmem:[%s111 + $0x48] sm:$0xff]
      %v127 = vld [vmem:[%s111 + $0x50] sm:$0xff]
      %v128 = vld [vmem:[%s111 + $0x58] sm:$0xff]
      %v129 = vld [vmem:[%s111 + $0x60] sm:$0xff]
      %v130 = vld [vmem:[%s111 + $0x68] sm:$0xff]
      %v131 = vld [vmem:[%s111 + $0x70] sm:$0xff]
      %v132 = vld [vmem:[%s111 + $0x78] sm:$0xff]
      %v133 = vmax.f32 %v117, %v118
      %v134 = vmax.f32 %v119, %v120
      %v135 = vmax.f32 %v121, %v122
      %v136 = vmax.f32 %v123, %v124
      %v137 = vmax.f32 %v125, %v126
      %v138 = vmax.f32 %v127, %v128
      %v139 = vmax.f32 %v129, %v130
      %v140 = vmax.f32 %v131, %v132
      %149 = vrot.lane.b32.xlu0 %v133, 96
      %v150 = vpop.permute.xlu0 %149
      %151 = vrot.lane.b32.xlu0 %v134, 96
      %v152 = vpop.permute.xlu0 %151
      %153 = vrot.lane.b32.xlu0 %v135, 96
      %v154 = vpop.permute.xlu0 %153
      %155 = vrot.lane.b32.xlu0 %v136, 96
      %v156 = vpop.permute.xlu0 %155
      %157 = vrot.lane.b32.xlu0 %v137, 96
      %v158 = vpop.permute.xlu0 %157
      %159 = vrot.lane.b32.xlu0 %v138, 96
      %v160 = vpop.permute.xlu0 %159
      %161 = vrot.lane.b32.xlu0 %v139, 96
      %v162 = vpop.permute.xlu0 %161
      %163 = vrot.lane.b32.xlu0 %v140, 96
      %v164 = vpop.permute.xlu0 %163
      %v173 = vmax.f32 %v133, %v150
      %v174 = vmax.f32 %v134, %v152
      %v175 = vmax.f32 %v135, %v154
      %v176 = vmax.f32 %v136, %v156
      %v177 = vmax.f32 %v137, %v158
      %v178 = vmax.f32 %v138, %v160
      %v179 = vmax.f32 %v139, %v162
      %v180 = vmax.f32 %v140, %v164
      %vm181 = vcmask 261120
      %182 = vst.msk [vmem:[%s116] sm:$0xff] %vm181, %v173
      %183 = vst.msk [vmem:[%s116 + $0x8] sm:$0xff] %vm181, %v174
      %184 = vst.msk [vmem:[%s116 + $0x10] sm:$0xff] %vm181, %v175
      %185 = vst.msk [vmem:[%s116 + $0x18] sm:$0xff] %vm181, %v176
      %186 = vst.msk [vmem:[%s116 + $0x20] sm:$0xff] %vm181, %v177
      %187 = vst.msk [vmem:[%s116 + $0x28] sm:$0xff] %vm181, %v178
      %188 = vst.msk [vmem:[%s116 + $0x30] sm:$0xff] %vm181, %v179
      %189 = vst.msk [vmem:[%s116 + $0x38] sm:$0xff] %vm181, %v180
      %p190 = scmp.lt.s32.totalorder %s12, 1
      %s191 = scalar_select %p190, %s12, 1
      %s192 = smul.addr %s191, 8
      %s193 = smul.addr %s192, 8
      %s194 = scalar_lea.vmem %s1, %s193
      // Predicated region
      $region25: #{alexnet_forward.14} parent=23 // pred_check
        %p195 = pneg %p56
      $region26: #{alexnet_forward.14} parent=23 // pred_check_branch
        %197 = sbr.rel (%p195) target = $region28
      $region27: #{alexnet_forward.14} parent=23 // pred_region
        _
      $region28: #{alexnet_forward.14} parent=23 // pred_fallthru
        _
    $region24: #{alexnet_forward.14} parent=5 // pred_fallthru
      _
    %p198 = scmp.le.s32.totalorder 2, %s7
    // Predicated region
    $region29: #{alexnet_forward.14} parent=5 // pred_check
      %p199 = pneg %p198
    $region30: #{alexnet_forward.14} parent=5 // pred_check_branch
      %201 = sbr.rel (%p199) target = $region32
    $region31: #{alexnet_forward.14} parent=5 // pred_region
      %s202 = ssub.s32 %s7, 2
      // Predicated region
      $region33: #{alexnet_forward.14} parent=31 // pred_check
        %p203 = pneg %p62
      $region34: #{alexnet_forward.14} parent=31 // pred_check_branch
        %205 = sbr.rel (%p203) target = $region36
      $region35: #{alexnet_forward.14} parent=31 // pred_region
        %p206 = scmp.lt.s32.totalorder %s13, 1
        %s207 = scalar_select %p206, %s13, 1
        %s208 = smul.addr %s207, 8
        %s209 = smul.addr %s208, 8
        %s210 = scalar_lea.vmem %s1, %s209
      $region36: #{alexnet_forward.14} parent=31 // pred_fallthru
        _
    $region32: #{alexnet_forward.14} parent=5 // pred_fallthru
      _
  $region6: #{alexnet_forward.14} parent=0 // loop_footer
    %s11 = sadd.s32 1, %s7
  $region7: #{alexnet_forward.14} parent=0 // loop_footer_branch
    %6 = sbr.rel target = $region3
  $region8: #{alexnet_forward.14} parent=0 // loop_exit
    _

// kernel: alexnet_forward.13
$region0: #{alexnet_forward.13}
  #allocation0 [shape = 'u32[]', space=smem, size = 0x4, offset = 0x4, fixed_abs, tag = 'smem constant byte address 0x4 - core index']
  #allocation1 [shape = 'u32[144,128]{1,0:T(1,128)}', space=vmem, size = 0x12000, scoped, tag = 'internal scratch']
  #allocation2 [shape = 'f32[512,128]{1,0:T(8,128)}', space=vmem, size = 0x40000, scoped, tag = 'scratch operand']
  %s0 = inlined_call_operand.vmem [shape: bf16[512,256], index: 0, kind: input, shape index: {}]
  %s1 = inlined_call_operand.vmem [shape: bf16[256,128], index: 1, kind: input, shape index: {}]
  %s2 = inlined_call_operand.vmem [shape: f32[1,128], index: 2, kind: input, shape index: {}]
  %s3 = inlined_call_operand.vmem [shape: f32[512,128], index: 3, kind: output, shape index: {}]
  %s4 = sld [smem:[#allocation0]]
  $region30: #{alexnet_forward.13} parent=0
    _
  %s6 = ssub.s32 1, %s4
  %s7 = scalar_select 0, %s6, %s4
  // Predicated region
  $region2: #{alexnet_forward.13} parent=0 // pred_check
    _
  $region3: #{alexnet_forward.13} parent=0 // pred_check_branch
    %9 = sbr.rel (0) target = $region5
  $region4: #{alexnet_forward.13} parent=0 // pred_region
    _
  $region5: #{alexnet_forward.13} parent=0 // pred_fallthru
    _
  // Predicated region
  $region6: #{alexnet_forward.13} parent=0 // pred_check
    _
  $region7: #{alexnet_forward.13} parent=0 // pred_check_branch
    %11 = sbr.rel (0) target = $region9
  $region8: #{alexnet_forward.13} parent=0 // pred_region
    _
  $region9: #{alexnet_forward.13} parent=0 // pred_fallthru
    _
  // Predicated region
  $region10: #{alexnet_forward.13} parent=0 // pred_check
    _
  $region11: #{alexnet_forward.13} parent=0 // pred_check_branch
    %13 = sbr.rel (0) target = $region13
  $region12: #{alexnet_forward.13} parent=0 // pred_region
    _
  $region13: #{alexnet_forward.13} parent=0 // pred_fallthru
    _
  %p15 = scmp.eq.s32.totalorder 0, 0
  // Predicated region
  $region14: #{alexnet_forward.13} parent=0 // pred_check
    %p16 = pneg %p15
  $region15: #{alexnet_forward.13} parent=0 // pred_check_branch
    %18 = sbr.rel (%p16) target = $region17
  $region16: #{alexnet_forward.13} parent=0 // pred_region
    %19 = vst [vmem:[#allocation2] sm:$0xff] 0.0
    %20 = vst [vmem:[#allocation2 + $0x8] sm:$0xff] 0.0
    %21 = vst [vmem:[#allocation2 + $0x10] sm:$0xff] 0.0
    %22 = vst [vmem:[#allocation2 + $0x18] sm:$0xff] 0.0
    %23 = vst [vmem:[#allocation2 + $0x20] sm:$0xff] 0.0
    %24 = vst [vmem:[#allocation2 + $0x28] sm:$0xff] 0.0
    %25 = vst [vmem:[#allocation2 + $0x30] sm:$0xff] 0.0
    %26 = vst [vmem:[#allocation2 + $0x38] sm:$0xff] 0.0
    %27 = vst [vmem:[#allocation2 + $0x40] sm:$0xff] 0.0
    %28 = vst [vmem:[#allocation2 + $0x48] sm:$0xff] 0.0
    %29 = vst [vmem:[#allocation2 + $0x50] sm:$0xff] 0.0
    %30 = vst [vmem:[#allocation2 + $0x58] sm:$0xff] 0.0
    %31 = vst [vmem:[#allocation2 + $0x60] sm:$0xff] 0.0
    %32 = vst [vmem:[#allocation2 + $0x68] sm:$0xff] 0.0
    %33 = vst [vmem:[#allocation2 + $0x70] sm:$0xff] 0.0
    %34 = vst [vmem:[#allocation2 + $0x78] sm:$0xff] 0.0
    %35 = vst [vmem:[#allocation2 + $0x80] sm:$0xff] 0.0
    %36 = vst [vmem:[#allocation2 + $0x88] sm:$0xff] 0.0
    %37 = vst [vmem:[#allocation2 + $0x90] sm:$0xff] 0.0
    %38 = vst [vmem:[#allocation2 + $0x98] sm:$0xff] 0.0
    %39 = vst [vmem:[#allocation2 + $0xa0] sm:$0xff] 0.0
    %40 = vst [vmem:[#allocation2 + $0xa8] sm:$0xff] 0.0
    %41 = vst [vmem:[#allocation2 + $0xb0] sm:$0xff] 0.0
    %42 = vst [vmem:[#allocation2 + $0xb8] sm:$0xff] 0.0
    %43 = vst [vmem:[#allocation2 + $0xc0] sm:$0xff] 0.0
    %44 = vst [vmem:[#allocation2 + $0xc8] sm:$0xff] 0.0
    %45 = vst [vmem:[#allocation2 + $0xd0] sm:$0xff] 0.0
    %46 = vst [vmem:[#allocation2 + $0xd8] sm:$0xff] 0.0
    %47 = vst [vmem:[#allocation2 + $0xe0] sm:$0xff] 0.0
    %48 = vst [vmem:[#allocation2 + $0xe8] sm:$0xff] 0.0
    %49 = vst [vmem:[#allocation2 + $0xf0] sm:$0xff] 0.0
    %50 = vst [vmem:[#allocation2 + $0xf8] sm:$0xff] 0.0
    %51 = vst [vmem:[#allocation2 + $0x100] sm:$0xff] 0.0
    %52 = vst [vmem:[#allocation2 + $0x108] sm:$0xff] 0.0
    %53 = vst [vmem:[#allocation2 + $0x110] sm:$0xff] 0.0
    %54 = vst [vmem:[#allocation2 + $0x118] sm:$0xff] 0.0
    %55 = vst [vmem:[#allocation2 + $0x120] sm:$0xff] 0.0
    %56 = vst [vmem:[#allocation2 + $0x128] sm:$0xff] 0.0
    %57 = vst [vmem:[#allocation2 + $0x130] sm:$0xff] 0.0
    %58 = vst [vmem:[#allocation2 + $0x138] sm:$0xff] 0.0
    %59 = vst [vmem:[#allocation2 + $0x140] sm:$0xff] 0.0
    %60 = vst [vmem:[#allocation2 + $0x148] sm:$0xff] 0.0
    %61 = vst [vmem:[#allocation2 + $0x150] sm:$0xff] 0.0
    %62 = vst [vmem:[#allocation2 + $0x158] sm:$0xff] 0.0
    %63 = vst [vmem:[#allocation2 + $0x160] sm:$0xff] 0.0
    %64 = vst [vmem:[#allocation2 + $0x168] sm:$0xff] 0.0
    %65 = vst [vmem:[#allocation2 + $0x170] sm:$0xff] 0.0
    %66 = vst [vmem:[#allocation2 + $0x178] sm:$0xff] 0.0
    %67 = vst [vmem:[#allocation2 + $0x180] sm:$0xff] 0.0
    %68 = vst [vmem:[#allocation2 + $0x188] sm:$0xff] 0.0
    %69 = vst [vmem:[#allocation2 + $0x190] sm:$0xff] 0.0
    %70 = vst [vmem:[#allocation2 + $0x198] sm:$0xff] 0.0
    %71 = vst [vmem:[#allocation2 + $0x1a0] sm:$0xff] 0.0
    %72 = vst [vmem:[#allocation2 + $0x1a8] sm:$0xff] 0.0
    %73 = vst [vmem:[#allocation2 + $0x1b0] sm:$0xff] 0.0
    %74 = vst [vmem:[#allocation2 + $0x1b8] sm:$0xff] 0.0
    %75 = vst [vmem:[#allocation2 + $0x1c0] sm:$0xff] 0.0
    %76 = vst [vmem:[#allocation2 + $0x1c8] sm:$0xff] 0.0
    %77 = vst [vmem:[#allocation2 + $0x1d0] sm:$0xff] 0.0
    %78 = vst [vmem:[#allocation2 + $0x1d8] sm:$0xff] 0.0
    %79 = vst [vmem:[#allocation2 + $0x1e0] sm:$0xff] 0.0
    %80 = vst [vmem:[#allocation2 + $0x1e8] sm:$0xff] 0.0
    %81 = vst [vmem:[#allocation2 + $0x1f0] sm:$0xff] 0.0
    %82 = vst [vmem:[#allocation2 + $0x1f8] sm:$0xff] 0.0
  $region17: #{alexnet_forward.13} parent=0 // pred_fallthru
    _
  %v83 = vld [vmem:[#allocation2] sm:$0xff]
  %v84 = vld [vmem:[#allocation2 + $0x8] sm:$0xff]
  %v85 = vld [vmem:[#allocation2 + $0x10] sm:$0xff]
  %v86 = vld [vmem:[#allocation2 + $0x18] sm:$0xff]
  %v87 = vld [vmem:[#allocation2 + $0x20] sm:$0xff]
  %v88 = vld [vmem:[#allocation2 + $0x28] sm:$0xff]
  %v89 = vld [vmem:[#allocation2 + $0x30] sm:$0xff]
  %v90 = vld [vmem:[#allocation2 + $0x38] sm:$0xff]
  %v91 = vld [vmem:[#allocation2 + $0x40] sm:$0xff]
  %v92 = vld [vmem:[#allocation2 + $0x48] sm:$0xff]
  %v93 = vld [vmem:[#allocation2 + $0x50] sm:$0xff]
  %v94 = vld [vmem:[#allocation2 + $0x58] sm:$0xff]
  %v95 = vld [vmem:[#allocation2 + $0x60] sm:$0xff]
  %v96 = vld [vmem:[#allocation2 + $0x68] sm:$0xff]
  %v97 = vld [vmem:[#allocation2 + $0x70] sm:$0xff]
  %v98 = vld [vmem:[#allocation2 + $0x78] sm:$0xff]
  %v99 = vld [vmem:[#allocation2 + $0x80] sm:$0xff]
  %v100 = vld [vmem:[#allocation2 + $0x88] sm:$0xff]
  %v101 = vld [vmem:[#allocation2 + $0x90] sm:$0xff]
  %v102 = vld [vmem:[#allocation2 + $0x98] sm:$0xff]
  %v103 = vld [vmem:[#allocation2 + $0xa0] sm:$0xff]
  %v104 = vld [vmem:[#allocation2 + $0xa8] sm:$0xff]
  %v105 = vld [vmem:[#allocation2 + $0xb0] sm:$0xff]
  %v106 = vld [vmem:[#allocation2 + $0xb8] sm:$0xff]
  %v107 = vld [vmem:[#allocation2 + $0xc0] sm:$0xff]
  %v108 = vld [vmem:[#allocation2 + $0xc8] sm:$0xff]
  %v109 = vld [vmem:[#allocation2 + $0xd0] sm:$0xff]
  %v110 = vld [vmem:[#allocation2 + $0xd8] sm:$0xff]
  %v111 = vld [vmem:[#allocation2 + $0xe0] sm:$0xff]
  %v112 = vld [vmem:[#allocation2 + $0xe8] sm:$0xff]
  %v113 = vld [vmem:[#allocation2 + $0xf0] sm:$0xff]
  %v114 = vld [vmem:[#allocation2 + $0xf8] sm:$0xff]
  %v115 = vld [vmem:[#allocation2 + $0x100] sm:$0xff]
  %v116 = vld [vmem:[#allocation2 + $0x108] sm:$0xff]
  %v117 = vld [vmem:[#allocation2 + $0x110] sm:$0xff]
  %v118 = vld [vmem:[#allocation2 + $0x118] sm:$0xff]
  %v119 = vld [vmem:[#allocation2 + $0x120] sm:$0xff]
  %v120 = vld [vmem:[#allocation2 + $0x128] sm:$0xff]
  %v121 = vld [vmem:[#allocation2 + $0x130] sm:$0xff]
  %v122 = vld [vmem:[#allocation2 + $0x138] sm:$0xff]
  %v123 = vld [vmem:[#allocation2 + $0x140] sm:$0xff]
  %v124 = vld [vmem:[#allocation2 + $0x148] sm:$0xff]
  %v125 = vld [vmem:[#allocation2 + $0x150] sm:$0xff]
  %v126 = vld [vmem:[#allocation2 + $0x158] sm:$0xff]
  %v127 = vld [vmem:[#allocation2 + $0x160] sm:$0xff]
  %v128 = vld [vmem:[#allocation2 + $0x168] sm:$0xff]
  %v129 = vld [vmem:[#allocation2 + $0x170] sm:$0xff]
  %v130 = vld [vmem:[#allocation2 + $0x178] sm:$0xff]
  %v131 = vld [vmem:[#allocation2 + $0x180] sm:$0xff]
  %v132 = vld [vmem:[#allocation2 + $0x188] sm:$0xff]
  %v133 = vld [vmem:[#allocation2 + $0x190] sm:$0xff]
  %v134 = vld [vmem:[#allocation2 + $0x198] sm:$0xff]
  %v135 = vld [vmem:[#allocation2 + $0x1a0] sm:$0xff]
  %v136 = vld [vmem:[#allocation2 + $0x1a8] sm:$0xff]
  %v137 = vld [vmem:[#allocation2 + $0x1b0] sm:$0xff]
  %v138 = vld [vmem:[#allocation2 + $0x1b8] sm:$0xff]
  %v139 = vld [vmem:[#allocation2 + $0x1c0] sm:$0xff]
  %v140 = vld [vmem:[#allocation2 + $0x1c8] sm:$0xff]
  %v141 = vld [vmem:[#allocation2 + $0x1d0] sm:$0xff]
  %v142 = vld [vmem:[#allocation2 + $0x1d8] sm:$0xff]
  %v143 = vld [vmem:[#allocation2 + $0x1e0] sm:$0xff]
  %v144 = vld [vmem:[#allocation2 + $0x1e8] sm:$0xff]
  %v145 = vld [vmem:[#allocation2 + $0x1f0] sm:$0xff]
  %v146 = vld [vmem:[#allocation2 + $0x1f8] sm:$0xff]
  %v147 = vld [vmem:[%s0] sm:$0xff]
  %v148 = vld [vmem:[%s0 + $0x8] sm:$0xff]
  %v149 = vld [vmem:[%s0 + $0x10] sm:$0xff]
  %v150 = vld [vmem:[%s0 + $0x18] sm:$0xff]
  %v151 = vld [vmem:[%s0 + $0x20] sm:$0xff]
  %v152 = vld [vmem:[%s0 + $0x28] sm:$0xff]
  %v153 = vld [vmem:[%s0 + $0x30] sm:$0xff]
  %v154 = vld [vmem:[%s0 + $0x38] sm:$0xff]
  %v155 = vld [vmem:[%s0 + $0x40] sm:$0xff]
  %v156 = vld [vmem:[%s0 + $0x48] sm:$0xff]
  %v157 = vld [vmem:[%s0 + $0x50] sm:$0xff]
  %v158 = vld [vmem:[%s0 + $0x58] sm:$0xff]
  %v159 = vld [vmem:[%s0 + $0x60] sm:$0xff]
  %v160 = vld [vmem:[%s0 + $0x68] sm:$0xff]
  %v161 = vld [vmem:[%s0 + $0x70] sm:$0xff]
  %v162 = vld [vmem:[%s0 + $0x78] sm:$0xff]
  %v163 = vld [vmem:[%s0 + $0x80] sm:$0xff]
  %v164 = vld [vmem:[%s0 + $0x88] sm:$0xff]
  %v165 = vld [vmem:[%s0 + $0x90] sm:$0xff]
  %v166 = vld [vmem:[%s0 + $0x98] sm:$0xff]
  %v167 = vld [vmem:[%s0 + $0xa0] sm:$0xff]
  %v168 = vld [vmem:[%s0 + $0xa8] sm:$0xff]
  %v169 = vld [vmem:[%s0 + $0xb0] sm:$0xff]
  %v170 = vld [vmem:[%s0 + $0xb8] sm:$0xff]
  %v171 = vld [vmem:[%s0 + $0xc0] sm:$0xff]
  %v172 = vld [vmem:[%s0 + $0xc8] sm:$0xff]
  %v173 = vld [vmem:[%s0 + $0xd0] sm:$0xff]
  %v174 = vld [vmem:[%s0 + $0xd8] sm:$0xff]
  %v175 = vld [vmem:[%s0 + $0xe0] sm:$0xff]
  %v176 = vld [vmem:[%s0 + $0xe8] sm:$0xff]
  %v177 = vld [vmem:[%s0 + $0xf0] sm:$0xff]
  %v178 = vld [vmem:[%s0 + $0xf8] sm:$0xff]
  %v179 = vld [vmem:[%s0 + $0x100] sm:$0xff]
  %v180 = vld [vmem:[%s0 + $0x108] sm:$0xff]
  %v181 = vld [vmem:[%s0 + $0x110] sm:$0xff]
  %v182 = vld [vmem:[%s0 + $0x118] sm:$0xff]
  %v183 = vld [vmem:[%s0 + $0x120] sm:$0xff]
  %v184 = vld [vmem:[%s0 + $0x128] sm:$0xff]
  %v185 = vld [vmem:[%s0 + $0x130] sm:$0xff]
  %v186 = vld [vmem:[%s0 + $0x138] sm:$0xff]
  %v187 = vld [vmem:[%s0 + $0x140] sm:$0xff]
  %v188 = vld [vmem:[%s0 + $0x148] sm:$0xff]
  %v189 = vld [vmem:[%s0 + $0x150] sm:$0xff]
  %v190 = vld [vmem:[%s0 + $0x158] sm:$0xff]
  %v191 = vld [vmem:[%s0 + $0x160] sm:$0xff]
  %v192 = vld [vmem:[%s0 + $0x168] sm:$0xff]
  %v193 = vld [vmem:[%s0 + $0x170] sm:$0xff]
  %v194 = vld [vmem:[%s0 + $0x178] sm:$0xff]
  %v195 = vld [vmem:[%s0 + $0x180] sm:$0xff]
  %v196 = vld [vmem:[%s0 + $0x188] sm:$0xff]
  %v197 = vld [vmem:[%s0 + $0x190] sm:$0xff]
  %v198 = vld [vmem:[%s0 + $0x198] sm:$0xff]
  %v199 = vld [vmem:[%s0 + $0x1a0] sm:$0xff]
  %v200 = vld [vmem:[%s0 + $0x1a8] sm:$0xff]
  %v201 = vld [vmem:[%s0 + $0x1b0] sm:$0xff]
  %v202 = vld [vmem:[%s0 + $0x1b8] sm:$0xff]
  %v203 = vld [vmem:[%s0 + $0x1c0] sm:$0xff]
  %v204 = vld [vmem:[%s0 + $0x1c8] sm:$0xff]
  %v205 = vld [vmem:[%s0 + $0x1d0] sm:$0xff]
  %v206 = vld [vmem:[%s0 + $0x1d8] sm:$0xff]
  %v207 = vld [vmem:[%s0 + $0x1e0] sm:$0xff]
  %v208 = vld [vmem:[%s0 + $0x1e8] sm:$0xff]
  %v209 = vld [vmem:[%s0 + $0x1f0] sm:$0xff]
  %v210 = vld [vmem:[%s0 + $0x1f8] sm:$0xff]
  %v211 = vld [vmem:[%s1] sm:$0xf]
  %v212 = vld [vmem:[%s1 + $0x4] sm:$0xf]
  %v213 = vld [vmem:[%s1 + $0x8] sm:$0xf]
  %v214 = vld [vmem:[%s1 + $0xc] sm:$0xf]
  %v215 = vld [vmem:[%s1 + $0x10] sm:$0xf]
  %v216 = vld [vmem:[%s1 + $0x14] sm:$0xf]
  %v217 = vld [vmem:[%s1 + $0x18] sm:$0xf]
  %v218 = vld [vmem:[%s1 + $0x1c] sm:$0xf]
  %v219 = vld [vmem:[%s1 + $0x20] sm:$0xf]
  %v220 = vld [vmem:[%s1 + $0x24] sm:$0xf]
  %v221 = vld [vmem:[%s1 + $0x28] sm:$0xf]
  %v222 = vld [vmem:[%s1 + $0x2c] sm:$0xf]
  %v223 = vld [vmem:[%s1 + $0x30] sm:$0xf]
  %v224 = vld [vmem:[%s1 + $0x34] sm:$0xf]
  %v225 = vld [vmem:[%s1 + $0x38] sm:$0xf]
  %v226 = vld [vmem:[%s1 + $0x3c] sm:$0xf]
  %v227 = vld [vmem:[%s1 + $0x40] sm:$0xf]
  %v228 = vld [vmem:[%s1 + $0x44] sm:$0xf]
  %v229 = vld [vmem:[%s1 + $0x48] sm:$0xf]
  %v230 = vld [vmem:[%s1 + $0x4c] sm:$0xf]
  %v231 = vld [vmem:[%s1 + $0x50] sm:$0xf]
  %v232 = vld [vmem:[%s1 + $0x54] sm:$0xf]
  %v233 = vld [vmem:[%s1 + $0x58] sm:$0xf]
  %v234 = vld [vmem:[%s1 + $0x5c] sm:$0xf]
  %v235 = vld [vmem:[%s1 + $0x60] sm:$0xf]
  %v236 = vld [vmem:[%s1 + $0x64] sm:$0xf]
  %v237 = vld [vmem:[%s1 + $0x68] sm:$0xf]
  %v238 = vld [vmem:[%s1 + $0x6c] sm:$0xf]
  %v239 = vld [vmem:[%s1 + $0x70] sm:$0xf]
  %v240 = vld [vmem:[%s1 + $0x74] sm:$0xf]
  %v241 = vld [vmem:[%s1 + $0x78] sm:$0xf]
  %v242 = vld [vmem:[%s1 + $0x7c] sm:$0xf]
  %v307 = vunpack.c.l.b16 %v147
  %v308 = vunpack.c.h.b16 %v147
  %v309 = vunpack.c.l.b16 %v148
  %v310 = vunpack.c.h.b16 %v148
  %v311 = vunpack.c.l.b16 %v149
  %v312 = vunpack.c.h.b16 %v149
  %v313 = vunpack.c.l.b16 %v150
  %v314 = vunpack.c.h.b16 %v150
  %v315 = vunpack.c.l.b16 %v151
  %v316 = vunpack.c.h.b16 %v151
  %v317 = vunpack.c.l.b16 %v152
  %v318 = vunpack.c.h.b16 %v152
  %v319 = vunpack.c.l.b16 %v153
  %v320 = vunpack.c.h.b16 %v153
  %v321 = vunpack.c.l.b16 %v154
  %v322 = vunpack.c.h.b16 %v154
  %v323 = vunpack.c.l.b16 %v155
  %v324 = vunpack.c.h.b16 %v155
  %v325 = vunpack.c.l.b16 %v156
  %v326 = vunpack.c.h.b16 %v156
  %v327 = vunpack.c.l.b16 %v157
  %v328 = vunpack.c.h.b16 %v157
  %v329 = vunpack.c.l.b16 %v158
  %v330 = vunpack.c.h.b16 %v158
  %v331 = vunpack.c.l.b16 %v159
  %v332 = vunpack.c.h.b16 %v159
  %v333 = vunpack.c.l.b16 %v160
  %v334 = vunpack.c.h.b16 %v160
  %v335 = vunpack.c.l.b16 %v161
  %v336 = vunpack.c.h.b16 %v161
  %v337 = vunpack.c.l.b16 %v162
  %v338 = vunpack.c.h.b16 %v162
  %v339 = vunpack.c.l.b16 %v163
  %v340 = vunpack.c.h.b16 %v163
  %v341 = vunpack.c.l.b16 %v164
  %v342 = vunpack.c.h.b16 %v164
  %v343 = vunpack.c.l.b16 %v165
  %v344 = vunpack.c.h.b16 %v165
  %v345 = vunpack.c.l.b16 %v166
  %v346 = vunpack.c.h.b16 %v166
  %v347 = vunpack.c.l.b16 %v167
  %v348 = vunpack.c.h.b16 %v167
  %v349 = vunpack.c.l.b16 %v168
  %v350 = vunpack.c.h.b16 %v168
  %v351 = vunpack.c.l.b16 %v169
  %v352 = vunpack.c.h.b16 %v169
  %v353 = vunpack.c.l.b16 %v170
  %v354 = vunpack.c.h.b16 %v170
  %v355 = vunpack.c.l.b16 %v171
  %v356 = vunpack.c.h.b16 %v171
  %v357 = vunpack.c.l.b16 %v172
  %v358 = vunpack.c.h.b16 %v172
  %v359 = vunpack.c.l.b16 %v173
  %v360 = vunpack.c.h.b16 %v173
  %v361 = vunpack.c.l.b16 %v174
  %v362 = vunpack.c.h.b16 %v174
  %v363 = vunpack.c.l.b16 %v175
  %v364 = vunpack.c.h.b16 %v175
  %v365 = vunpack.c.l.b16 %v176
  %v366 = vunpack.c.h.b16 %v176
  %v367 = vunpack.c.l.b16 %v177
  %v368 = vunpack.c.h.b16 %v177
  %v369 = vunpack.c.l.b16 %v178
  %v370 = vunpack.c.h.b16 %v178
  %v371 = vunpack.c.l.b16 %v179
  %v372 = vunpack.c.h.b16 %v179
  %v373 = vunpack.c.l.b16 %v180
  %v374 = vunpack.c.h.b16 %v180
  %v375 = vunpack.c.l.b16 %v181
  %v376 = vunpack.c.h.b16 %v181
  %v377 = vunpack.c.l.b16 %v182
  %v378 = vunpack.c.h.b16 %v182
  %v379 = vunpack.c.l.b16 %v183
  %v380 = vunpack.c.h.b16 %v183
  %v381 = vunpack.c.l.b16 %v184
  %v382 = vunpack.c.h.b16 %v184
  %v383 = vunpack.c.l.b16 %v185
  %v384 = vunpack.c.h.b16 %v185
  %v385 = vunpack.c.l.b16 %v186
  %v386 = vunpack.c.h.b16 %v186
  %v387 = vunpack.c.l.b16 %v187
  %v388 = vunpack.c.h.b16 %v187
  %v389 = vunpack.c.l.b16 %v188
  %v390 = vunpack.c.h.b16 %v188
  %v391 = vunpack.c.l.b16 %v189
  %v392 = vunpack.c.h.b16 %v189
  %v393 = vunpack.c.l.b16 %v190
  %v394 = vunpack.c.h.b16 %v190
  %v395 = vunpack.c.l.b16 %v191
  %v396 = vunpack.c.h.b16 %v191
  %v397 = vunpack.c.l.b16 %v192
  %v398 = vunpack.c.h.b16 %v192
  %v399 = vunpack.c.l.b16 %v193
  %v400 = vunpack.c.h.b16 %v193
  %v401 = vunpack.c.l.b16 %v194
  %v402 = vunpack.c.h.b16 %v194
  %v403 = vunpack.c.l.b16 %v195
  %v404 = vunpack.c.h.b16 %v195
  %v405 = vunpack.c.l.b16 %v196
  %v406 = vunpack.c.h.b16 %v196
  %v407 = vunpack.c.l.b16 %v197
  %v408 = vunpack.c.h.b16 %v197
  %v409 = vunpack.c.l.b16 %v198
  %v410 = vunpack.c.h.b16 %v198
  %v411 = vunpack.c.l.b16 %v199
  %v412 = vunpack.c.h.b16 %v199
  %v413 = vunpack.c.l.b16 %v200
  %v414 = vunpack.c.h.b16 %v200
  %v415 = vunpack.c.l.b16 %v201
  %v416 = vunpack.c.h.b16 %v201
  %v417 = vunpack.c.l.b16 %v202
  %v418 = vunpack.c.h.b16 %v202
  %v419 = vunpack.c.l.b16 %v203
  %v420 = vunpack.c.h.b16 %v203
  %v421 = vunpack.c.l.b16 %v204
  %v422 = vunpack.c.h.b16 %v204
  %v423 = vunpack.c.l.b16 %v205
  %v424 = vunpack.c.h.b16 %v205
  %v425 = vunpack.c.l.b16 %v206
  %v426 = vunpack.c.h.b16 %v206
  %v427 = vunpack.c.l.b16 %v207
  %v428 = vunpack.c.h.b16 %v207
  %v429 = vunpack.c.l.b16 %v208
  %v430 = vunpack.c.h.b16 %v208
  %v431 = vunpack.c.l.b16 %v209
  %v432 = vunpack.c.h.b16 %v209
  %v433 = vunpack.c.l.b16 %v210
  %v434 = vunpack.c.h.b16 %v210
  %v435 = vpack.c.b16 %v309, %v307
  %v436 = vpack.c.b16 %v310, %v308
  %v437 = vpack.c.b16 %v313, %v311
  %v438 = vpack.c.b16 %v314, %v312
  %v439 = vpack.c.b16 %v317, %v315
  %v440 = vpack.c.b16 %v318, %v316
  %v441 = vpack.c.b16 %v321, %v319
  %v442 = vpack.c.b16 %v322, %v320
  %v443 = vpack.c.b16 %v325, %v323
  %v444 = vpack.c.b16 %v326, %v324
  %v445 = vpack.c.b16 %v329, %v327
  %v446 = vpack.c.b16 %v330, %v328
  %v447 = vpack.c.b16 %v333, %v331
  %v448 = vpack.c.b16 %v334, %v332
  %v449 = vpack.c.b16 %v337, %v335
  %v450 = vpack.c.b16 %v338, %v336
  %v451 = vpack.c.b16 %v341, %v339
  %v452 = vpack.c.b16 %v342, %v340
  %v453 = vpack.c.b16 %v345, %v343
  %v454 = vpack.c.b16 %v346, %v344
  %v455 = vpack.c.b16 %v349, %v347
  %v456 = vpack.c.b16 %v350, %v348
  %v457 = vpack.c.b16 %v353, %v351
  %v458 = vpack.c.b16 %v354, %v352
  %v459 = vpack.c.b16 %v357, %v355
  %v460 = vpack.c.b16 %v358, %v356
  %v461 = vpack.c.b16 %v361, %v359
  %v462 = vpack.c.b16 %v362, %v360
  %v463 = vpack.c.b16 %v365, %v363
  %v464 = vpack.c.b16 %v366, %v364
  %v465 = vpack.c.b16 %v369, %v367
  %v466 = vpack.c.b16 %v370, %v368
  %v467 = vpack.c.b16 %v373, %v371
  %v468 = vpack.c.b16 %v374, %v372
  %v469 = vpack.c.b16 %v377, %v375
  %v470 = vpack.c.b16 %v378, %v376
  %v471 = vpack.c.b16 %v381, %v379
  %v472 = vpack.c.b16 %v382, %v380
  %v473 = vpack.c.b16 %v385, %v383
  %v474 = vpack.c.b16 %v386, %v384
  %v475 = vpack.c.b16 %v389, %v387
  %v476 = vpack.c.b16 %v390, %v388
  %v477 = vpack.c.b16 %v393, %v391
  %v478 = vpack.c.b16 %v394, %v392
  %v479 = vpack.c.b16 %v397, %v395
  %v480 = vpack.c.b16 %v398, %v396
  %v481 = vpack.c.b16 %v401, %v399
  %v482 = vpack.c.b16 %v402, %v400
  %v483 = vpack.c.b16 %v405, %v403
  %v484 = vpack.c.b16 %v406, %v404
  %v485 = vpack.c.b16 %v409, %v407
  %v486 = vpack.c.b16 %v410, %v408
  %v487 = vpack.c.b16 %v413, %v411
  %v488 = vpack.c.b16 %v414, %v412
  %v489 = vpack.c.b16 %v417, %v415
  %v490 = vpack.c.b16 %v418, %v416
  %v491 = vpack.c.b16 %v421, %v419
  %v492 = vpack.c.b16 %v422, %v420
  %v493 = vpack.c.b16 %v425, %v423
  %v494 = vpack.c.b16 %v426, %v424
  %v495 = vpack.c.b16 %v429, %v427
  %v496 = vpack.c.b16 %v430, %v428
  %v497 = vpack.c.b16 %v433, %v431
  %v498 = vpack.c.b16 %v434, %v432
  %v595 = vunpack.c.l.b16 %v211
  %v596 = vunpack.c.l.b16 %v212
  %v597 = vunpack.c.l.b16 %v213
  %v598 = vunpack.c.l.b16 %v214
  %v599 = vunpack.c.l.b16 %v215
  %v600 = vunpack.c.l.b16 %v216
  %v601 = vunpack.c.l.b16 %v217
  %v602 = vunpack.c.l.b16 %v218
  %v603 = vunpack.c.l.b16 %v219
  %v604 = vunpack.c.l.b16 %v220
  %v605 = vunpack.c.l.b16 %v221
  %v606 = vunpack.c.l.b16 %v222
  %v607 = vunpack.c.l.b16 %v223
  %v608 = vunpack.c.l.b16 %v224
  %v609 = vunpack.c.l.b16 %v225
  %v610 = vunpack.c.l.b16 %v226
  %v611 = vunpack.c.l.b16 %v227
  %v612 = vunpack.c.l.b16 %v228
  %v613 = vunpack.c.l.b16 %v229
  %v614 = vunpack.c.l.b16 %v230
  %v615 = vunpack.c.l.b16 %v231
  %v616 = vunpack.c.l.b16 %v232
  %v617 = vunpack.c.l.b16 %v233
  %v618 = vunpack.c.l.b16 %v234
  %v619 = vunpack.c.l.b16 %v235
  %v620 = vunpack.c.l.b16 %v236
  %v621 = vunpack.c.l.b16 %v237
  %v622 = vunpack.c.l.b16 %v238
  %v623 = vunpack.c.l.b16 %v239
  %v624 = vunpack.c.l.b16 %v240
  %v625 = vunpack.c.l.b16 %v241
  %v626 = vunpack.c.l.b16 %v242
  %v627 = vpack.c.b16 %v596, %v595
  %v628 = vpack.c.b16 %v598, %v597
  %v629 = vpack.c.b16 %v600, %v599
  %v630 = vpack.c.b16 %v602, %v601
  %v631 = vpack.c.b16 %v604, %v603
  %v632 = vpack.c.b16 %v606, %v605
  %v633 = vpack.c.b16 %v608, %v607
  %v634 = vpack.c.b16 %v610, %v609
  %v635 = vpack.c.b16 %v612, %v611
  %v636 = vpack.c.b16 %v614, %v613
  %v637 = vpack.c.b16 %v616, %v615
  %v638 = vpack.c.b16 %v618, %v617
  %v639 = vpack.c.b16 %v620, %v619
  %v640 = vpack.c.b16 %v622, %v621
  %v641 = vpack.c.b16 %v624, %v623
  %v642 = vpack.c.b16 %v626, %v625
  %659 = vmatprep.subr.bf16.mxu0 0
  %660 = vmatpush1.bf16.msra.mxu0 %v634
  %661 = vmatprep.subr.bf16.mxu0 0
  %662 = vmatpush1.bf16.msra.mxu0 %v633
  %663 = vmatprep.subr.bf16.mxu0 0
  %664 = vmatpush1.bf16.msra.mxu0 %v632
  %665 = vmatprep.subr.bf16.mxu0 0
  %666 = vmatpush1.bf16.msra.mxu0 %v631
  %667 = vmatprep.subr.bf16.mxu0 0
  %668 = vmatpush1.bf16.msra.mxu0 %v630
  %669 = vmatprep.subr.bf16.mxu0 0
  %670 = vmatpush1.bf16.msra.mxu0 %v629
  %671 = vmatprep.subr.bf16.mxu0 0
  %672 = vmatpush1.bf16.msra.mxu0 %v628
  %673 = vmatprep.subr.bf16.mxu0 0
  %674 = vmatpush1.bf16.msra.mxu0 %v627
  %675 = vmatprep.subr.bf16.mxu0 0
  %676 = vmatpush2.bf16.msra.mxu0 %v642
  %677 = vmatprep.subr.bf16.mxu0 0
  %678 = vmatpush2.bf16.msra.mxu0 %v641
  %679 = vmatprep.subr.bf16.mxu0 0
  %680 = vmatpush2.bf16.msra.mxu0 %v640
  %681 = vmatprep.subr.bf16.mxu0 0
  %682 = vmatpush2.bf16.msra.mxu0 %v639
  %683 = vmatprep.subr.bf16.mxu0 0
  %684 = vmatpush2.bf16.msra.mxu0 %v638
  %685 = vmatprep.subr.bf16.mxu0 0
  %686 = vmatpush2.bf16.msra.mxu0 %v637
  %687 = vmatprep.subr.bf16.mxu0 0
  %688 = vmatpush2.bf16.msra.mxu0 %v636
  %689 = vmatprep.subr.bf16.mxu0 0
  %690 = vmatpush2.bf16.msra.mxu0 %v635
  %691 = vmatprep.mubr.bf16.mxu0 %v436
  %692 = vmatmul.mubr.bf16.gmra.mxu0 %v435
  %v693 = vpop.f32.mrf.mxu0
  %v694 = vadd.f32 0.0, %v693
  %v695 = vpop.f32.mrf.mxu0
  %v696 = vpop.f32.mrf.mxu0
  %v697 = vadd.f32 0.0, %v696
  %v698 = vpop.f32.mrf.mxu0
  %699 = vmatprep.mubr.bf16.mxu0 %v438
  %700 = vmatmul.mubr.bf16.gmra.mxu0 %v437
  %v701 = vpop.f32.mrf.mxu0
  %v702 = vadd.f32 0.0, %v701
  %v703 = vpop.f32.mrf.mxu0
  %v704 = vpop.f32.mrf.mxu0
  %v705 = vadd.f32 0.0, %v704
  %v706 = vpop.f32.mrf.mxu0
  %707 = vmatprep.mubr.bf16.mxu0 %v440
  %708 = vmatmul.mubr.bf16.gmra.mxu0 %v439
  %v709 = vpop.f32.mrf.mxu0
  %v710 = vadd.f32 0.0, %v709
  %v711 = vpop.f32.mrf.mxu0
  %v712 = vpop.f32.mrf.mxu0
  %v713 = vadd.f32 0.0, %v712
  %v714 = vpop.f32.mrf.mxu0
  %715 = vmatprep.mubr.bf16.mxu0 %v442
  %716 = vmatmul.mubr.bf16.gmra.mxu0 %v441
  %v717 = vpop.f32.mrf.mxu0
  %v718 = vadd.f32 0.0, %v717
  %v719 = vpop.f32.mrf.mxu0
  %v720 = vpop.f32.mrf.mxu0
  %v721 = vadd.f32 0.0, %v720
  %v722 = vpop.f32.mrf.mxu0
  %723 = vmatprep.mubr.bf16.mxu0 %v444
  %724 = vmatmul.mubr.bf16.gmra.mxu0 %v443
  %v725 = vpop.f32.mrf.mxu0
  %v726 = vadd.f32 0.0, %v725
  %v727 = vpop.f32.mrf.mxu0
  %v728 = vpop.f32.mrf.mxu0
  %v729 = vadd.f32 0.0, %v728
  %v730 = vpop.f32.mrf.mxu0
  %731 = vmatprep.mubr.bf16.mxu0 %v446
  %732 = vmatmul.mubr.bf16.gmra.mxu0 %v445
  %v733 = vpop.f32.mrf.mxu0
  %v734 = vadd.f32 0.0, %v733
  %v735 = vpop.f32.mrf.mxu0
  %v736 = vpop.f32.mrf.mxu0
  %v737 = vadd.f32 0.0, %v736
  %v738 = vpop.f32.mrf.mxu0
  %739 = vmatprep.mubr.bf16.mxu0 %v448
  %740 = vmatmul.mubr.bf16.gmra.mxu0 %v447
  %v741 = vpop.f32.mrf.mxu0
  %v742 = vadd.f32 0.0, %v741
  %v743 = vpop.f32.mrf.mxu0
  %v744 = vpop.f32.mrf.mxu0
  %v745 = vadd.f32 0.0, %v744
  %v746 = vpop.f32.mrf.mxu0
  %747 = vmatprep.mubr.bf16.mxu0 %v450
  %748 = vmatmul.mubr.bf16.gmra.mxu0 %v449
  %v749 = vpop.f32.mrf.mxu0
  %v750 = vadd.f32 0.0, %v749
  %v751 = vpop.f32.mrf.mxu0
  %v752 = vpop.f32.mrf.mxu0
  %v753 = vadd.f32 0.0, %v752
  %v754 = vpop.f32.mrf.mxu0
  %755 = vmatprep.mubr.bf16.mxu0 %v452
  %756 = vmatmul.mubr.bf16.gmra.mxu0 %v451
  %v757 = vpop.f32.mrf.mxu0
  %v758 = vadd.f32 0.0, %v757
  %v759 = vpop.f32.mrf.mxu0
  %v760 = vpop.f32.mrf.mxu0
  %v761 = vadd.f32 0.0, %v760
  %v762 = vpop.f32.mrf.mxu0
  %763 = vmatprep.mubr.bf16.mxu0 %v454
  %764 = vmatmul.mubr.bf16.gmra.mxu0 %v453
  %v765 = vpop.f32.mrf.mxu0
  %v766 = vadd.f32 0.0, %v765
  %v767 = vpop.f32.mrf.mxu0
  %v768 = vpop.f32.mrf.mxu0
  %v769 = vadd.f32 0.0, %v768
  %v770 = vpop.f32.mrf.mxu0
  %771 = vmatprep.mubr.bf16.mxu0 %v456
  %772 = vmatmul.mubr.bf16.gmra.mxu0 %v455
  %v773 = vpop.f32.mrf.mxu0
  %v774 = vadd.f32 0.0, %v773
  %v775 = vpop.f32.mrf.mxu0
  %v776 = vpop.f32.mrf.mxu0
  %v777 = vadd.f32 0.0, %v776
  %v778 = vpop.f32.mrf.mxu0
  %779 = vmatprep.mubr.bf16.mxu0 %v458
  %780 = vmatmul.mubr.bf16.gmra.mxu0 %v457
  %v781 = vpop.f32.mrf.mxu0
  %v782 = vadd.f32 0.0, %v781
  %v783 = vpop.f32.mrf.mxu0
  %v784 = vpop.f32.mrf.mxu0
  %v785 = vadd.f32 0.0, %v784
  %v786 = vpop.f32.mrf.mxu0
  %787 = vmatprep.mubr.bf16.mxu0 %v460
  %788 = vmatmul.mubr.bf16.gmra.mxu0 %v459
  %v789 = vpop.f32.mrf.mxu0
  %v790 = vadd.f32 0.0, %v789
  %v791 = vpop.f32.mrf.mxu0
  %v792 = vpop.f32.mrf.mxu0
  %v793 = vadd.f32 0.0, %v792
  %v794 = vpop.f32.mrf.mxu0
  %795 = vmatprep.mubr.bf16.mxu0 %v462
  %796 = vmatmul.mubr.bf16.gmra.mxu0 %v461
  %v797 = vpop.f32.mrf.mxu0
  %v798 = vadd.f32 0.0, %v797
  %v799 = vpop.f32.mrf.mxu0
  %v800 = vpop.f32.mrf.mxu0
  %v801 = vadd.f32 0.0, %v800
  %v802 = vpop.f32.mrf.mxu0
  %803 = vmatprep.mubr.bf16.mxu0 %v464
  %804 = vmatmul.mubr.bf16.gmra.mxu0 %v463
  %v805 = vpop.f32.mrf.mxu0
  %v806 = vadd.f32 0.0, %v805
  %v807 = vpop.f32.mrf.mxu0
  %v808 = vpop.f32.mrf.mxu0
  %v809 = vadd.f32 0.0, %v808
  %v810 = vpop.f32.mrf.mxu0
  %811 = vmatprep.mubr.bf16.mxu0 %v466
  %812 = vmatmul.mubr.bf16.gmra.mxu0 %v465
  %v813 = vpop.f32.mrf.mxu0
  %v814 = vadd.f32 0.0, %v813
  %v815 = vpop.f32.mrf.mxu0
  %v816 = vpop.f32.mrf.mxu0
  %v817 = vadd.f32 0.0, %v816
  %v818 = vpop.f32.mrf.mxu0
  %819 = vmatprep.mubr.bf16.mxu0 %v468
  %820 = vmatmul.mubr.bf16.gmra.mxu0 %v467
  %v821 = vpop.f32.mrf.mxu0
  %v822 = vadd.f32 0.0, %v821
  %v823 = vpop.f32.mrf.mxu0
  %v824 = vpop.f32.mrf.mxu0
  %v825 = vadd.f32 0.0, %v824
  %v826 = vpop.f32.mrf.mxu0
  %827 = vmatprep.mubr.bf16.mxu0 %v470
  %828 = vmatmul.mubr.bf16.gmra.mxu0 %v469
  %v829 = vpop.f32.mrf.mxu0
  %v830 = vadd.f32 0.0, %v829
  %v831 = vpop.f32.mrf.mxu0
  %v832 = vpop.f32.mrf.mxu0
  %v833 = vadd.f32 0.0, %v832
  %v834 = vpop.f32.mrf.mxu0
  %835 = vmatprep.mubr.bf16.mxu0 %v472
  %836 = vmatmul.mubr.bf16.gmra.mxu0 %v471
  %v837 = vpop.f32.mrf.mxu0
  %v838 = vadd.f32 0.0, %v837
  %v839 = vpop.f32.mrf.mxu0
  %v840 = vpop.f32.mrf.mxu0
  %v841 = vadd.f32 0.0, %v840
  %v842 = vpop.f32.mrf.mxu0
  %843 = vmatprep.mubr.bf16.mxu0 %v474
  %844 = vmatmul.mubr.bf16.gmra.mxu0 %v473
  %v845 = vpop.f32.mrf.mxu0
  %v846 = vadd.f32 0.0, %v845
  %v847 = vpop.f32.mrf.mxu0
  %v848 = vpop.f32.mrf.mxu0
  %v849 = vadd.f32 0.0, %v848
  %v850 = vpop.f32.mrf.mxu0
  %851 = vmatprep.mubr.bf16.mxu0 %v476
  %852 = vmatmul.mubr.bf16.gmra.mxu0 %v475
  %v853 = vpop.f32.mrf.mxu0
  %v854 = vadd.f32 0.0, %v853
  %v855 = vpop.f32.mrf.mxu0
  %v856 = vpop.f32.mrf.mxu0
  %v857 = vadd.f32 0.0, %v856
  %v858 = vpop.f32.mrf.mxu0
  %859 = vmatprep.mubr.bf16.mxu0 %v478
  %860 = vmatmul.mubr.bf16.gmra.mxu0 %v477
  %v861 = vpop.f32.mrf.mxu0
  %v862 = vadd.f32 0.0, %v861
  %v863 = vpop.f32.mrf.mxu0
  %v864 = vpop.f32.mrf.mxu0
  %v865 = vadd.f32 0.0, %v864
  %v866 = vpop.f32.mrf.mxu0
  %867 = vmatprep.mubr.bf16.mxu0 %v480
  %868 = vmatmul.mubr.bf16.gmra.mxu0 %v479
  %v869 = vpop.f32.mrf.mxu0
  %v870 = vadd.f32 0.0, %v869
  %v871 = vpop.f32.mrf.mxu0
  %v872 = vpop.f32.mrf.mxu0
  %v873 = vadd.f32 0.0, %v872
  %v874 = vpop.f32.mrf.mxu0
  %875 = vmatprep.mubr.bf16.mxu0 %v482
  %876 = vmatmul.mubr.bf16.gmra.mxu0 %v481
  %v877 = vpop.f32.mrf.mxu0
  %v878 = vadd.f32 0.0, %v877
  %v879 = vpop.f32.mrf.mxu0
  %v880 = vpop.f32.mrf.mxu0
  %v881 = vadd.f32 0.0, %v880
  %v882 = vpop.f32.mrf.mxu0
  %883 = vmatprep.mubr.bf16.mxu0 %v484
  %884 = vmatmul.mubr.bf16.gmra.mxu0 %v483
  %v885 = vpop.f32.mrf.mxu0
  %v886 = vadd.f32 0.0, %v885
  %v887 = vpop.f32.mrf.mxu0
  %v888 = vpop.f32.mrf.mxu0
  %v889 = vadd.f32 0.0, %v888
  %v890 = vpop.f32.mrf.mxu0
  %891 = vmatprep.mubr.bf16.mxu0 %v486
  %892 = vmatmul.mubr.bf16.gmra.mxu0 %v485
  %v893 = vpop.f32.mrf.mxu0
  %v894 = vadd.f32 0.0, %v893
  %v895 = vpop.f32.mrf.mxu0
  %v896 = vpop.f32.mrf.mxu0
  %v897 = vadd.f32 0.0, %v896
  %v898 = vpop.f32.mrf.mxu0
  %899 = vmatprep.mubr.bf16.mxu0 %v488
  %900 = vmatmul.mubr.bf16.gmra.mxu0 %v487
  %v901 = vpop.f32.mrf.mxu0
  %v902 = vadd.f32 0.0, %v901
  %v903 = vpop.f32.mrf.mxu0
  %v904 = vpop.f32.mrf.mxu0
  %v905 = vadd.f32 0.0, %v904
  %v906 = vpop.f32.mrf.mxu0
  %907 = vmatprep.mubr.bf16.mxu0 %v490
  %908 = vmatmul.mubr.bf16.gmra.mxu0 %v489
  %v909 = vpop.f32.mrf.mxu0
  %v910 = vadd.f32 0.0, %v909
  %v911 = vpop.f32.mrf.mxu0
  %v912 = vpop.f32.mrf.mxu0
  %v913 = vadd.f32 0.0, %v912
  %v914 = vpop.f32.mrf.mxu0
  %915 = vmatprep.mubr.bf16.mxu0 %v492
  %916 = vmatmul.mubr.bf16.gmra.mxu0 %v491
  %v917 = vpop.f32.mrf.mxu0
  %v918 = vadd.f32 0.0, %v917
  %v919 = vpop.f32.mrf.mxu0
  %v920 = vpop.f32.mrf.mxu0
  %v921 = vadd.f32 0.0, %v920
  %v922 = vpop.f32.mrf.mxu0
  %923 = vmatprep.mubr.bf16.mxu0 %v494
  %924 = vmatmul.mubr.bf16.gmra.mxu0 %v493
  %v925 = vpop.f32.mrf.mxu0
  %v926 = vadd.f32 0.0, %v925
  %v927 = vpop.f32.mrf.mxu0
  %v928 = vpop.f32.mrf.mxu0
  %v929 = vadd.f32 0.0, %v928
  %v930 = vpop.f32.mrf.mxu0
  %931 = vmatprep.mubr.bf16.mxu0 %v496
  %932 = vmatmul.mubr.bf16.gmra.mxu0 %v495
  %v933 = vpop.f32.mrf.mxu0
  %v934 = vadd.f32 0.0, %v933
  %v935 = vpop.f32.mrf.mxu0
  %v936 = vpop.f32.mrf.mxu0
  %v937 = vadd.f32 0.0, %v936
  %v938 = vpop.f32.mrf.mxu0
  %939 = vmatprep.mubr.bf16.mxu0 %v498
  %940 = vmatmul.mubr.bf16.gmra.mxu0 %v497
  %v941 = vpop.f32.mrf.mxu0
  %v942 = vadd.f32 0.0, %v941
  %v943 = vpop.f32.mrf.mxu0
  %v944 = vpop.f32.mrf.mxu0
  %v945 = vadd.f32 0.0, %v944
  %v946 = vpop.f32.mrf.mxu0
  %947 = vdwg.mxu0
  %v948 = vadd.f32 %v83, %v694
  %v949 = vadd.f32 %v84, %v697
  %v950 = vadd.f32 %v85, %v702
  %v951 = vadd.f32 %v86, %v705
  %v952 = vadd.f32 %v87, %v710
  %v953 = vadd.f32 %v88, %v713
  %v954 = vadd.f32 %v89, %v718
  %v955 = vadd.f32 %v90, %v721
  %v956 = vadd.f32 %v91, %v726
  %v957 = vadd.f32 %v92, %v729
  %v958 = vadd.f32 %v93, %v734
  %v959 = vadd.f32 %v94, %v737
  %v960 = vadd.f32 %v95, %v742
  %v961 = vadd.f32 %v96, %v745
  %v962 = vadd.f32 %v97, %v750
  %v963 = vadd.f32 %v98, %v753
  %v964 = vadd.f32 %v99, %v758
  %v965 = vadd.f32 %v100, %v761
  %v966 = vadd.f32 %v101, %v766
  %v967 = vadd.f32 %v102, %v769
  %v968 = vadd.f32 %v103, %v774
  %v969 = vadd.f32 %v104, %v777
  %v970 = vadd.f32 %v105, %v782
  %v971 = vadd.f32 %v106, %v785
  %v972 = vadd.f32 %v107, %v790
  %v973 = vadd.f32 %v108, %v793
  %v974 = vadd.f32 %v109, %v798
  %v975 = vadd.f32 %v110, %v801
  %v976 = vadd.f32 %v111, %v806
  %v977 = vadd.f32 %v112, %v809
  %v978 = vadd.f32 %v113, %v814
  %v979 = vadd.f32 %v114, %v817
  %v980 = vadd.f32 %v115, %v822
  %v981 = vadd.f32 %v116, %v825
  %v982 = vadd.f32 %v117, %v830
  %v983 = vadd.f32 %v118, %v833
  %v984 = vadd.f32 %v119, %v838
  %v985 = vadd.f32 %v120, %v841
  %v986 = vadd.f32 %v121, %v846
  %v987 = vadd.f32 %v122, %v849
  %v988 = vadd.f32 %v123, %v854
  %v989 = vadd.f32 %v124, %v857
  %v990 = vadd.f32 %v125, %v862
  %v991 = vadd.f32 %v126, %v865
  %v992 = vadd.f32 %v127, %v870
  %v993 = vadd.f32 %v128, %v873
  %v994 = vadd.f32 %v129, %v878
  %v995 = vadd.f32 %v130, %v881
  %v996 = vadd.f32 %v131, %v886
  %v997 = vadd.f32 %v132, %v889
  %v998 = vadd.f32 %v133, %v894
  %v999 = vadd.f32 %v134, %v897
  %v1000 = vadd.f32 %v135, %v902
  %v1001 = vadd.f32 %v136, %v905
  %v1002 = vadd.f32 %v137, %v910
  %v1003 = vadd.f32 %v138, %v913
  %v1004 = vadd.f32 %v139, %v918
  %v1005 = vadd.f32 %v140, %v921
  %v1006 = vadd.f32 %v141, %v926
  %v1007 = vadd.f32 %v142, %v929
  %v1008 = vadd.f32 %v143, %v934
  %v1009 = vadd.f32 %v144, %v937
  %v1010 = vadd.f32 %v145, %v942
  %v1011 = vadd.f32 %v146, %v945
  %1012 = vst [vmem:[#allocation2] sm:$0xff] %v948
  %1013 = vst [vmem:[#allocation2 + $0x8] sm:$0xff] %v949
  %1014 = vst [vmem:[#allocation2 + $0x10] sm:$0xff] %v950
  %1015 = vst [vmem:[#allocation2 + $0x18] sm:$0xff] %v951
  %1016 = vst [vmem:[#allocation2 + $0x20] sm:$0xff] %v952
  %1017 = vst [vmem:[#allocation2 + $0x28] sm:$0xff] %v953
  %1018 = vst [vmem:[#allocation2 + $0x30] sm:$0xff] %v954
  %1019 = vst [vmem:[#allocation2 + $0x38] sm:$0xff] %v955
  %1020 = vst [vmem:[#allocation2 + $0x40] sm:$0xff] %v956
  %1021 = vst [vmem:[#allocation2 + $0x48] sm:$0xff] %v957
  %1022 = vst [vmem:[#allocation2 + $0x50] sm:$0xff] %v958
  %1023 = vst [vmem:[#allocation2 + $0x58] sm:$0xff] %v959
  %1024 = vst [vmem:[#allocation2 + $0x60] sm:$0xff] %v960
  %1025 = vst [vmem:[#allocation2 + $0x68] sm:$0xff] %v961
  %1026 = vst [vmem:[#allocation2 + $0x70] sm:$0xff] %v962
  %1027 = vst [vmem:[#allocation2 + $0x78] sm:$0xff] %v963
  %1028 = vst [vmem:[#allocation2 + $0x80] sm:$0xff] %v964
  %1029 = vst [vmem:[#allocation2 + $0x88] sm:$0xff] %v965
  %1030 = vst [vmem:[#allocation2 + $0x90] sm:$0xff] %v966
  %1031 = vst [vmem:[#allocation2 + $0x98] sm:$0xff] %v967
  %1032 = vst [vmem:[#allocation2 + $0xa0] sm:$0xff] %v968
  %1033 = vst [vmem:[#allocation2 + $0xa8] sm:$0xff] %v969
  %1034 = vst [vmem:[#allocation2 + $0xb0] sm:$0xff] %v970
  %1035 = vst [vmem:[#allocation2 + $0xb8] sm:$0xff] %v971
  %1036 = vst [vmem:[#allocation2 + $0xc0] sm:$0xff] %v972
  %1037 = vst [vmem:[#allocation2 + $0xc8] sm:$0xff] %v973
  %1038 = vst [vmem:[#allocation2 + $0xd0] sm:$0xff] %v974
  %1039 = vst [vmem:[#allocation2 + $0xd8] sm:$0xff] %v975
  %1040 = vst [vmem:[#allocation2 + $0xe0] sm:$0xff] %v976
  %1041 = vst [vmem:[#allocation2 + $0xe8] sm:$0xff] %v977
  %1042 = vst [vmem:[#allocation2 + $0xf0] sm:$0xff] %v978
  %1043 = vst [vmem:[#allocation2 + $0xf8] sm:$0xff] %v979
  %1044 = vst [vmem:[#allocation2 + $0x100] sm:$0xff] %v980
  %1045 = vst [vmem:[#allocation2 + $0x108] sm:$0xff] %v981
  %1046 = vst [vmem:[#allocation2 + $0x110] sm:$0xff] %v982
  %1047 = vst [vmem:[#allocation2 + $0x118] sm:$0xff] %v983
  %1048 = vst [vmem:[#allocation2 + $0x120] sm:$0xff] %v984
  %1049 = vst [vmem:[#allocation2 + $0x128] sm:$0xff] %v985
  %1050 = vst [vmem:[#allocation2 + $0x130] sm:$0xff] %v986
  %1051 = vst [vmem:[#allocation2 + $0x138] sm:$0xff] %v987
  %1052 = vst [vmem:[#allocation2 + $0x140] sm:$0xff] %v988
  %1053 = vst [vmem:[#allocation2 + $0x148] sm:$0xff] %v989
  %1054 = vst [vmem:[#allocation2 + $0x150] sm:$0xff] %v990
  %1055 = vst [vmem:[#allocation2 + $0x158] sm:$0xff] %v991
  %1056 = vst [vmem:[#allocation2 + $0x160] sm:$0xff] %v992
  %1057 = vst [vmem:[#allocation2 + $0x168] sm:$0xff] %v993
  %1058 = vst [vmem:[#allocation2 + $0x170] sm:$0xff] %v994
  %1059 = vst [vmem:[#allocation2 + $0x178] sm:$0xff] %v995
  %1060 = vst [vmem:[#allocation2 + $0x180] sm:$0xff] %v996
  %1061 = vst [vmem:[#allocation2 + $0x188] sm:$0xff] %v997
  %1062 = vst [vmem:[#allocation2 + $0x190] sm:$0xff] %v998
  %1063 = vst [vmem:[#allocation2 + $0x198] sm:$0xff] %v999
  %1064 = vst [vmem:[#allocation2 + $0x1a0] sm:$0xff] %v1000
  %1065 = vst [vmem:[#allocation2 + $0x1a8] sm:$0xff] %v1001
  %1066 = vst [vmem:[#allocation2 + $0x1b0] sm:$0xff] %v1002
  %1067 = vst [vmem:[#allocation2 + $0x1b8] sm:$0xff] %v1003
  %1068 = vst [vmem:[#allocation2 + $0x1c0] sm:$0xff] %v1004
  %1069 = vst [vmem:[#allocation2 + $0x1c8] sm:$0xff] %v1005
  %1070 = vst [vmem:[#allocation2 + $0x1d0] sm:$0xff] %v1006
  %1071 = vst [vmem:[#allocation2 + $0x1d8] sm:$0xff] %v1007
  %1072 = vst [vmem:[#allocation2 + $0x1e0] sm:$0xff] %v1008
  %1073 = vst [vmem:[#allocation2 + $0x1e8] sm:$0xff] %v1009
  %1074 = vst [vmem:[#allocation2 + $0x1f0] sm:$0xff] %v1010
  %1075 = vst [vmem:[#allocation2 + $0x1f8] sm:$0xff] %v1011
  // Predicated region
  $region18: #{alexnet_forward.13} parent=0 // pred_check
    %p1076 = pneg %p15
  $region19: #{alexnet_forward.13} parent=0 // pred_check_branch
    %1078 = sbr.rel (%p1076) target = $region21
  $region20: #{alexnet_forward.13} parent=0 // pred_region
    %v1079 = vld [vmem:[#allocation2] sm:$0xff]
    %v1080 = vld [vmem:[#allocation2 + $0x8] sm:$0xff]
    %v1081 = vld [vmem:[#allocation2 + $0x10] sm:$0xff]
    %v1082 = vld [vmem:[#allocation2 + $0x18] sm:$0xff]
    %v1083 = vld [vmem:[#allocation2 + $0x20] sm:$0xff]
    %v1084 = vld [vmem:[#allocation2 + $0x28] sm:$0xff]
    %v1085 = vld [vmem:[#allocation2 + $0x30] sm:$0xff]
    %v1086 = vld [vmem:[#allocation2 + $0x38] sm:$0xff]
    %v1087 = vld [vmem:[#allocation2 + $0x40] sm:$0xff]
    %v1088 = vld [vmem:[#allocation2 + $0x48] sm:$0xff]
    %v1089 = vld [vmem:[#allocation2 + $0x50] sm:$0xff]
    %v1090 = vld [vmem:[#allocation2 + $0x58] sm:$0xff]
    %v1091 = vld [vmem:[#allocation2 + $0x60] sm:$0xff]
    %v1092 = vld [vmem:[#allocation2 + $0x68] sm:$0xff]
    %v1093 = vld [vmem:[#allocation2 + $0x70] sm:$0xff]
    %v1094 = vld [vmem:[#allocation2 + $0x78] sm:$0xff]
    %v1095 = vld [vmem:[#allocation2 + $0x80] sm:$0xff]
    %v1096 = vld [vmem:[#allocation2 + $0x88] sm:$0xff]
    %v1097 = vld [vmem:[#allocation2 + $0x90] sm:$0xff]
    %v1098 = vld [vmem:[#allocation2 + $0x98] sm:$0xff]
    %v1099 = vld [vmem:[#allocation2 + $0xa0] sm:$0xff]
    %v1100 = vld [vmem:[#allocation2 + $0xa8] sm:$0xff]
    %v1101 = vld [vmem:[#allocation2 + $0xb0] sm:$0xff]
    %v1102 = vld [vmem:[#allocation2 + $0xb8] sm:$0xff]
    %v1103 = vld [vmem:[#allocation2 + $0xc0] sm:$0xff]
    %v1104 = vld [vmem:[#allocation2 + $0xc8] sm:$0xff]
    %v1105 = vld [vmem:[#allocation2 + $0xd0] sm:$0xff]
    %v1106 = vld [vmem:[#allocation2 + $0xd8] sm:$0xff]
    %v1107 = vld [vmem:[#allocation2 + $0xe0] sm:$0xff]
    %v1108 = vld [vmem:[#allocation2 + $0xe8] sm:$0xff]
    %v1109 = vld [vmem:[#allocation2 + $0xf0] sm:$0xff]
    %v1110 = vld [vmem:[#allocation2 + $0xf8] sm:$0xff]
    %v1111 = vld [vmem:[#allocation2 + $0x100] sm:$0xff]
    %v1112 = vld [vmem:[#allocation2 + $0x108] sm:$0xff]
    %v1113 = vld [vmem:[#allocation2 + $0x110] sm:$0xff]
    %v1114 = vld [vmem:[#allocation2 + $0x118] sm:$0xff]
    %v1115 = vld [vmem:[#allocation2 + $0x120] sm:$0xff]
    %v1116 = vld [vmem:[#allocation2 + $0x128] sm:$0xff]
    %v1117 = vld [vmem:[#allocation2 + $0x130] sm:$0xff]
    %v1118 = vld [vmem:[#allocation2 + $0x138] sm:$0xff]
    %v1119 = vld [vmem:[#allocation2 + $0x140] sm:$0xff]
    %v1120 = vld [vmem:[#allocation2 + $0x148] sm:$0xff]
    %v1121 = vld [vmem:[#allocation2 + $0x150] sm:$0xff]
    %v1122 = vld [vmem:[#allocation2 + $0x158] sm:$0xff]
    %v1123 = vld [vmem:[#allocation2 + $0x160] sm:$0xff]
    %v1124 = vld [vmem:[#allocation2 + $0x168] sm:$0xff]
    %v1125 = vld [vmem:[#allocation2 + $0x170] sm:$0xff]
    %v1126 = vld [vmem:[#allocation2 + $0x178] sm:$0xff]
    %v1127 = vld [vmem:[#allocation2 + $0x180] sm:$0xff]
    %v1128 = vld [vmem:[#allocation2 + $0x188] sm:$0xff]
    %v1129 = vld [vmem:[#allocation2 + $0x190] sm:$0xff]
    %v1130 = vld [vmem:[#allocation2 + $0x198] sm:$0xff]
    %v1131 = vld [vmem:[#allocation2 + $0x1a0] sm:$0xff]
    %v1132 = vld [vmem:[#allocation2 + $0x1a8] sm:$0xff]
    %v1133 = vld [vmem:[#allocation2 + $0x1b0] sm:$0xff]
    %v1134 = vld [vmem:[#allocation2 + $0x1b8] sm:$0xff]
    %v1135 = vld [vmem:[#allocation2 + $0x1c0] sm:$0xff]
    %v1136 = vld [vmem:[#allocation2 + $0x1c8] sm:$0xff]
    %v1137 = vld [vmem:[#allocation2 + $0x1d0] sm:$0xff]
    %v1138 = vld [vmem:[#allocation2 + $0x1d8] sm:$0xff]
    %v1139 = vld [vmem:[#allocation2 + $0x1e0] sm:$0xff]
    %v1140 = vld [vmem:[#allocation2 + $0x1e8] sm:$0xff]
    %v1141 = vld [vmem:[#allocation2 + $0x1f0] sm:$0xff]
    %v1142 = vld [vmem:[#allocation2 + $0x1f8] sm:$0xff]
    %v1143 = vld [vmem:[%s2] sm:$0x1]
    %v1145 = vlaneseq
    %v1146 = vshrl.u32 %v1145, 7
    %v1147 = vsub.s32 0, %v1146
    %v1148 = vrot.slane %v1143, %v1147
    %v1150 = vadd.f32 %v1079, %v1148
    %v1151 = vadd.f32 %v1080, %v1148
    %v1152 = vadd.f32 %v1081, %v1148
    %v1153 = vadd.f32 %v1082, %v1148
    %v1154 = vadd.f32 %v1083, %v1148
    %v1155 = vadd.f32 %v1084, %v1148
    %v1156 = vadd.f32 %v1085, %v1148
    %v1157 = vadd.f32 %v1086, %v1148
    %v1158 = vadd.f32 %v1087, %v1148
    %v1159 = vadd.f32 %v1088, %v1148
    %v1160 = vadd.f32 %v1089, %v1148
    %v1161 = vadd.f32 %v1090, %v1148
    %v1162 = vadd.f32 %v1091, %v1148
    %v1163 = vadd.f32 %v1092, %v1148
    %v1164 = vadd.f32 %v1093, %v1148
    %v1165 = vadd.f32 %v1094, %v1148
    %v1166 = vadd.f32 %v1095, %v1148
    %v1167 = vadd.f32 %v1096, %v1148
    %v1168 = vadd.f32 %v1097, %v1148
    %v1169 = vadd.f32 %v1098, %v1148
    %v1170 = vadd.f32 %v1099, %v1148
    %v1171 = vadd.f32 %v1100, %v1148
    %v1172 = vadd.f32 %v1101, %v1148
    %v1173 = vadd.f32 %v1102, %v1148
    %v1174 = vadd.f32 %v1103, %v1148
    %v1175 = vadd.f32 %v1104, %v1148
    %v1176 = vadd.f32 %v1105, %v1148
    %v1177 = vadd.f32 %v1106, %v1148
    %v1178 = vadd.f32 %v1107, %v1148
    %v1179 = vadd.f32 %v1108, %v1148
    %v1180 = vadd.f32 %v1109, %v1148
    %v1181 = vadd.f32 %v1110, %v1148
    %v1182 = vadd.f32 %v1111, %v1148
    %v1183 = vadd.f32 %v1112, %v1148
    %v1184 = vadd.f32 %v1113, %v1148
    %v1185 = vadd.f32 %v1114, %v1148
    %v1186 = vadd.f32 %v1115, %v1148
    %v1187 = vadd.f32 %v1116, %v1148
    %v1188 = vadd.f32 %v1117, %v1148
    %v1189 = vadd.f32 %v1118, %v1148
    %v1190 = vadd.f32 %v1119, %v1148
    %v1191 = vadd.f32 %v1120, %v1148
    %v1192 = vadd.f32 %v1121, %v1148
    %v1193 = vadd.f32 %v1122, %v1148
    %v1194 = vadd.f32 %v1123, %v1148
    %v1195 = vadd.f32 %v1124, %v1148
    %v1196 = vadd.f32 %v1125, %v1148
    %v1197 = vadd.f32 %v1126, %v1148
    %v1198 = vadd.f32 %v1127, %v1148
    %v1199 = vadd.f32 %v1128, %v1148
    %v1200 = vadd.f32 %v1129, %v1148
    %v1201 = vadd.f32 %v1130, %v1148
    %v1202 = vadd.f32 %v1131, %v1148
    %v1203 = vadd.f32 %v1132, %v1148
    %v1204 = vadd.f32 %v1133, %v1148
    %v1205 = vadd.f32 %v1134, %v1148
    %v1206 = vadd.f32 %v1135, %v1148
    %v1207 = vadd.f32 %v1136, %v1148
    %v1208 = vadd.f32 %v1137, %v1148
    %v1209 = vadd.f32 %v1138, %v1148
    %v1210 = vadd.f32 %v1139, %v1148
    %v1211 = vadd.f32 %v1140, %v1148
    %v1212 = vadd.f32 %v1141, %v1148
    %v1213 = vadd.f32 %v1142, %v1148
    %v1214 = vmax.f32 %v1150, 0.0
    %v1215 = vmax.f32 %v1151, 0.0
    %v1216 = vmax.f32 %v1152, 0.0
    %v1217 = vmax.f32 %v1153, 0.0
    %v1218 = vmax.f32 %v1154, 0.0
    %v1219 = vmax.f32 %v1155, 0.0
    %v1220 = vmax.f32 %v1156, 0.0
    %v1221 = vmax.f32 %v1157, 0.0
    %v1222 = vmax.f32 %v1158, 0.0
    %v1223 = vmax.f32 %v1159, 0.0
    %v1224 = vmax.f32 %v1160, 0.0
    %v1225 = vmax.f32 %v1161, 0.0
    %v1226 = vmax.f32 %v1162, 0.0
    %v1227 = vmax.f32 %v1163, 0.0
    %v1228 = vmax.f32 %v1164, 0.0
    %v1229 = vmax.f32 %v1165, 0.0
    %v1230 = vmax.f32 %v1166, 0.0
    %v1231 = vmax.f32 %v1167, 0.0
    %v1232 = vmax.f32 %v1168, 0.0
    %v1233 = vmax.f32 %v1169, 0.0
    %v1234 = vmax.f32 %v1170, 0.0
    %v1235 = vmax.f32 %v1171, 0.0
    %v1236 = vmax.f32 %v1172, 0.0
    %v1237 = vmax.f32 %v1173, 0.0
    %v1238 = vmax.f32 %v1174, 0.0
    %v1239 = vmax.f32 %v1175, 0.0
    %v1240 = vmax.f32 %v1176, 0.0
    %v1241 = vmax.f32 %v1177, 0.0
    %v1242 = vmax.f32 %v1178, 0.0
    %v1243 = vmax.f32 %v1179, 0.0
    %v1244 = vmax.f32 %v1180, 0.0
    %v1245 = vmax.f32 %v1181, 0.0
    %v1246 = vmax.f32 %v1182, 0.0
    %v1247 = vmax.f32 %v1183, 0.0
    %v1248 = vmax.f32 %v1184, 0.0
    %v1249 = vmax.f32 %v1185, 0.0
    %v1250 = vmax.f32 %v1186, 0.0
    %v1251 = vmax.f32 %v1187, 0.0
    %v1252 = vmax.f32 %v1188, 0.0
    %v1253 = vmax.f32 %v1189, 0.0
    %v1254 = vmax.f32 %v1190, 0.0
    %v1255 = vmax.f32 %v1191, 0.0
    %v1256 = vmax.f32 %v1192, 0.0
    %v1257 = vmax.f32 %v1193, 0.0
    %v1258 = vmax.f32 %v1194, 0.0
    %v1259 = vmax.f32 %v1195, 0.0
    %v1260 = vmax.f32 %v1196, 0.0
    %v1261 = vmax.f32 %v1197, 0.0
    %v1262 = vmax.f32 %v1198, 0.0
    %v1263 = vmax.f32 %v1199, 0.0
    %v1264 = vmax.f32 %v1200, 0.0
    %v1265 = vmax.f32 %v1201, 0.0
    %v1266 = vmax.f32 %v1202, 0.0
    %v1267 = vmax.f32 %v1203, 0.0
    %v1268 = vmax.f32 %v1204, 0.0
    %v1269 = vmax.f32 %v1205, 0.0
    %v1270 = vmax.f32 %v1206, 0.0
    %v1271 = vmax.f32 %v1207, 0.0
    %v1272 = vmax.f32 %v1208, 0.0
    %v1273 = vmax.f32 %v1209, 0.0
    %v1274 = vmax.f32 %v1210, 0.0
    %v1275 = vmax.f32 %v1211, 0.0
    %v1276 = vmax.f32 %v1212, 0.0
    %v1277 = vmax.f32 %v1213, 0.0
    %1278 = vst [vmem:[%s3] sm:$0xff] %v1214
    %1279 = vst [vmem:[%s3 + $0x8] sm:$0xff] %v1215
    %1280 = vst [vmem:[%s3 + $0x10] sm:$0xff] %v1216
    %1281 = vst [vmem:[%s3 + $0x18] sm:$0xff] %v1217
    %1282 = vst [vmem:[%s3 + $0x20] sm:$0xff] %v1218
    %1283 = vst [vmem:[%s3 + $0x28] sm:$0xff] %v1219
    %1284 = vst [vmem:[%s3 + $0x30] sm:$0xff] %v1220
    %1285 = vst [vmem:[%s3 + $0x38] sm:$0xff] %v1221
    %1286 = vst [vmem:[%s3 + $0x40] sm:$0xff] %v1222
    %1287 = vst [vmem:[%s3 + $0x48] sm:$0xff] %v1223
    %1288 = vst [vmem:[%s3 + $0x50] sm:$0xff] %v1224
    %1289 = vst [vmem:[%s3 + $0x58] sm:$0xff] %v1225
    %1290 = vst [vmem:[%s3 + $0x60] sm:$0xff] %v1226
    %1291 = vst [vmem:[%s3 + $0x68] sm:$0xff] %v1227
    %1292 = vst [vmem:[%s3 + $0x70] sm:$0xff] %v1228
    %1293 = vst [vmem:[%s3 + $0x78] sm:$0xff] %v1229
    %1294 = vst [vmem:[%s3 + $0x80] sm:$0xff] %v1230
    %1295 = vst [vmem:[%s3 + $0x88] sm:$0xff] %v1231
    %1296 = vst [vmem:[%s3 + $0x90] sm:$0xff] %v1232
    %1297 = vst [vmem:[%s3 + $0x98] sm:$0xff] %v1233
    %1298 = vst [vmem:[%s3 + $0xa0] sm:$0xff] %v1234
    %1299 = vst [vmem:[%s3 + $0xa8] sm:$0xff] %v1235
    %1300 = vst [vmem:[%s3 + $0xb0] sm:$0xff] %v1236
    %1301 = vst [vmem:[%s3 + $0xb8] sm:$0xff] %v1237
    %1302 = vst [vmem:[%s3 + $0xc0] sm:$0xff] %v1238
    %1303 = vst [vmem:[%s3 + $0xc8] sm:$0xff] %v1239
    %1304 = vst [vmem:[%s3 + $0xd0] sm:$0xff] %v1240
    %1305 = vst [vmem:[%s3 + $0xd8] sm:$0xff] %v1241
    %1306 = vst [vmem:[%s3 + $0xe0] sm:$0xff] %v1242
    %1307 = vst [vmem:[%s3 + $0xe8] sm:$0xff] %v1243
    %1308 = vst [vmem:[%s3 + $0xf0] sm:$0xff] %v1244
    %1309 = vst [vmem:[%s3 + $0xf8] sm:$0xff] %v1245
    %1310 = vst [vmem:[%s3 + $0x100] sm:$0xff] %v1246
    %1311 = vst [vmem:[%s3 + $0x108] sm:$0xff] %v1247
    %1312 = vst [vmem:[%s3 + $0x110] sm:$0xff] %v1248
    %1313 = vst [vmem:[%s3 + $0x118] sm:$0xff] %v1249
    %1314 = vst [vmem:[%s3 + $0x120] sm:$0xff] %v1250
    %1315 = vst [vmem:[%s3 + $0x128] sm:$0xff] %v1251
    %1316 = vst [vmem:[%s3 + $0x130] sm:$0xff] %v1252
    %1317 = vst [vmem:[%s3 + $0x138] sm:$0xff] %v1253
    %1318 = vst [vmem:[%s3 + $0x140] sm:$0xff] %v1254
    %1319 = vst [vmem:[%s3 + $0x148] sm:$0xff] %v1255
    %1320 = vst [vmem:[%s3 + $0x150] sm:$0xff] %v1256
    %1321 = vst [vmem:[%s3 + $0x158] sm:$0xff] %v1257
    %1322 = vst [vmem:[%s3 + $0x160] sm:$0xff] %v1258
    %1323 = vst [vmem:[%s3 + $0x168] sm:$0xff] %v1259
    %1324 = vst [vmem:[%s3 + $0x170] sm:$0xff] %v1260
    %1325 = vst [vmem:[%s3 + $0x178] sm:$0xff] %v1261
    %1326 = vst [vmem:[%s3 + $0x180] sm:$0xff] %v1262
    %1327 = vst [vmem:[%s3 + $0x188] sm:$0xff] %v1263
    %1328 = vst [vmem:[%s3 + $0x190] sm:$0xff] %v1264
    %1329 = vst [vmem:[%s3 + $0x198] sm:$0xff] %v1265
    %1330 = vst [vmem:[%s3 + $0x1a0] sm:$0xff] %v1266
    %1331 = vst [vmem:[%s3 + $0x1a8] sm:$0xff] %v1267
    %1332 = vst [vmem:[%s3 + $0x1b0] sm:$0xff] %v1268
    %1333 = vst [vmem:[%s3 + $0x1b8] sm:$0xff] %v1269
    %1334 = vst [vmem:[%s3 + $0x1c0] sm:$0xff] %v1270
    %1335 = vst [vmem:[%s3 + $0x1c8] sm:$0xff] %v1271
    %1336 = vst [vmem:[%s3 + $0x1d0] sm:$0xff] %v1272
    %1337 = vst [vmem:[%s3 + $0x1d8] sm:$0xff] %v1273
    %1338 = vst [vmem:[%s3 + $0x1e0] sm:$0xff] %v1274
    %1339 = vst [vmem:[%s3 + $0x1e8] sm:$0xff] %v1275
    %1340 = vst [vmem:[%s3 + $0x1f0] sm:$0xff] %v1276
    %1341 = vst [vmem:[%s3 + $0x1f8] sm:$0xff] %v1277
  $region21: #{alexnet_forward.13} parent=0 // pred_fallthru
    _
  // Predicated region
  $region22: #{alexnet_forward.13} parent=0 // pred_check
    _
  $region23: #{alexnet_forward.13} parent=0 // pred_check_branch
    %1343 = sbr.rel (0) target = $region25
  $region24: #{alexnet_forward.13} parent=0 // pred_region
    _
  $region25: #{alexnet_forward.13} parent=0 // pred_fallthru
    _
  // Predicated region
  $region26: #{alexnet_forward.13} parent=0 // pred_check
    _
  $region27: #{alexnet_forward.13} parent=0 // pred_check_branch
    %1345 = sbr.rel (0) target = $region29
  $region28: #{alexnet_forward.13} parent=0 // pred_region
    _
  $region29: #{alexnet_forward.13} parent=0 // pred_fallthru
    _

// kernel: alexnet_forward.15
$region0: #{alexnet_forward.15}
  #allocation0 [shape = 'u32[]', space=smem, size = 0x4, offset = 0x4, fixed_abs, tag = 'smem constant byte address 0x4 - core index']
  #allocation1 [shape = 'u32[144,128]{1,0:T(1,128)}', space=vmem, size = 0x12000, scoped, tag = 'internal scratch']
  #allocation2 [shape = 'f32[128,128]{1,0:T(8,128)}', space=vmem, size = 0x10000, scoped, tag = 'scratch operand']
  %s0 = inlined_call_operand.vmem [shape: bf16[128,384], index: 0, kind: input, shape index: {}]
  %s1 = inlined_call_operand.vmem [shape: bf16[384,128], index: 1, kind: input, shape index: {}]
  %s2 = inlined_call_operand.vmem [shape: f32[1,128], index: 2, kind: input, shape index: {}]
  %s3 = inlined_call_operand.vmem [shape: f32[128,128], index: 3, kind: output, shape index: {}]
  %s4 = sld [smem:[#allocation0]]
  $region94: #{alexnet_forward.15} parent=0
    _
  %s6 = ssub.s32 1, %s4
  %s7 = scalar_select 0, %s6, %s4
  $region1: #{alexnet_forward.15} parent=0
    #allocation3 [shape = 'u8[65536]{0}', space=vmem, size = 0x10000, scoped, tag = 'input window, operand 0']
    loop: start=0, step=1, limit=5
    $region2: #{alexnet_forward.15} parent=1 // loop_pre_header
      _
    $region3: #{alexnet_forward.15} parent=1 // loop_header
      %s9 = sphi 0, %s13
      %p10 = scmp.ge.s32.totalorder %s9, 5
      %s16 = sphi 0, %s35
      %s17 = sphi 0, %s31
      %s18 = sphi 0, %s27
      %s19 = sphi 0, %s16
      %s20 = sphi 0, %s17
      %s21 = sphi 0, %s18
      %s22 = sphi 0, %s19
      %s23 = sphi 0, %s20
      %s24 = sphi 0, %s21
      %s40 = sphi 0, %s42
      %s43 = sphi 0, %s40
      %s44 = sphi 0, %s43
      %s60 = sphi 0, %s44
      %s68 = sphi 0, %s70
      %s71 = sphi 0, %s68
      %s72 = sphi 0, %s71
      %s88 = sphi 0, %s72
      %s94 = sphi 0, %s96
      %s97 = sphi 0, %s94
      %s98 = sphi 0, %s97
      %s114 = sphi 0, %s98
      %s122 = sphi 0, %s124
      %s125 = sphi 0, %s122
      %s126 = sphi 0, %s125
      %s142 = sphi 0, %s126
    $region4: #{alexnet_forward.15} parent=1 // loop_header_branch
      %12 = sbr.rel (%p10) target = $region8
    $region5: #{alexnet_forward.15} parent=1 // loop_body
      %s14 = ssub.s32 %s9, 1
      %s15 = ssub.s32 %s9, 2
      %s25 = sadd.s32 1, %s18
      %p26 = scmp.ge.s32.totalorder %s25, 3
      %s27 = scalar_select %p26, 0, %s25
      %s28 = sadd.s32 1, %s17
      %s29 = scalar_select %p26, %s28, %s17
      %p30 = scmp.ge.s32.totalorder %s29, 1
      %s31 = scalar_select %p30, 0, %s29
      %s32 = sadd.s32 1, %s16
      %s33 = scalar_select %p30, %s32, %s16
      %p34 = scmp.ge.s32.totalorder %s33, 1
      %s35 = scalar_select %p34, 0, %s33
      %s36 = ssub.s32 %s16, %s35
      %s37 = ssub.s32 %s18, %s27
      %s38 = sor.u32 %s36, %s37
      %p39 = scmp.eq.s32.totalorder %s38, 0
      %s41 = sadd.s32 %s40, 1
      %s42 = scalar_select %p39, %s40, %s41
      %p45 = pneg %p39
      %p46 = scmp.eq.s32.totalorder %s9, 2
      %p47 = por %p45, %p46
      %p48 = scmp.ne.s32.totalorder %s40, %s43
      %p49 = scmp.eq.s32.totalorder %s9, 0
      %p50 = por %p48, %p49
      %p51 = scmp.ne.s32.totalorder %s40, %s43
      %p52 = scmp.eq.s32.totalorder %s14, 2
      %p53 = por %p51, %p52
      %p54 = scmp.ne.s32.totalorder %s43, %s44
      %p55 = scmp.eq.s32.totalorder %s14, 0
      %p56 = por %p54, %p55
      %p57 = scmp.ne.s32.totalorder %s43, %s44
      %p58 = scmp.eq.s32.totalorder %s15, 2
      %p59 = por %p57, %p58
      %p61 = scmp.ne.s32.totalorder %s44, %s60
      %p62 = scmp.eq.s32.totalorder %s15, 0
      %p63 = por %p61, %p62
      %s64 = ssub.s32 %s18, %s27
      %s65 = ssub.s32 %s17, %s31
      %s66 = sor.u32 %s64, %s65
      %p67 = scmp.eq.s32.totalorder %s66, 0
      %s69 = sadd.s32 %s68, 1
      %s70 = scalar_select %p67, %s68, %s69
      %p73 = pneg %p67
      %p74 = scmp.eq.s32.totalorder %s9, 2
      %p75 = por %p73, %p74
      %p76 = scmp.ne.s32.totalorder %s68, %s71
      %p77 = scmp.eq.s32.totalorder %s9, 0
      %p78 = por %p76, %p77
      %p79 = scmp.ne.s32.totalorder %s68, %s71
      %p80 = scmp.eq.s32.totalorder %s14, 2
      %p81 = por %p79, %p80
      %p82 = scmp.ne.s32.totalorder %s71, %s72
      %p83 = scmp.eq.s32.totalorder %s14, 0
      %p84 = por %p82, %p83
      %p85 = scmp.ne.s32.totalorder %s71, %s72
      %p86 = scmp.eq.s32.totalorder %s15, 2
      %p87 = por %p85, %p86
      %p89 = scmp.ne.s32.totalorder %s72, %s88
      %p90 = scmp.eq.s32.totalorder %s15, 0
      %p91 = por %p89, %p90
      %s92 = ssub.s32 %s17, %s31
      %p93 = scmp.eq.s32.totalorder %s92, 0
      %s95 = sadd.s32 %s94, 1
      %s96 = scalar_select %p93, %s94, %s95
      %p99 = pneg %p93
      %p100 = scmp.eq.s32.totalorder %s9, 2
      %p101 = por %p99, %p100
      %p102 = scmp.ne.s32.totalorder %s94, %s97
      %p103 = scmp.eq.s32.totalorder %s9, 0
      %p104 = por %p102, %p103
      %p105 = scmp.ne.s32.totalorder %s94, %s97
      %p106 = scmp.eq.s32.totalorder %s14, 2
      %p107 = por %p105, %p106
      %p108 = scmp.ne.s32.totalorder %s97, %s98
      %p109 = scmp.eq.s32.totalorder %s14, 0
      %p110 = por %p108, %p109
      %p111 = scmp.ne.s32.totalorder %s97, %s98
      %p112 = scmp.eq.s32.totalorder %s15, 2
      %p113 = por %p111, %p112
      %p115 = scmp.ne.s32.totalorder %s98, %s114
      %p116 = scmp.eq.s32.totalorder %s15, 0
      %p117 = por %p115, %p116
      %s118 = ssub.s32 %s16, %s35
      %s119 = ssub.s32 %s17, %s31
      %s120 = sor.u32 %s118, %s119
      %p121 = scmp.eq.s32.totalorder %s120, 0
      %s123 = sadd.s32 %s122, 1
      %s124 = scalar_select %p121, %s122, %s123
      %p127 = pneg %p121
      %p128 = scmp.eq.s32.totalorder %s9, 2
      %p129 = por %p127, %p128
      %p130 = scmp.ne.s32.totalorder %s122, %s125
      %p131 = scmp.eq.s32.totalorder %s9, 0
      %p132 = por %p130, %p131
      %p133 = scmp.ne.s32.totalorder %s122, %s125
      %p134 = scmp.eq.s32.totalorder %s14, 2
      %p135 = por %p133, %p134
      %p136 = scmp.ne.s32.totalorder %s125, %s126
      %p137 = scmp.eq.s32.totalorder %s14, 0
      %p138 = por %p136, %p137
      %p139 = scmp.ne.s32.totalorder %s125, %s126
      %p140 = scmp.eq.s32.totalorder %s15, 2
      %p141 = por %p139, %p140
      %p143 = scmp.ne.s32.totalorder %s126, %s142
      %p144 = scmp.eq.s32.totalorder %s15, 0
      %p145 = por %p143, %p144
      %p146 = scmp.le.s32.totalorder 1, %s9
      %p147 = scmp.lt.s32.totalorder %s9, 4
      %p148 = pnand %p146, %p147
      %p149 = pneg %p148
      // Predicated region
      $region9: #{alexnet_forward.15} parent=5 // pred_check
        _
      $region10: #{alexnet_forward.15} parent=5 // pred_check_branch
        %151 = sbr.rel (%p148) target = $region12
      $region11: #{alexnet_forward.15} parent=5 // pred_region
        %s152 = ssub.s32 %s9, 1
        // Predicated region
        $region13: #{alexnet_forward.15} parent=11 // pred_check
          %p153 = pneg %p110
        $region14: #{alexnet_forward.15} parent=11 // pred_check_branch
          %155 = sbr.rel (%p153) target = $region16
        $region15: #{alexnet_forward.15} parent=11 // pred_region
          %p156 = scmp.lt.s32.totalorder %s20, 0
          %s157 = scalar_select %p156, %s20, 0
          %s158 = scalar_lea.vmem %s2, %s157
        $region16: #{alexnet_forward.15} parent=11 // pred_fallthru
          _
      $region12: #{alexnet_forward.15} parent=5 // pred_fallthru
        _
      %p159 = scmp.lt.s32.totalorder %s9, 3
      // Predicated region
      $region17: #{alexnet_forward.15} parent=5 // pred_check
        %p160 = pneg %p159
      $region18: #{alexnet_forward.15} parent=5 // pred_check_branch
        %162 = sbr.rel (%p160) target = $region20
      $region19: #{alexnet_forward.15} parent=5 // pred_region
        // Predicated region
        $region21: #{alexnet_forward.15} parent=19 // pred_check
          %p163 = pneg %p50
        $region22: #{alexnet_forward.15} parent=19 // pred_check_branch
          %165 = sbr.rel (%p163) target = $region24
        $region23: #{alexnet_forward.15} parent=19 // pred_region
          %s166 = sand.u32 %s40, 1
          %s167 = sand.u32 %s40, 1
          %s168 = smul.addr %s167, 64
          %s169 = scalar_lea.vmem [#allocation3], %s168
          %s170 = smul.u32 16, %s16
          %s171 = smul.addr %s170, 3
          %s172 = sadd.s32 %s18, %s171
          %s173 = smul.addr %s172, 4
          %s174 = scalar_lea.vmem %s0, %s173
          // Predicated region
          $region25: #{alexnet_forward.15} parent=23 // pred_check
            _
          $region26: #{alexnet_forward.15} parent=23 // pred_check_branch
            %176 = sbr.rel (0) target = $region28
          $region27: #{alexnet_forward.15} parent=23 // pred_region
            // Predicated region
            $region29: #{alexnet_forward.15} parent=27 // pred_check
              _
            $region30: #{alexnet_forward.15} parent=27 // pred_check_branch
              %178 = sbr.rel target = $region32
            $region31: #{alexnet_forward.15} parent=27 // pred_region
              // Predicated region
              $region44: #{alexnet_forward.15} parent=31 // pred_check
                _
              $region45: #{alexnet_forward.15} parent=31 // pred_check_branch
                %224 = sbr.rel (0) target = $region47
              $region46: #{alexnet_forward.15} parent=31 // pred_region
                loop: start=0, step=1, limit=1
                $region48: #{alexnet_forward.15} parent=46 // loop_pre_header
                  _
                $region49: #{alexnet_forward.15} parent=46 // loop_header
                  %s226 = sphi 0, %s230
                  %p227 = scmp.ge.s32.totalorder %s226, 1
                  %s231 = sphi %s174, %s174
                  %s232 = sphi %s169, %s169
                $region50: #{alexnet_forward.15} parent=46 // loop_header_branch
                  %229 = sbr.rel (%p227) target = $region54
                $region51: #{alexnet_forward.15} parent=46 // loop_body
                  _
                $region52: #{alexnet_forward.15} parent=46 // loop_footer
                  %s230 = sadd.s32 1, %s226
                $region53: #{alexnet_forward.15} parent=46 // loop_footer_branch
                  %225 = sbr.rel target = $region49
                $region54: #{alexnet_forward.15} parent=46 // loop_exit
                  _
                %s234 = ssub.s32 16, 1
                loop: start=0, step=1, limit=1
                $region55: #{alexnet_forward.15} parent=46 // loop_pre_header
                  _
                $region56: #{alexnet_forward.15} parent=46 // loop_header
                  %s236 = sphi 0, %s240
                  %p237 = scmp.ge.s32.totalorder %s236, 1
                  %s241 = sphi %s174, %s174
                  %s242 = sphi %s169, %s169
                $region57: #{alexnet_forward.15} parent=46 // loop_header_branch
                  %239 = sbr.rel (%p237) target = $region61
                $region58: #{alexnet_forward.15} parent=46 // loop_body
                  %v243 = vld [vmem:[%s241] sm:%s234]
                  %244 = vst [vmem:[%s242] sm:%s234] %v243
                  %v245 = vld [vmem:[%s241 + $0xc] sm:%s234]
                  %246 = vst [vmem:[%s242 + $0x4] sm:%s234] %v245
                  %v247 = vld [vmem:[%s241 + $0x18] sm:%s234]
                  %248 = vst [vmem:[%s242 + $0x8] sm:%s234] %v247
                  %v249 = vld [vmem:[%s241 + $0x24] sm:%s234]
                  %250 = vst [vmem:[%s242 + $0xc] sm:%s234] %v249
                  %v251 = vld [vmem:[%s241 + $0x30] sm:%s234]
                  %252 = vst [vmem:[%s242 + $0x10] sm:%s234] %v251
                  %v253 = vld [vmem:[%s241 + $0x3c] sm:%s234]
                  %254 = vst [vmem:[%s242 + $0x14] sm:%s234] %v253
                  %v255 = vld [vmem:[%s241 + $0x48] sm:%s234]
                  %256 = vst [vmem:[%s242 + $0x18] sm:%s234] %v255
                  %v257 = vld [vmem:[%s241 + $0x54] sm:%s234]
                  %258 = vst [vmem:[%s242 + $0x1c] sm:%s234] %v257
                  %v259 = vld [vmem:[%s241 + $0x60] sm:%s234]
                  %260 = vst [vmem:[%s242 + $0x20] sm:%s234] %v259
                  %v261 = vld [vmem:[%s241 + $0x6c] sm:%s234]
                  %262 = vst [vmem:[%s242 + $0x24] sm:%s234] %v261
                  %v263 = vld [vmem:[%s241 + $0x78] sm:%s234]
                  %264 = vst [vmem:[%s242 + $0x28] sm:%s234] %v263
                  %v265 = vld [vmem:[%s241 + $0x84] sm:%s234]
                  %266 = vst [vmem:[%s242 + $0x2c] sm:%s234] %v265
                  %v267 = vld [vmem:[%s241 + $0x90] sm:%s234]
                  %268 = vst [vmem:[%s242 + $0x30] sm:%s234] %v267
                  %v269 = vld [vmem:[%s241 + $0x9c] sm:%s234]
                  %270 = vst [vmem:[%s242 + $0x34] sm:%s234] %v269
                  %v271 = vld [vmem:[%s241 + $0xa8] sm:%s234]
                  %272 = vst [vmem:[%s242 + $0x38] sm:%s234] %v271
                  %v273 = vld [vmem:[%s241 + $0xb4] sm:%s234]
                  %274 = vst [vmem:[%s242 + $0x3c] sm:%s234] %v273
                $region59: #{alexnet_forward.15} parent=46 // loop_footer
                  %s240 = sadd.s32 1, %s236
                $region60: #{alexnet_forward.15} parent=46 // loop_footer_branch
                  %235 = sbr.rel target = $region56
                $region61: #{alexnet_forward.15} parent=46 // loop_exit
                  _
              $region47: #{alexnet_forward.15} parent=31 // pred_fallthru
                _
            $region32: #{alexnet_forward.15} parent=27 // pred_fallthru
              _
            // Predicated region
            $region33: #{alexnet_forward.15} parent=27 // pred_check
              _
            $region34: #{alexnet_forward.15} parent=27 // pred_check_branch
              %180 = sbr.rel (0) target = $region36
            $region35: #{alexnet_forward.15} parent=27 // pred_region
              %s182 = ssub.s32 16, 1
              loop: start=0, step=1, limit=1
              $region37: #{alexnet_forward.15} parent=35 // loop_pre_header
                _
              $region38: #{alexnet_forward.15} parent=35 // loop_header
                %s184 = sphi 0, %s188
                %p185 = scmp.ge.s32.totalorder %s184, 1
                %s189 = sphi %s174, %s174
                %s190 = sphi %s169, %s169
              $region39: #{alexnet_forward.15} parent=35 // loop_header_branch
                %187 = sbr.rel (%p185) target = $region43
              $region40: #{alexnet_forward.15} parent=35 // loop_body
                %v191 = vld [vmem:[%s189] sm:%s182]
                %192 = vst [vmem:[%s190] sm:%s182] %v191
                %v193 = vld [vmem:[%s189 + $0xc] sm:%s182]
                %194 = vst [vmem:[%s190 + $0x4] sm:%s182] %v193
                %v195 = vld [vmem:[%s189 + $0x18] sm:%s182]
                %196 = vst [vmem:[%s190 + $0x8] sm:%s182] %v195
                %v197 = vld [vmem:[%s189 + $0x24] sm:%s182]
                %198 = vst [vmem:[%s190 + $0xc] sm:%s182] %v197
                %v199 = vld [vmem:[%s189 + $0x30] sm:%s182]
                %200 = vst [vmem:[%s190 + $0x10] sm:%s182] %v199
                %v201 = vld [vmem:[%s189 + $0x3c] sm:%s182]
                %202 = vst [vmem:[%s190 + $0x14] sm:%s182] %v201
                %v203 = vld [vmem:[%s189 + $0x48] sm:%s182]
                %204 = vst [vmem:[%s190 + $0x18] sm:%s182] %v203
                %v205 = vld [vmem:[%s189 + $0x54] sm:%s182]
                %206 = vst [vmem:[%s190 + $0x1c] sm:%s182] %v205
                %v207 = vld [vmem:[%s189 + $0x60] sm:%s182]
                %208 = vst [vmem:[%s190 + $0x20] sm:%s182] %v207
                %v209 = vld [vmem:[%s189 + $0x6c] sm:%s182]
                %210 = vst [vmem:[%s190 + $0x24] sm:%s182] %v209
                %v211 = vld [vmem:[%s189 + $0x78] sm:%s182]
                %212 = vst [vmem:[%s190 + $0x28] sm:%s182] %v211
                %v213 = vld [vmem:[%s189 + $0x84] sm:%s182]
                %214 = vst [vmem:[%s190 + $0x2c] sm:%s182] %v213
                %v215 = vld [vmem:[%s189 + $0x90] sm:%s182]
                %216 = vst [vmem:[%s190 + $0x30] sm:%s182] %v215
                %v217 = vld [vmem:[%s189 + $0x9c] sm:%s182]
                %218 = vst [vmem:[%s190 + $0x34] sm:%s182] %v217
                %v219 = vld [vmem:[%s189 + $0xa8] sm:%s182]
                %220 = vst [vmem:[%s190 + $0x38] sm:%s182] %v219
                %v221 = vld [vmem:[%s189 + $0xb4] sm:%s182]
                %222 = vst [vmem:[%s190 + $0x3c] sm:%s182] %v221
              $region41: #{alexnet_forward.15} parent=35 // loop_footer
                %s188 = sadd.s32 1, %s184
              $region42: #{alexnet_forward.15} parent=35 // loop_footer_branch
                %183 = sbr.rel target = $region38
              $region43: #{alexnet_forward.15} parent=35 // loop_exit
                _
            $region36: #{alexnet_forward.15} parent=27 // pred_fallthru
              _
          $region28: #{alexnet_forward.15} parent=23 // pred_fallthru
            _
          %275 = vnop
        $region24: #{alexnet_forward.15} parent=19 // pred_fallthru
          _
        // Predicated region
        $region62: #{alexnet_forward.15} parent=19 // pred_check
          %p276 = pneg %p78
        $region63: #{alexnet_forward.15} parent=19 // pred_check_branch
          %278 = sbr.rel (%p276) target = $region65
        $region64: #{alexnet_forward.15} parent=19 // pred_region
          %s279 = smul.u32 16, %s18
          %p280 = scmp.lt.s32.totalorder %s279, 47
          %s281 = scalar_select %p280, %s279, 47
          %p282 = scmp.lt.s32.totalorder %s17, 0
          %s283 = scalar_select %p282, %s17, 0
          %s284 = sadd.s32 %s283, %s281
          %s285 = smul.addr %s284, 4
          %s286 = scalar_lea.vmem %s1, %s285
          %s287 = smul.u32 16, %s18
        $region65: #{alexnet_forward.15} parent=19 // pred_fallthru
          _
      $region20: #{alexnet_forward.15} parent=5 // pred_fallthru
        _
      %p288 = scmp.le.s32.totalorder 1, %s9
      %p289 = scmp.lt.s32.totalorder %s9, 4
      %p290 = pnand %p288, %p289
      %p291 = pneg %p290
      // Predicated region
      $region66: #{alexnet_forward.15} parent=5 // pred_check
        _
      $region67: #{alexnet_forward.15} parent=5 // pred_check_branch
        %293 = sbr.rel (%p290) target = $region69
      $region68: #{alexnet_forward.15} parent=5 // pred_region
        %s294 = ssub.s32 %s9, 1
        %s295 = sand.u32 %s43, 1
        %s296 = sand.u32 %s43, 1
        %s297 = smul.addr %s296, 64
        %s298 = scalar_lea.vmem [#allocation3], %s297
        // Predicated region
        $region70: #{alexnet_forward.15} parent=68 // pred_check
          %p299 = pneg %p56
        $region71: #{alexnet_forward.15} parent=68 // pred_check_branch
          %301 = sbr.rel (%p299) target = $region73
        $region72: #{alexnet_forward.15} parent=68 // pred_region
          _
        $region73: #{alexnet_forward.15} parent=68 // pred_fallthru
          _
        %s302 = sand.u32 %s43, 1
        %s303 = sand.u32 %s43, 1
        %s304 = smul.addr %s303, 64
        %s305 = scalar_lea.vmem [#allocation3], %s304
        %p306 = pneg %p56
        %p307 = pneg %p53
        %s308 = smul.u32 16, %s21
        %p309 = scmp.lt.s32.totalorder %s308, 47
        %s310 = scalar_select %p309, %s308, 47
        %p311 = scmp.lt.s32.totalorder %s20, 0
        %s312 = scalar_select %p311, %s20, 0
        %s313 = sadd.s32 %s312, %s310
        %s314 = smul.addr %s313, 4
        %s315 = scalar_lea.vmem %s1, %s314
        %p316 = pneg %p84
        %p317 = pneg %p81
        %p318 = scmp.lt.s32.totalorder %s20, 0
        %s319 = scalar_select %p318, %s20, 0
        %s320 = scalar_lea.vmem %s2, %s319
        %p321 = pneg %p110
        %p322 = pneg %p107
        %p323 = pneg %p138
        %p324 = pneg %p135
        %s325 = smul.u32 16, %s19
        %p326 = scmp.lt.s32.totalorder %s325, 15
        %s327 = scalar_select %p326, %s325, 15
        %p328 = scmp.lt.s32.totalorder %s20, 0
        %s329 = scalar_select %p328, %s20, 0
        %s330 = sadd.s32 %s329, %s327
        %s331 = smul.addr %s330, 8
        %s332 = scalar_lea.vmem %s3, %s331
        %s333 = smul.u32 16, %s19
        %s334 = smul.u32 16, %s21
        %p335 = scmp.lt.s32.totalorder %s334, 47
        %s336 = scalar_select %p335, %s334, 47
        %p337 = scmp.lt.s32.totalorder %s20, 0
        %s338 = scalar_select %p337, %s20, 0
        %s339 = sadd.s32 %s338, %s336
        %s340 = smul.addr %s339, 4
        %s341 = scalar_lea.vmem %s1, %s340
        %s342 = smul.u32 16, %s21
        %p343 = scmp.lt.s32.totalorder %s20, 0
        %s344 = scalar_select %p343, %s20, 0
        %s345 = scalar_lea.vmem %s2, %s344
        %s346 = smul.u32 16, %s19
        %p347 = scmp.lt.s32.totalorder %s346, 15
        %s348 = scalar_select %p347, %s346, 15
        %p349 = scmp.lt.s32.totalorder %s20, 0
        %s350 = scalar_select %p349, %s20, 0
        %s351 = sadd.s32 %s350, %s348
        %s352 = smul.addr %s351, 8
        %s353 = scalar_lea.vmem %s3, %s352
        %s354 = smul.u32 16, %s19
        %p356 = scmp.eq.s32.totalorder %s21, 0
        // Predicated region
        $region74: #{alexnet_forward.15} parent=68 // pred_check
          %p357 = pneg %p356
        $region75: #{alexnet_forward.15} parent=68 // pred_check_branch
          %359 = sbr.rel (%p357) target = $region77
        $region76: #{alexnet_forward.15} parent=68 // pred_region
          %360 = vst [vmem:[#allocation2] sm:$0xff] 0.0
          %361 = vst [vmem:[#allocation2 + $0x8] sm:$0xff] 0.0
          %362 = vst [vmem:[#allocation2 + $0x10] sm:$0xff] 0.0
          %363 = vst [vmem:[#allocation2 + $0x18] sm:$0xff] 0.0
          %364 = vst [vmem:[#allocation2 + $0x20] sm:$0xff] 0.0
          %365 = vst [vmem:[#allocation2 + $0x28] sm:$0xff] 0.0
          %366 = vst [vmem:[#allocation2 + $0x30] sm:$0xff] 0.0
          %367 = vst [vmem:[#allocation2 + $0x38] sm:$0xff] 0.0
          %368 = vst [vmem:[#allocation2 + $0x40] sm:$0xff] 0.0
          %369 = vst [vmem:[#allocation2 + $0x48] sm:$0xff] 0.0
          %370 = vst [vmem:[#allocation2 + $0x50] sm:$0xff] 0.0
          %371 = vst [vmem:[#allocation2 + $0x58] sm:$0xff] 0.0
          %372 = vst [vmem:[#allocation2 + $0x60] sm:$0xff] 0.0
          %373 = vst [vmem:[#allocation2 + $0x68] sm:$0xff] 0.0
          %374 = vst [vmem:[#allocation2 + $0x70] sm:$0xff] 0.0
          %375 = vst [vmem:[#allocation2 + $0x78] sm:$0xff] 0.0
        $region77: #{alexnet_forward.15} parent=68 // pred_fallthru
          _
        %v376 = vld [vmem:[#allocation2] sm:$0xff]
        %v377 = vld [vmem:[#allocation2 + $0x8] sm:$0xff]
        %v378 = vld [vmem:[#allocation2 + $0x10] sm:$0xff]
        %v379 = vld [vmem:[#allocation2 + $0x18] sm:$0xff]
        %v380 = vld [vmem:[#allocation2 + $0x20] sm:$0xff]
        %v381 = vld [vmem:[#allocation2 + $0x28] sm:$0xff]
        %v382 = vld [vmem:[#allocation2 + $0x30] sm:$0xff]
        %v383 = vld [vmem:[#allocation2 + $0x38] sm:$0xff]
        %v384 = vld [vmem:[#allocation2 + $0x40] sm:$0xff]
        %v385 = vld [vmem:[#allocation2 + $0x48] sm:$0xff]
        %v386 = vld [vmem:[#allocation2 + $0x50] sm:$0xff]
        %v387 = vld [vmem:[#allocation2 + $0x58] sm:$0xff]
        %v388 = vld [vmem:[#allocation2 + $0x60] sm:$0xff]
        %v389 = vld [vmem:[#allocation2 + $0x68] sm:$0xff]
        %v390 = vld [vmem:[#allocation2 + $0x70] sm:$0xff]
        %v391 = vld [vmem:[#allocation2 + $0x78] sm:$0xff]
        %v392 = vld [vmem:[%s298] sm:$0xf]
        %v393 = vld [vmem:[%s298 + $0x4] sm:$0xf]
        %v394 = vld [vmem:[%s298 + $0x8] sm:$0xf]
        %v395 = vld [vmem:[%s298 + $0xc] sm:$0xf]
        %v396 = vld [vmem:[%s298 + $0x10] sm:$0xf]
        %v397 = vld [vmem:[%s298 + $0x14] sm:$0xf]
        %v398 = vld [vmem:[%s298 + $0x18] sm:$0xf]
        %v399 = vld [vmem:[%s298 + $0x1c] sm:$0xf]
        %v400 = vld [vmem:[%s298 + $0x20] sm:$0xf]
        %v401 = vld [vmem:[%s298 + $0x24] sm:$0xf]
        %v402 = vld [vmem:[%s298 + $0x28] sm:$0xf]
        %v403 = vld [vmem:[%s298 + $0x2c] sm:$0xf]
        %v404 = vld [vmem:[%s298 + $0x30] sm:$0xf]
        %v405 = vld [vmem:[%s298 + $0x34] sm:$0xf]
        %v406 = vld [vmem:[%s298 + $0x38] sm:$0xf]
        %v407 = vld [vmem:[%s298 + $0x3c] sm:$0xf]
        %v408 = vld [vmem:[%s341] sm:$0xf]
        %v409 = vld [vmem:[%s341 + $0x4] sm:$0xf]
        %v410 = vld [vmem:[%s341 + $0x8] sm:$0xf]
        %v411 = vld [vmem:[%s341 + $0xc] sm:$0xf]
        %v412 = vld [vmem:[%s341 + $0x10] sm:$0xf]
        %v413 = vld [vmem:[%s341 + $0x14] sm:$0xf]
        %v414 = vld [vmem:[%s341 + $0x18] sm:$0xf]
        %v415 = vld [vmem:[%s341 + $0x1c] sm:$0xf]
        %v416 = vld [vmem:[%s341 + $0x20] sm:$0xf]
        %v417 = vld [vmem:[%s341 + $0x24] sm:$0xf]
        %v418 = vld [vmem:[%s341 + $0x28] sm:$0xf]
        %v419 = vld [vmem:[%s341 + $0x2c] sm:$0xf]
        %v420 = vld [vmem:[%s341 + $0x30] sm:$0xf]
        %v421 = vld [vmem:[%s341 + $0x34] sm:$0xf]
        %v422 = vld [vmem:[%s341 + $0x38] sm:$0xf]
        %v423 = vld [vmem:[%s341 + $0x3c] sm:$0xf]
        %v440 = vunpack.c.l.b16 %v392
        %v441 = vunpack.c.l.b16 %v393
        %v442 = vunpack.c.l.b16 %v394
        %v443 = vunpack.c.l.b16 %v395
        %v444 = vunpack.c.l.b16 %v396
        %v445 = vunpack.c.l.b16 %v397
        %v446 = vunpack.c.l.b16 %v398
        %v447 = vunpack.c.l.b16 %v399
        %v448 = vunpack.c.l.b16 %v400
        %v449 = vunpack.c.l.b16 %v401
        %v450 = vunpack.c.l.b16 %v402
        %v451 = vunpack.c.l.b16 %v403
        %v452 = vunpack.c.l.b16 %v404
        %v453 = vunpack.c.l.b16 %v405
        %v454 = vunpack.c.l.b16 %v406
        %v455 = vunpack.c.l.b16 %v407
        %v456 = vpack.c.b16 %v441, %v440
        %v457 = vpack.c.b16 %v443, %v442
        %v458 = vpack.c.b16 %v445, %v444
        %v459 = vpack.c.b16 %v447, %v446
        %v460 = vpack.c.b16 %v449, %v448
        %v461 = vpack.c.b16 %v451, %v450
        %v462 = vpack.c.b16 %v453, %v452
        %v463 = vpack.c.b16 %v455, %v454
        %v488 = vunpack.c.l.b16 %v408
        %v489 = vunpack.c.l.b16 %v409
        %v490 = vunpack.c.l.b16 %v410
        %v491 = vunpack.c.l.b16 %v411
        %v492 = vunpack.c.l.b16 %v412
        %v493 = vunpack.c.l.b16 %v413
        %v494 = vunpack.c.l.b16 %v414
        %v495 = vunpack.c.l.b16 %v415
        %v496 = vunpack.c.l.b16 %v416
        %v497 = vunpack.c.l.b16 %v417
        %v498 = vunpack.c.l.b16 %v418
        %v499 = vunpack.c.l.b16 %v419
        %v500 = vunpack.c.l.b16 %v420
        %v501 = vunpack.c.l.b16 %v421
        %v502 = vunpack.c.l.b16 %v422
        %v503 = vunpack.c.l.b16 %v423
        %v504 = vpack.c.b16 %v489, %v488
        %v505 = vpack.c.b16 %v491, %v490
        %v506 = vpack.c.b16 %v493, %v492
        %v507 = vpack.c.b16 %v495, %v494
        %v508 = vpack.c.b16 %v497, %v496
        %v509 = vpack.c.b16 %v499, %v498
        %v510 = vpack.c.b16 %v501, %v500
        %v511 = vpack.c.b16 %v503, %v502
        %520 = vmatprep.subr.bf16.mxu0 0
        %521 = vmatpush1.bf16.msra.mxu0 %v511
        %522 = vmatprep.subr.bf16.mxu0 0
        %523 = vmatpush1.bf16.msra.mxu0 %v510
        %524 = vmatprep.subr.bf16.mxu0 0
        %525 = vmatpush1.bf16.msra.mxu0 %v509
        %526 = vmatprep.subr.bf16.mxu0 0
        %527 = vmatpush1.bf16.msra.mxu0 %v508
        %528 = vmatprep.subr.bf16.mxu0 0
        %529 = vmatpush1.bf16.msra.mxu0 %v507
        %530 = vmatprep.subr.bf16.mxu0 0
        %531 = vmatpush1.bf16.msra.mxu0 %v506
        %532 = vmatprep.subr.bf16.mxu0 0
        %533 = vmatpush1.bf16.msra.mxu0 %v505
        %534 = vmatprep.subr.bf16.mxu0 0
        %535 = vmatpush1.bf16.msra.mxu0 %v504
        %536 = vmatprep.subr.bf16.mxu0 0
        %537 = vmatpush2.bf16.msra.mxu0 0
        %538 = vmatprep.subr.bf16.mxu0 0
        %539 = vmatpush2.bf16.msra.mxu0 0
        %540 = vmatprep.subr.bf16.mxu0 0
        %541 = vmatpush2.bf16.msra.mxu0 0
        %542 = vmatprep.subr.bf16.mxu0 0
        %543 = vmatpush2.bf16.msra.mxu0 0
        %544 = vmatprep.subr.bf16.mxu0 0
        %545 = vmatpush2.bf16.msra.mxu0 0
        %546 = vmatprep.subr.bf16.mxu0 0
        %547 = vmatpush2.bf16.msra.mxu0 0
        %548 = vmatprep.subr.bf16.mxu0 0
        %549 = vmatpush2.bf16.msra.mxu0 0
        %550 = vmatprep.subr.bf16.mxu0 0
        %551 = vmatpush2.bf16.msra.mxu0 0
        %552 = vmatprep.mubr.bf16.mxu0 0
        %553 = vmatmul.mubr.bf16.gmra.mxu0 %v456
        %v554 = vpop.f32.mrf.mxu0
        %v555 = vadd.f32 0.0, %v554
        %v556 = vpop.f32.mrf.mxu0
        %v557 = vpop.f32.mrf.mxu0
        %v558 = vadd.f32 0.0, %v557
        %v559 = vpop.f32.mrf.mxu0
        %560 = vmatprep.mubr.bf16.mxu0 0
        %561 = vmatmul.mubr.bf16.gmra.mxu0 %v457
        %v562 = vpop.f32.mrf.mxu0
        %v563 = vadd.f32 0.0, %v562
        %v564 = vpop.f32.mrf.mxu0
        %v565 = vpop.f32.mrf.mxu0
        %v566 = vadd.f32 0.0, %v565
        %v567 = vpop.f32.mrf.mxu0
        %568 = vmatprep.mubr.bf16.mxu0 0
        %569 = vmatmul.mubr.bf16.gmra.mxu0 %v458
        %v570 = vpop.f32.mrf.mxu0
        %v571 = vadd.f32 0.0, %v570
        %v572 = vpop.f32.mrf.mxu0
        %v573 = vpop.f32.mrf.mxu0
        %v574 = vadd.f32 0.0, %v573
        %v575 = vpop.f32.mrf.mxu0
        %576 = vmatprep.mubr.bf16.mxu0 0
        %577 = vmatmul.mubr.bf16.gmra.mxu0 %v459
        %v578 = vpop.f32.mrf.mxu0
        %v579 = vadd.f32 0.0, %v578
        %v580 = vpop.f32.mrf.mxu0
        %v581 = vpop.f32.mrf.mxu0
        %v582 = vadd.f32 0.0, %v581
        %v583 = vpop.f32.mrf.mxu0
        %584 = vmatprep.mubr.bf16.mxu0 0
        %585 = vmatmul.mubr.bf16.gmra.mxu0 %v460
        %v586 = vpop.f32.mrf.mxu0
        %v587 = vadd.f32 0.0, %v586
        %v588 = vpop.f32.mrf.mxu0
        %v589 = vpop.f32.mrf.mxu0
        %v590 = vadd.f32 0.0, %v589
        %v591 = vpop.f32.mrf.mxu0
        %592 = vmatprep.mubr.bf16.mxu0 0
        %593 = vmatmul.mubr.bf16.gmra.mxu0 %v461
        %v594 = vpop.f32.mrf.mxu0
        %v595 = vadd.f32 0.0, %v594
        %v596 = vpop.f32.mrf.mxu0
        %v597 = vpop.f32.mrf.mxu0
        %v598 = vadd.f32 0.0, %v597
        %v599 = vpop.f32.mrf.mxu0
        %600 = vmatprep.mubr.bf16.mxu0 0
        %601 = vmatmul.mubr.bf16.gmra.mxu0 %v462
        %v602 = vpop.f32.mrf.mxu0
        %v603 = vadd.f32 0.0, %v602
        %v604 = vpop.f32.mrf.mxu0
        %v605 = vpop.f32.mrf.mxu0
        %v606 = vadd.f32 0.0, %v605
        %v607 = vpop.f32.mrf.mxu0
        %608 = vmatprep.mubr.bf16.mxu0 0
        %609 = vmatmul.mubr.bf16.gmra.mxu0 %v463
        %v610 = vpop.f32.mrf.mxu0
        %v611 = vadd.f32 0.0, %v610
        %v612 = vpop.f32.mrf.mxu0
        %v613 = vpop.f32.mrf.mxu0
        %v614 = vadd.f32 0.0, %v613
        %v615 = vpop.f32.mrf.mxu0
        %616 = vdwg.mxu0
        %v617 = vadd.f32 %v376, %v555
        %v618 = vadd.f32 %v377, %v558
        %v619 = vadd.f32 %v378, %v563
        %v620 = vadd.f32 %v379, %v566
        %v621 = vadd.f32 %v380, %v571
        %v622 = vadd.f32 %v381, %v574
        %v623 = vadd.f32 %v382, %v579
        %v624 = vadd.f32 %v383, %v582
        %v625 = vadd.f32 %v384, %v587
        %v626 = vadd.f32 %v385, %v590
        %v627 = vadd.f32 %v386, %v595
        %v628 = vadd.f32 %v387, %v598
        %v629 = vadd.f32 %v388, %v603
        %v630 = vadd.f32 %v389, %v606
        %v631 = vadd.f32 %v390, %v611
        %v632 = vadd.f32 %v391, %v614
        %633 = vst [vmem:[#allocation2] sm:$0xff] %v617
        %634 = vst [vmem:[#allocation2 + $0x8] sm:$0xff] %v618
        %635 = vst [vmem:[#allocation2 + $0x10] sm:$0xff] %v619
        %636 = vst [vmem:[#allocation2 + $0x18] sm:$0xff] %v620
        %637 = vst [vmem:[#allocation2 + $0x20] sm:$0xff] %v621
        %638 = vst [vmem:[#allocation2 + $0x28] sm:$0xff] %v622
        %639 = vst [vmem:[#allocation2 + $0x30] sm:$0xff] %v623
        %640 = vst [vmem:[#allocation2 + $0x38] sm:$0xff] %v624
        %641 = vst [vmem:[#allocation2 + $0x40] sm:$0xff] %v625
        %642 = vst [vmem:[#allocation2 + $0x48] sm:$0xff] %v626
        %643 = vst [vmem:[#allocation2 + $0x50] sm:$0xff] %v627
        %644 = vst [vmem:[#allocation2 + $0x58] sm:$0xff] %v628
        %645 = vst [vmem:[#allocation2 + $0x60] sm:$0xff] %v629
        %646 = vst [vmem:[#allocation2 + $0x68] sm:$0xff] %v630
        %647 = vst [vmem:[#allocation2 + $0x70] sm:$0xff] %v631
        %648 = vst [vmem:[#allocation2 + $0x78] sm:$0xff] %v632
        %p649 = scmp.eq.s32.totalorder %s21, 2
        // Predicated region
        $region78: #{alexnet_forward.15} parent=68 // pred_check
          %p650 = pneg %p649
        $region79: #{alexnet_forward.15} parent=68 // pred_check_branch
          %652 = sbr.rel (%p650) target = $region81
        $region80: #{alexnet_forward.15} parent=68 // pred_region
          %v653 = vld [vmem:[#allocation2] sm:$0xff]
          %v654 = vld [vmem:[#allocation2 + $0x8] sm:$0xff]
          %v655 = vld [vmem:[#allocation2 + $0x10] sm:$0xff]
          %v656 = vld [vmem:[#allocation2 + $0x18] sm:$0xff]
          %v657 = vld [vmem:[#allocation2 + $0x20] sm:$0xff]
          %v658 = vld [vmem:[#allocation2 + $0x28] sm:$0xff]
          %v659 = vld [vmem:[#allocation2 + $0x30] sm:$0xff]
          %v660 = vld [vmem:[#allocation2 + $0x38] sm:$0xff]
          %v661 = vld [vmem:[#allocation2 + $0x40] sm:$0xff]
          %v662 = vld [vmem:[#allocation2 + $0x48] sm:$0xff]
          %v663 = vld [vmem:[#allocation2 + $0x50] sm:$0xff]
          %v664 = vld [vmem:[#allocation2 + $0x58] sm:$0xff]
          %v665 = vld [vmem:[#allocation2 + $0x60] sm:$0xff]
          %v666 = vld [vmem:[#allocation2 + $0x68] sm:$0xff]
          %v667 = vld [vmem:[#allocation2 + $0x70] sm:$0xff]
          %v668 = vld [vmem:[#allocation2 + $0x78] sm:$0xff]
          %v669 = vld [vmem:[%s345] sm:$0x1]
          %v671 = vlaneseq
          %v672 = vshrl.u32 %v671, 7
          %v673 = vsub.s32 0, %v672
          %v674 = vrot.slane %v669, %v673
          %v676 = vadd.f32 %v653, %v674
          %v677 = vadd.f32 %v654, %v674
          %v678 = vadd.f32 %v655, %v674
          %v679 = vadd.f32 %v656, %v674
          %v680 = vadd.f32 %v657, %v674
          %v681 = vadd.f32 %v658, %v674
          %v682 = vadd.f32 %v659, %v674
          %v683 = vadd.f32 %v660, %v674
          %v684 = vadd.f32 %v661, %v674
          %v685 = vadd.f32 %v662, %v674
          %v686 = vadd.f32 %v663, %v674
          %v687 = vadd.f32 %v664, %v674
          %v688 = vadd.f32 %v665, %v674
          %v689 = vadd.f32 %v666, %v674
          %v690 = vadd.f32 %v667, %v674
          %v691 = vadd.f32 %v668, %v674
          %v692 = vmax.f32 %v676, 0.0
          %v693 = vmax.f32 %v677, 0.0
          %v694 = vmax.f32 %v678, 0.0
          %v695 = vmax.f32 %v679, 0.0
          %v696 = vmax.f32 %v680, 0.0
          %v697 = vmax.f32 %v681, 0.0
          %v698 = vmax.f32 %v682, 0.0
          %v699 = vmax.f32 %v683, 0.0
          %v700 = vmax.f32 %v684, 0.0
          %v701 = vmax.f32 %v685, 0.0
          %v702 = vmax.f32 %v686, 0.0
          %v703 = vmax.f32 %v687, 0.0
          %v704 = vmax.f32 %v688, 0.0
          %v705 = vmax.f32 %v689, 0.0
          %v706 = vmax.f32 %v690, 0.0
          %v707 = vmax.f32 %v691, 0.0
          %708 = vst [vmem:[%s353] sm:$0xff] %v692
          %709 = vst [vmem:[%s353 + $0x8] sm:$0xff] %v693
          %710 = vst [vmem:[%s353 + $0x10] sm:$0xff] %v694
          %711 = vst [vmem:[%s353 + $0x18] sm:$0xff] %v695
          %712 = vst [vmem:[%s353 + $0x20] sm:$0xff] %v696
          %713 = vst [vmem:[%s353 + $0x28] sm:$0xff] %v697
          %714 = vst [vmem:[%s353 + $0x30] sm:$0xff] %v698
          %715 = vst [vmem:[%s353 + $0x38] sm:$0xff] %v699
          %716 = vst [vmem:[%s353 + $0x40] sm:$0xff] %v700
          %717 = vst [vmem:[%s353 + $0x48] sm:$0xff] %v701
          %718 = vst [vmem:[%s353 + $0x50] sm:$0xff] %v702
          %719 = vst [vmem:[%s353 + $0x58] sm:$0xff] %v703
          %720 = vst [vmem:[%s353 + $0x60] sm:$0xff] %v704
          %721 = vst [vmem:[%s353 + $0x68] sm:$0xff] %v705
          %722 = vst [vmem:[%s353 + $0x70] sm:$0xff] %v706
          %723 = vst [vmem:[%s353 + $0x78] sm:$0xff] %v707
        $region81: #{alexnet_forward.15} parent=68 // pred_fallthru
          _
        %s724 = smul.u32 16, %s19
        %p725 = scmp.lt.s32.totalorder %s724, 15
        %s726 = scalar_select %p725, %s724, 15
        %p727 = scmp.lt.s32.totalorder %s20, 0
        %s728 = scalar_select %p727, %s20, 0
        %s729 = sadd.s32 %s728, %s726
        %s730 = smul.addr %s729, 8
        %s731 = scalar_lea.vmem %s3, %s730
        // Predicated region
        $region82: #{alexnet_forward.15} parent=68 // pred_check
          %p732 = pneg %p135
        $region83: #{alexnet_forward.15} parent=68 // pred_check_branch
          %734 = sbr.rel (%p732) target = $region85
        $region84: #{alexnet_forward.15} parent=68 // pred_region
          %s735 = smul.u32 16, %s19
        $region85: #{alexnet_forward.15} parent=68 // pred_fallthru
          _
        // Predicated region
        $region86: #{alexnet_forward.15} parent=68 // pred_check
          %p736 = pneg %p135
        $region87: #{alexnet_forward.15} parent=68 // pred_check_branch
          %738 = sbr.rel (%p736) target = $region89
        $region88: #{alexnet_forward.15} parent=68 // pred_region
          %s739 = smul.u32 16, %s19
          %p740 = scmp.lt.s32.totalorder %s739, 15
          %s741 = scalar_select %p740, %s739, 15
          %p742 = scmp.lt.s32.totalorder %s20, 0
          %s743 = scalar_select %p742, %s20, 0
          %s744 = sadd.s32 %s743, %s741
          %s745 = smul.addr %s744, 8
          %s746 = scalar_lea.vmem %s3, %s745
        $region89: #{alexnet_forward.15} parent=68 // pred_fallthru
          _
      $region69: #{alexnet_forward.15} parent=5 // pred_fallthru
        _
      %p747 = scmp.le.s32.totalorder 2, %s9
      // Predicated region
      $region90: #{alexnet_forward.15} parent=5 // pred_check
        %p748 = pneg %p747
      $region91: #{alexnet_forward.15} parent=5 // pred_check_branch
        %750 = sbr.rel (%p748) target = $region93
      $region92: #{alexnet_forward.15} parent=5 // pred_region
        %s751 = ssub.s32 %s9, 2
      $region93: #{alexnet_forward.15} parent=5 // pred_fallthru
        _
    $region6: #{alexnet_forward.15} parent=1 // loop_footer
      %s13 = sadd.s32 1, %s9
    $region7: #{alexnet_forward.15} parent=1 // loop_footer_branch
      %8 = sbr.rel target = $region3
    $region8: #{alexnet_forward.15} parent=1 // loop_exit
      _

// kernel: alexnet_forward.16
$region0: #{alexnet_forward.16}
  #allocation0 [shape = 'u32[]', space=smem, size = 0x4, offset = 0x4, fixed_abs, tag = 'smem constant byte address 0x4 - core index']
  #allocation1 [shape = 'u32[144,128]{1,0:T(1,128)}', space=vmem, size = 0x12000, scoped, tag = 'internal scratch']
  #allocation2 [shape = 'f32[128,128]{1,0:T(8,128)}', space=vmem, size = 0x10000, scoped, tag = 'scratch operand']
  %s0 = inlined_call_operand.vmem [shape: bf16[128,640], index: 0, kind: input, shape index: {}]
  %s1 = inlined_call_operand.vmem [shape: bf16[640,128], index: 1, kind: input, shape index: {}]
  %s2 = inlined_call_operand.vmem [shape: f32[1,128], index: 2, kind: input, shape index: {}]
  %s3 = inlined_call_operand.vmem [shape: f32[128,128], index: 3, kind: output, shape index: {}]
  %s4 = sld [smem:[#allocation0]]
  $region94: #{alexnet_forward.16} parent=0
    _
  %s6 = ssub.s32 1, %s4
  %s7 = scalar_select 0, %s6, %s4
  $region1: #{alexnet_forward.16} parent=0
    #allocation3 [shape = 'u8[65536]{0}', space=vmem, size = 0x10000, scoped, tag = 'input window, operand 0']
    loop: start=0, step=1, limit=7
    $region2: #{alexnet_forward.16} parent=1 // loop_pre_header
      _
    $region3: #{alexnet_forward.16} parent=1 // loop_header
      %s9 = sphi 0, %s13
      %p10 = scmp.ge.s32.totalorder %s9, 7
      %s16 = sphi 0, %s35
      %s17 = sphi 0, %s31
      %s18 = sphi 0, %s27
      %s19 = sphi 0, %s16
      %s20 = sphi 0, %s17
      %s21 = sphi 0, %s18
      %s22 = sphi 0, %s19
      %s23 = sphi 0, %s20
      %s24 = sphi 0, %s21
      %s40 = sphi 0, %s42
      %s43 = sphi 0, %s40
      %s44 = sphi 0, %s43
      %s60 = sphi 0, %s44
      %s68 = sphi 0, %s70
      %s71 = sphi 0, %s68
      %s72 = sphi 0, %s71
      %s88 = sphi 0, %s72
      %s94 = sphi 0, %s96
      %s97 = sphi 0, %s94
      %s98 = sphi 0, %s97
      %s114 = sphi 0, %s98
      %s122 = sphi 0, %s124
      %s125 = sphi 0, %s122
      %s126 = sphi 0, %s125
      %s142 = sphi 0, %s126
    $region4: #{alexnet_forward.16} parent=1 // loop_header_branch
      %12 = sbr.rel (%p10) target = $region8
    $region5: #{alexnet_forward.16} parent=1 // loop_body
      %s14 = ssub.s32 %s9, 1
      %s15 = ssub.s32 %s9, 2
      %s25 = sadd.s32 1, %s18
      %p26 = scmp.ge.s32.totalorder %s25, 5
      %s27 = scalar_select %p26, 0, %s25
      %s28 = sadd.s32 1, %s17
      %s29 = scalar_select %p26, %s28, %s17
      %p30 = scmp.ge.s32.totalorder %s29, 1
      %s31 = scalar_select %p30, 0, %s29
      %s32 = sadd.s32 1, %s16
      %s33 = scalar_select %p30, %s32, %s16
      %p34 = scmp.ge.s32.totalorder %s33, 1
      %s35 = scalar_select %p34, 0, %s33
      %s36 = ssub.s32 %s16, %s35
      %s37 = ssub.s32 %s18, %s27
      %s38 = sor.u32 %s36, %s37
      %p39 = scmp.eq.s32.totalorder %s38, 0
      %s41 = sadd.s32 %s40, 1
      %s42 = scalar_select %p39, %s40, %s41
      %p45 = pneg %p39
      %p46 = scmp.eq.s32.totalorder %s9, 4
      %p47 = por %p45, %p46
      %p48 = scmp.ne.s32.totalorder %s40, %s43
      %p49 = scmp.eq.s32.totalorder %s9, 0
      %p50 = por %p48, %p49
      %p51 = scmp.ne.s32.totalorder %s40, %s43
      %p52 = scmp.eq.s32.totalorder %s14, 4
      %p53 = por %p51, %p52
      %p54 = scmp.ne.s32.totalorder %s43, %s44
      %p55 = scmp.eq.s32.totalorder %s14, 0
      %p56 = por %p54, %p55
      %p57 = scmp.ne.s32.totalorder %s43, %s44
      %p58 = scmp.eq.s32.totalorder %s15, 4
      %p59 = por %p57, %p58
      %p61 = scmp.ne.s32.totalorder %s44, %s60
      %p62 = scmp.eq.s32.totalorder %s15, 0
      %p63 = por %p61, %p62
      %s64 = ssub.s32 %s18, %s27
      %s65 = ssub.s32 %s17, %s31
      %s66 = sor.u32 %s64, %s65
      %p67 = scmp.eq.s32.totalorder %s66, 0
      %s69 = sadd.s32 %s68, 1
      %s70 = scalar_select %p67, %s68, %s69
      %p73 = pneg %p67
      %p74 = scmp.eq.s32.totalorder %s9, 4
      %p75 = por %p73, %p74
      %p76 = scmp.ne.s32.totalorder %s68, %s71
      %p77 = scmp.eq.s32.totalorder %s9, 0
      %p78 = por %p76, %p77
      %p79 = scmp.ne.s32.totalorder %s68, %s71
      %p80 = scmp.eq.s32.totalorder %s14, 4
      %p81 = por %p79, %p80
      %p82 = scmp.ne.s32.totalorder %s71, %s72
      %p83 = scmp.eq.s32.totalorder %s14, 0
      %p84 = por %p82, %p83
      %p85 = scmp.ne.s32.totalorder %s71, %s72
      %p86 = scmp.eq.s32.totalorder %s15, 4
      %p87 = por %p85, %p86
      %p89 = scmp.ne.s32.totalorder %s72, %s88
      %p90 = scmp.eq.s32.totalorder %s15, 0
      %p91 = por %p89, %p90
      %s92 = ssub.s32 %s17, %s31
      %p93 = scmp.eq.s32.totalorder %s92, 0
      %s95 = sadd.s32 %s94, 1
      %s96 = scalar_select %p93, %s94, %s95
      %p99 = pneg %p93
      %p100 = scmp.eq.s32.totalorder %s9, 4
      %p101 = por %p99, %p100
      %p102 = scmp.ne.s32.totalorder %s94, %s97
      %p103 = scmp.eq.s32.totalorder %s9, 0
      %p104 = por %p102, %p103
      %p105 = scmp.ne.s32.totalorder %s94, %s97
      %p106 = scmp.eq.s32.totalorder %s14, 4
      %p107 = por %p105, %p106
      %p108 = scmp.ne.s32.totalorder %s97, %s98
      %p109 = scmp.eq.s32.totalorder %s14, 0
      %p110 = por %p108, %p109
      %p111 = scmp.ne.s32.totalorder %s97, %s98
      %p112 = scmp.eq.s32.totalorder %s15, 4
      %p113 = por %p111, %p112
      %p115 = scmp.ne.s32.totalorder %s98, %s114
      %p116 = scmp.eq.s32.totalorder %s15, 0
      %p117 = por %p115, %p116
      %s118 = ssub.s32 %s16, %s35
      %s119 = ssub.s32 %s17, %s31
      %s120 = sor.u32 %s118, %s119
      %p121 = scmp.eq.s32.totalorder %s120, 0
      %s123 = sadd.s32 %s122, 1
      %s124 = scalar_select %p121, %s122, %s123
      %p127 = pneg %p121
      %p128 = scmp.eq.s32.totalorder %s9, 4
      %p129 = por %p127, %p128
      %p130 = scmp.ne.s32.totalorder %s122, %s125
      %p131 = scmp.eq.s32.totalorder %s9, 0
      %p132 = por %p130, %p131
      %p133 = scmp.ne.s32.totalorder %s122, %s125
      %p134 = scmp.eq.s32.totalorder %s14, 4
      %p135 = por %p133, %p134
      %p136 = scmp.ne.s32.totalorder %s125, %s126
      %p137 = scmp.eq.s32.totalorder %s14, 0
      %p138 = por %p136, %p137
      %p139 = scmp.ne.s32.totalorder %s125, %s126
      %p140 = scmp.eq.s32.totalorder %s15, 4
      %p141 = por %p139, %p140
      %p143 = scmp.ne.s32.totalorder %s126, %s142
      %p144 = scmp.eq.s32.totalorder %s15, 0
      %p145 = por %p143, %p144
      %p146 = scmp.le.s32.totalorder 1, %s9
      %p147 = scmp.lt.s32.totalorder %s9, 6
      %p148 = pnand %p146, %p147
      %p149 = pneg %p148
      // Predicated region
      $region9: #{alexnet_forward.16} parent=5 // pred_check
        _
      $region10: #{alexnet_forward.16} parent=5 // pred_check_branch
        %151 = sbr.rel (%p148) target = $region12
      $region11: #{alexnet_forward.16} parent=5 // pred_region
        %s152 = ssub.s32 %s9, 1
        // Predicated region
        $region13: #{alexnet_forward.16} parent=11 // pred_check
          %p153 = pneg %p110
        $region14: #{alexnet_forward.16} parent=11 // pred_check_branch
          %155 = sbr.rel (%p153) target = $region16
        $region15: #{alexnet_forward.16} parent=11 // pred_region
          %p156 = scmp.lt.s32.totalorder %s20, 0
          %s157 = scalar_select %p156, %s20, 0
          %s158 = scalar_lea.vmem %s2, %s157
        $region16: #{alexnet_forward.16} parent=11 // pred_fallthru
          _
      $region12: #{alexnet_forward.16} parent=5 // pred_fallthru
        _
      %p159 = scmp.lt.s32.totalorder %s9, 5
      // Predicated region
      $region17: #{alexnet_forward.16} parent=5 // pred_check
        %p160 = pneg %p159
      $region18: #{alexnet_forward.16} parent=5 // pred_check_branch
        %162 = sbr.rel (%p160) target = $region20
      $region19: #{alexnet_forward.16} parent=5 // pred_region
        // Predicated region
        $region21: #{alexnet_forward.16} parent=19 // pred_check
          %p163 = pneg %p50
        $region22: #{alexnet_forward.16} parent=19 // pred_check_branch
          %165 = sbr.rel (%p163) target = $region24
        $region23: #{alexnet_forward.16} parent=19 // pred_region
          %s166 = sand.u32 %s40, 1
          %s167 = sand.u32 %s40, 1
          %s168 = smul.addr %s167, 64
          %s169 = scalar_lea.vmem [#allocation3], %s168
          %s170 = smul.u32 16, %s16
          %s171 = smul.addr %s170, 5
          %s172 = sadd.s32 %s18, %s171
          %s173 = smul.addr %s172, 4
          %s174 = scalar_lea.vmem %s0, %s173
          // Predicated region
          $region25: #{alexnet_forward.16} parent=23 // pred_check
            _
          $region26: #{alexnet_forward.16} parent=23 // pred_check_branch
            %176 = sbr.rel (0) target = $region28
          $region27: #{alexnet_forward.16} parent=23 // pred_region
            // Predicated region
            $region29: #{alexnet_forward.16} parent=27 // pred_check
              _
            $region30: #{alexnet_forward.16} parent=27 // pred_check_branch
              %178 = sbr.rel target = $region32
            $region31: #{alexnet_forward.16} parent=27 // pred_region
              // Predicated region
              $region44: #{alexnet_forward.16} parent=31 // pred_check
                _
              $region45: #{alexnet_forward.16} parent=31 // pred_check_branch
                %224 = sbr.rel (0) target = $region47
              $region46: #{alexnet_forward.16} parent=31 // pred_region
                loop: start=0, step=1, limit=1
                $region48: #{alexnet_forward.16} parent=46 // loop_pre_header
                  _
                $region49: #{alexnet_forward.16} parent=46 // loop_header
                  %s226 = sphi 0, %s230
                  %p227 = scmp.ge.s32.totalorder %s226, 1
                  %s231 = sphi %s174, %s174
                  %s232 = sphi %s169, %s169
                $region50: #{alexnet_forward.16} parent=46 // loop_header_branch
                  %229 = sbr.rel (%p227) target = $region54
                $region51: #{alexnet_forward.16} parent=46 // loop_body
                  _
                $region52: #{alexnet_forward.16} parent=46 // loop_footer
                  %s230 = sadd.s32 1, %s226
                $region53: #{alexnet_forward.16} parent=46 // loop_footer_branch
                  %225 = sbr.rel target = $region49
                $region54: #{alexnet_forward.16} parent=46 // loop_exit
                  _
                %s234 = ssub.s32 16, 1
                loop: start=0, step=1, limit=1
                $region55: #{alexnet_forward.16} parent=46 // loop_pre_header
                  _
                $region56: #{alexnet_forward.16} parent=46 // loop_header
                  %s236 = sphi 0, %s240
                  %p237 = scmp.ge.s32.totalorder %s236, 1
                  %s241 = sphi %s174, %s174
                  %s242 = sphi %s169, %s169
                $region57: #{alexnet_forward.16} parent=46 // loop_header_branch
                  %239 = sbr.rel (%p237) target = $region61
                $region58: #{alexnet_forward.16} parent=46 // loop_body
                  %v243 = vld [vmem:[%s241] sm:%s234]
                  %244 = vst [vmem:[%s242] sm:%s234] %v243
                  %v245 = vld [vmem:[%s241 + $0x14] sm:%s234]
                  %246 = vst [vmem:[%s242 + $0x4] sm:%s234] %v245
                  %v247 = vld [vmem:[%s241 + $0x28] sm:%s234]
                  %248 = vst [vmem:[%s242 + $0x8] sm:%s234] %v247
                  %v249 = vld [vmem:[%s241 + $0x3c] sm:%s234]
                  %250 = vst [vmem:[%s242 + $0xc] sm:%s234] %v249
                  %v251 = vld [vmem:[%s241 + $0x50] sm:%s234]
                  %252 = vst [vmem:[%s242 + $0x10] sm:%s234] %v251
                  %v253 = vld [vmem:[%s241 + $0x64] sm:%s234]
                  %254 = vst [vmem:[%s242 + $0x14] sm:%s234] %v253
                  %v255 = vld [vmem:[%s241 + $0x78] sm:%s234]
                  %256 = vst [vmem:[%s242 + $0x18] sm:%s234] %v255
                  %v257 = vld [vmem:[%s241 + $0x8c] sm:%s234]
                  %258 = vst [vmem:[%s242 + $0x1c] sm:%s234] %v257
                  %v259 = vld [vmem:[%s241 + $0xa0] sm:%s234]
                  %260 = vst [vmem:[%s242 + $0x20] sm:%s234] %v259
                  %v261 = vld [vmem:[%s241 + $0xb4] sm:%s234]
                  %262 = vst [vmem:[%s242 + $0x24] sm:%s234] %v261
                  %v263 = vld [vmem:[%s241 + $0xc8] sm:%s234]
                  %264 = vst [vmem:[%s242 + $0x28] sm:%s234] %v263
                  %v265 = vld [vmem:[%s241 + $0xdc] sm:%s234]
                  %266 = vst [vmem:[%s242 + $0x2c] sm:%s234] %v265
                  %v267 = vld [vmem:[%s241 + $0xf0] sm:%s234]
                  %268 = vst [vmem:[%s242 + $0x30] sm:%s234] %v267
                  %v269 = vld [vmem:[%s241 + $0x104] sm:%s234]
                  %270 = vst [vmem:[%s242 + $0x34] sm:%s234] %v269
                  %v271 = vld [vmem:[%s241 + $0x118] sm:%s234]
                  %272 = vst [vmem:[%s242 + $0x38] sm:%s234] %v271
                  %v273 = vld [vmem:[%s241 + $0x12c] sm:%s234]
                  %274 = vst [vmem:[%s242 + $0x3c] sm:%s234] %v273
                $region59: #{alexnet_forward.16} parent=46 // loop_footer
                  %s240 = sadd.s32 1, %s236
                $region60: #{alexnet_forward.16} parent=46 // loop_footer_branch
                  %235 = sbr.rel target = $region56
                $region61: #{alexnet_forward.16} parent=46 // loop_exit
                  _
              $region47: #{alexnet_forward.16} parent=31 // pred_fallthru
                _
            $region32: #{alexnet_forward.16} parent=27 // pred_fallthru
              _
            // Predicated region
            $region33: #{alexnet_forward.16} parent=27 // pred_check
              _
            $region34: #{alexnet_forward.16} parent=27 // pred_check_branch
              %180 = sbr.rel (0) target = $region36
            $region35: #{alexnet_forward.16} parent=27 // pred_region
              %s182 = ssub.s32 16, 1
              loop: start=0, step=1, limit=1
              $region37: #{alexnet_forward.16} parent=35 // loop_pre_header
                _
              $region38: #{alexnet_forward.16} parent=35 // loop_header
                %s184 = sphi 0, %s188
                %p185 = scmp.ge.s32.totalorder %s184, 1
                %s189 = sphi %s174, %s174
                %s190 = sphi %s169, %s169
              $region39: #{alexnet_forward.16} parent=35 // loop_header_branch
                %187 = sbr.rel (%p185) target = $region43
              $region40: #{alexnet_forward.16} parent=35 // loop_body
                %v191 = vld [vmem:[%s189] sm:%s182]
                %192 = vst [vmem:[%s190] sm:%s182] %v191
                %v193 = vld [vmem:[%s189 + $0x14] sm:%s182]
                %194 = vst [vmem:[%s190 + $0x4] sm:%s182] %v193
                %v195 = vld [vmem:[%s189 + $0x28] sm:%s182]
                %196 = vst [vmem:[%s190 + $0x8] sm:%s182] %v195
                %v197 = vld [vmem:[%s189 + $0x3c] sm:%s182]
                %198 = vst [vmem:[%s190 + $0xc] sm:%s182] %v197
                %v199 = vld [vmem:[%s189 + $0x50] sm:%s182]
                %200 = vst [vmem:[%s190 + $0x10] sm:%s182] %v199
                %v201 = vld [vmem:[%s189 + $0x64] sm:%s182]
                %202 = vst [vmem:[%s190 + $0x14] sm:%s182] %v201
                %v203 = vld [vmem:[%s189 + $0x78] sm:%s182]
                %204 = vst [vmem:[%s190 + $0x18] sm:%s182] %v203
                %v205 = vld [vmem:[%s189 + $0x8c] sm:%s182]
                %206 = vst [vmem:[%s190 + $0x1c] sm:%s182] %v205
                %v207 = vld [vmem:[%s189 + $0xa0] sm:%s182]
                %208 = vst [vmem:[%s190 + $0x20] sm:%s182] %v207
                %v209 = vld [vmem:[%s189 + $0xb4] sm:%s182]
                %210 = vst [vmem:[%s190 + $0x24] sm:%s182] %v209
                %v211 = vld [vmem:[%s189 + $0xc8] sm:%s182]
                %212 = vst [vmem:[%s190 + $0x28] sm:%s182] %v211
                %v213 = vld [vmem:[%s189 + $0xdc] sm:%s182]
                %214 = vst [vmem:[%s190 + $0x2c] sm:%s182] %v213
                %v215 = vld [vmem:[%s189 + $0xf0] sm:%s182]
                %216 = vst [vmem:[%s190 + $0x30] sm:%s182] %v215
                %v217 = vld [vmem:[%s189 + $0x104] sm:%s182]
                %218 = vst [vmem:[%s190 + $0x34] sm:%s182] %v217
                %v219 = vld [vmem:[%s189 + $0x118] sm:%s182]
                %220 = vst [vmem:[%s190 + $0x38] sm:%s182] %v219
                %v221 = vld [vmem:[%s189 + $0x12c] sm:%s182]
                %222 = vst [vmem:[%s190 + $0x3c] sm:%s182] %v221
              $region41: #{alexnet_forward.16} parent=35 // loop_footer
                %s188 = sadd.s32 1, %s184
              $region42: #{alexnet_forward.16} parent=35 // loop_footer_branch
                %183 = sbr.rel target = $region38
              $region43: #{alexnet_forward.16} parent=35 // loop_exit
                _
            $region36: #{alexnet_forward.16} parent=27 // pred_fallthru
              _
          $region28: #{alexnet_forward.16} parent=23 // pred_fallthru
            _
          %275 = vnop
        $region24: #{alexnet_forward.16} parent=19 // pred_fallthru
          _
        // Predicated region
        $region62: #{alexnet_forward.16} parent=19 // pred_check
          %p276 = pneg %p78
        $region63: #{alexnet_forward.16} parent=19 // pred_check_branch
          %278 = sbr.rel (%p276) target = $region65
        $region64: #{alexnet_forward.16} parent=19 // pred_region
          %s279 = smul.u32 16, %s18
          %p280 = scmp.lt.s32.totalorder %s279, 79
          %s281 = scalar_select %p280, %s279, 79
          %p282 = scmp.lt.s32.totalorder %s17, 0
          %s283 = scalar_select %p282, %s17, 0
          %s284 = sadd.s32 %s283, %s281
          %s285 = smul.addr %s284, 4
          %s286 = scalar_lea.vmem %s1, %s285
          %s287 = smul.u32 16, %s18
        $region65: #{alexnet_forward.16} parent=19 // pred_fallthru
          _
      $region20: #{alexnet_forward.16} parent=5 // pred_fallthru
        _
      %p288 = scmp.le.s32.totalorder 1, %s9
      %p289 = scmp.lt.s32.totalorder %s9, 6
      %p290 = pnand %p288, %p289
      %p291 = pneg %p290
      // Predicated region
      $region66: #{alexnet_forward.16} parent=5 // pred_check
        _
      $region67: #{alexnet_forward.16} parent=5 // pred_check_branch
        %293 = sbr.rel (%p290) target = $region69
      $region68: #{alexnet_forward.16} parent=5 // pred_region
        %s294 = ssub.s32 %s9, 1
        %s295 = sand.u32 %s43, 1
        %s296 = sand.u32 %s43, 1
        %s297 = smul.addr %s296, 64
        %s298 = scalar_lea.vmem [#allocation3], %s297
        // Predicated region
        $region70: #{alexnet_forward.16} parent=68 // pred_check
          %p299 = pneg %p56
        $region71: #{alexnet_forward.16} parent=68 // pred_check_branch
          %301 = sbr.rel (%p299) target = $region73
        $region72: #{alexnet_forward.16} parent=68 // pred_region
          _
        $region73: #{alexnet_forward.16} parent=68 // pred_fallthru
          _
        %s302 = sand.u32 %s43, 1
        %s303 = sand.u32 %s43, 1
        %s304 = smul.addr %s303, 64
        %s305 = scalar_lea.vmem [#allocation3], %s304
        %p306 = pneg %p56
        %p307 = pneg %p53
        %s308 = smul.u32 16, %s21
        %p309 = scmp.lt.s32.totalorder %s308, 79
        %s310 = scalar_select %p309, %s308, 79
        %p311 = scmp.lt.s32.totalorder %s20, 0
        %s312 = scalar_select %p311, %s20, 0
        %s313 = sadd.s32 %s312, %s310
        %s314 = smul.addr %s313, 4
        %s315 = scalar_lea.vmem %s1, %s314
        %p316 = pneg %p84
        %p317 = pneg %p81
        %p318 = scmp.lt.s32.totalorder %s20, 0
        %s319 = scalar_select %p318, %s20, 0
        %s320 = scalar_lea.vmem %s2, %s319
        %p321 = pneg %p110
        %p322 = pneg %p107
        %p323 = pneg %p138
        %p324 = pneg %p135
        %s325 = smul.u32 16, %s19
        %p326 = scmp.lt.s32.totalorder %s325, 15
        %s327 = scalar_select %p326, %s325, 15
        %p328 = scmp.lt.s32.totalorder %s20, 0
        %s329 = scalar_select %p328, %s20, 0
        %s330 = sadd.s32 %s329, %s327
        %s331 = smul.addr %s330, 8
        %s332 = scalar_lea.vmem %s3, %s331
        %s333 = smul.u32 16, %s19
        %s334 = smul.u32 16, %s21
        %p335 = scmp.lt.s32.totalorder %s334, 79
        %s336 = scalar_select %p335, %s334, 79
        %p337 = scmp.lt.s32.totalorder %s20, 0
        %s338 = scalar_select %p337, %s20, 0
        %s339 = sadd.s32 %s338, %s336
        %s340 = smul.addr %s339, 4
        %s341 = scalar_lea.vmem %s1, %s340
        %s342 = smul.u32 16, %s21
        %p343 = scmp.lt.s32.totalorder %s20, 0
        %s344 = scalar_select %p343, %s20, 0
        %s345 = scalar_lea.vmem %s2, %s344
        %s346 = smul.u32 16, %s19
        %p347 = scmp.lt.s32.totalorder %s346, 15
        %s348 = scalar_select %p347, %s346, 15
        %p349 = scmp.lt.s32.totalorder %s20, 0
        %s350 = scalar_select %p349, %s20, 0
        %s351 = sadd.s32 %s350, %s348
        %s352 = smul.addr %s351, 8
        %s353 = scalar_lea.vmem %s3, %s352
        %s354 = smul.u32 16, %s19
        %p356 = scmp.eq.s32.totalorder %s21, 0
        // Predicated region
        $region74: #{alexnet_forward.16} parent=68 // pred_check
          %p357 = pneg %p356
        $region75: #{alexnet_forward.16} parent=68 // pred_check_branch
          %359 = sbr.rel (%p357) target = $region77
        $region76: #{alexnet_forward.16} parent=68 // pred_region
          %360 = vst [vmem:[#allocation2] sm:$0xff] 0.0
          %361 = vst [vmem:[#allocation2 + $0x8] sm:$0xff] 0.0
          %362 = vst [vmem:[#allocation2 + $0x10] sm:$0xff] 0.0
          %363 = vst [vmem:[#allocation2 + $0x18] sm:$0xff] 0.0
          %364 = vst [vmem:[#allocation2 + $0x20] sm:$0xff] 0.0
          %365 = vst [vmem:[#allocation2 + $0x28] sm:$0xff] 0.0
          %366 = vst [vmem:[#allocation2 + $0x30] sm:$0xff] 0.0
          %367 = vst [vmem:[#allocation2 + $0x38] sm:$0xff] 0.0
          %368 = vst [vmem:[#allocation2 + $0x40] sm:$0xff] 0.0
          %369 = vst [vmem:[#allocation2 + $0x48] sm:$0xff] 0.0
          %370 = vst [vmem:[#allocation2 + $0x50] sm:$0xff] 0.0
          %371 = vst [vmem:[#allocation2 + $0x58] sm:$0xff] 0.0
          %372 = vst [vmem:[#allocation2 + $0x60] sm:$0xff] 0.0
          %373 = vst [vmem:[#allocation2 + $0x68] sm:$0xff] 0.0
          %374 = vst [vmem:[#allocation2 + $0x70] sm:$0xff] 0.0
          %375 = vst [vmem:[#allocation2 + $0x78] sm:$0xff] 0.0
        $region77: #{alexnet_forward.16} parent=68 // pred_fallthru
          _
        %v376 = vld [vmem:[#allocation2] sm:$0xff]
        %v377 = vld [vmem:[#allocation2 + $0x8] sm:$0xff]
        %v378 = vld [vmem:[#allocation2 + $0x10] sm:$0xff]
        %v379 = vld [vmem:[#allocation2 + $0x18] sm:$0xff]
        %v380 = vld [vmem:[#allocation2 + $0x20] sm:$0xff]
        %v381 = vld [vmem:[#allocation2 + $0x28] sm:$0xff]
        %v382 = vld [vmem:[#allocation2 + $0x30] sm:$0xff]
        %v383 = vld [vmem:[#allocation2 + $0x38] sm:$0xff]
        %v384 = vld [vmem:[#allocation2 + $0x40] sm:$0xff]
        %v385 = vld [vmem:[#allocation2 + $0x48] sm:$0xff]
        %v386 = vld [vmem:[#allocation2 + $0x50] sm:$0xff]
        %v387 = vld [vmem:[#allocation2 + $0x58] sm:$0xff]
        %v388 = vld [vmem:[#allocation2 + $0x60] sm:$0xff]
        %v389 = vld [vmem:[#allocation2 + $0x68] sm:$0xff]
        %v390 = vld [vmem:[#allocation2 + $0x70] sm:$0xff]
        %v391 = vld [vmem:[#allocation2 + $0x78] sm:$0xff]
        %v392 = vld [vmem:[%s298] sm:$0xf]
        %v393 = vld [vmem:[%s298 + $0x4] sm:$0xf]
        %v394 = vld [vmem:[%s298 + $0x8] sm:$0xf]
        %v395 = vld [vmem:[%s298 + $0xc] sm:$0xf]
        %v396 = vld [vmem:[%s298 + $0x10] sm:$0xf]
        %v397 = vld [vmem:[%s298 + $0x14] sm:$0xf]
        %v398 = vld [vmem:[%s298 + $0x18] sm:$0xf]
        %v399 = vld [vmem:[%s298 + $0x1c] sm:$0xf]
        %v400 = vld [vmem:[%s298 + $0x20] sm:$0xf]
        %v401 = vld [vmem:[%s298 + $0x24] sm:$0xf]
        %v402 = vld [vmem:[%s298 + $0x28] sm:$0xf]
        %v403 = vld [vmem:[%s298 + $0x2c] sm:$0xf]
        %v404 = vld [vmem:[%s298 + $0x30] sm:$0xf]
        %v405 = vld [vmem:[%s298 + $0x34] sm:$0xf]
        %v406 = vld [vmem:[%s298 + $0x38] sm:$0xf]
        %v407 = vld [vmem:[%s298 + $0x3c] sm:$0xf]
        %v408 = vld [vmem:[%s341] sm:$0xf]
        %v409 = vld [vmem:[%s341 + $0x4] sm:$0xf]
        %v410 = vld [vmem:[%s341 + $0x8] sm:$0xf]
        %v411 = vld [vmem:[%s341 + $0xc] sm:$0xf]
        %v412 = vld [vmem:[%s341 + $0x10] sm:$0xf]
        %v413 = vld [vmem:[%s341 + $0x14] sm:$0xf]
        %v414 = vld [vmem:[%s341 + $0x18] sm:$0xf]
        %v415 = vld [vmem:[%s341 + $0x1c] sm:$0xf]
        %v416 = vld [vmem:[%s341 + $0x20] sm:$0xf]
        %v417 = vld [vmem:[%s341 + $0x24] sm:$0xf]
        %v418 = vld [vmem:[%s341 + $0x28] sm:$0xf]
        %v419 = vld [vmem:[%s341 + $0x2c] sm:$0xf]
        %v420 = vld [vmem:[%s341 + $0x30] sm:$0xf]
        %v421 = vld [vmem:[%s341 + $0x34] sm:$0xf]
        %v422 = vld [vmem:[%s341 + $0x38] sm:$0xf]
        %v423 = vld [vmem:[%s341 + $0x3c] sm:$0xf]
        %v440 = vunpack.c.l.b16 %v392
        %v441 = vunpack.c.l.b16 %v393
        %v442 = vunpack.c.l.b16 %v394
        %v443 = vunpack.c.l.b16 %v395
        %v444 = vunpack.c.l.b16 %v396
        %v445 = vunpack.c.l.b16 %v397
        %v446 = vunpack.c.l.b16 %v398
        %v447 = vunpack.c.l.b16 %v399
        %v448 = vunpack.c.l.b16 %v400
        %v449 = vunpack.c.l.b16 %v401
        %v450 = vunpack.c.l.b16 %v402
        %v451 = vunpack.c.l.b16 %v403
        %v452 = vunpack.c.l.b16 %v404
        %v453 = vunpack.c.l.b16 %v405
        %v454 = vunpack.c.l.b16 %v406
        %v455 = vunpack.c.l.b16 %v407
        %v456 = vpack.c.b16 %v441, %v440
        %v457 = vpack.c.b16 %v443, %v442
        %v458 = vpack.c.b16 %v445, %v444
        %v459 = vpack.c.b16 %v447, %v446
        %v460 = vpack.c.b16 %v449, %v448
        %v461 = vpack.c.b16 %v451, %v450
        %v462 = vpack.c.b16 %v453, %v452
        %v463 = vpack.c.b16 %v455, %v454
        %v488 = vunpack.c.l.b16 %v408
        %v489 = vunpack.c.l.b16 %v409
        %v490 = vunpack.c.l.b16 %v410
        %v491 = vunpack.c.l.b16 %v411
        %v492 = vunpack.c.l.b16 %v412
        %v493 = vunpack.c.l.b16 %v413
        %v494 = vunpack.c.l.b16 %v414
        %v495 = vunpack.c.l.b16 %v415
        %v496 = vunpack.c.l.b16 %v416
        %v497 = vunpack.c.l.b16 %v417
        %v498 = vunpack.c.l.b16 %v418
        %v499 = vunpack.c.l.b16 %v419
        %v500 = vunpack.c.l.b16 %v420
        %v501 = vunpack.c.l.b16 %v421
        %v502 = vunpack.c.l.b16 %v422
        %v503 = vunpack.c.l.b16 %v423
        %v504 = vpack.c.b16 %v489, %v488
        %v505 = vpack.c.b16 %v491, %v490
        %v506 = vpack.c.b16 %v493, %v492
        %v507 = vpack.c.b16 %v495, %v494
        %v508 = vpack.c.b16 %v497, %v496
        %v509 = vpack.c.b16 %v499, %v498
        %v510 = vpack.c.b16 %v501, %v500
        %v511 = vpack.c.b16 %v503, %v502
        %520 = vmatprep.subr.bf16.mxu0 0
        %521 = vmatpush1.bf16.msra.mxu0 %v511
        %522 = vmatprep.subr.bf16.mxu0 0
        %523 = vmatpush1.bf16.msra.mxu0 %v510
        %524 = vmatprep.subr.bf16.mxu0 0
        %525 = vmatpush1.bf16.msra.mxu0 %v509
        %526 = vmatprep.subr.bf16.mxu0 0
        %527 = vmatpush1.bf16.msra.mxu0 %v508
        %528 = vmatprep.subr.bf16.mxu0 0
        %529 = vmatpush1.bf16.msra.mxu0 %v507
        %530 = vmatprep.subr.bf16.mxu0 0
        %531 = vmatpush1.bf16.msra.mxu0 %v506
        %532 = vmatprep.subr.bf16.mxu0 0
        %533 = vmatpush1.bf16.msra.mxu0 %v505
        %534 = vmatprep.subr.bf16.mxu0 0
        %535 = vmatpush1.bf16.msra.mxu0 %v504
        %536 = vmatprep.subr.bf16.mxu0 0
        %537 = vmatpush2.bf16.msra.mxu0 0
        %538 = vmatprep.subr.bf16.mxu0 0
        %539 = vmatpush2.bf16.msra.mxu0 0
        %540 = vmatprep.subr.bf16.mxu0 0
        %541 = vmatpush2.bf16.msra.mxu0 0
        %542 = vmatprep.subr.bf16.mxu0 0
        %543 = vmatpush2.bf16.msra.mxu0 0
        %544 = vmatprep.subr.bf16.mxu0 0
        %545 = vmatpush2.bf16.msra.mxu0 0
        %546 = vmatprep.subr.bf16.mxu0 0
        %547 = vmatpush2.bf16.msra.mxu0 0
        %548 = vmatprep.subr.bf16.mxu0 0
        %549 = vmatpush2.bf16.msra.mxu0 0
        %550 = vmatprep.subr.bf16.mxu0 0
        %551 = vmatpush2.bf16.msra.mxu0 0
        %552 = vmatprep.mubr.bf16.mxu0 0
        %553 = vmatmul.mubr.bf16.gmra.mxu0 %v456
        %v554 = vpop.f32.mrf.mxu0
        %v555 = vadd.f32 0.0, %v554
        %v556 = vpop.f32.mrf.mxu0
        %v557 = vpop.f32.mrf.mxu0
        %v558 = vadd.f32 0.0, %v557
        %v559 = vpop.f32.mrf.mxu0
        %560 = vmatprep.mubr.bf16.mxu0 0
        %561 = vmatmul.mubr.bf16.gmra.mxu0 %v457
        %v562 = vpop.f32.mrf.mxu0
        %v563 = vadd.f32 0.0, %v562
        %v564 = vpop.f32.mrf.mxu0
        %v565 = vpop.f32.mrf.mxu0
        %v566 = vadd.f32 0.0, %v565
        %v567 = vpop.f32.mrf.mxu0
        %568 = vmatprep.mubr.bf16.mxu0 0
        %569 = vmatmul.mubr.bf16.gmra.mxu0 %v458
        %v570 = vpop.f32.mrf.mxu0
        %v571 = vadd.f32 0.0, %v570
        %v572 = vpop.f32.mrf.mxu0
        %v573 = vpop.f32.mrf.mxu0
        %v574 = vadd.f32 0.0, %v573
        %v575 = vpop.f32.mrf.mxu0
        %576 = vmatprep.mubr.bf16.mxu0 0
        %577 = vmatmul.mubr.bf16.gmra.mxu0 %v459
        %v578 = vpop.f32.mrf.mxu0
        %v579 = vadd.f32 0.0, %v578
        %v580 = vpop.f32.mrf.mxu0
        %v581 = vpop.f32.mrf.mxu0
        %v582 = vadd.f32 0.0, %v581
        %v583 = vpop.f32.mrf.mxu0
        %584 = vmatprep.mubr.bf16.mxu0 0
        %585 = vmatmul.mubr.bf16.gmra.mxu0 %v460
        %v586 = vpop.f32.mrf.mxu0
        %v587 = vadd.f32 0.0, %v586
        %v588 = vpop.f32.mrf.mxu0
        %v589 = vpop.f32.mrf.mxu0
        %v590 = vadd.f32 0.0, %v589
        %v591 = vpop.f32.mrf.mxu0
        %592 = vmatprep.mubr.bf16.mxu0 0
        %593 = vmatmul.mubr.bf16.gmra.mxu0 %v461
        %v594 = vpop.f32.mrf.mxu0
        %v595 = vadd.f32 0.0, %v594
        %v596 = vpop.f32.mrf.mxu0
        %v597 = vpop.f32.mrf.mxu0
        %v598 = vadd.f32 0.0, %v597
        %v599 = vpop.f32.mrf.mxu0
        %600 = vmatprep.mubr.bf16.mxu0 0
        %601 = vmatmul.mubr.bf16.gmra.mxu0 %v462
        %v602 = vpop.f32.mrf.mxu0
        %v603 = vadd.f32 0.0, %v602
        %v604 = vpop.f32.mrf.mxu0
        %v605 = vpop.f32.mrf.mxu0
        %v606 = vadd.f32 0.0, %v605
        %v607 = vpop.f32.mrf.mxu0
        %608 = vmatprep.mubr.bf16.mxu0 0
        %609 = vmatmul.mubr.bf16.gmra.mxu0 %v463
        %v610 = vpop.f32.mrf.mxu0
        %v611 = vadd.f32 0.0, %v610
        %v612 = vpop.f32.mrf.mxu0
        %v613 = vpop.f32.mrf.mxu0
        %v614 = vadd.f32 0.0, %v613
        %v615 = vpop.f32.mrf.mxu0
        %616 = vdwg.mxu0
        %v617 = vadd.f32 %v376, %v555
        %v618 = vadd.f32 %v377, %v558
        %v619 = vadd.f32 %v378, %v563
        %v620 = vadd.f32 %v379, %v566
        %v621 = vadd.f32 %v380, %v571
        %v622 = vadd.f32 %v381, %v574
        %v623 = vadd.f32 %v382, %v579
        %v624 = vadd.f32 %v383, %v582
        %v625 = vadd.f32 %v384, %v587
        %v626 = vadd.f32 %v385, %v590
        %v627 = vadd.f32 %v386, %v595
        %v628 = vadd.f32 %v387, %v598
        %v629 = vadd.f32 %v388, %v603
        %v630 = vadd.f32 %v389, %v606
        %v631 = vadd.f32 %v390, %v611
        %v632 = vadd.f32 %v391, %v614
        %633 = vst [vmem:[#allocation2] sm:$0xff] %v617
        %634 = vst [vmem:[#allocation2 + $0x8] sm:$0xff] %v618
        %635 = vst [vmem:[#allocation2 + $0x10] sm:$0xff] %v619
        %636 = vst [vmem:[#allocation2 + $0x18] sm:$0xff] %v620
        %637 = vst [vmem:[#allocation2 + $0x20] sm:$0xff] %v621
        %638 = vst [vmem:[#allocation2 + $0x28] sm:$0xff] %v622
        %639 = vst [vmem:[#allocation2 + $0x30] sm:$0xff] %v623
        %640 = vst [vmem:[#allocation2 + $0x38] sm:$0xff] %v624
        %641 = vst [vmem:[#allocation2 + $0x40] sm:$0xff] %v625
        %642 = vst [vmem:[#allocation2 + $0x48] sm:$0xff] %v626
        %643 = vst [vmem:[#allocation2 + $0x50] sm:$0xff] %v627
        %644 = vst [vmem:[#allocation2 + $0x58] sm:$0xff] %v628
        %645 = vst [vmem:[#allocation2 + $0x60] sm:$0xff] %v629
        %646 = vst [vmem:[#allocation2 + $0x68] sm:$0xff] %v630
        %647 = vst [vmem:[#allocation2 + $0x70] sm:$0xff] %v631
        %648 = vst [vmem:[#allocation2 + $0x78] sm:$0xff] %v632
        %p649 = scmp.eq.s32.totalorder %s21, 4
        // Predicated region
        $region78: #{alexnet_forward.16} parent=68 // pred_check
          %p650 = pneg %p649
        $region79: #{alexnet_forward.16} parent=68 // pred_check_branch
          %652 = sbr.rel (%p650) target = $region81
        $region80: #{alexnet_forward.16} parent=68 // pred_region
          %v653 = vld [vmem:[#allocation2] sm:$0xff]
          %v654 = vld [vmem:[#allocation2 + $0x8] sm:$0xff]
          %v655 = vld [vmem:[#allocation2 + $0x10] sm:$0xff]
          %v656 = vld [vmem:[#allocation2 + $0x18] sm:$0xff]
          %v657 = vld [vmem:[#allocation2 + $0x20] sm:$0xff]
          %v658 = vld [vmem:[#allocation2 + $0x28] sm:$0xff]
          %v659 = vld [vmem:[#allocation2 + $0x30] sm:$0xff]
          %v660 = vld [vmem:[#allocation2 + $0x38] sm:$0xff]
          %v661 = vld [vmem:[#allocation2 + $0x40] sm:$0xff]
          %v662 = vld [vmem:[#allocation2 + $0x48] sm:$0xff]
          %v663 = vld [vmem:[#allocation2 + $0x50] sm:$0xff]
          %v664 = vld [vmem:[#allocation2 + $0x58] sm:$0xff]
          %v665 = vld [vmem:[#allocation2 + $0x60] sm:$0xff]
          %v666 = vld [vmem:[#allocation2 + $0x68] sm:$0xff]
          %v667 = vld [vmem:[#allocation2 + $0x70] sm:$0xff]
          %v668 = vld [vmem:[#allocation2 + $0x78] sm:$0xff]
          %v669 = vld [vmem:[%s345] sm:$0x1]
          %v671 = vlaneseq
          %v672 = vshrl.u32 %v671, 7
          %v673 = vsub.s32 0, %v672
          %v674 = vrot.slane %v669, %v673
          %v676 = vadd.f32 %v653, %v674
          %v677 = vadd.f32 %v654, %v674
          %v678 = vadd.f32 %v655, %v674
          %v679 = vadd.f32 %v656, %v674
          %v680 = vadd.f32 %v657, %v674
          %v681 = vadd.f32 %v658, %v674
          %v682 = vadd.f32 %v659, %v674
          %v683 = vadd.f32 %v660, %v674
          %v684 = vadd.f32 %v661, %v674
          %v685 = vadd.f32 %v662, %v674
          %v686 = vadd.f32 %v663, %v674
          %v687 = vadd.f32 %v664, %v674
          %v688 = vadd.f32 %v665, %v674
          %v689 = vadd.f32 %v666, %v674
          %v690 = vadd.f32 %v667, %v674
          %v691 = vadd.f32 %v668, %v674
          %v692 = vmax.f32 %v676, 0.0
          %v693 = vmax.f32 %v677, 0.0
          %v694 = vmax.f32 %v678, 0.0
          %v695 = vmax.f32 %v679, 0.0
          %v696 = vmax.f32 %v680, 0.0
          %v697 = vmax.f32 %v681, 0.0
          %v698 = vmax.f32 %v682, 0.0
          %v699 = vmax.f32 %v683, 0.0
          %v700 = vmax.f32 %v684, 0.0
          %v701 = vmax.f32 %v685, 0.0
          %v702 = vmax.f32 %v686, 0.0
          %v703 = vmax.f32 %v687, 0.0
          %v704 = vmax.f32 %v688, 0.0
          %v705 = vmax.f32 %v689, 0.0
          %v706 = vmax.f32 %v690, 0.0
          %v707 = vmax.f32 %v691, 0.0
          %708 = vst [vmem:[%s353] sm:$0xff] %v692
          %709 = vst [vmem:[%s353 + $0x8] sm:$0xff] %v693
          %710 = vst [vmem:[%s353 + $0x10] sm:$0xff] %v694
          %711 = vst [vmem:[%s353 + $0x18] sm:$0xff] %v695
          %712 = vst [vmem:[%s353 + $0x20] sm:$0xff] %v696
          %713 = vst [vmem:[%s353 + $0x28] sm:$0xff] %v697
          %714 = vst [vmem:[%s353 + $0x30] sm:$0xff] %v698
          %715 = vst [vmem:[%s353 + $0x38] sm:$0xff] %v699
          %716 = vst [vmem:[%s353 + $0x40] sm:$0xff] %v700
          %717 = vst [vmem:[%s353 + $0x48] sm:$0xff] %v701
          %718 = vst [vmem:[%s353 + $0x50] sm:$0xff] %v702
          %719 = vst [vmem:[%s353 + $0x58] sm:$0xff] %v703
          %720 = vst [vmem:[%s353 + $0x60] sm:$0xff] %v704
          %721 = vst [vmem:[%s353 + $0x68] sm:$0xff] %v705
          %722 = vst [vmem:[%s353 + $0x70] sm:$0xff] %v706
          %723 = vst [vmem:[%s353 + $0x78] sm:$0xff] %v707
        $region81: #{alexnet_forward.16} parent=68 // pred_fallthru
          _
        %s724 = smul.u32 16, %s19
        %p725 = scmp.lt.s32.totalorder %s724, 15
        %s726 = scalar_select %p725, %s724, 15
        %p727 = scmp.lt.s32.totalorder %s20, 0
        %s728 = scalar_select %p727, %s20, 0
        %s729 = sadd.s32 %s728, %s726
        %s730 = smul.addr %s729, 8
        %s731 = scalar_lea.vmem %s3, %s730
        // Predicated region
        $region82: #{alexnet_forward.16} parent=68 // pred_check
          %p732 = pneg %p135
        $region83: #{alexnet_forward.16} parent=68 // pred_check_branch
          %734 = sbr.rel (%p732) target = $region85
        $region84: #{alexnet_forward.16} parent=68 // pred_region
          %s735 = smul.u32 16, %s19
        $region85: #{alexnet_forward.16} parent=68 // pred_fallthru
          _
        // Predicated region
        $region86: #{alexnet_forward.16} parent=68 // pred_check
          %p736 = pneg %p135
        $region87: #{alexnet_forward.16} parent=68 // pred_check_branch
          %738 = sbr.rel (%p736) target = $region89
        $region88: #{alexnet_forward.16} parent=68 // pred_region
          %s739 = smul.u32 16, %s19
          %p740 = scmp.lt.s32.totalorder %s739, 15
          %s741 = scalar_select %p740, %s739, 15
          %p742 = scmp.lt.s32.totalorder %s20, 0
          %s743 = scalar_select %p742, %s20, 0
          %s744 = sadd.s32 %s743, %s741
          %s745 = smul.addr %s744, 8
          %s746 = scalar_lea.vmem %s3, %s745
        $region89: #{alexnet_forward.16} parent=68 // pred_fallthru
          _
      $region69: #{alexnet_forward.16} parent=5 // pred_fallthru
        _
      %p747 = scmp.le.s32.totalorder 2, %s9
      // Predicated region
      $region90: #{alexnet_forward.16} parent=5 // pred_check
        %p748 = pneg %p747
      $region91: #{alexnet_forward.16} parent=5 // pred_check_branch
        %750 = sbr.rel (%p748) target = $region93
      $region92: #{alexnet_forward.16} parent=5 // pred_region
        %s751 = ssub.s32 %s9, 2
      $region93: #{alexnet_forward.16} parent=5 // pred_fallthru
        _
    $region6: #{alexnet_forward.16} parent=1 // loop_footer
      %s13 = sadd.s32 1, %s9
    $region7: #{alexnet_forward.16} parent=1 // loop_footer_branch
      %8 = sbr.rel target = $region3
    $region8: #{alexnet_forward.16} parent=1 // loop_exit
      _

// kernel: alexnet_forward.18
$region0: #{alexnet_forward.18}
  #allocation0 [shape = 'u32[]', space=smem, size = 0x4, offset = 0x4, fixed_abs, tag = 'smem constant byte address 0x4 - core index']
  #allocation1 [shape = 'u32[144,128]{1,0:T(1,128)}', space=vmem, size = 0x12000, scoped, tag = 'internal scratch']
  %s0 = inlined_call_operand.vmem [shape: f32[2,4,2,4,256], index: 0, kind: input, shape index: {}]
  %s1 = inlined_call_operand.vmem [shape: f32[2,4,4,128], index: 1, kind: output, shape index: {}]
  %s2 = sld [smem:[#allocation0]]
  $region37: #{alexnet_forward.18} parent=0
    _
  %s4 = ssub.s32 1, %s2
  %s5 = scalar_select 0, %s4, %s2
  loop: start=0, step=1, limit=4
  $region2: #{alexnet_forward.18} parent=0 // loop_pre_header
    _
  $region3: #{alexnet_forward.18} parent=0 // loop_header
    %s7 = sphi 0, %s11
    %p8 = scmp.ge.s32.totalorder %s7, 4
    %s17 = sphi 0, %s19
    %s20 = sphi 0, %s17
    %s21 = sphi 0, %s20
    %s37 = sphi 0, %s21
    %s43 = sphi 0, %s45
    %s46 = sphi 0, %s43
    %s47 = sphi 0, %s46
    %s63 = sphi 0, %s47
  $region4: #{alexnet_forward.18} parent=0 // loop_header_branch
    %10 = sbr.rel (%p8) target = $region8
  $region5: #{alexnet_forward.18} parent=0 // loop_body
    %s12 = ssub.s32 %s7, 1
    %s13 = ssub.s32 %s7, 2
    %s14 = sadd.s32 %s7, 1
    %s15 = ssub.s32 %s7, %s14
    %p16 = scmp.eq.s32.totalorder %s15, 0
    %s18 = sadd.s32 %s17, 1
    %s19 = scalar_select %p16, %s17, %s18
    %p22 = pneg %p16
    %p23 = scmp.eq.s32.totalorder %s7, 1
    %p24 = por %p22, %p23
    %p25 = scmp.ne.s32.totalorder %s17, %s20
    %p26 = scmp.eq.s32.totalorder %s7, 0
    %p27 = por %p25, %p26
    %p28 = scmp.ne.s32.totalorder %s17, %s20
    %p29 = scmp.eq.s32.totalorder %s12, 1
    %p30 = por %p28, %p29
    %p31 = scmp.ne.s32.totalorder %s20, %s21
    %p32 = scmp.eq.s32.totalorder %s12, 0
    %p33 = por %p31, %p32
    %p34 = scmp.ne.s32.totalorder %s20, %s21
    %p35 = scmp.eq.s32.totalorder %s13, 1
    %p36 = por %p34, %p35
    %p38 = scmp.ne.s32.totalorder %s21, %s37
    %p39 = scmp.eq.s32.totalorder %s13, 0
    %p40 = por %p38, %p39
    %s41 = ssub.s32 %s7, %s14
    %p42 = scmp.eq.s32.totalorder %s41, 0
    %s44 = sadd.s32 %s43, 1
    %s45 = scalar_select %p42, %s43, %s44
    %p48 = pneg %p42
    %p49 = scmp.eq.s32.totalorder %s7, 1
    %p50 = por %p48, %p49
    %p51 = scmp.ne.s32.totalorder %s43, %s46
    %p52 = scmp.eq.s32.totalorder %s7, 0
    %p53 = por %p51, %p52
    %p54 = scmp.ne.s32.totalorder %s43, %s46
    %p55 = scmp.eq.s32.totalorder %s12, 1
    %p56 = por %p54, %p55
    %p57 = scmp.ne.s32.totalorder %s46, %s47
    %p58 = scmp.eq.s32.totalorder %s12, 0
    %p59 = por %p57, %p58
    %p60 = scmp.ne.s32.totalorder %s46, %s47
    %p61 = scmp.eq.s32.totalorder %s13, 1
    %p62 = por %p60, %p61
    %p64 = scmp.ne.s32.totalorder %s47, %s63
    %p65 = scmp.eq.s32.totalorder %s13, 0
    %p66 = por %p64, %p65
    %p67 = scmp.le.s32.totalorder 1, %s7
    %p68 = scmp.lt.s32.totalorder %s7, 3
    %p69 = pnand %p67, %p68
    %p70 = pneg %p69
    // Predicated region
    $region9: #{alexnet_forward.18} parent=5 // pred_check
      _
    $region10: #{alexnet_forward.18} parent=5 // pred_check_branch
      %72 = sbr.rel (%p69) target = $region12
    $region11: #{alexnet_forward.18} parent=5 // pred_region
      %s73 = ssub.s32 %s7, 1
    $region12: #{alexnet_forward.18} parent=5 // pred_fallthru
      _
    %p74 = scmp.lt.s32.totalorder %s7, 2
    // Predicated region
    $region13: #{alexnet_forward.18} parent=5 // pred_check
      %p75 = pneg %p74
    $region14: #{alexnet_forward.18} parent=5 // pred_check_branch
      %77 = sbr.rel (%p75) target = $region16
    $region15: #{alexnet_forward.18} parent=5 // pred_region
      // Predicated region
      $region17: #{alexnet_forward.18} parent=15 // pred_check
        %p78 = pneg %p27
      $region18: #{alexnet_forward.18} parent=15 // pred_check_branch
        %80 = sbr.rel (%p78) target = $region20
      $region19: #{alexnet_forward.18} parent=15 // pred_region
        %p81 = scmp.lt.s32.totalorder %s7, 1
        %s82 = scalar_select %p81, %s7, 1
        %s83 = smul.addr %s82, 16
        %s84 = smul.addr %s83, 4
        %s85 = scalar_lea.vmem %s0, %s84
      $region20: #{alexnet_forward.18} parent=15 // pred_fallthru
        _
    $region16: #{alexnet_forward.18} parent=5 // pred_fallthru
      _
    %p86 = scmp.le.s32.totalorder 1, %s7
    %p87 = scmp.lt.s32.totalorder %s7, 3
    %p88 = pnand %p86, %p87
    %p89 = pneg %p88
    // Predicated region
    $region21: #{alexnet_forward.18} parent=5 // pred_check
      _
    $region22: #{alexnet_forward.18} parent=5 // pred_check_branch
      %91 = sbr.rel (%p88) target = $region24
    $region23: #{alexnet_forward.18} parent=5 // pred_region
      %s92 = ssub.s32 %s7, 1
      %p93 = scmp.lt.s32.totalorder %s12, 1
      %s94 = scalar_select %p93, %s12, 1
      %s95 = smul.addr %s94, 16
      %s96 = smul.addr %s95, 4
      %s97 = scalar_lea.vmem %s0, %s96
      %p98 = pneg %p33
      %p99 = pneg %p30
      %p100 = pneg %p59
      %p101 = pneg %p56
      %p102 = scmp.lt.s32.totalorder %s12, 1
      %s103 = scalar_select %p102, %s12, 1
      %s104 = smul.addr %s103, 4
      %s105 = smul.addr %s104, 4
      %s106 = scalar_lea.vmem %s1, %s105
      %p107 = scmp.lt.s32.totalorder %s12, 1
      %s108 = scalar_select %p107, %s12, 1
      %s109 = smul.addr %s108, 16
      %s110 = smul.addr %s109, 4
      %s111 = scalar_lea.vmem %s0, %s110
      %p112 = scmp.lt.s32.totalorder %s12, 1
      %s113 = scalar_select %p112, %s12, 1
      %s114 = smul.addr %s113, 4
      %s115 = smul.addr %s114, 4
      %s116 = scalar_lea.vmem %s1, %s115
      %v117 = vld [vmem:[%s111] sm:$0xff]
      %v118 = vld [vmem:[%s111 + $0x8] sm:$0xff]
      %v119 = vld [vmem:[%s111 + $0x10] sm:$0xff]
      %v120 = vld [vmem:[%s111 + $0x18] sm:$0xff]
      %v121 = vld [vmem:[%s111 + $0x20] sm:$0xff]
      %v122 = vld [vmem:[%s111 + $0x28] sm:$0xff]
      %v123 = vld [vmem:[%s111 + $0x30] sm:$0xff]
      %v124 = vld [vmem:[%s111 + $0x38] sm:$0xff]
      %v125 = vmax.f32 %v117, %v118
      %v126 = vmax.f32 %v119, %v120
      %v127 = vmax.f32 %v121, %v122
      %v128 = vmax.f32 %v123, %v124
      %v133 = vrot.slane %v125, 4
      %v134 = vrot.slane %v126, 4
      %v135 = vrot.slane %v127, 4
      %v136 = vrot.slane %v128, 4
      %v141 = vmax.f32 %v125, %v133
      %v142 = vmax.f32 %v126, %v134
      %v143 = vmax.f32 %v127, %v135
      %v144 = vmax.f32 %v128, %v136
      %145 = vst [vmem:[%s116] sm:$0xf] %v141
      %146 = vst [vmem:[%s116 + $0x4] sm:$0xf] %v142
      %147 = vst [vmem:[%s116 + $0x8] sm:$0xf] %v143
      %148 = vst [vmem:[%s116 + $0xc] sm:$0xf] %v144
      %p149 = scmp.lt.s32.totalorder %s12, 1
      %s150 = scalar_select %p149, %s12, 1
      %s151 = smul.addr %s150, 4
      %s152 = smul.addr %s151, 4
      %s153 = scalar_lea.vmem %s1, %s152
      // Predicated region
      $region25: #{alexnet_forward.18} parent=23 // pred_check
        %p154 = pneg %p56
      $region26: #{alexnet_forward.18} parent=23 // pred_check_branch
        %156 = sbr.rel (%p154) target = $region28
      $region27: #{alexnet_forward.18} parent=23 // pred_region
        _
      $region28: #{alexnet_forward.18} parent=23 // pred_fallthru
        _
    $region24: #{alexnet_forward.18} parent=5 // pred_fallthru
      _
    %p157 = scmp.le.s32.totalorder 2, %s7
    // Predicated region
    $region29: #{alexnet_forward.18} parent=5 // pred_check
      %p158 = pneg %p157
    $region30: #{alexnet_forward.18} parent=5 // pred_check_branch
      %160 = sbr.rel (%p158) target = $region32
    $region31: #{alexnet_forward.18} parent=5 // pred_region
      %s161 = ssub.s32 %s7, 2
      // Predicated region
      $region33: #{alexnet_forward.18} parent=31 // pred_check
        %p162 = pneg %p62
      $region34: #{alexnet_forward.18} parent=31 // pred_check_branch
        %164 = sbr.rel (%p162) target = $region36
      $region35: #{alexnet_forward.18} parent=31 // pred_region
        %p165 = scmp.lt.s32.totalorder %s13, 1
        %s166 = scalar_select %p165, %s13, 1
        %s167 = smul.addr %s166, 4
        %s168 = smul.addr %s167, 4
        %s169 = scalar_lea.vmem %s1, %s168
      $region36: #{alexnet_forward.18} parent=31 // pred_fallthru
        _
    $region32: #{alexnet_forward.18} parent=5 // pred_fallthru
      _
  $region6: #{alexnet_forward.18} parent=0 // loop_footer
    %s11 = sadd.s32 1, %s7
  $region7: #{alexnet_forward.18} parent=0 // loop_footer_branch
    %6 = sbr.rel target = $region3
  $region8: #{alexnet_forward.18} parent=0 // loop_exit
    _

// kernel: alexnet_forward.17
$region0: #{alexnet_forward.17}
  #allocation0 [shape = 'u32[]', space=smem, size = 0x4, offset = 0x4, fixed_abs, tag = 'smem constant byte address 0x4 - core index']
  #allocation1 [shape = 'u32[144,128]{1,0:T(1,128)}', space=vmem, size = 0x12000, scoped, tag = 'internal scratch']
  #allocation2 [shape = 'f32[128,128]{1,0:T(8,128)}', space=vmem, size = 0x10000, scoped, tag = 'scratch operand']
  %s0 = inlined_call_operand.vmem [shape: bf16[128,1152], index: 0, kind: input, shape index: {}]
  %s1 = inlined_call_operand.vmem [shape: bf16[1152,128], index: 1, kind: input, shape index: {}]
  %s2 = inlined_call_operand.vmem [shape: f32[1,128], index: 2, kind: input, shape index: {}]
  %s3 = inlined_call_operand.vmem [shape: f32[128,128], index: 3, kind: output, shape index: {}]
  %s4 = sld [smem:[#allocation0]]
  $region94: #{alexnet_forward.17} parent=0
    _
  %s6 = ssub.s32 1, %s4
  %s7 = scalar_select 0, %s6, %s4
  $region1: #{alexnet_forward.17} parent=0
    #allocation3 [shape = 'u8[65536]{0}', space=vmem, size = 0x10000, scoped, tag = 'input window, operand 0']
    loop: start=0, step=1, limit=11
    $region2: #{alexnet_forward.17} parent=1 // loop_pre_header
      _
    $region3: #{alexnet_forward.17} parent=1 // loop_header
      %s9 = sphi 0, %s13
      %p10 = scmp.ge.s32.totalorder %s9, 11
      %s16 = sphi 0, %s35
      %s17 = sphi 0, %s31
      %s18 = sphi 0, %s27
      %s19 = sphi 0, %s16
      %s20 = sphi 0, %s17
      %s21 = sphi 0, %s18
      %s22 = sphi 0, %s19
      %s23 = sphi 0, %s20
      %s24 = sphi 0, %s21
      %s40 = sphi 0, %s42
      %s43 = sphi 0, %s40
      %s44 = sphi 0, %s43
      %s60 = sphi 0, %s44
      %s68 = sphi 0, %s70
      %s71 = sphi 0, %s68
      %s72 = sphi 0, %s71
      %s88 = sphi 0, %s72
      %s94 = sphi 0, %s96
      %s97 = sphi 0, %s94
      %s98 = sphi 0, %s97
      %s114 = sphi 0, %s98
      %s122 = sphi 0, %s124
      %s125 = sphi 0, %s122
      %s126 = sphi 0, %s125
      %s142 = sphi 0, %s126
    $region4: #{alexnet_forward.17} parent=1 // loop_header_branch
      %12 = sbr.rel (%p10) target = $region8
    $region5: #{alexnet_forward.17} parent=1 // loop_body
      %s14 = ssub.s32 %s9, 1
      %s15 = ssub.s32 %s9, 2
      %s25 = sadd.s32 1, %s18
      %p26 = scmp.ge.s32.totalorder %s25, 9
      %s27 = scalar_select %p26, 0, %s25
      %s28 = sadd.s32 1, %s17
      %s29 = scalar_select %p26, %s28, %s17
      %p30 = scmp.ge.s32.totalorder %s29, 1
      %s31 = scalar_select %p30, 0, %s29
      %s32 = sadd.s32 1, %s16
      %s33 = scalar_select %p30, %s32, %s16
      %p34 = scmp.ge.s32.totalorder %s33, 1
      %s35 = scalar_select %p34, 0, %s33
      %s36 = ssub.s32 %s16, %s35
      %s37 = ssub.s32 %s18, %s27
      %s38 = sor.u32 %s36, %s37
      %p39 = scmp.eq.s32.totalorder %s38, 0
      %s41 = sadd.s32 %s40, 1
      %s42 = scalar_select %p39, %s40, %s41
      %p45 = pneg %p39
      %p46 = scmp.eq.s32.totalorder %s9, 8
      %p47 = por %p45, %p46
      %p48 = scmp.ne.s32.totalorder %s40, %s43
      %p49 = scmp.eq.s32.totalorder %s9, 0
      %p50 = por %p48, %p49
      %p51 = scmp.ne.s32.totalorder %s40, %s43
      %p52 = scmp.eq.s32.totalorder %s14, 8
      %p53 = por %p51, %p52
      %p54 = scmp.ne.s32.totalorder %s43, %s44
      %p55 = scmp.eq.s32.totalorder %s14, 0
      %p56 = por %p54, %p55
      %p57 = scmp.ne.s32.totalorder %s43, %s44
      %p58 = scmp.eq.s32.totalorder %s15, 8
      %p59 = por %p57, %p58
      %p61 = scmp.ne.s32.totalorder %s44, %s60
      %p62 = scmp.eq.s32.totalorder %s15, 0
      %p63 = por %p61, %p62
      %s64 = ssub.s32 %s18, %s27
      %s65 = ssub.s32 %s17, %s31
      %s66 = sor.u32 %s64, %s65
      %p67 = scmp.eq.s32.totalorder %s66, 0
      %s69 = sadd.s32 %s68, 1
      %s70 = scalar_select %p67, %s68, %s69
      %p73 = pneg %p67
      %p74 = scmp.eq.s32.totalorder %s9, 8
      %p75 = por %p73, %p74
      %p76 = scmp.ne.s32.totalorder %s68, %s71
      %p77 = scmp.eq.s32.totalorder %s9, 0
      %p78 = por %p76, %p77
      %p79 = scmp.ne.s32.totalorder %s68, %s71
      %p80 = scmp.eq.s32.totalorder %s14, 8
      %p81 = por %p79, %p80
      %p82 = scmp.ne.s32.totalorder %s71, %s72
      %p83 = scmp.eq.s32.totalorder %s14, 0
      %p84 = por %p82, %p83
      %p85 = scmp.ne.s32.totalorder %s71, %s72
      %p86 = scmp.eq.s32.totalorder %s15, 8
      %p87 = por %p85, %p86
      %p89 = scmp.ne.s32.totalorder %s72, %s88
      %p90 = scmp.eq.s32.totalorder %s15, 0
      %p91 = por %p89, %p90
      %s92 = ssub.s32 %s17, %s31
      %p93 = scmp.eq.s32.totalorder %s92, 0
      %s95 = sadd.s32 %s94, 1
      %s96 = scalar_select %p93, %s94, %s95
      %p99 = pneg %p93
      %p100 = scmp.eq.s32.totalorder %s9, 8
      %p101 = por %p99, %p100
      %p102 = scmp.ne.s32.totalorder %s94, %s97
      %p103 = scmp.eq.s32.totalorder %s9, 0
      %p104 = por %p102, %p103
      %p105 = scmp.ne.s32.totalorder %s94, %s97
      %p106 = scmp.eq.s32.totalorder %s14, 8
      %p107 = por %p105, %p106
      %p108 = scmp.ne.s32.totalorder %s97, %s98
      %p109 = scmp.eq.s32.totalorder %s14, 0
      %p110 = por %p108, %p109
      %p111 = scmp.ne.s32.totalorder %s97, %s98
      %p112 = scmp.eq.s32.totalorder %s15, 8
      %p113 = por %p111, %p112
      %p115 = scmp.ne.s32.totalorder %s98, %s114
      %p116 = scmp.eq.s32.totalorder %s15, 0
      %p117 = por %p115, %p116
      %s118 = ssub.s32 %s16, %s35
      %s119 = ssub.s32 %s17, %s31
      %s120 = sor.u32 %s118, %s119
      %p121 = scmp.eq.s32.totalorder %s120, 0
      %s123 = sadd.s32 %s122, 1
      %s124 = scalar_select %p121, %s122, %s123
      %p127 = pneg %p121
      %p128 = scmp.eq.s32.totalorder %s9, 8
      %p129 = por %p127, %p128
      %p130 = scmp.ne.s32.totalorder %s122, %s125
      %p131 = scmp.eq.s32.totalorder %s9, 0
      %p132 = por %p130, %p131
      %p133 = scmp.ne.s32.totalorder %s122, %s125
      %p134 = scmp.eq.s32.totalorder %s14, 8
      %p135 = por %p133, %p134
      %p136 = scmp.ne.s32.totalorder %s125, %s126
      %p137 = scmp.eq.s32.totalorder %s14, 0
      %p138 = por %p136, %p137
      %p139 = scmp.ne.s32.totalorder %s125, %s126
      %p140 = scmp.eq.s32.totalorder %s15, 8
      %p141 = por %p139, %p140
      %p143 = scmp.ne.s32.totalorder %s126, %s142
      %p144 = scmp.eq.s32.totalorder %s15, 0
      %p145 = por %p143, %p144
      %p146 = scmp.le.s32.totalorder 1, %s9
      %p147 = scmp.lt.s32.totalorder %s9, 10
      %p148 = pnand %p146, %p147
      %p149 = pneg %p148
      // Predicated region
      $region9: #{alexnet_forward.17} parent=5 // pred_check
        _
      $region10: #{alexnet_forward.17} parent=5 // pred_check_branch
        %151 = sbr.rel (%p148) target = $region12
      $region11: #{alexnet_forward.17} parent=5 // pred_region
        %s152 = ssub.s32 %s9, 1
        // Predicated region
        $region13: #{alexnet_forward.17} parent=11 // pred_check
          %p153 = pneg %p110
        $region14: #{alexnet_forward.17} parent=11 // pred_check_branch
          %155 = sbr.rel (%p153) target = $region16
        $region15: #{alexnet_forward.17} parent=11 // pred_region
          %p156 = scmp.lt.s32.totalorder %s20, 0
          %s157 = scalar_select %p156, %s20, 0
          %s158 = scalar_lea.vmem %s2, %s157
        $region16: #{alexnet_forward.17} parent=11 // pred_fallthru
          _
      $region12: #{alexnet_forward.17} parent=5 // pred_fallthru
        _
      %p159 = scmp.lt.s32.totalorder %s9, 9
      // Predicated region
      $region17: #{alexnet_forward.17} parent=5 // pred_check
        %p160 = pneg %p159
      $region18: #{alexnet_forward.17} parent=5 // pred_check_branch
        %162 = sbr.rel (%p160) target = $region20
      $region19: #{alexnet_forward.17} parent=5 // pred_region
        // Predicated region
        $region21: #{alexnet_forward.17} parent=19 // pred_check
          %p163 = pneg %p50
        $region22: #{alexnet_forward.17} parent=19 // pred_check_branch
          %165 = sbr.rel (%p163) target = $region24
        $region23: #{alexnet_forward.17} parent=19 // pred_region
          %s166 = sand.u32 %s40, 1
          %s167 = sand.u32 %s40, 1
          %s168 = smul.addr %s167, 64
          %s169 = scalar_lea.vmem [#allocation3], %s168
          %s170 = smul.u32 16, %s16
          %s171 = smul.addr %s170, 9
          %s172 = sadd.s32 %s18, %s171
          %s173 = smul.addr %s172, 4
          %s174 = scalar_lea.vmem %s0, %s173
          // Predicated region
          $region25: #{alexnet_forward.17} parent=23 // pred_check
            _
          $region26: #{alexnet_forward.17} parent=23 // pred_check_branch
            %176 = sbr.rel (0) target = $region28
          $region27: #{alexnet_forward.17} parent=23 // pred_region
            // Predicated region
            $region29: #{alexnet_forward.17} parent=27 // pred_check
              _
            $region30: #{alexnet_forward.17} parent=27 // pred_check_branch
              %178 = sbr.rel target = $region32
            $region31: #{alexnet_forward.17} parent=27 // pred_region
              // Predicated region
              $region44: #{alexnet_forward.17} parent=31 // pred_check
                _
              $region45: #{alexnet_forward.17} parent=31 // pred_check_branch
                %224 = sbr.rel (0) target = $region47
              $region46: #{alexnet_forward.17} parent=31 // pred_region
                loop: start=0, step=1, limit=1
                $region48: #{alexnet_forward.17} parent=46 // loop_pre_header
                  _
                $region49: #{alexnet_forward.17} parent=46 // loop_header
                  %s226 = sphi 0, %s230
                  %p227 = scmp.ge.s32.totalorder %s226, 1
                  %s231 = sphi %s174, %s174
                  %s232 = sphi %s169, %s169
                $region50: #{alexnet_forward.17} parent=46 // loop_header_branch
                  %229 = sbr.rel (%p227) target = $region54
                $region51: #{alexnet_forward.17} parent=46 // loop_body
                  _
                $region52: #{alexnet_forward.17} parent=46 // loop_footer
                  %s230 = sadd.s32 1, %s226
                $region53: #{alexnet_forward.17} parent=46 // loop_footer_branch
                  %225 = sbr.rel target = $region49
                $region54: #{alexnet_forward.17} parent=46 // loop_exit
                  _
                %s234 = ssub.s32 16, 1
                loop: start=0, step=1, limit=1
                $region55: #{alexnet_forward.17} parent=46 // loop_pre_header
                  _
                $region56: #{alexnet_forward.17} parent=46 // loop_header
                  %s236 = sphi 0, %s240
                  %p237 = scmp.ge.s32.totalorder %s236, 1
                  %s241 = sphi %s174, %s174
                  %s242 = sphi %s169, %s169
                $region57: #{alexnet_forward.17} parent=46 // loop_header_branch
                  %239 = sbr.rel (%p237) target = $region61
                $region58: #{alexnet_forward.17} parent=46 // loop_body
                  %v243 = vld [vmem:[%s241] sm:%s234]
                  %244 = vst [vmem:[%s242] sm:%s234] %v243
                  %v245 = vld [vmem:[%s241 + $0x24] sm:%s234]
                  %246 = vst [vmem:[%s242 + $0x4] sm:%s234] %v245
                  %v247 = vld [vmem:[%s241 + $0x48] sm:%s234]
                  %248 = vst [vmem:[%s242 + $0x8] sm:%s234] %v247
                  %v249 = vld [vmem:[%s241 + $0x6c] sm:%s234]
                  %250 = vst [vmem:[%s242 + $0xc] sm:%s234] %v249
                  %v251 = vld [vmem:[%s241 + $0x90] sm:%s234]
                  %252 = vst [vmem:[%s242 + $0x10] sm:%s234] %v251
                  %v253 = vld [vmem:[%s241 + $0xb4] sm:%s234]
                  %254 = vst [vmem:[%s242 + $0x14] sm:%s234] %v253
                  %v255 = vld [vmem:[%s241 + $0xd8] sm:%s234]
                  %256 = vst [vmem:[%s242 + $0x18] sm:%s234] %v255
                  %v257 = vld [vmem:[%s241 + $0xfc] sm:%s234]
                  %258 = vst [vmem:[%s242 + $0x1c] sm:%s234] %v257
                  %v259 = vld [vmem:[%s241 + $0x120] sm:%s234]
                  %260 = vst [vmem:[%s242 + $0x20] sm:%s234] %v259
                  %v261 = vld [vmem:[%s241 + $0x144] sm:%s234]
                  %262 = vst [vmem:[%s242 + $0x24] sm:%s234] %v261
                  %v263 = vld [vmem:[%s241 + $0x168] sm:%s234]
                  %264 = vst [vmem:[%s242 + $0x28] sm:%s234] %v263
                  %v265 = vld [vmem:[%s241 + $0x18c] sm:%s234]
                  %266 = vst [vmem:[%s242 + $0x2c] sm:%s234] %v265
                  %v267 = vld [vmem:[%s241 + $0x1b0] sm:%s234]
                  %268 = vst [vmem:[%s242 + $0x30] sm:%s234] %v267
                  %v269 = vld [vmem:[%s241 + $0x1d4] sm:%s234]
                  %270 = vst [vmem:[%s242 + $0x34] sm:%s234] %v269
                  %v271 = vld [vmem:[%s241 + $0x1f8] sm:%s234]
                  %272 = vst [vmem:[%s242 + $0x38] sm:%s234] %v271
                  %v273 = vld [vmem:[%s241 + $0x21c] sm:%s234]
                  %274 = vst [vmem:[%s242 + $0x3c] sm:%s234] %v273
                $region59: #{alexnet_forward.17} parent=46 // loop_footer
                  %s240 = sadd.s32 1, %s236
                $region60: #{alexnet_forward.17} parent=46 // loop_footer_branch
                  %235 = sbr.rel target = $region56
                $region61: #{alexnet_forward.17} parent=46 // loop_exit
                  _
              $region47: #{alexnet_forward.17} parent=31 // pred_fallthru
                _
            $region32: #{alexnet_forward.17} parent=27 // pred_fallthru
              _
            // Predicated region
            $region33: #{alexnet_forward.17} parent=27 // pred_check
              _
            $region34: #{alexnet_forward.17} parent=27 // pred_check_branch
              %180 = sbr.rel (0) target = $region36
            $region35: #{alexnet_forward.17} parent=27 // pred_region
              %s182 = ssub.s32 16, 1
              loop: start=0, step=1, limit=1
              $region37: #{alexnet_forward.17} parent=35 // loop_pre_header
                _
              $region38: #{alexnet_forward.17} parent=35 // loop_header
                %s184 = sphi 0, %s188
                %p185 = scmp.ge.s32.totalorder %s184, 1
                %s189 = sphi %s174, %s174
                %s190 = sphi %s169, %s169
              $region39: #{alexnet_forward.17} parent=35 // loop_header_branch
                %187 = sbr.rel (%p185) target = $region43
              $region40: #{alexnet_forward.17} parent=35 // loop_body
                %v191 = vld [vmem:[%s189] sm:%s182]
                %192 = vst [vmem:[%s190] sm:%s182] %v191
                %v193 = vld [vmem:[%s189 + $0x24] sm:%s182]
                %194 = vst [vmem:[%s190 + $0x4] sm:%s182] %v193
                %v195 = vld [vmem:[%s189 + $0x48] sm:%s182]
                %196 = vst [vmem:[%s190 + $0x8] sm:%s182] %v195
                %v197 = vld [vmem:[%s189 + $0x6c] sm:%s182]
                %198 = vst [vmem:[%s190 + $0xc] sm:%s182] %v197
                %v199 = vld [vmem:[%s189 + $0x90] sm:%s182]
                %200 = vst [vmem:[%s190 + $0x10] sm:%s182] %v199
                %v201 = vld [vmem:[%s189 + $0xb4] sm:%s182]
                %202 = vst [vmem:[%s190 + $0x14] sm:%s182] %v201
                %v203 = vld [vmem:[%s189 + $0xd8] sm:%s182]
                %204 = vst [vmem:[%s190 + $0x18] sm:%s182] %v203
                %v205 = vld [vmem:[%s189 + $0xfc] sm:%s182]
                %206 = vst [vmem:[%s190 + $0x1c] sm:%s182] %v205
                %v207 = vld [vmem:[%s189 + $0x120] sm:%s182]
                %208 = vst [vmem:[%s190 + $0x20] sm:%s182] %v207
                %v209 = vld [vmem:[%s189 + $0x144] sm:%s182]
                %210 = vst [vmem:[%s190 + $0x24] sm:%s182] %v209
                %v211 = vld [vmem:[%s189 + $0x168] sm:%s182]
                %212 = vst [vmem:[%s190 + $0x28] sm:%s182] %v211
                %v213 = vld [vmem:[%s189 + $0x18c] sm:%s182]
                %214 = vst [vmem:[%s190 + $0x2c] sm:%s182] %v213
                %v215 = vld [vmem:[%s189 + $0x1b0] sm:%s182]
                %216 = vst [vmem:[%s190 + $0x30] sm:%s182] %v215
                %v217 = vld [vmem:[%s189 + $0x1d4] sm:%s182]
                %218 = vst [vmem:[%s190 + $0x34] sm:%s182] %v217
                %v219 = vld [vmem:[%s189 + $0x1f8] sm:%s182]
                %220 = vst [vmem:[%s190 + $0x38] sm:%s182] %v219
                %v221 = vld [vmem:[%s189 + $0x21c] sm:%s182]
                %222 = vst [vmem:[%s190 + $0x3c] sm:%s182] %v221
              $region41: #{alexnet_forward.17} parent=35 // loop_footer
                %s188 = sadd.s32 1, %s184
              $region42: #{alexnet_forward.17} parent=35 // loop_footer_branch
                %183 = sbr.rel target = $region38
              $region43: #{alexnet_forward.17} parent=35 // loop_exit
                _
            $region36: #{alexnet_forward.17} parent=27 // pred_fallthru
              _
          $region28: #{alexnet_forward.17} parent=23 // pred_fallthru
            _
          %275 = vnop
        $region24: #{alexnet_forward.17} parent=19 // pred_fallthru
          _
        // Predicated region
        $region62: #{alexnet_forward.17} parent=19 // pred_check
          %p276 = pneg %p78
        $region63: #{alexnet_forward.17} parent=19 // pred_check_branch
          %278 = sbr.rel (%p276) target = $region65
        $region64: #{alexnet_forward.17} parent=19 // pred_region
          %s279 = smul.u32 16, %s18
          %p280 = scmp.lt.s32.totalorder %s279, 143
          %s281 = scalar_select %p280, %s279, 143
          %p282 = scmp.lt.s32.totalorder %s17, 0
          %s283 = scalar_select %p282, %s17, 0
          %s284 = sadd.s32 %s283, %s281
          %s285 = smul.addr %s284, 4
          %s286 = scalar_lea.vmem %s1, %s285
          %s287 = smul.u32 16, %s18
        $region65: #{alexnet_forward.17} parent=19 // pred_fallthru
          _
      $region20: #{alexnet_forward.17} parent=5 // pred_fallthru
        _
      %p288 = scmp.le.s32.totalorder 1, %s9
      %p289 = scmp.lt.s32.totalorder %s9, 10
      %p290 = pnand %p288, %p289
      %p291 = pneg %p290
      // Predicated region
      $region66: #{alexnet_forward.17} parent=5 // pred_check
        _
      $region67: #{alexnet_forward.17} parent=5 // pred_check_branch
        %293 = sbr.rel (%p290) target = $region69
      $region68: #{alexnet_forward.17} parent=5 // pred_region
        %s294 = ssub.s32 %s9, 1
        %s295 = sand.u32 %s43, 1
        %s296 = sand.u32 %s43, 1
        %s297 = smul.addr %s296, 64
        %s298 = scalar_lea.vmem [#allocation3], %s297
        // Predicated region
        $region70: #{alexnet_forward.17} parent=68 // pred_check
          %p299 = pneg %p56
        $region71: #{alexnet_forward.17} parent=68 // pred_check_branch
          %301 = sbr.rel (%p299) target = $region73
        $region72: #{alexnet_forward.17} parent=68 // pred_region
          _
        $region73: #{alexnet_forward.17} parent=68 // pred_fallthru
          _
        %s302 = sand.u32 %s43, 1
        %s303 = sand.u32 %s43, 1
        %s304 = smul.addr %s303, 64
        %s305 = scalar_lea.vmem [#allocation3], %s304
        %p306 = pneg %p56
        %p307 = pneg %p53
        %s308 = smul.u32 16, %s21
        %p309 = scmp.lt.s32.totalorder %s308, 143
        %s310 = scalar_select %p309, %s308, 143
        %p311 = scmp.lt.s32.totalorder %s20, 0
        %s312 = scalar_select %p311, %s20, 0
        %s313 = sadd.s32 %s312, %s310
        %s314 = smul.addr %s313, 4
        %s315 = scalar_lea.vmem %s1, %s314
        %p316 = pneg %p84
        %p317 = pneg %p81
        %p318 = scmp.lt.s32.totalorder %s20, 0
        %s319 = scalar_select %p318, %s20, 0
        %s320 = scalar_lea.vmem %s2, %s319
        %p321 = pneg %p110
        %p322 = pneg %p107
        %p323 = pneg %p138
        %p324 = pneg %p135
        %s325 = smul.u32 16, %s19
        %p326 = scmp.lt.s32.totalorder %s325, 15
        %s327 = scalar_select %p326, %s325, 15
        %p328 = scmp.lt.s32.totalorder %s20, 0
        %s329 = scalar_select %p328, %s20, 0
        %s330 = sadd.s32 %s329, %s327
        %s331 = smul.addr %s330, 8
        %s332 = scalar_lea.vmem %s3, %s331
        %s333 = smul.u32 16, %s19
        %s334 = smul.u32 16, %s21
        %p335 = scmp.lt.s32.totalorder %s334, 143
        %s336 = scalar_select %p335, %s334, 143
        %p337 = scmp.lt.s32.totalorder %s20, 0
        %s338 = scalar_select %p337, %s20, 0
        %s339 = sadd.s32 %s338, %s336
        %s340 = smul.addr %s339, 4
        %s341 = scalar_lea.vmem %s1, %s340
        %s342 = smul.u32 16, %s21
        %p343 = scmp.lt.s32.totalorder %s20, 0
        %s344 = scalar_select %p343, %s20, 0
        %s345 = scalar_lea.vmem %s2, %s344
        %s346 = smul.u32 16, %s19
        %p347 = scmp.lt.s32.totalorder %s346, 15
        %s348 = scalar_select %p347, %s346, 15
        %p349 = scmp.lt.s32.totalorder %s20, 0
        %s350 = scalar_select %p349, %s20, 0
        %s351 = sadd.s32 %s350, %s348
        %s352 = smul.addr %s351, 8
        %s353 = scalar_lea.vmem %s3, %s352
        %s354 = smul.u32 16, %s19
        %p356 = scmp.eq.s32.totalorder %s21, 0
        // Predicated region
        $region74: #{alexnet_forward.17} parent=68 // pred_check
          %p357 = pneg %p356
        $region75: #{alexnet_forward.17} parent=68 // pred_check_branch
          %359 = sbr.rel (%p357) target = $region77
        $region76: #{alexnet_forward.17} parent=68 // pred_region
          %360 = vst [vmem:[#allocation2] sm:$0xff] 0.0
          %361 = vst [vmem:[#allocation2 + $0x8] sm:$0xff] 0.0
          %362 = vst [vmem:[#allocation2 + $0x10] sm:$0xff] 0.0
          %363 = vst [vmem:[#allocation2 + $0x18] sm:$0xff] 0.0
          %364 = vst [vmem:[#allocation2 + $0x20] sm:$0xff] 0.0
          %365 = vst [vmem:[#allocation2 + $0x28] sm:$0xff] 0.0
          %366 = vst [vmem:[#allocation2 + $0x30] sm:$0xff] 0.0
          %367 = vst [vmem:[#allocation2 + $0x38] sm:$0xff] 0.0
          %368 = vst [vmem:[#allocation2 + $0x40] sm:$0xff] 0.0
          %369 = vst [vmem:[#allocation2 + $0x48] sm:$0xff] 0.0
          %370 = vst [vmem:[#allocation2 + $0x50] sm:$0xff] 0.0
          %371 = vst [vmem:[#allocation2 + $0x58] sm:$0xff] 0.0
          %372 = vst [vmem:[#allocation2 + $0x60] sm:$0xff] 0.0
          %373 = vst [vmem:[#allocation2 + $0x68] sm:$0xff] 0.0
          %374 = vst [vmem:[#allocation2 + $0x70] sm:$0xff] 0.0
          %375 = vst [vmem:[#allocation2 + $0x78] sm:$0xff] 0.0
        $region77: #{alexnet_forward.17} parent=68 // pred_fallthru
          _
        %v376 = vld [vmem:[#allocation2] sm:$0xff]
        %v377 = vld [vmem:[#allocation2 + $0x8] sm:$0xff]
        %v378 = vld [vmem:[#allocation2 + $0x10] sm:$0xff]
        %v379 = vld [vmem:[#allocation2 + $0x18] sm:$0xff]
        %v380 = vld [vmem:[#allocation2 + $0x20] sm:$0xff]
        %v381 = vld [vmem:[#allocation2 + $0x28] sm:$0xff]
        %v382 = vld [vmem:[#allocation2 + $0x30] sm:$0xff]
        %v383 = vld [vmem:[#allocation2 + $0x38] sm:$0xff]
        %v384 = vld [vmem:[#allocation2 + $0x40] sm:$0xff]
        %v385 = vld [vmem:[#allocation2 + $0x48] sm:$0xff]
        %v386 = vld [vmem:[#allocation2 + $0x50] sm:$0xff]
        %v387 = vld [vmem:[#allocation2 + $0x58] sm:$0xff]
        %v388 = vld [vmem:[#allocation2 + $0x60] sm:$0xff]
        %v389 = vld [vmem:[#allocation2 + $0x68] sm:$0xff]
        %v390 = vld [vmem:[#allocation2 + $0x70] sm:$0xff]
        %v391 = vld [vmem:[#allocation2 + $0x78] sm:$0xff]
        %v392 = vld [vmem:[%s298] sm:$0xf]
        %v393 = vld [vmem:[%s298 + $0x4] sm:$0xf]
        %v394 = vld [vmem:[%s298 + $0x8] sm:$0xf]
        %v395 = vld [vmem:[%s298 + $0xc] sm:$0xf]
        %v396 = vld [vmem:[%s298 + $0x10] sm:$0xf]
        %v397 = vld [vmem:[%s298 + $0x14] sm:$0xf]
        %v398 = vld [vmem:[%s298 + $0x18] sm:$0xf]
        %v399 = vld [vmem:[%s298 + $0x1c] sm:$0xf]
        %v400 = vld [vmem:[%s298 + $0x20] sm:$0xf]
        %v401 = vld [vmem:[%s298 + $0x24] sm:$0xf]
        %v402 = vld [vmem:[%s298 + $0x28] sm:$0xf]
        %v403 = vld [vmem:[%s298 + $0x2c] sm:$0xf]
        %v404 = vld [vmem:[%s298 + $0x30] sm:$0xf]
        %v405 = vld [vmem:[%s298 + $0x34] sm:$0xf]
        %v406 = vld [vmem:[%s298 + $0x38] sm:$0xf]
        %v407 = vld [vmem:[%s298 + $0x3c] sm:$0xf]
        %v408 = vld [vmem:[%s341] sm:$0xf]
        %v409 = vld [vmem:[%s341 + $0x4] sm:$0xf]
        %v410 = vld [vmem:[%s341 + $0x8] sm:$0xf]
        %v411 = vld [vmem:[%s341 + $0xc] sm:$0xf]
        %v412 = vld [vmem:[%s341 + $0x10] sm:$0xf]
        %v413 = vld [vmem:[%s341 + $0x14] sm:$0xf]
        %v414 = vld [vmem:[%s341 + $0x18] sm:$0xf]
        %v415 = vld [vmem:[%s341 + $0x1c] sm:$0xf]
        %v416 = vld [vmem:[%s341 + $0x20] sm:$0xf]
        %v417 = vld [vmem:[%s341 + $0x24] sm:$0xf]
        %v418 = vld [vmem:[%s341 + $0x28] sm:$0xf]
        %v419 = vld [vmem:[%s341 + $0x2c] sm:$0xf]
        %v420 = vld [vmem:[%s341 + $0x30] sm:$0xf]
        %v421 = vld [vmem:[%s341 + $0x34] sm:$0xf]
        %v422 = vld [vmem:[%s341 + $0x38] sm:$0xf]
        %v423 = vld [vmem:[%s341 + $0x3c] sm:$0xf]
        %v440 = vunpack.c.l.b16 %v392
        %v441 = vunpack.c.l.b16 %v393
        %v442 = vunpack.c.l.b16 %v394
        %v443 = vunpack.c.l.b16 %v395
        %v444 = vunpack.c.l.b16 %v396
        %v445 = vunpack.c.l.b16 %v397
        %v446 = vunpack.c.l.b16 %v398
        %v447 = vunpack.c.l.b16 %v399
        %v448 = vunpack.c.l.b16 %v400
        %v449 = vunpack.c.l.b16 %v401
        %v450 = vunpack.c.l.b16 %v402
        %v451 = vunpack.c.l.b16 %v403
        %v452 = vunpack.c.l.b16 %v404
        %v453 = vunpack.c.l.b16 %v405
        %v454 = vunpack.c.l.b16 %v406
        %v455 = vunpack.c.l.b16 %v407
        %v456 = vpack.c.b16 %v441, %v440
        %v457 = vpack.c.b16 %v443, %v442
        %v458 = vpack.c.b16 %v445, %v444
        %v459 = vpack.c.b16 %v447, %v446
        %v460 = vpack.c.b16 %v449, %v448
        %v461 = vpack.c.b16 %v451, %v450
        %v462 = vpack.c.b16 %v453, %v452
        %v463 = vpack.c.b16 %v455, %v454
        %v488 = vunpack.c.l.b16 %v408
        %v489 = vunpack.c.l.b16 %v409
        %v490 = vunpack.c.l.b16 %v410
        %v491 = vunpack.c.l.b16 %v411
        %v492 = vunpack.c.l.b16 %v412
        %v493 = vunpack.c.l.b16 %v413
        %v494 = vunpack.c.l.b16 %v414
        %v495 = vunpack.c.l.b16 %v415
        %v496 = vunpack.c.l.b16 %v416
        %v497 = vunpack.c.l.b16 %v417
        %v498 = vunpack.c.l.b16 %v418
        %v499 = vunpack.c.l.b16 %v419
        %v500 = vunpack.c.l.b16 %v420
        %v501 = vunpack.c.l.b16 %v421
        %v502 = vunpack.c.l.b16 %v422
        %v503 = vunpack.c.l.b16 %v423
        %v504 = vpack.c.b16 %v489, %v488
        %v505 = vpack.c.b16 %v491, %v490
        %v506 = vpack.c.b16 %v493, %v492
        %v507 = vpack.c.b16 %v495, %v494
        %v508 = vpack.c.b16 %v497, %v496
        %v509 = vpack.c.b16 %v499, %v498
        %v510 = vpack.c.b16 %v501, %v500
        %v511 = vpack.c.b16 %v503, %v502
        %520 = vmatprep.subr.bf16.mxu0 0
        %521 = vmatpush1.bf16.msra.mxu0 %v511
        %522 = vmatprep.subr.bf16.mxu0 0
        %523 = vmatpush1.bf16.msra.mxu0 %v510
        %524 = vmatprep.subr.bf16.mxu0 0
        %525 = vmatpush1.bf16.msra.mxu0 %v509
        %526 = vmatprep.subr.bf16.mxu0 0
        %527 = vmatpush1.bf16.msra.mxu0 %v508
        %528 = vmatprep.subr.bf16.mxu0 0
        %529 = vmatpush1.bf16.msra.mxu0 %v507
        %530 = vmatprep.subr.bf16.mxu0 0
        %531 = vmatpush1.bf16.msra.mxu0 %v506
        %532 = vmatprep.subr.bf16.mxu0 0
        %533 = vmatpush1.bf16.msra.mxu0 %v505
        %534 = vmatprep.subr.bf16.mxu0 0
        %535 = vmatpush1.bf16.msra.mxu0 %v504
        %536 = vmatprep.subr.bf16.mxu0 0
        %537 = vmatpush2.bf16.msra.mxu0 0
        %538 = vmatprep.subr.bf16.mxu0 0
        %539 = vmatpush2.bf16.msra.mxu0 0
        %540 = vmatprep.subr.bf16.mxu0 0
        %541 = vmatpush2.bf16.msra.mxu0 0
        %542 = vmatprep.subr.bf16.mxu0 0
        %543 = vmatpush2.bf16.msra.mxu0 0
        %544 = vmatprep.subr.bf16.mxu0 0
        %545 = vmatpush2.bf16.msra.mxu0 0
        %546 = vmatprep.subr.bf16.mxu0 0
        %547 = vmatpush2.bf16.msra.mxu0 0
        %548 = vmatprep.subr.bf16.mxu0 0
        %549 = vmatpush2.bf16.msra.mxu0 0
        %550 = vmatprep.subr.bf16.mxu0 0
        %551 = vmatpush2.bf16.msra.mxu0 0
        %552 = vmatprep.mubr.bf16.mxu0 0
        %553 = vmatmul.mubr.bf16.gmra.mxu0 %v456
        %v554 = vpop.f32.mrf.mxu0
        %v555 = vadd.f32 0.0, %v554
        %v556 = vpop.f32.mrf.mxu0
        %v557 = vpop.f32.mrf.mxu0
        %v558 = vadd.f32 0.0, %v557
        %v559 = vpop.f32.mrf.mxu0
        %560 = vmatprep.mubr.bf16.mxu0 0
        %561 = vmatmul.mubr.bf16.gmra.mxu0 %v457
        %v562 = vpop.f32.mrf.mxu0
        %v563 = vadd.f32 0.0, %v562
        %v564 = vpop.f32.mrf.mxu0
        %v565 = vpop.f32.mrf.mxu0
        %v566 = vadd.f32 0.0, %v565
        %v567 = vpop.f32.mrf.mxu0
        %568 = vmatprep.mubr.bf16.mxu0 0
        %569 = vmatmul.mubr.bf16.gmra.mxu0 %v458
        %v570 = vpop.f32.mrf.mxu0
        %v571 = vadd.f32 0.0, %v570
        %v572 = vpop.f32.mrf.mxu0
        %v573 = vpop.f32.mrf.mxu0
        %v574 = vadd.f32 0.0, %v573
        %v575 = vpop.f32.mrf.mxu0
        %576 = vmatprep.mubr.bf16.mxu0 0
        %577 = vmatmul.mubr.bf16.gmra.mxu0 %v459
        %v578 = vpop.f32.mrf.mxu0
        %v579 = vadd.f32 0.0, %v578
        %v580 = vpop.f32.mrf.mxu0
        %v581 = vpop.f32.mrf.mxu0
        %v582 = vadd.f32 0.0, %v581
        %v583 = vpop.f32.mrf.mxu0
        %584 = vmatprep.mubr.bf16.mxu0 0
        %585 = vmatmul.mubr.bf16.gmra.mxu0 %v460
        %v586 = vpop.f32.mrf.mxu0
        %v587 = vadd.f32 0.0, %v586
        %v588 = vpop.f32.mrf.mxu0
        %v589 = vpop.f32.mrf.mxu0
        %v590 = vadd.f32 0.0, %v589
        %v591 = vpop.f32.mrf.mxu0
        %592 = vmatprep.mubr.bf16.mxu0 0
        %593 = vmatmul.mubr.bf16.gmra.mxu0 %v461
        %v594 = vpop.f32.mrf.mxu0
        %v595 = vadd.f32 0.0, %v594
        %v596 = vpop.f32.mrf.mxu0
        %v597 = vpop.f32.mrf.mxu0
        %v598 = vadd.f32 0.0, %v597
        %v599 = vpop.f32.mrf.mxu0
        %600 = vmatprep.mubr.bf16.mxu0 0
        %601 = vmatmul.mubr.bf16.gmra.mxu0 %v462
        %v602 = vpop.f32.mrf.mxu0
        %v603 = vadd.f32 0.0, %v602
        %v604 = vpop.f32.mrf.mxu0
        %v605 = vpop.f32.mrf.mxu0
        %v606 = vadd.f32 0.0, %v605
        %v607 = vpop.f32.mrf.mxu0
        %608 = vmatprep.mubr.bf16.mxu0 0
        %609 = vmatmul.mubr.bf16.gmra.mxu0 %v463
        %v610 = vpop.f32.mrf.mxu0
        %v611 = vadd.f32 0.0, %v610
        %v612 = vpop.f32.mrf.mxu0
        %v613 = vpop.f32.mrf.mxu0
        %v614 = vadd.f32 0.0, %v613
        %v615 = vpop.f32.mrf.mxu0
        %616 = vdwg.mxu0
        %v617 = vadd.f32 %v376, %v555
        %v618 = vadd.f32 %v377, %v558
        %v619 = vadd.f32 %v378, %v563
        %v620 = vadd.f32 %v379, %v566
        %v621 = vadd.f32 %v380, %v571
        %v622 = vadd.f32 %v381, %v574
        %v623 = vadd.f32 %v382, %v579
        %v624 = vadd.f32 %v383, %v582
        %v625 = vadd.f32 %v384, %v587
        %v626 = vadd.f32 %v385, %v590
        %v627 = vadd.f32 %v386, %v595
        %v628 = vadd.f32 %v387, %v598
        %v629 = vadd.f32 %v388, %v603
        %v630 = vadd.f32 %v389, %v606
        %v631 = vadd.f32 %v390, %v611
        %v632 = vadd.f32 %v391, %v614
        %633 = vst [vmem:[#allocation2] sm:$0xff] %v617
        %634 = vst [vmem:[#allocation2 + $0x8] sm:$0xff] %v618
        %635 = vst [vmem:[#allocation2 + $0x10] sm:$0xff] %v619
        %636 = vst [vmem:[#allocation2 + $0x18] sm:$0xff] %v620
        %637 = vst [vmem:[#allocation2 + $0x20] sm:$0xff] %v621
        %638 = vst [vmem:[#allocation2 + $0x28] sm:$0xff] %v622
        %639 = vst [vmem:[#allocation2 + $0x30] sm:$0xff] %v623
        %640 = vst [vmem:[#allocation2 + $0x38] sm:$0xff] %v624
        %641 = vst [vmem:[#allocation2 + $0x40] sm:$0xff] %v625
        %642 = vst [vmem:[#allocation2 + $0x48] sm:$0xff] %v626
        %643 = vst [vmem:[#allocation2 + $0x50] sm:$0xff] %v627
        %644 = vst [vmem:[#allocation2 + $0x58] sm:$0xff] %v628
        %645 = vst [vmem:[#allocation2 + $0x60] sm:$0xff] %v629
        %646 = vst [vmem:[#allocation2 + $0x68] sm:$0xff] %v630
        %647 = vst [vmem:[#allocation2 + $0x70] sm:$0xff] %v631
        %648 = vst [vmem:[#allocation2 + $0x78] sm:$0xff] %v632
        %p649 = scmp.eq.s32.totalorder %s21, 8
        // Predicated region
        $region78: #{alexnet_forward.17} parent=68 // pred_check
          %p650 = pneg %p649
        $region79: #{alexnet_forward.17} parent=68 // pred_check_branch
          %652 = sbr.rel (%p650) target = $region81
        $region80: #{alexnet_forward.17} parent=68 // pred_region
          %v653 = vld [vmem:[#allocation2] sm:$0xff]
          %v654 = vld [vmem:[#allocation2 + $0x8] sm:$0xff]
          %v655 = vld [vmem:[#allocation2 + $0x10] sm:$0xff]
          %v656 = vld [vmem:[#allocation2 + $0x18] sm:$0xff]
          %v657 = vld [vmem:[#allocation2 + $0x20] sm:$0xff]
          %v658 = vld [vmem:[#allocation2 + $0x28] sm:$0xff]
          %v659 = vld [vmem:[#allocation2 + $0x30] sm:$0xff]
          %v660 = vld [vmem:[#allocation2 + $0x38] sm:$0xff]
          %v661 = vld [vmem:[#allocation2 + $0x40] sm:$0xff]
          %v662 = vld [vmem:[#allocation2 + $0x48] sm:$0xff]
          %v663 = vld [vmem:[#allocation2 + $0x50] sm:$0xff]
          %v664 = vld [vmem:[#allocation2 + $0x58] sm:$0xff]
          %v665 = vld [vmem:[#allocation2 + $0x60] sm:$0xff]
          %v666 = vld [vmem:[#allocation2 + $0x68] sm:$0xff]
          %v667 = vld [vmem:[#allocation2 + $0x70] sm:$0xff]
          %v668 = vld [vmem:[#allocation2 + $0x78] sm:$0xff]
          %v669 = vld [vmem:[%s345] sm:$0x1]
          %v671 = vlaneseq
          %v672 = vshrl.u32 %v671, 7
          %v673 = vsub.s32 0, %v672
          %v674 = vrot.slane %v669, %v673
          %v676 = vadd.f32 %v653, %v674
          %v677 = vadd.f32 %v654, %v674
          %v678 = vadd.f32 %v655, %v674
          %v679 = vadd.f32 %v656, %v674
          %v680 = vadd.f32 %v657, %v674
          %v681 = vadd.f32 %v658, %v674
          %v682 = vadd.f32 %v659, %v674
          %v683 = vadd.f32 %v660, %v674
          %v684 = vadd.f32 %v661, %v674
          %v685 = vadd.f32 %v662, %v674
          %v686 = vadd.f32 %v663, %v674
          %v687 = vadd.f32 %v664, %v674
          %v688 = vadd.f32 %v665, %v674
          %v689 = vadd.f32 %v666, %v674
          %v690 = vadd.f32 %v667, %v674
          %v691 = vadd.f32 %v668, %v674
          %v692 = vmax.f32 %v676, 0.0
          %v693 = vmax.f32 %v677, 0.0
          %v694 = vmax.f32 %v678, 0.0
          %v695 = vmax.f32 %v679, 0.0
          %v696 = vmax.f32 %v680, 0.0
          %v697 = vmax.f32 %v681, 0.0
          %v698 = vmax.f32 %v682, 0.0
          %v699 = vmax.f32 %v683, 0.0
          %v700 = vmax.f32 %v684, 0.0
          %v701 = vmax.f32 %v685, 0.0
          %v702 = vmax.f32 %v686, 0.0
          %v703 = vmax.f32 %v687, 0.0
          %v704 = vmax.f32 %v688, 0.0
          %v705 = vmax.f32 %v689, 0.0
          %v706 = vmax.f32 %v690, 0.0
          %v707 = vmax.f32 %v691, 0.0
          %708 = vst [vmem:[%s353] sm:$0xff] %v692
          %709 = vst [vmem:[%s353 + $0x8] sm:$0xff] %v693
          %710 = vst [vmem:[%s353 + $0x10] sm:$0xff] %v694
          %711 = vst [vmem:[%s353 + $0x18] sm:$0xff] %v695
          %712 = vst [vmem:[%s353 + $0x20] sm:$0xff] %v696
          %713 = vst [vmem:[%s353 + $0x28] sm:$0xff] %v697
          %714 = vst [vmem:[%s353 + $0x30] sm:$0xff] %v698
          %715 = vst [vmem:[%s353 + $0x38] sm:$0xff] %v699
          %716 = vst [vmem:[%s353 + $0x40] sm:$0xff] %v700
          %717 = vst [vmem:[%s353 + $0x48] sm:$0xff] %v701
          %718 = vst [vmem:[%s353 + $0x50] sm:$0xff] %v702
          %719 = vst [vmem:[%s353 + $0x58] sm:$0xff] %v703
          %720 = vst [vmem:[%s353 + $0x60] sm:$0xff] %v704
          %721 = vst [vmem:[%s353 + $0x68] sm:$0xff] %v705
          %722 = vst [vmem:[%s353 + $0x70] sm:$0xff] %v706
          %723 = vst [vmem:[%s353 + $0x78] sm:$0xff] %v707
        $region81: #{alexnet_forward.17} parent=68 // pred_fallthru
          _
        %s724 = smul.u32 16, %s19
        %p725 = scmp.lt.s32.totalorder %s724, 15
        %s726 = scalar_select %p725, %s724, 15
        %p727 = scmp.lt.s32.totalorder %s20, 0
        %s728 = scalar_select %p727, %s20, 0
        %s729 = sadd.s32 %s728, %s726
        %s730 = smul.addr %s729, 8
        %s731 = scalar_lea.vmem %s3, %s730
        // Predicated region
        $region82: #{alexnet_forward.17} parent=68 // pred_check
          %p732 = pneg %p135
        $region83: #{alexnet_forward.17} parent=68 // pred_check_branch
          %734 = sbr.rel (%p732) target = $region85
        $region84: #{alexnet_forward.17} parent=68 // pred_region
          %s735 = smul.u32 16, %s19
        $region85: #{alexnet_forward.17} parent=68 // pred_fallthru
          _
        // Predicated region
        $region86: #{alexnet_forward.17} parent=68 // pred_check
          %p736 = pneg %p135
        $region87: #{alexnet_forward.17} parent=68 // pred_check_branch
          %738 = sbr.rel (%p736) target = $region89
        $region88: #{alexnet_forward.17} parent=68 // pred_region
          %s739 = smul.u32 16, %s19
          %p740 = scmp.lt.s32.totalorder %s739, 15
          %s741 = scalar_select %p740, %s739, 15
          %p742 = scmp.lt.s32.totalorder %s20, 0
          %s743 = scalar_select %p742, %s20, 0
          %s744 = sadd.s32 %s743, %s741
          %s745 = smul.addr %s744, 8
          %s746 = scalar_lea.vmem %s3, %s745
        $region89: #{alexnet_forward.17} parent=68 // pred_fallthru
          _
      $region69: #{alexnet_forward.17} parent=5 // pred_fallthru
        _
      %p747 = scmp.le.s32.totalorder 2, %s9
      // Predicated region
      $region90: #{alexnet_forward.17} parent=5 // pred_check
        %p748 = pneg %p747
      $region91: #{alexnet_forward.17} parent=5 // pred_check_branch
        %750 = sbr.rel (%p748) target = $region93
      $region92: #{alexnet_forward.17} parent=5 // pred_region
        %s751 = ssub.s32 %s9, 2
      $region93: #{alexnet_forward.17} parent=5 // pred_fallthru
        _
    $region6: #{alexnet_forward.17} parent=1 // loop_footer
      %s13 = sadd.s32 1, %s9
    $region7: #{alexnet_forward.17} parent=1 // loop_footer_branch
      %8 = sbr.rel target = $region3
    $region8: #{alexnet_forward.17} parent=1 // loop_exit
      _

// kernel: alexnet_forward.20
$region0: #{alexnet_forward.20}
  #allocation0 [shape = 'u32[]', space=smem, size = 0x4, offset = 0x4, fixed_abs, tag = 'smem constant byte address 0x4 - core index']
  #allocation1 [shape = 'u32[144,128]{1,0:T(1,128)}', space=vmem, size = 0x12000, scoped, tag = 'internal scratch']
  #allocation2 [shape = 'f32[8,512]{1,0:T(8,128)}', space=vmem, size = 0x4000, scoped, tag = 'scratch operand']
  %s0 = inlined_call_operand.vmem [shape: bf16[8,1024], index: 0, kind: input, shape index: {}]
  %s1 = inlined_call_operand.vmem [shape: bf16[1024,512], index: 1, kind: input, shape index: {}]
  %s2 = inlined_call_operand.vmem [shape: f32[1,512], index: 2, kind: input, shape index: {}]
  %s3 = inlined_call_operand.vmem [shape: f32[8,512], index: 3, kind: output, shape index: {}]
  %s4 = sld [smem:[#allocation0]]
  $region53: #{alexnet_forward.20} parent=0
    _
  %s6 = ssub.s32 1, %s4
  %s7 = scalar_select 0, %s6, %s4
  loop: start=0, step=1, limit=4
  $region2: #{alexnet_forward.20} parent=0 // loop_pre_header
    _
  $region3: #{alexnet_forward.20} parent=0 // loop_header
    %s9 = sphi 0, %s13
    %p10 = scmp.ge.s32.totalorder %s9, 4
    %s16 = sphi 0, %s35
    %s17 = sphi 0, %s31
    %s18 = sphi 0, %s27
    %s19 = sphi 0, %s16
    %s20 = sphi 0, %s17
    %s21 = sphi 0, %s18
    %s22 = sphi 0, %s19
    %s23 = sphi 0, %s20
    %s24 = sphi 0, %s21
    %s40 = sphi 0, %s42
    %s43 = sphi 0, %s40
    %s44 = sphi 0, %s43
    %s60 = sphi 0, %s44
    %s68 = sphi 0, %s70
    %s71 = sphi 0, %s68
    %s72 = sphi 0, %s71
    %s88 = sphi 0, %s72
    %s94 = sphi 0, %s96
    %s97 = sphi 0, %s94
    %s98 = sphi 0, %s97
    %s114 = sphi 0, %s98
    %s122 = sphi 0, %s124
    %s125 = sphi 0, %s122
    %s126 = sphi 0, %s125
    %s142 = sphi 0, %s126
  $region4: #{alexnet_forward.20} parent=0 // loop_header_branch
    %12 = sbr.rel (%p10) target = $region8
  $region5: #{alexnet_forward.20} parent=0 // loop_body
    %s14 = ssub.s32 %s9, 1
    %s15 = ssub.s32 %s9, 2
    %s25 = sadd.s32 1, %s18
    %p26 = scmp.ge.s32.totalorder %s25, 2
    %s27 = scalar_select %p26, 0, %s25
    %s28 = sadd.s32 1, %s17
    %s29 = scalar_select %p26, %s28, %s17
    %p30 = scmp.ge.s32.totalorder %s29, 1
    %s31 = scalar_select %p30, 0, %s29
    %s32 = sadd.s32 1, %s16
    %s33 = scalar_select %p30, %s32, %s16
    %p34 = scmp.ge.s32.totalorder %s33, 1
    %s35 = scalar_select %p34, 0, %s33
    %s36 = ssub.s32 %s16, %s35
    %s37 = ssub.s32 %s18, %s27
    %s38 = sor.u32 %s36, %s37
    %p39 = scmp.eq.s32.totalorder %s38, 0
    %s41 = sadd.s32 %s40, 1
    %s42 = scalar_select %p39, %s40, %s41
    %p45 = pneg %p39
    %p46 = scmp.eq.s32.totalorder %s9, 1
    %p47 = por %p45, %p46
    %p48 = scmp.ne.s32.totalorder %s40, %s43
    %p49 = scmp.eq.s32.totalorder %s9, 0
    %p50 = por %p48, %p49
    %p51 = scmp.ne.s32.totalorder %s40, %s43
    %p52 = scmp.eq.s32.totalorder %s14, 1
    %p53 = por %p51, %p52
    %p54 = scmp.ne.s32.totalorder %s43, %s44
    %p55 = scmp.eq.s32.totalorder %s14, 0
    %p56 = por %p54, %p55
    %p57 = scmp.ne.s32.totalorder %s43, %s44
    %p58 = scmp.eq.s32.totalorder %s15, 1
    %p59 = por %p57, %p58
    %p61 = scmp.ne.s32.totalorder %s44, %s60
    %p62 = scmp.eq.s32.totalorder %s15, 0
    %p63 = por %p61, %p62
    %s64 = ssub.s32 %s18, %s27
    %s65 = ssub.s32 %s17, %s31
    %s66 = sor.u32 %s64, %s65
    %p67 = scmp.eq.s32.totalorder %s66, 0
    %s69 = sadd.s32 %s68, 1
    %s70 = scalar_select %p67, %s68, %s69
    %p73 = pneg %p67
    %p74 = scmp.eq.s32.totalorder %s9, 1
    %p75 = por %p73, %p74
    %p76 = scmp.ne.s32.totalorder %s68, %s71
    %p77 = scmp.eq.s32.totalorder %s9, 0
    %p78 = por %p76, %p77
    %p79 = scmp.ne.s32.totalorder %s68, %s71
    %p80 = scmp.eq.s32.totalorder %s14, 1
    %p81 = por %p79, %p80
    %p82 = scmp.ne.s32.totalorder %s71, %s72
    %p83 = scmp.eq.s32.totalorder %s14, 0
    %p84 = por %p82, %p83
    %p85 = scmp.ne.s32.totalorder %s71, %s72
    %p86 = scmp.eq.s32.totalorder %s15, 1
    %p87 = por %p85, %p86
    %p89 = scmp.ne.s32.totalorder %s72, %s88
    %p90 = scmp.eq.s32.totalorder %s15, 0
    %p91 = por %p89, %p90
    %s92 = ssub.s32 %s17, %s31
    %p93 = scmp.eq.s32.totalorder %s92, 0
    %s95 = sadd.s32 %s94, 1
    %s96 = scalar_select %p93, %s94, %s95
    %p99 = pneg %p93
    %p100 = scmp.eq.s32.totalorder %s9, 1
    %p101 = por %p99, %p100
    %p102 = scmp.ne.s32.totalorder %s94, %s97
    %p103 = scmp.eq.s32.totalorder %s9, 0
    %p104 = por %p102, %p103
    %p105 = scmp.ne.s32.totalorder %s94, %s97
    %p106 = scmp.eq.s32.totalorder %s14, 1
    %p107 = por %p105, %p106
    %p108 = scmp.ne.s32.totalorder %s97, %s98
    %p109 = scmp.eq.s32.totalorder %s14, 0
    %p110 = por %p108, %p109
    %p111 = scmp.ne.s32.totalorder %s97, %s98
    %p112 = scmp.eq.s32.totalorder %s15, 1
    %p113 = por %p111, %p112
    %p115 = scmp.ne.s32.totalorder %s98, %s114
    %p116 = scmp.eq.s32.totalorder %s15, 0
    %p117 = por %p115, %p116
    %s118 = ssub.s32 %s16, %s35
    %s119 = ssub.s32 %s17, %s31
    %s120 = sor.u32 %s118, %s119
    %p121 = scmp.eq.s32.totalorder %s120, 0
    %s123 = sadd.s32 %s122, 1
    %s124 = scalar_select %p121, %s122, %s123
    %p127 = pneg %p121
    %p128 = scmp.eq.s32.totalorder %s9, 1
    %p129 = por %p127, %p128
    %p130 = scmp.ne.s32.totalorder %s122, %s125
    %p131 = scmp.eq.s32.totalorder %s9, 0
    %p132 = por %p130, %p131
    %p133 = scmp.ne.s32.totalorder %s122, %s125
    %p134 = scmp.eq.s32.totalorder %s14, 1
    %p135 = por %p133, %p134
    %p136 = scmp.ne.s32.totalorder %s125, %s126
    %p137 = scmp.eq.s32.totalorder %s14, 0
    %p138 = por %p136, %p137
    %p139 = scmp.ne.s32.totalorder %s125, %s126
    %p140 = scmp.eq.s32.totalorder %s15, 1
    %p141 = por %p139, %p140
    %p143 = scmp.ne.s32.totalorder %s126, %s142
    %p144 = scmp.eq.s32.totalorder %s15, 0
    %p145 = por %p143, %p144
    %p146 = scmp.le.s32.totalorder 1, %s9
    %p147 = scmp.lt.s32.totalorder %s9, 3
    %p148 = pnand %p146, %p147
    %p149 = pneg %p148
    // Predicated region
    $region9: #{alexnet_forward.20} parent=5 // pred_check
      _
    $region10: #{alexnet_forward.20} parent=5 // pred_check_branch
      %151 = sbr.rel (%p148) target = $region12
    $region11: #{alexnet_forward.20} parent=5 // pred_region
      %s152 = ssub.s32 %s9, 1
      // Predicated region
      $region13: #{alexnet_forward.20} parent=11 // pred_check
        %p153 = pneg %p110
      $region14: #{alexnet_forward.20} parent=11 // pred_check_branch
        %155 = sbr.rel (%p153) target = $region16
      $region15: #{alexnet_forward.20} parent=11 // pred_region
        %s156 = smul.u32 4, %s20
        %p157 = scmp.lt.s32.totalorder %s156, 3
        %s158 = scalar_select %p157, %s156, 3
        %s159 = scalar_lea.vmem %s2, %s158
        %s160 = smul.u32 4, %s20
      $region16: #{alexnet_forward.20} parent=11 // pred_fallthru
        _
    $region12: #{alexnet_forward.20} parent=5 // pred_fallthru
      _
    %p161 = scmp.lt.s32.totalorder %s9, 2
    // Predicated region
    $region17: #{alexnet_forward.20} parent=5 // pred_check
      %p162 = pneg %p161
    $region18: #{alexnet_forward.20} parent=5 // pred_check_branch
      %164 = sbr.rel (%p162) target = $region20
    $region19: #{alexnet_forward.20} parent=5 // pred_region
      // Predicated region
      $region21: #{alexnet_forward.20} parent=19 // pred_check
        %p165 = pneg %p50
      $region22: #{alexnet_forward.20} parent=19 // pred_check_branch
        %167 = sbr.rel (%p165) target = $region24
      $region23: #{alexnet_forward.20} parent=19 // pred_region
        %s168 = smul.u32 4, %s18
        %p169 = scmp.lt.s32.totalorder %s16, 0
        %s170 = scalar_select %p169, %s16, 0
        %p171 = scmp.lt.s32.totalorder %s168, 7
        %s172 = scalar_select %p171, %s168, 7
        %s173 = smul.addr %s170, 8
        %s174 = sadd.s32 %s172, %s173
        %s175 = smul.addr %s174, 4
        %s176 = scalar_lea.vmem %s0, %s175
        %s177 = smul.u32 4, %s18
      $region24: #{alexnet_forward.20} parent=19 // pred_fallthru
        _
      // Predicated region
      $region25: #{alexnet_forward.20} parent=19 // pred_check
        %p178 = pneg %p78
      $region26: #{alexnet_forward.20} parent=19 // pred_check_branch
        %180 = sbr.rel (%p178) target = $region28
      $region27: #{alexnet_forward.20} parent=19 // pred_region
        %s181 = smul.u32 64, %s18
        %s182 = smul.u32 4, %s17
        %p183 = scmp.lt.s32.totalorder %s181, 127
        %s184 = scalar_select %p183, %s181, 127
        %p185 = scmp.lt.s32.totalorder %s182, 3
        %s186 = scalar_select %p185, %s182, 3
        %s187 = smul.addr %s184, 4
        %s188 = sadd.s32 %s186, %s187
        %s189 = smul.addr %s188, 4
        %s190 = scalar_lea.vmem %s1, %s189
        %s191 = smul.u32 64, %s18
        %s192 = smul.u32 4, %s17
      $region28: #{alexnet_forward.20} parent=19 // pred_fallthru
        _
    $region20: #{alexnet_forward.20} parent=5 // pred_fallthru
      _
    %p193 = scmp.le.s32.totalorder 1, %s9
    %p194 = scmp.lt.s32.totalorder %s9, 3
    %p195 = pnand %p193, %p194
    %p196 = pneg %p195
    // Predicated region
    $region29: #{alexnet_forward.20} parent=5 // pred_check
      _
    $region30: #{alexnet_forward.20} parent=5 // pred_check_branch
      %198 = sbr.rel (%p195) target = $region32
    $region31: #{alexnet_forward.20} parent=5 // pred_region
      %s199 = ssub.s32 %s9, 1
      %s200 = smul.u32 4, %s21
      %p201 = scmp.lt.s32.totalorder %s19, 0
      %s202 = scalar_select %p201, %s19, 0
      %p203 = scmp.lt.s32.totalorder %s200, 7
      %s204 = scalar_select %p203, %s200, 7
      %s205 = smul.addr %s202, 8
      %s206 = sadd.s32 %s204, %s205
      %s207 = smul.addr %s206, 4
      %s208 = scalar_lea.vmem %s0, %s207
      %p209 = pneg %p56
      %p210 = pneg %p53
      %s211 = smul.u32 64, %s21
      %s212 = smul.u32 4, %s20
      %p213 = scmp.lt.s32.totalorder %s211, 127
      %s214 = scalar_select %p213, %s211, 127
      %p215 = scmp.lt.s32.totalorder %s212, 3
      %s216 = scalar_select %p215, %s212, 3
      %s217 = smul.addr %s214, 4
      %s218 = sadd.s32 %s216, %s217
      %s219 = smul.addr %s218, 4
      %s220 = scalar_lea.vmem %s1, %s219
      %p221 = pneg %p84
      %p222 = pneg %p81
      %s223 = smul.u32 4, %s20
      %p224 = scmp.lt.s32.totalorder %s223, 3
      %s225 = scalar_select %p224, %s223, 3
      %s226 = scalar_lea.vmem %s2, %s225
      %p227 = pneg %p110
      %p228 = pneg %p107
      %p229 = pneg %p138
      %p230 = pneg %p135
      %s231 = smul.u32 4, %s20
      %p232 = scmp.lt.s32.totalorder %s19, 0
      %s233 = scalar_select %p232, %s19, 0
      %p234 = scmp.lt.s32.totalorder %s231, 3
      %s235 = scalar_select %p234, %s231, 3
      %s236 = smul.addr %s233, 4
      %s237 = sadd.s32 %s235, %s236
      %s238 = smul.addr %s237, 8
      %s239 = scalar_lea.vmem %s3, %s238
      %s240 = smul.u32 4, %s21
      %p241 = scmp.lt.s32.totalorder %s19, 0
      %s242 = scalar_select %p241, %s19, 0
      %p243 = scmp.lt.s32.totalorder %s240, 7
      %s244 = scalar_select %p243, %s240, 7
      %s245 = smul.addr %s242, 8
      %s246 = sadd.s32 %s244, %s245
      %s247 = smul.addr %s246, 4
      %s248 = scalar_lea.vmem %s0, %s247
      %s249 = smul.u32 4, %s21
      %s250 = smul.u32 64, %s21
      %s251 = smul.u32 4, %s20
      %p252 = scmp.lt.s32.totalorder %s250, 127
      %s253 = scalar_select %p252, %s250, 127
      %p254 = scmp.lt.s32.totalorder %s251, 3
      %s255 = scalar_select %p254, %s251, 3
      %s256 = smul.addr %s253, 4
      %s257 = sadd.s32 %s255, %s256
      %s258 = smul.addr %s257, 4
      %s259 = scalar_lea.vmem %s1, %s258
      %s260 = smul.u32 64, %s21
      %s261 = smul.u32 4, %s20
      %s262 = smul.u32 4, %s20
      %p263 = scmp.lt.s32.totalorder %s262, 3
      %s264 = scalar_select %p263, %s262, 3
      %s265 = scalar_lea.vmem %s2, %s264
      %s266 = smul.u32 4, %s20
      %s267 = smul.u32 4, %s20
      %p268 = scmp.lt.s32.totalorder %s19, 0
      %s269 = scalar_select %p268, %s19, 0
      %p270 = scmp.lt.s32.totalorder %s267, 3
      %s271 = scalar_select %p270, %s267, 3
      %s272 = smul.addr %s269, 4
      %s273 = sadd.s32 %s271, %s272
      %s274 = smul.addr %s273, 8
      %s275 = scalar_lea.vmem %s3, %s274
      %s276 = smul.u32 4, %s20
      %p277 = scmp.eq.s32.totalorder %s21, 0
      // Predicated region
      $region33: #{alexnet_forward.20} parent=31 // pred_check
        %p278 = pneg %p277
      $region34: #{alexnet_forward.20} parent=31 // pred_check_branch
        %280 = sbr.rel (%p278) target = $region36
      $region35: #{alexnet_forward.20} parent=31 // pred_region
        %281 = vst [vmem:[#allocation2] sm:$0xff] 0.0
        %282 = vst [vmem:[#allocation2 + $0x8] sm:$0xff] 0.0
        %283 = vst [vmem:[#allocation2 + $0x10] sm:$0xff] 0.0
        %284 = vst [vmem:[#allocation2 + $0x18] sm:$0xff] 0.0
      $region36: #{alexnet_forward.20} parent=31 // pred_fallthru
        _
      %v285 = vld [vmem:[#allocation2] sm:$0xff]
      %v286 = vld [vmem:[#allocation2 + $0x8] sm:$0xff]
      %v287 = vld [vmem:[#allocation2 + $0x10] sm:$0xff]
      %v288 = vld [vmem:[#allocation2 + $0x18] sm:$0xff]
      %v289 = vld [vmem:[%s248] sm:$0xff]
      %v290 = vld [vmem:[%s248 + $0x8] sm:$0xff]
      %v291 = vld [vmem:[%s259] sm:$0xff]
      %v292 = vld [vmem:[%s259 + $0x8] sm:$0xff]
      %v293 = vld [vmem:[%s259 + $0x10] sm:$0xff]
      %v294 = vld [vmem:[%s259 + $0x18] sm:$0xff]
      %v295 = vld [vmem:[%s259 + $0x20] sm:$0xff]
      %v296 = vld [vmem:[%s259 + $0x28] sm:$0xff]
      %v297 = vld [vmem:[%s259 + $0x30] sm:$0xff]
      %v298 = vld [vmem:[%s259 + $0x38] sm:$0xff]
      %v299 = vld [vmem:[%s259 + $0x40] sm:$0xff]
      %v300 = vld [vmem:[%s259 + $0x48] sm:$0xff]
      %v301 = vld [vmem:[%s259 + $0x50] sm:$0xff]
      %v302 = vld [vmem:[%s259 + $0x58] sm:$0xff]
      %v303 = vld [vmem:[%s259 + $0x60] sm:$0xff]
      %v304 = vld [vmem:[%s259 + $0x68] sm:$0xff]
      %v305 = vld [vmem:[%s259 + $0x70] sm:$0xff]
      %v306 = vld [vmem:[%s259 + $0x78] sm:$0xff]
      %v307 = vld [vmem:[%s259 + $0x80] sm:$0xff]
      %v308 = vld [vmem:[%s259 + $0x88] sm:$0xff]
      %v309 = vld [vmem:[%s259 + $0x90] sm:$0xff]
      %v310 = vld [vmem:[%s259 + $0x98] sm:$0xff]
      %v311 = vld [vmem:[%s259 + $0xa0] sm:$0xff]
      %v312 = vld [vmem:[%s259 + $0xa8] sm:$0xff]
      %v313 = vld [vmem:[%s259 + $0xb0] sm:$0xff]
      %v314 = vld [vmem:[%s259 + $0xb8] sm:$0xff]
      %v315 = vld [vmem:[%s259 + $0xc0] sm:$0xff]
      %v316 = vld [vmem:[%s259 + $0xc8] sm:$0xff]
      %v317 = vld [vmem:[%s259 + $0xd0] sm:$0xff]
      %v318 = vld [vmem:[%s259 + $0xd8] sm:$0xff]
      %v319 = vld [vmem:[%s259 + $0xe0] sm:$0xff]
      %v320 = vld [vmem:[%s259 + $0xe8] sm:$0xff]
      %v321 = vld [vmem:[%s259 + $0xf0] sm:$0xff]
      %v322 = vld [vmem:[%s259 + $0xf8] sm:$0xff]
      %v323 = vld [vmem:[%s259 + $0x100] sm:$0xff]
      %v324 = vld [vmem:[%s259 + $0x108] sm:$0xff]
      %v325 = vld [vmem:[%s259 + $0x110] sm:$0xff]
      %v326 = vld [vmem:[%s259 + $0x118] sm:$0xff]
      %v327 = vld [vmem:[%s259 + $0x120] sm:$0xff]
      %v328 = vld [vmem:[%s259 + $0x128] sm:$0xff]
      %v329 = vld [vmem:[%s259 + $0x130] sm:$0xff]
      %v330 = vld [vmem:[%s259 + $0x138] sm:$0xff]
      %v331 = vld [vmem:[%s259 + $0x140] sm:$0xff]
      %v332 = vld [vmem:[%s259 + $0x148] sm:$0xff]
      %v333 = vld [vmem:[%s259 + $0x150] sm:$0xff]
      %v334 = vld [vmem:[%s259 + $0x158] sm:$0xff]
      %v335 = vld [vmem:[%s259 + $0x160] sm:$0xff]
      %v336 = vld [vmem:[%s259 + $0x168] sm:$0xff]
      %v337 = vld [vmem:[%s259 + $0x170] sm:$0xff]
      %v338 = vld [vmem:[%s259 + $0x178] sm:$0xff]
      %v339 = vld [vmem:[%s259 + $0x180] sm:$0xff]
      %v340 = vld [vmem:[%s259 + $0x188] sm:$0xff]
      %v341 = vld [vmem:[%s259 + $0x190] sm:$0xff]
      %v342 = vld [vmem:[%s259 + $0x198] sm:$0xff]
      %v343 = vld [vmem:[%s259 + $0x1a0] sm:$0xff]
      %v344 = vld [vmem:[%s259 + $0x1a8] sm:$0xff]
      %v345 = vld [vmem:[%s259 + $0x1b0] sm:$0xff]
      %v346 = vld [vmem:[%s259 + $0x1b8] sm:$0xff]
      %v347 = vld [vmem:[%s259 + $0x1c0] sm:$0xff]
      %v348 = vld [vmem:[%s259 + $0x1c8] sm:$0xff]
      %v349 = vld [vmem:[%s259 + $0x1d0] sm:$0xff]
      %v350 = vld [vmem:[%s259 + $0x1d8] sm:$0xff]
      %v351 = vld [vmem:[%s259 + $0x1e0] sm:$0xff]
      %v352 = vld [vmem:[%s259 + $0x1e8] sm:$0xff]
      %v353 = vld [vmem:[%s259 + $0x1f0] sm:$0xff]
      %v354 = vld [vmem:[%s259 + $0x1f8] sm:$0xff]
      %v355 = vld [vmem:[%s259 + $0x200] sm:$0xff]
      %v356 = vld [vmem:[%s259 + $0x208] sm:$0xff]
      %v357 = vld [vmem:[%s259 + $0x210] sm:$0xff]
      %v358 = vld [vmem:[%s259 + $0x218] sm:$0xff]
      %v359 = vld [vmem:[%s259 + $0x220] sm:$0xff]
      %v360 = vld [vmem:[%s259 + $0x228] sm:$0xff]
      %v361 = vld [vmem:[%s259 + $0x230] sm:$0xff]
      %v362 = vld [vmem:[%s259 + $0x238] sm:$0xff]
      %v363 = vld [vmem:[%s259 + $0x240] sm:$0xff]
      %v364 = vld [vmem:[%s259 + $0x248] sm:$0xff]
      %v365 = vld [vmem:[%s259 + $0x250] sm:$0xff]
      %v366 = vld [vmem:[%s259 + $0x258] sm:$0xff]
      %v367 = vld [vmem:[%s259 + $0x260] sm:$0xff]
      %v368 = vld [vmem:[%s259 + $0x268] sm:$0xff]
      %v369 = vld [vmem:[%s259 + $0x270] sm:$0xff]
      %v370 = vld [vmem:[%s259 + $0x278] sm:$0xff]
      %v371 = vld [vmem:[%s259 + $0x280] sm:$0xff]
      %v372 = vld [vmem:[%s259 + $0x288] sm:$0xff]
      %v373 = vld [vmem:[%s259 + $0x290] sm:$0xff]
      %v374 = vld [vmem:[%s259 + $0x298] sm:$0xff]
      %v375 = vld [vmem:[%s259 + $0x2a0] sm:$0xff]
      %v376 = vld [vmem:[%s259 + $0x2a8] sm:$0xff]
      %v377 = vld [vmem:[%s259 + $0x2b0] sm:$0xff]
      %v378 = vld [vmem:[%s259 + $0x2b8] sm:$0xff]
      %v379 = vld [vmem:[%s259 + $0x2c0] sm:$0xff]
      %v380 = vld [vmem:[%s259 + $0x2c8] sm:$0xff]
      %v381 = vld [vmem:[%s259 + $0x2d0] sm:$0xff]
      %v382 = vld [vmem:[%s259 + $0x2d8] sm:$0xff]
      %v383 = vld [vmem:[%s259 + $0x2e0] sm:$0xff]
      %v384 = vld [vmem:[%s259 + $0x2e8] sm:$0xff]
      %v385 = vld [vmem:[%s259 + $0x2f0] sm:$0xff]
      %v386 = vld [vmem:[%s259 + $0x2f8] sm:$0xff]
      %v387 = vld [vmem:[%s259 + $0x300] sm:$0xff]
      %v388 = vld [vmem:[%s259 + $0x308] sm:$0xff]
      %v389 = vld [vmem:[%s259 + $0x310] sm:$0xff]
      %v390 = vld [vmem:[%s259 + $0x318] sm:$0xff]
      %v391 = vld [vmem:[%s259 + $0x320] sm:$0xff]
      %v392 = vld [vmem:[%s259 + $0x328] sm:$0xff]
      %v393 = vld [vmem:[%s259 + $0x330] sm:$0xff]
      %v394 = vld [vmem:[%s259 + $0x338] sm:$0xff]
      %v395 = vld [vmem:[%s259 + $0x340] sm:$0xff]
      %v396 = vld [vmem:[%s259 + $0x348] sm:$0xff]
      %v397 = vld [vmem:[%s259 + $0x350] sm:$0xff]
      %v398 = vld [vmem:[%s259 + $0x358] sm:$0xff]
      %v399 = vld [vmem:[%s259 + $0x360] sm:$0xff]
      %v400 = vld [vmem:[%s259 + $0x368] sm:$0xff]
      %v401 = vld [vmem:[%s259 + $0x370] sm:$0xff]
      %v402 = vld [vmem:[%s259 + $0x378] sm:$0xff]
      %v403 = vld [vmem:[%s259 + $0x380] sm:$0xff]
      %v404 = vld [vmem:[%s259 + $0x388] sm:$0xff]
      %v405 = vld [vmem:[%s259 + $0x390] sm:$0xff]
      %v406 = vld [vmem:[%s259 + $0x398] sm:$0xff]
      %v407 = vld [vmem:[%s259 + $0x3a0] sm:$0xff]
      %v408 = vld [vmem:[%s259 + $0x3a8] sm:$0xff]
      %v409 = vld [vmem:[%s259 + $0x3b0] sm:$0xff]
      %v410 = vld [vmem:[%s259 + $0x3b8] sm:$0xff]
      %v411 = vld [vmem:[%s259 + $0x3c0] sm:$0xff]
      %v412 = vld [vmem:[%s259 + $0x3c8] sm:$0xff]
      %v413 = vld [vmem:[%s259 + $0x3d0] sm:$0xff]
      %v414 = vld [vmem:[%s259 + $0x3d8] sm:$0xff]
      %v415 = vld [vmem:[%s259 + $0x3e0] sm:$0xff]
      %v416 = vld [vmem:[%s259 + $0x3e8] sm:$0xff]
      %v417 = vld [vmem:[%s259 + $0x3f0] sm:$0xff]
      %v418 = vld [vmem:[%s259 + $0x3f8] sm:$0xff]
      %v421 = vunpack.c.l.b16 %v289
      %v422 = vunpack.c.h.b16 %v289
      %v423 = vunpack.c.l.b16 %v290
      %v424 = vunpack.c.h.b16 %v290
      %v425 = vpack.c.b16 %v421, %v421
      %v426 = vpack.c.b16 %v422, %v422
      %v427 = vpack.c.b16 %v423, %v423
      %v428 = vpack.c.b16 %v424, %v424
      %v561 = vunpack.c.l.b16 %v291
      %v562 = vunpack.c.h.b16 %v291
      %v563 = vunpack.c.l.b16 %v292
      %v564 = vunpack.c.h.b16 %v292
      %v565 = vunpack.c.l.b16 %v293
      %v566 = vunpack.c.h.b16 %v293
      %v567 = vunpack.c.l.b16 %v294
      %v568 = vunpack.c.h.b16 %v294
      %v569 = vunpack.c.l.b16 %v295
      %v570 = vunpack.c.h.b16 %v295
      %v571 = vunpack.c.l.b16 %v296
      %v572 = vunpack.c.h.b16 %v296
      %v573 = vunpack.c.l.b16 %v297
      %v574 = vunpack.c.h.b16 %v297
      %v575 = vunpack.c.l.b16 %v298
      %v576 = vunpack.c.h.b16 %v298
      %v577 = vunpack.c.l.b16 %v299
      %v578 = vunpack.c.h.b16 %v299
      %v579 = vunpack.c.l.b16 %v300
      %v580 = vunpack.c.h.b16 %v300
      %v581 = vunpack.c.l.b16 %v301
      %v582 = vunpack.c.h.b16 %v301
      %v583 = vunpack.c.l.b16 %v302
      %v584 = vunpack.c.h.b16 %v302
      %v585 = vunpack.c.l.b16 %v303
      %v586 = vunpack.c.h.b16 %v303
      %v587 = vunpack.c.l.b16 %v304
      %v588 = vunpack.c.h.b16 %v304
      %v589 = vunpack.c.l.b16 %v305
      %v590 = vunpack.c.h.b16 %v305
      %v591 = vunpack.c.l.b16 %v306
      %v592 = vunpack.c.h.b16 %v306
      %v593 = vunpack.c.l.b16 %v307
      %v594 = vunpack.c.h.b16 %v307
      %v595 = vunpack.c.l.b16 %v308
      %v596 = vunpack.c.h.b16 %v308
      %v597 = vunpack.c.l.b16 %v309
      %v598 = vunpack.c.h.b16 %v309
      %v599 = vunpack.c.l.b16 %v310
      %v600 = vunpack.c.h.b16 %v310
      %v601 = vunpack.c.l.b16 %v311
      %v602 = vunpack.c.h.b16 %v311
      %v603 = vunpack.c.l.b16 %v312
      %v604 = vunpack.c.h.b16 %v312
      %v605 = vunpack.c.l.b16 %v313
      %v606 = vunpack.c.h.b16 %v313
      %v607 = vunpack.c.l.b16 %v314
      %v608 = vunpack.c.h.b16 %v314
      %v609 = vunpack.c.l.b16 %v315
      %v610 = vunpack.c.h.b16 %v315
      %v611 = vunpack.c.l.b16 %v316
      %v612 = vunpack.c.h.b16 %v316
      %v613 = vunpack.c.l.b16 %v317
      %v614 = vunpack.c.h.b16 %v317
      %v615 = vunpack.c.l.b16 %v318
      %v616 = vunpack.c.h.b16 %v318
      %v617 = vunpack.c.l.b16 %v319
      %v618 = vunpack.c.h.b16 %v319
      %v619 = vunpack.c.l.b16 %v320
      %v620 = vunpack.c.h.b16 %v320
      %v621 = vunpack.c.l.b16 %v321
      %v622 = vunpack.c.h.b16 %v321
      %v623 = vunpack.c.l.b16 %v322
      %v624 = vunpack.c.h.b16 %v322
      %v625 = vunpack.c.l.b16 %v323
      %v626 = vunpack.c.h.b16 %v323
      %v627 = vunpack.c.l.b16 %v324
      %v628 = vunpack.c.h.b16 %v324
      %v629 = vunpack.c.l.b16 %v325
      %v630 = vunpack.c.h.b16 %v325
      %v631 = vunpack.c.l.b16 %v326
      %v632 = vunpack.c.h.b16 %v326
      %v633 = vunpack.c.l.b16 %v327
      %v634 = vunpack.c.h.b16 %v327
      %v635 = vunpack.c.l.b16 %v328
      %v636 = vunpack.c.h.b16 %v328
      %v637 = vunpack.c.l.b16 %v329
      %v638 = vunpack.c.h.b16 %v329
      %v639 = vunpack.c.l.b16 %v330
      %v640 = vunpack.c.h.b16 %v330
      %v641 = vunpack.c.l.b16 %v331
      %v642 = vunpack.c.h.b16 %v331
      %v643 = vunpack.c.l.b16 %v332
      %v644 = vunpack.c.h.b16 %v332
      %v645 = vunpack.c.l.b16 %v333
      %v646 = vunpack.c.h.b16 %v333
      %v647 = vunpack.c.l.b16 %v334
      %v648 = vunpack.c.h.b16 %v334
      %v649 = vunpack.c.l.b16 %v335
      %v650 = vunpack.c.h.b16 %v335
      %v651 = vunpack.c.l.b16 %v336
      %v652 = vunpack.c.h.b16 %v336
      %v653 = vunpack.c.l.b16 %v337
      %v654 = vunpack.c.h.b16 %v337
      %v655 = vunpack.c.l.b16 %v338
      %v656 = vunpack.c.h.b16 %v338
      %v657 = vunpack.c.l.b16 %v339
      %v658 = vunpack.c.h.b16 %v339
      %v659 = vunpack.c.l.b16 %v340
      %v660 = vunpack.c.h.b16 %v340
      %v661 = vunpack.c.l.b16 %v341
      %v662 = vunpack.c.h.b16 %v341
      %v663 = vunpack.c.l.b16 %v342
      %v664 = vunpack.c.h.b16 %v342
      %v665 = vunpack.c.l.b16 %v343
      %v666 = vunpack.c.h.b16 %v343
      %v667 = vunpack.c.l.b16 %v344
      %v668 = vunpack.c.h.b16 %v344
      %v669 = vunpack.c.l.b16 %v345
      %v670 = vunpack.c.h.b16 %v345
      %v671 = vunpack.c.l.b16 %v346
      %v672 = vunpack.c.h.b16 %v346
      %v673 = vunpack.c.l.b16 %v347
      %v674 = vunpack.c.h.b16 %v347
      %v675 = vunpack.c.l.b16 %v348
      %v676 = vunpack.c.h.b16 %v348
      %v677 = vunpack.c.l.b16 %v349
      %v678 = vunpack.c.h.b16 %v349
      %v679 = vunpack.c.l.b16 %v350
      %v680 = vunpack.c.h.b16 %v350
      %v681 = vunpack.c.l.b16 %v351
      %v682 = vunpack.c.h.b16 %v351
      %v683 = vunpack.c.l.b16 %v352
      %v684 = vunpack.c.h.b16 %v352
      %v685 = vunpack.c.l.b16 %v353
      %v686 = vunpack.c.h.b16 %v353
      %v687 = vunpack.c.l.b16 %v354
      %v688 = vunpack.c.h.b16 %v354
      %v689 = vunpack.c.l.b16 %v355
      %v690 = vunpack.c.h.b16 %v355
      %v691 = vunpack.c.l.b16 %v356
      %v692 = vunpack.c.h.b16 %v356
      %v693 = vunpack.c.l.b16 %v357
      %v694 = vunpack.c.h.b16 %v357
      %v695 = vunpack.c.l.b16 %v358
      %v696 = vunpack.c.h.b16 %v358
      %v697 = vunpack.c.l.b16 %v359
      %v698 = vunpack.c.h.b16 %v359
      %v699 = vunpack.c.l.b16 %v360
      %v700 = vunpack.c.h.b16 %v360
      %v701 = vunpack.c.l.b16 %v361
      %v702 = vunpack.c.h.b16 %v361
      %v703 = vunpack.c.l.b16 %v362
      %v704 = vunpack.c.h.b16 %v362
      %v705 = vunpack.c.l.b16 %v363
      %v706 = vunpack.c.h.b16 %v363
      %v707 = vunpack.c.l.b16 %v364
      %v708 = vunpack.c.h.b16 %v364
      %v709 = vunpack.c.l.b16 %v365
      %v710 = vunpack.c.h.b16 %v365
      %v711 = vunpack.c.l.b16 %v366
      %v712 = vunpack.c.h.b16 %v366
      %v713 = vunpack.c.l.b16 %v367
      %v714 = vunpack.c.h.b16 %v367
      %v715 = vunpack.c.l.b16 %v368
      %v716 = vunpack.c.h.b16 %v368
      %v717 = vunpack.c.l.b16 %v369
      %v718 = vunpack.c.h.b16 %v369
      %v719 = vunpack.c.l.b16 %v370
      %v720 = vunpack.c.h.b16 %v370
      %v721 = vunpack.c.l.b16 %v371
      %v722 = vunpack.c.h.b16 %v371
      %v723 = vunpack.c.l.b16 %v372
      %v724 = vunpack.c.h.b16 %v372
      %v725 = vunpack.c.l.b16 %v373
      %v726 = vunpack.c.h.b16 %v373
      %v727 = vunpack.c.l.b16 %v374
      %v728 = vunpack.c.h.b16 %v374
      %v729 = vunpack.c.l.b16 %v375
      %v730 = vunpack.c.h.b16 %v375
      %v731 = vunpack.c.l.b16 %v376
      %v732 = vunpack.c.h.b16 %v376
      %v733 = vunpack.c.l.b16 %v377
      %v734 = vunpack.c.h.b16 %v377
      %v735 = vunpack.c.l.b16 %v378
      %v736 = vunpack.c.h.b16 %v378
      %v737 = vunpack.c.l.b16 %v379
      %v738 = vunpack.c.h.b16 %v379
      %v739 = vunpack.c.l.b16 %v380
      %v740 = vunpack.c.h.b16 %v380
      %v741 = vunpack.c.l.b16 %v381
      %v742 = vunpack.c.h.b16 %v381
      %v743 = vunpack.c.l.b16 %v382
      %v744 = vunpack.c.h.b16 %v382
      %v745 = vunpack.c.l.b16 %v383
      %v746 = vunpack.c.h.b16 %v383
      %v747 = vunpack.c.l.b16 %v384
      %v748 = vunpack.c.h.b16 %v384
      %v749 = vunpack.c.l.b16 %v385
      %v750 = vunpack.c.h.b16 %v385
      %v751 = vunpack.c.l.b16 %v386
      %v752 = vunpack.c.h.b16 %v386
      %v753 = vunpack.c.l.b16 %v387
      %v754 = vunpack.c.h.b16 %v387
      %v755 = vunpack.c.l.b16 %v388
      %v756 = vunpack.c.h.b16 %v388
      %v757 = vunpack.c.l.b16 %v389
      %v758 = vunpack.c.h.b16 %v389
      %v759 = vunpack.c.l.b16 %v390
      %v760 = vunpack.c.h.b16 %v390
      %v761 = vunpack.c.l.b16 %v391
      %v762 = vunpack.c.h.b16 %v391
      %v763 = vunpack.c.l.b16 %v392
      %v764 = vunpack.c.h.b16 %v392
      %v765 = vunpack.c.l.b16 %v393
      %v766 = vunpack.c.h.b16 %v393
      %v767 = vunpack.c.l.b16 %v394
      %v768 = vunpack.c.h.b16 %v394
      %v769 = vunpack.c.l.b16 %v395
      %v770 = vunpack.c.h.b16 %v395
      %v771 = vunpack.c.l.b16 %v396
      %v772 = vunpack.c.h.b16 %v396
      %v773 = vunpack.c.l.b16 %v397
      %v774 = vunpack.c.h.b16 %v397
      %v775 = vunpack.c.l.b16 %v398
      %v776 = vunpack.c.h.b16 %v398
      %v777 = vunpack.c.l.b16 %v399
      %v778 = vunpack.c.h.b16 %v399
      %v779 = vunpack.c.l.b16 %v400
      %v780 = vunpack.c.h.b16 %v400
      %v781 = vunpack.c.l.b16 %v401
      %v782 = vunpack.c.h.b16 %v401
      %v783 = vunpack.c.l.b16 %v402
      %v784 = vunpack.c.h.b16 %v402
      %v785 = vunpack.c.l.b16 %v403
      %v786 = vunpack.c.h.b16 %v403
      %v787 = vunpack.c.l.b16 %v404
      %v788 = vunpack.c.h.b16 %v404
      %v789 = vunpack.c.l.b16 %v405
      %v790 = vunpack.c.h.b16 %v405
      %v791 = vunpack.c.l.b16 %v406
      %v792 = vunpack.c.h.b16 %v406
      %v793 = vunpack.c.l.b16 %v407
      %v794 = vunpack.c.h.b16 %v407
      %v795 = vunpack.c.l.b16 %v408
      %v796 = vunpack.c.h.b16 %v408
      %v797 = vunpack.c.l.b16 %v409
      %v798 = vunpack.c.h.b16 %v409
      %v799 = vunpack.c.l.b16 %v410
      %v800 = vunpack.c.h.b16 %v410
      %v801 = vunpack.c.l.b16 %v411
      %v802 = vunpack.c.h.b16 %v411
      %v803 = vunpack.c.l.b16 %v412
      %v804 = vunpack.c.h.b16 %v412
      %v805 = vunpack.c.l.b16 %v413
      %v806 = vunpack.c.h.b16 %v413
      %v807 = vunpack.c.l.b16 %v414
      %v808 = vunpack.c.h.b16 %v414
      %v809 = vunpack.c.l.b16 %v415
      %v810 = vunpack.c.h.b16 %v415
      %v811 = vunpack.c.l.b16 %v416
      %v812 = vunpack.c.h.b16 %v416
      %v813 = vunpack.c.l.b16 %v417
      %v814 = vunpack.c.h.b16 %v417
      %v815 = vunpack.c.l.b16 %v418
      %v816 = vunpack.c.h.b16 %v418
      %v817 = vpack.c.b16 %v565, %v561
      %v818 = vpack.c.b16 %v566, %v562
      %v819 = vpack.c.b16 %v567, %v563
      %v820 = vpack.c.b16 %v568, %v564
      %v821 = vpack.c.b16 %v573, %v569
      %v822 = vpack.c.b16 %v574, %v570
      %v823 = vpack.c.b16 %v575, %v571
      %v824 = vpack.c.b16 %v576, %v572
      %v825 = vpack.c.b16 %v581, %v577
      %v826 = vpack.c.b16 %v582, %v578
      %v827 = vpack.c.b16 %v583, %v579
      %v828 = vpack.c.b16 %v584, %v580
      %v829 = vpack.c.b16 %v589, %v585
      %v830 = vpack.c.b16 %v590, %v586
      %v831 = vpack.c.b16 %v591, %v587
      %v832 = vpack.c.b16 %v592, %v588
      %v833 = vpack.c.b16 %v597, %v593
      %v834 = vpack.c.b16 %v598, %v594
      %v835 = vpack.c.b16 %v599, %v595
      %v836 = vpack.c.b16 %v600, %v596
      %v837 = vpack.c.b16 %v605, %v601
      %v838 = vpack.c.b16 %v606, %v602
      %v839 = vpack.c.b16 %v607, %v603
      %v840 = vpack.c.b16 %v608, %v604
      %v841 = vpack.c.b16 %v613, %v609
      %v842 = vpack.c.b16 %v614, %v610
      %v843 = vpack.c.b16 %v615, %v611
      %v844 = vpack.c.b16 %v616, %v612
      %v845 = vpack.c.b16 %v621, %v617
      %v846 = vpack.c.b16 %v622, %v618
      %v847 = vpack.c.b16 %v623, %v619
      %v848 = vpack.c.b16 %v624, %v620
      %v849 = vpack.c.b16 %v629, %v625
      %v850 = vpack.c.b16 %v630, %v626
      %v851 = vpack.c.b16 %v631, %v627
      %v852 = vpack.c.b16 %v632, %v628
      %v853 = vpack.c.b16 %v637, %v633
      %v854 = vpack.c.b16 %v638, %v634
      %v855 = vpack.c.b16 %v639, %v635
      %v856 = vpack.c.b16 %v640, %v636
      %v857 = vpack.c.b16 %v645, %v641
      %v858 = vpack.c.b16 %v646, %v642
      %v859 = vpack.c.b16 %v647, %v643
      %v860 = vpack.c.b16 %v648, %v644
      %v861 = vpack.c.b16 %v653, %v649
      %v862 = vpack.c.b16 %v654, %v650
      %v863 = vpack.c.b16 %v655, %v651
      %v864 = vpack.c.b16 %v656, %v652
      %v865 = vpack.c.b16 %v661, %v657
      %v866 = vpack.c.b16 %v662, %v658
      %v867 = vpack.c.b16 %v663, %v659
      %v868 = vpack.c.b16 %v664, %v660
      %v869 = vpack.c.b16 %v669, %v665
      %v870 = vpack.c.b16 %v670, %v666
      %v871 = vpack.c.b16 %v671, %v667
      %v872 = vpack.c.b16 %v672, %v668
      %v873 = vpack.c.b16 %v677, %v673
      %v874 = vpack.c.b16 %v678, %v674
      %v875 = vpack.c.b16 %v679, %v675
      %v876 = vpack.c.b16 %v680, %v676
      %v877 = vpack.c.b16 %v685, %v681
      %v878 = vpack.c.b16 %v686, %v682
      %v879 = vpack.c.b16 %v687, %v683
      %v880 = vpack.c.b16 %v688, %v684
      %v881 = vpack.c.b16 %v693, %v689
      %v882 = vpack.c.b16 %v694, %v690
      %v883 = vpack.c.b16 %v695, %v691
      %v884 = vpack.c.b16 %v696, %v692
      %v885 = vpack.c.b16 %v701, %v697
      %v886 = vpack.c.b16 %v702, %v698
      %v887 = vpack.c.b16 %v703, %v699
      %v888 = vpack.c.b16 %v704, %v700
      %v889 = vpack.c.b16 %v709, %v705
      %v890 = vpack.c.b16 %v710, %v706
      %v891 = vpack.c.b16 %v711, %v707
      %v892 = vpack.c.b16 %v712, %v708
      %v893 = vpack.c.b16 %v717, %v713
      %v894 = vpack.c.b16 %v718, %v714
      %v895 = vpack.c.b16 %v719, %v715
      %v896 = vpack.c.b16 %v720, %v716
      %v897 = vpack.c.b16 %v725, %v721
      %v898 = vpack.c.b16 %v726, %v722
      %v899 = vpack.c.b16 %v727, %v723
      %v900 = vpack.c.b16 %v728, %v724
      %v901 = vpack.c.b16 %v733, %v729
      %v902 = vpack.c.b16 %v734, %v730
      %v903 = vpack.c.b16 %v735, %v731
      %v904 = vpack.c.b16 %v736, %v732
      %v905 = vpack.c.b16 %v741, %v737
      %v906 = vpack.c.b16 %v742, %v738
      %v907 = vpack.c.b16 %v743, %v739
      %v908 = vpack.c.b16 %v744, %v740
      %v909 = vpack.c.b16 %v749, %v745
      %v910 = vpack.c.b16 %v750, %v746
      %v911 = vpack.c.b16 %v751, %v747
      %v912 = vpack.c.b16 %v752, %v748
      %v913 = vpack.c.b16 %v757, %v753
      %v914 = vpack.c.b16 %v758, %v754
      %v915 = vpack.c.b16 %v759, %v755
      %v916 = vpack.c.b16 %v760, %v756
      %v917 = vpack.c.b16 %v765, %v761
      %v918 = vpack.c.b16 %v766, %v762
      %v919 = vpack.c.b16 %v767, %v763
      %v920 = vpack.c.b16 %v768, %v764
      %v921 = vpack.c.b16 %v773, %v769
      %v922 = vpack.c.b16 %v774, %v770
      %v923 = vpack.c.b16 %v775, %v771
      %v924 = vpack.c.b16 %v776, %v772
      %v925 = vpack.c.b16 %v781, %v777
      %v926 = vpack.c.b16 %v782, %v778
      %v927 = vpack.c.b16 %v783, %v779
      %v928 = vpack.c.b16 %v784, %v780
      %v929 = vpack.c.b16 %v789, %v785
      %v930 = vpack.c.b16 %v790, %v786
      %v931 = vpack.c.b16 %v791, %v787
      %v932 = vpack.c.b16 %v792, %v788
      %v933 = vpack.c.b16 %v797, %v793
      %v934 = vpack.c.b16 %v798, %v794
      %v935 = vpack.c.b16 %v799, %v795
      %v936 = vpack.c.b16 %v800, %v796
      %v937 = vpack.c.b16 %v805, %v801
      %v938 = vpack.c.b16 %v806, %v802
      %v939 = vpack.c.b16 %v807, %v803
      %v940 = vpack.c.b16 %v808, %v804
      %v941 = vpack.c.b16 %v813, %v809
      %v942 = vpack.c.b16 %v814, %v810
      %v943 = vpack.c.b16 %v815, %v811
      %v944 = vpack.c.b16 %v816, %v812
      %1073 = vmatprep.subr.bf16.mxu0 %v846
      %1074 = vmatpush1.bf16.msra.mxu0 %v845
      %1075 = vmatprep.subr.bf16.mxu0 %v842
      %1076 = vmatpush1.bf16.msra.mxu0 %v841
      %1077 = vmatprep.subr.bf16.mxu0 %v838
      %1078 = vmatpush1.bf16.msra.mxu0 %v837
      %1079 = vmatprep.subr.bf16.mxu0 %v834
      %1080 = vmatpush1.bf16.msra.mxu0 %v833
      %1081 = vmatprep.subr.bf16.mxu0 %v830
      %1082 = vmatpush1.bf16.msra.mxu0 %v829
      %1083 = vmatprep.subr.bf16.mxu0 %v826
      %1084 = vmatpush1.bf16.msra.mxu0 %v825
      %1085 = vmatprep.subr.bf16.mxu0 %v822
      %1086 = vmatpush1.bf16.msra.mxu0 %v821
      %1087 = vmatprep.subr.bf16.mxu0 %v818
      %1088 = vmatpush1.bf16.msra.mxu0 %v817
      %1089 = vmatprep.subr.bf16.mxu0 %v878
      %1090 = vmatpush2.bf16.msra.mxu0 %v877
      %1091 = vmatprep.subr.bf16.mxu0 %v874
      %1092 = vmatpush2.bf16.msra.mxu0 %v873
      %1093 = vmatprep.subr.bf16.mxu0 %v870
      %1094 = vmatpush2.bf16.msra.mxu0 %v869
      %1095 = vmatprep.subr.bf16.mxu0 %v866
      %1096 = vmatpush2.bf16.msra.mxu0 %v865
      %1097 = vmatprep.subr.bf16.mxu0 %v862
      %1098 = vmatpush2.bf16.msra.mxu0 %v861
      %1099 = vmatprep.subr.bf16.mxu0 %v858
      %1100 = vmatpush2.bf16.msra.mxu0 %v857
      %1101 = vmatprep.subr.bf16.mxu0 %v854
      %1102 = vmatpush2.bf16.msra.mxu0 %v853
      %1103 = vmatprep.subr.bf16.mxu0 %v850
      %1104 = vmatpush2.bf16.msra.mxu0 %v849
      %1105 = vmatprep.mubr.bf16.mxu0 %v426
      %1106 = vmatmul.mubr.bf16.gmra.mxu0 %v425
      %v1107 = vpop.f32.mrf.mxu0
      %v1108 = vadd.f32 0.0, %v1107
      %v1109 = vpop.f32.mrf.mxu0
      %v1110 = vadd.f32 0.0, %v1109
      %v1111 = vpop.f32.mrf.mxu0
      %v1112 = vpop.f32.mrf.mxu0
      %1113 = vdwg.mxu0
      %1114 = vmatprep.subr.bf16.mxu0 %v910
      %1115 = vmatpush1.bf16.msra.mxu0 %v909
      %1116 = vmatprep.subr.bf16.mxu0 %v906
      %1117 = vmatpush1.bf16.msra.mxu0 %v905
      %1118 = vmatprep.subr.bf16.mxu0 %v902
      %1119 = vmatpush1.bf16.msra.mxu0 %v901
      %1120 = vmatprep.subr.bf16.mxu0 %v898
      %1121 = vmatpush1.bf16.msra.mxu0 %v897
      %1122 = vmatprep.subr.bf16.mxu0 %v894
      %1123 = vmatpush1.bf16.msra.mxu0 %v893
      %1124 = vmatprep.subr.bf16.mxu0 %v890
      %1125 = vmatpush1.bf16.msra.mxu0 %v889
      %1126 = vmatprep.subr.bf16.mxu0 %v886
      %1127 = vmatpush1.bf16.msra.mxu0 %v885
      %1128 = vmatprep.subr.bf16.mxu0 %v882
      %1129 = vmatpush1.bf16.msra.mxu0 %v881
      %1130 = vmatprep.subr.bf16.mxu0 %v942
      %1131 = vmatpush2.bf16.msra.mxu0 %v941
      %1132 = vmatprep.subr.bf16.mxu0 %v938
      %1133 = vmatpush2.bf16.msra.mxu0 %v937
      %1134 = vmatprep.subr.bf16.mxu0 %v934
      %1135 = vmatpush2.bf16.msra.mxu0 %v933
      %1136 = vmatprep.subr.bf16.mxu0 %v930
      %1137 = vmatpush2.bf16.msra.mxu0 %v929
      %1138 = vmatprep.subr.bf16.mxu0 %v926
      %1139 = vmatpush2.bf16.msra.mxu0 %v925
      %1140 = vmatprep.subr.bf16.mxu0 %v922
      %1141 = vmatpush2.bf16.msra.mxu0 %v921
      %1142 = vmatprep.subr.bf16.mxu0 %v918
      %1143 = vmatpush2.bf16.msra.mxu0 %v917
      %1144 = vmatprep.subr.bf16.mxu0 %v914
      %1145 = vmatpush2.bf16.msra.mxu0 %v913
      %1146 = vmatprep.mubr.bf16.mxu0 %v428
      %1147 = vmatmul.mubr.bf16.gmra.mxu0 %v427
      %v1148 = vpop.f32.mrf.mxu0
      %v1149 = vadd.f32 %v1108, %v1148
      %v1150 = vpop.f32.mrf.mxu0
      %v1151 = vadd.f32 %v1110, %v1150
      %v1152 = vpop.f32.mrf.mxu0
      %v1153 = vpop.f32.mrf.mxu0
      %1154 = vdwg.mxu0
      %1155 = vmatprep.subr.bf16.mxu0 %v848
      %1156 = vmatpush1.bf16.msra.mxu0 %v847
      %1157 = vmatprep.subr.bf16.mxu0 %v844
      %1158 = vmatpush1.bf16.msra.mxu0 %v843
      %1159 = vmatprep.subr.bf16.mxu0 %v840
      %1160 = vmatpush1.bf16.msra.mxu0 %v839
      %1161 = vmatprep.subr.bf16.mxu0 %v836
      %1162 = vmatpush1.bf16.msra.mxu0 %v835
      %1163 = vmatprep.subr.bf16.mxu0 %v832
      %1164 = vmatpush1.bf16.msra.mxu0 %v831
      %1165 = vmatprep.subr.bf16.mxu0 %v828
      %1166 = vmatpush1.bf16.msra.mxu0 %v827
      %1167 = vmatprep.subr.bf16.mxu0 %v824
      %1168 = vmatpush1.bf16.msra.mxu0 %v823
      %1169 = vmatprep.subr.bf16.mxu0 %v820
      %1170 = vmatpush1.bf16.msra.mxu0 %v819
      %1171 = vmatprep.subr.bf16.mxu0 %v880
      %1172 = vmatpush2.bf16.msra.mxu0 %v879
      %1173 = vmatprep.subr.bf16.mxu0 %v876
      %1174 = vmatpush2.bf16.msra.mxu0 %v875
      %1175 = vmatprep.subr.bf16.mxu0 %v872
      %1176 = vmatpush2.bf16.msra.mxu0 %v871
      %1177 = vmatprep.subr.bf16.mxu0 %v868
      %1178 = vmatpush2.bf16.msra.mxu0 %v867
      %1179 = vmatprep.subr.bf16.mxu0 %v864
      %1180 = vmatpush2.bf16.msra.mxu0 %v863
      %1181 = vmatprep.subr.bf16.mxu0 %v860
      %1182 = vmatpush2.bf16.msra.mxu0 %v859
      %1183 = vmatprep.subr.bf16.mxu0 %v856
      %1184 = vmatpush2.bf16.msra.mxu0 %v855
      %1185 = vmatprep.subr.bf16.mxu0 %v852
      %1186 = vmatpush2.bf16.msra.mxu0 %v851
      %1187 = vmatprep.mubr.bf16.mxu0 %v426
      %1188 = vmatmul.mubr.bf16.gmra.mxu0 %v425
      %v1189 = vpop.f32.mrf.mxu0
      %v1190 = vadd.f32 0.0, %v1189
      %v1191 = vpop.f32.mrf.mxu0
      %v1192 = vadd.f32 0.0, %v1191
      %v1193 = vpop.f32.mrf.mxu0
      %v1194 = vpop.f32.mrf.mxu0
      %1195 = vdwg.mxu0
      %1196 = vmatprep.subr.bf16.mxu0 %v912
      %1197 = vmatpush1.bf16.msra.mxu0 %v911
      %1198 = vmatprep.subr.bf16.mxu0 %v908
      %1199 = vmatpush1.bf16.msra.mxu0 %v907
      %1200 = vmatprep.subr.bf16.mxu0 %v904
      %1201 = vmatpush1.bf16.msra.mxu0 %v903
      %1202 = vmatprep.subr.bf16.mxu0 %v900
      %1203 = vmatpush1.bf16.msra.mxu0 %v899
      %1204 = vmatprep.subr.bf16.mxu0 %v896
      %1205 = vmatpush1.bf16.msra.mxu0 %v895
      %1206 = vmatprep.subr.bf16.mxu0 %v892
      %1207 = vmatpush1.bf16.msra.mxu0 %v891
      %1208 = vmatprep.subr.bf16.mxu0 %v888
      %1209 = vmatpush1.bf16.msra.mxu0 %v887
      %1210 = vmatprep.subr.bf16.mxu0 %v884
      %1211 = vmatpush1.bf16.msra.mxu0 %v883
      %1212 = vmatprep.subr.bf16.mxu0 %v944
      %1213 = vmatpush2.bf16.msra.mxu0 %v943
      %1214 = vmatprep.subr.bf16.mxu0 %v940
      %1215 = vmatpush2.bf16.msra.mxu0 %v939
      %1216 = vmatprep.subr.bf16.mxu0 %v936
      %1217 = vmatpush2.bf16.msra.mxu0 %v935
      %1218 = vmatprep.subr.bf16.mxu0 %v932
      %1219 = vmatpush2.bf16.msra.mxu0 %v931
      %1220 = vmatprep.subr.bf16.mxu0 %v928
      %1221 = vmatpush2.bf16.msra.mxu0 %v927
      %1222 = vmatprep.subr.bf16.mxu0 %v924
      %1223 = vmatpush2.bf16.msra.mxu0 %v923
      %1224 = vmatprep.subr.bf16.mxu0 %v920
      %1225 = vmatpush2.bf16.msra.mxu0 %v919
      %1226 = vmatprep.subr.bf16.mxu0 %v916
      %1227 = vmatpush2.bf16.msra.mxu0 %v915
      %1228 = vmatprep.mubr.bf16.mxu0 %v428
      %1229 = vmatmul.mubr.bf16.gmra.mxu0 %v427
      %v1230 = vpop.f32.mrf.mxu0
      %v1231 = vadd.f32 %v1190, %v1230
      %v1232 = vpop.f32.mrf.mxu0
      %v1233 = vadd.f32 %v1192, %v1232
      %v1234 = vpop.f32.mrf.mxu0
      %v1235 = vpop.f32.mrf.mxu0
      %1236 = vdwg.mxu0
      %v1237 = vadd.f32 %v285, %v1149
      %v1238 = vadd.f32 %v286, %v1151
      %v1239 = vadd.f32 %v287, %v1231
      %v1240 = vadd.f32 %v288, %v1233
      %1241 = vst [vmem:[#allocation2] sm:$0xff] %v1237
      %1242 = vst [vmem:[#allocation2 + $0x8] sm:$0xff] %v1238
      %1243 = vst [vmem:[#allocation2 + $0x10] sm:$0xff] %v1239
      %1244 = vst [vmem:[#allocation2 + $0x18] sm:$0xff] %v1240
      %p1245 = scmp.eq.s32.totalorder %s21, 1
      // Predicated region
      $region37: #{alexnet_forward.20} parent=31 // pred_check
        %p1246 = pneg %p1245
      $region38: #{alexnet_forward.20} parent=31 // pred_check_branch
        %1248 = sbr.rel (%p1246) target = $region40
      $region39: #{alexnet_forward.20} parent=31 // pred_region
        %v1249 = vld [vmem:[#allocation2] sm:$0xff]
        %v1250 = vld [vmem:[#allocation2 + $0x8] sm:$0xff]
        %v1251 = vld [vmem:[#allocation2 + $0x10] sm:$0xff]
        %v1252 = vld [vmem:[#allocation2 + $0x18] sm:$0xff]
        %v1253 = vld [vmem:[%s265] sm:$0xf]
        %v1255 = vlaneseq
        %v1256 = vshrl.u32 %v1255, 7
        %v1257 = vsub.s32 0, %v1256
        %v1258 = vrot.slane %v1253, %v1257
        %v1259 = vlaneseq
        %v1260 = vshrl.u32 %v1259, 7
        %v1261 = vsub.s32 1, %v1260
        %v1262 = vrot.slane %v1253, %v1261
        %v1263 = vlaneseq
        %v1264 = vshrl.u32 %v1263, 7
        %v1265 = vsub.s32 2, %v1264
        %v1266 = vrot.slane %v1253, %v1265
        %v1267 = vlaneseq
        %v1268 = vshrl.u32 %v1267, 7
        %v1269 = vsub.s32 3, %v1268
        %v1270 = vrot.slane %v1253, %v1269
        %v1275 = vadd.f32 %v1249, %v1258
        %v1276 = vadd.f32 %v1250, %v1262
        %v1277 = vadd.f32 %v1251, %v1266
        %v1278 = vadd.f32 %v1252, %v1270
        %v1279 = vmax.f32 %v1275, 0.0
        %v1280 = vmax.f32 %v1276, 0.0
        %v1281 = vmax.f32 %v1277, 0.0
        %v1282 = vmax.f32 %v1278, 0.0
        %1283 = vst [vmem:[%s275] sm:$0xff] %v1279
        %1284 = vst [vmem:[%s275 + $0x8] sm:$0xff] %v1280
        %1285 = vst [vmem:[%s275 + $0x10] sm:$0xff] %v1281
        %1286 = vst [vmem:[%s275 + $0x18] sm:$0xff] %v1282
      $region40: #{alexnet_forward.20} parent=31 // pred_fallthru
        _
      %s1287 = smul.u32 4, %s20
      %p1288 = scmp.lt.s32.totalorder %s19, 0
      %s1289 = scalar_select %p1288, %s19, 0
      %p1290 = scmp.lt.s32.totalorder %s1287, 3
      %s1291 = scalar_select %p1290, %s1287, 3
      %s1292 = smul.addr %s1289, 4
      %s1293 = sadd.s32 %s1291, %s1292
      %s1294 = smul.addr %s1293, 8
      %s1295 = scalar_lea.vmem %s3, %s1294
      // Predicated region
      $region41: #{alexnet_forward.20} parent=31 // pred_check
        %p1296 = pneg %p135
      $region42: #{alexnet_forward.20} parent=31 // pred_check_branch
        %1298 = sbr.rel (%p1296) target = $region44
      $region43: #{alexnet_forward.20} parent=31 // pred_region
        %s1299 = smul.u32 4, %s20
      $region44: #{alexnet_forward.20} parent=31 // pred_fallthru
        _
      // Predicated region
      $region45: #{alexnet_forward.20} parent=31 // pred_check
        %p1300 = pneg %p135
      $region46: #{alexnet_forward.20} parent=31 // pred_check_branch
        %1302 = sbr.rel (%p1300) target = $region48
      $region47: #{alexnet_forward.20} parent=31 // pred_region
        %s1303 = smul.u32 4, %s20
        %p1304 = scmp.lt.s32.totalorder %s19, 0
        %s1305 = scalar_select %p1304, %s19, 0
        %p1306 = scmp.lt.s32.totalorder %s1303, 3
        %s1307 = scalar_select %p1306, %s1303, 3
        %s1308 = smul.addr %s1305, 4
        %s1309 = sadd.s32 %s1307, %s1308
        %s1310 = smul.addr %s1309, 8
        %s1311 = scalar_lea.vmem %s3, %s1310
      $region48: #{alexnet_forward.20} parent=31 // pred_fallthru
        _
    $region32: #{alexnet_forward.20} parent=5 // pred_fallthru
      _
    %p1312 = scmp.le.s32.totalorder 2, %s9
    // Predicated region
    $region49: #{alexnet_forward.20} parent=5 // pred_check
      %p1313 = pneg %p1312
    $region50: #{alexnet_forward.20} parent=5 // pred_check_branch
      %1315 = sbr.rel (%p1313) target = $region52
    $region51: #{alexnet_forward.20} parent=5 // pred_region
      %s1316 = ssub.s32 %s9, 2
    $region52: #{alexnet_forward.20} parent=5 // pred_fallthru
      _
  $region6: #{alexnet_forward.20} parent=0 // loop_footer
    %s13 = sadd.s32 1, %s9
  $region7: #{alexnet_forward.20} parent=0 // loop_footer_branch
    %8 = sbr.rel target = $region3
  $region8: #{alexnet_forward.20} parent=0 // loop_exit
    _

// kernel: alexnet_forward.19
$region0: #{alexnet_forward.19}
  #allocation0 [shape = 'u32[]', space=smem, size = 0x4, offset = 0x4, fixed_abs, tag = 'smem constant byte address 0x4 - core index']
  #allocation1 [shape = 'u32[144,128]{1,0:T(1,128)}', space=vmem, size = 0x12000, scoped, tag = 'internal scratch']
  #allocation2 [shape = 'f32[8,512]{1,0:T(8,128)}', space=vmem, size = 0x4000, scoped, tag = 'scratch operand']
  %s0 = inlined_call_operand.vmem [shape: bf16[8,2048], index: 0, kind: input, shape index: {}]
  %s1 = inlined_call_operand.vmem [shape: bf16[2048,1024], index: 1, kind: input, shape index: {}]
  %s2 = inlined_call_operand.vmem [shape: f32[1,1024], index: 2, kind: input, shape index: {}]
  %s3 = inlined_call_operand.vmem [shape: f32[8,1024], index: 3, kind: output, shape index: {}]
  %s4 = sld [smem:[#allocation0]]
  $region76: #{alexnet_forward.19} parent=0
    _
  %s6 = ssub.s32 1, %s4
  %s7 = scalar_select 0, %s6, %s4
  $region1: #{alexnet_forward.19} parent=0
    #allocation3 [shape = 'u8[1048576]{0}', space=vmem, size = 0x100000, scoped, tag = 'input window, operand 1']
    loop: start=0, step=1, limit=10
    $region2: #{alexnet_forward.19} parent=1 // loop_pre_header
      _
    $region3: #{alexnet_forward.19} parent=1 // loop_header
      %s9 = sphi 0, %s13
      %p10 = scmp.ge.s32.totalorder %s9, 10
      %s16 = sphi 0, %s35
      %s17 = sphi 0, %s31
      %s18 = sphi 0, %s27
      %s19 = sphi 0, %s16
      %s20 = sphi 0, %s17
      %s21 = sphi 0, %s18
      %s22 = sphi 0, %s19
      %s23 = sphi 0, %s20
      %s24 = sphi 0, %s21
      %s40 = sphi 0, %s42
      %s43 = sphi 0, %s40
      %s44 = sphi 0, %s43
      %s60 = sphi 0, %s44
      %s68 = sphi 0, %s70
      %s71 = sphi 0, %s68
      %s72 = sphi 0, %s71
      %s88 = sphi 0, %s72
      %s94 = sphi 0, %s96
      %s97 = sphi 0, %s94
      %s98 = sphi 0, %s97
      %s114 = sphi 0, %s98
      %s122 = sphi 0, %s124
      %s125 = sphi 0, %s122
      %s126 = sphi 0, %s125
      %s142 = sphi 0, %s126
    $region4: #{alexnet_forward.19} parent=1 // loop_header_branch
      %12 = sbr.rel (%p10) target = $region8
    $region5: #{alexnet_forward.19} parent=1 // loop_body
      %s14 = ssub.s32 %s9, 1
      %s15 = ssub.s32 %s9, 2
      %s25 = sadd.s32 1, %s18
      %p26 = scmp.ge.s32.totalorder %s25, 4
      %s27 = scalar_select %p26, 0, %s25
      %s28 = sadd.s32 1, %s17
      %s29 = scalar_select %p26, %s28, %s17
      %p30 = scmp.ge.s32.totalorder %s29, 2
      %s31 = scalar_select %p30, 0, %s29
      %s32 = sadd.s32 1, %s16
      %s33 = scalar_select %p30, %s32, %s16
      %p34 = scmp.ge.s32.totalorder %s33, 1
      %s35 = scalar_select %p34, 0, %s33
      %s36 = ssub.s32 %s16, %s35
      %s37 = ssub.s32 %s18, %s27
      %s38 = sor.u32 %s36, %s37
      %p39 = scmp.eq.s32.totalorder %s38, 0
      %s41 = sadd.s32 %s40, 1
      %s42 = scalar_select %p39, %s40, %s41
      %p45 = pneg %p39
      %p46 = scmp.eq.s32.totalorder %s9, 7
      %p47 = por %p45, %p46
      %p48 = scmp.ne.s32.totalorder %s40, %s43
      %p49 = scmp.eq.s32.totalorder %s9, 0
      %p50 = por %p48, %p49
      %p51 = scmp.ne.s32.totalorder %s40, %s43
      %p52 = scmp.eq.s32.totalorder %s14, 7
      %p53 = por %p51, %p52
      %p54 = scmp.ne.s32.totalorder %s43, %s44
      %p55 = scmp.eq.s32.totalorder %s14, 0
      %p56 = por %p54, %p55
      %p57 = scmp.ne.s32.totalorder %s43, %s44
      %p58 = scmp.eq.s32.totalorder %s15, 7
      %p59 = por %p57, %p58
      %p61 = scmp.ne.s32.totalorder %s44, %s60
      %p62 = scmp.eq.s32.totalorder %s15, 0
      %p63 = por %p61, %p62
      %s64 = ssub.s32 %s18, %s27
      %s65 = ssub.s32 %s17, %s31
      %s66 = sor.u32 %s64, %s65
      %p67 = scmp.eq.s32.totalorder %s66, 0
      %s69 = sadd.s32 %s68, 1
      %s70 = scalar_select %p67, %s68, %s69
      %p73 = pneg %p67
      %p74 = scmp.eq.s32.totalorder %s9, 7
      %p75 = por %p73, %p74
      %p76 = scmp.ne.s32.totalorder %s68, %s71
      %p77 = scmp.eq.s32.totalorder %s9, 0
      %p78 = por %p76, %p77
      %p79 = scmp.ne.s32.totalorder %s68, %s71
      %p80 = scmp.eq.s32.totalorder %s14, 7
      %p81 = por %p79, %p80
      %p82 = scmp.ne.s32.totalorder %s71, %s72
      %p83 = scmp.eq.s32.totalorder %s14, 0
      %p84 = por %p82, %p83
      %p85 = scmp.ne.s32.totalorder %s71, %s72
      %p86 = scmp.eq.s32.totalorder %s15, 7
      %p87 = por %p85, %p86
      %p89 = scmp.ne.s32.totalorder %s72, %s88
      %p90 = scmp.eq.s32.totalorder %s15, 0
      %p91 = por %p89, %p90
      %s92 = ssub.s32 %s17, %s31
      %p93 = scmp.eq.s32.totalorder %s92, 0
      %s95 = sadd.s32 %s94, 1
      %s96 = scalar_select %p93, %s94, %s95
      %p99 = pneg %p93
      %p100 = scmp.eq.s32.totalorder %s9, 7
      %p101 = por %p99, %p100
      %p102 = scmp.ne.s32.totalorder %s94, %s97
      %p103 = scmp.eq.s32.totalorder %s9, 0
      %p104 = por %p102, %p103
      %p105 = scmp.ne.s32.totalorder %s94, %s97
      %p106 = scmp.eq.s32.totalorder %s14, 7
      %p107 = por %p105, %p106
      %p108 = scmp.ne.s32.totalorder %s97, %s98
      %p109 = scmp.eq.s32.totalorder %s14, 0
      %p110 = por %p108, %p109
      %p111 = scmp.ne.s32.totalorder %s97, %s98
      %p112 = scmp.eq.s32.totalorder %s15, 7
      %p113 = por %p111, %p112
      %p115 = scmp.ne.s32.totalorder %s98, %s114
      %p116 = scmp.eq.s32.totalorder %s15, 0
      %p117 = por %p115, %p116
      %s118 = ssub.s32 %s16, %s35
      %s119 = ssub.s32 %s17, %s31
      %s120 = sor.u32 %s118, %s119
      %p121 = scmp.eq.s32.totalorder %s120, 0
      %s123 = sadd.s32 %s122, 1
      %s124 = scalar_select %p121, %s122, %s123
      %p127 = pneg %p121
      %p128 = scmp.eq.s32.totalorder %s9, 7
      %p129 = por %p127, %p128
      %p130 = scmp.ne.s32.totalorder %s122, %s125
      %p131 = scmp.eq.s32.totalorder %s9, 0
      %p132 = por %p130, %p131
      %p133 = scmp.ne.s32.totalorder %s122, %s125
      %p134 = scmp.eq.s32.totalorder %s14, 7
      %p135 = por %p133, %p134
      %p136 = scmp.ne.s32.totalorder %s125, %s126
      %p137 = scmp.eq.s32.totalorder %s14, 0
      %p138 = por %p136, %p137
      %p139 = scmp.ne.s32.totalorder %s125, %s126
      %p140 = scmp.eq.s32.totalorder %s15, 7
      %p141 = por %p139, %p140
      %p143 = scmp.ne.s32.totalorder %s126, %s142
      %p144 = scmp.eq.s32.totalorder %s15, 0
      %p145 = por %p143, %p144
      %p146 = scmp.le.s32.totalorder 1, %s9
      %p147 = scmp.lt.s32.totalorder %s9, 9
      %p148 = pnand %p146, %p147
      %p149 = pneg %p148
      // Predicated region
      $region9: #{alexnet_forward.19} parent=5 // pred_check
        _
      $region10: #{alexnet_forward.19} parent=5 // pred_check_branch
        %151 = sbr.rel (%p148) target = $region12
      $region11: #{alexnet_forward.19} parent=5 // pred_region
        %s152 = ssub.s32 %s9, 1
      $region12: #{alexnet_forward.19} parent=5 // pred_fallthru
        _
      %p153 = scmp.lt.s32.totalorder %s9, 8
      // Predicated region
      $region13: #{alexnet_forward.19} parent=5 // pred_check
        %p154 = pneg %p153
      $region14: #{alexnet_forward.19} parent=5 // pred_check_branch
        %156 = sbr.rel (%p154) target = $region16
      $region15: #{alexnet_forward.19} parent=5 // pred_region
        // Predicated region
        $region17: #{alexnet_forward.19} parent=15 // pred_check
          %p157 = pneg %p50
        $region18: #{alexnet_forward.19} parent=15 // pred_check_branch
          %159 = sbr.rel (%p157) target = $region20
        $region19: #{alexnet_forward.19} parent=15 // pred_region
          %s160 = smul.u32 4, %s18
          %p161 = scmp.lt.s32.totalorder %s16, 0
          %s162 = scalar_select %p161, %s16, 0
          %p163 = scmp.lt.s32.totalorder %s160, 15
          %s164 = scalar_select %p163, %s160, 15
          %s165 = smul.addr %s162, 16
          %s166 = sadd.s32 %s164, %s165
          %s167 = smul.addr %s166, 4
          %s168 = scalar_lea.vmem %s0, %s167
          %s169 = smul.u32 4, %s18
        $region20: #{alexnet_forward.19} parent=15 // pred_fallthru
          _
        // Predicated region
        $region21: #{alexnet_forward.19} parent=15 // pred_check
          %p170 = pneg %p78
        $region22: #{alexnet_forward.19} parent=15 // pred_check_branch
          %172 = sbr.rel (%p170) target = $region24
        $region23: #{alexnet_forward.19} parent=15 // pred_region
          %s173 = sand.u32 %s68, 1
          %s174 = sand.u32 %s68, 1
          %s175 = smul.addr %s174, 1024
          %s176 = scalar_lea.vmem [#allocation3], %s175
          %s177 = smul.u32 64, %s18
          %s178 = smul.u32 4, %s17
          %s179 = smul.addr %s177, 8
          %s180 = sadd.s32 %s178, %s179
          %s181 = smul.addr %s180, 4
          %s182 = scalar_lea.vmem %s1, %s181
          // Predicated region
          $region25: #{alexnet_forward.19} parent=23 // pred_check
            _
          $region26: #{alexnet_forward.19} parent=23 // pred_check_branch
            %184 = sbr.rel (0) target = $region28
          $region27: #{alexnet_forward.19} parent=23 // pred_region
            // Predicated region
            $region29: #{alexnet_forward.19} parent=27 // pred_check
              _
            $region30: #{alexnet_forward.19} parent=27 // pred_check_branch
              %186 = sbr.rel (0) target = $region32
            $region31: #{alexnet_forward.19} parent=27 // pred_region
              loop: start=0, step=1, limit=1
              $region33: #{alexnet_forward.19} parent=31 // loop_pre_header
                _
              $region34: #{alexnet_forward.19} parent=31 // loop_header
                %s188 = sphi 0, %s192
                %p189 = scmp.ge.s32.totalorder %s188, 1
                %s193 = sphi %s182, %s182
                %s194 = sphi %s176, %s176
              $region35: #{alexnet_forward.19} parent=31 // loop_header_branch
                %191 = sbr.rel (%p189) target = $region39
              $region36: #{alexnet_forward.19} parent=31 // loop_body
                %v195 = vld [vmem:[%s193] sm:$0xff]
                %196 = vst [vmem:[%s194] sm:$0xff] %v195
                %v197 = vld [vmem:[%s193 + $0x8] sm:$0xff]
                %198 = vst [vmem:[%s194 + $0x8] sm:$0xff] %v197
                %v199 = vld [vmem:[%s193 + $0x20] sm:$0xff]
                %200 = vst [vmem:[%s194 + $0x10] sm:$0xff] %v199
                %v201 = vld [vmem:[%s193 + $0x28] sm:$0xff]
                %202 = vst [vmem:[%s194 + $0x18] sm:$0xff] %v201
                %v203 = vld [vmem:[%s193 + $0x40] sm:$0xff]
                %204 = vst [vmem:[%s194 + $0x20] sm:$0xff] %v203
                %v205 = vld [vmem:[%s193 + $0x48] sm:$0xff]
                %206 = vst [vmem:[%s194 + $0x28] sm:$0xff] %v205
                %v207 = vld [vmem:[%s193 + $0x60] sm:$0xff]
                %208 = vst [vmem:[%s194 + $0x30] sm:$0xff] %v207
                %v209 = vld [vmem:[%s193 + $0x68] sm:$0xff]
                %210 = vst [vmem:[%s194 + $0x38] sm:$0xff] %v209
                %v211 = vld [vmem:[%s193 + $0x80] sm:$0xff]
                %212 = vst [vmem:[%s194 + $0x40] sm:$0xff] %v211
                %v213 = vld [vmem:[%s193 + $0x88] sm:$0xff]
                %214 = vst [vmem:[%s194 + $0x48] sm:$0xff] %v213
                %v215 = vld [vmem:[%s193 + $0xa0] sm:$0xff]
                %216 = vst [vmem:[%s194 + $0x50] sm:$0xff] %v215
                %v217 = vld [vmem:[%s193 + $0xa8] sm:$0xff]
                %218 = vst [vmem:[%s194 + $0x58] sm:$0xff] %v217
                %v219 = vld [vmem:[%s193 + $0xc0] sm:$0xff]
                %220 = vst [vmem:[%s194 + $0x60] sm:$0xff] %v219
                %v221 = vld [vmem:[%s193 + $0xc8] sm:$0xff]
                %222 = vst [vmem:[%s194 + $0x68] sm:$0xff] %v221
                %v223 = vld [vmem:[%s193 + $0xe0] sm:$0xff]
                %224 = vst [vmem:[%s194 + $0x70] sm:$0xff] %v223
                %v225 = vld [vmem:[%s193 + $0xe8] sm:$0xff]
                %226 = vst [vmem:[%s194 + $0x78] sm:$0xff] %v225
                %v227 = vld [vmem:[%s193 + $0x100] sm:$0xff]
                %228 = vst [vmem:[%s194 + $0x80] sm:$0xff] %v227
                %v229 = vld [vmem:[%s193 + $0x108] sm:$0xff]
                %230 = vst [vmem:[%s194 + $0x88] sm:$0xff] %v229
                %v231 = vld [vmem:[%s193 + $0x120] sm:$0xff]
                %232 = vst [vmem:[%s194 + $0x90] sm:$0xff] %v231
                %v233 = vld [vmem:[%s193 + $0x128] sm:$0xff]
                %234 = vst [vmem:[%s194 + $0x98] sm:$0xff] %v233
                %v235 = vld [vmem:[%s193 + $0x140] sm:$0xff]
                %236 = vst [vmem:[%s194 + $0xa0] sm:$0xff] %v235
                %v237 = vld [vmem:[%s193 + $0x148] sm:$0xff]
                %238 = vst [vmem:[%s194 + $0xa8] sm:$0xff] %v237
                %v239 = vld [vmem:[%s193 + $0x160] sm:$0xff]
                %240 = vst [vmem:[%s194 + $0xb0] sm:$0xff] %v239
                %v241 = vld [vmem:[%s193 + $0x168] sm:$0xff]
                %242 = vst [vmem:[%s194 + $0xb8] sm:$0xff] %v241
                %v243 = vld [vmem:[%s193 + $0x180] sm:$0xff]
                %244 = vst [vmem:[%s194 + $0xc0] sm:$0xff] %v243
                %v245 = vld [vmem:[%s193 + $0x188] sm:$0xff]
                %246 = vst [vmem:[%s194 + $0xc8] sm:$0xff] %v245
                %v247 = vld [vmem:[%s193 + $0x1a0] sm:$0xff]
                %248 = vst [vmem:[%s194 + $0xd0] sm:$0xff] %v247
                %v249 = vld [vmem:[%s193 + $0x1a8] sm:$0xff]
                %250 = vst [vmem:[%s194 + $0xd8] sm:$0xff] %v249
                %v251 = vld [vmem:[%s193 + $0x1c0] sm:$0xff]
                %252 = vst [vmem:[%s194 + $0xe0] sm:$0xff] %v251
                %v253 = vld [vmem:[%s193 + $0x1c8] sm:$0xff]
                %254 = vst [vmem:[%s194 + $0xe8] sm:$0xff] %v253
                %v255 = vld [vmem:[%s193 + $0x1e0] sm:$0xff]
                %256 = vst [vmem:[%s194 + $0xf0] sm:$0xff] %v255
                %v257 = vld [vmem:[%s193 + $0x1e8] sm:$0xff]
                %258 = vst [vmem:[%s194 + $0xf8] sm:$0xff] %v257
                %v259 = vld [vmem:[%s193 + $0x200] sm:$0xff]
                %260 = vst [vmem:[%s194 + $0x100] sm:$0xff] %v259
                %v261 = vld [vmem:[%s193 + $0x208] sm:$0xff]
                %262 = vst [vmem:[%s194 + $0x108] sm:$0xff] %v261
                %v263 = vld [vmem:[%s193 + $0x220] sm:$0xff]
                %264 = vst [vmem:[%s194 + $0x110] sm:$0xff] %v263
                %v265 = vld [vmem:[%s193 + $0x228] sm:$0xff]
                %266 = vst [vmem:[%s194 + $0x118] sm:$0xff] %v265
                %v267 = vld [vmem:[%s193 + $0x240] sm:$0xff]
                %268 = vst [vmem:[%s194 + $0x120] sm:$0xff] %v267
                %v269 = vld [vmem:[%s193 + $0x248] sm:$0xff]
                %270 = vst [vmem:[%s194 + $0x128] sm:$0xff] %v269
                %v271 = vld [vmem:[%s193 + $0x260] sm:$0xff]
                %272 = vst [vmem:[%s194 + $0x130] sm:$0xff] %v271
                %v273 = vld [vmem:[%s193 + $0x268] sm:$0xff]
                %274 = vst [vmem:[%s194 + $0x138] sm:$0xff] %v273
                %v275 = vld [vmem:[%s193 + $0x280] sm:$0xff]
                %276 = vst [vmem:[%s194 + $0x140] sm:$0xff] %v275
                %v277 = vld [vmem:[%s193 + $0x288] sm:$0xff]
                %278 = vst [vmem:[%s194 + $0x148] sm:$0xff] %v277
                %v279 = vld [vmem:[%s193 + $0x2a0] sm:$0xff]
                %280 = vst [vmem:[%s194 + $0x150] sm:$0xff] %v279
                %v281 = vld [vmem:[%s193 + $0x2a8] sm:$0xff]
                %282 = vst [vmem:[%s194 + $0x158] sm:$0xff] %v281
                %v283 = vld [vmem:[%s193 + $0x2c0] sm:$0xff]
                %284 = vst [vmem:[%s194 + $0x160] sm:$0xff] %v283
                %v285 = vld [vmem:[%s193 + $0x2c8] sm:$0xff]
                %286 = vst [vmem:[%s194 + $0x168] sm:$0xff] %v285
                %v287 = vld [vmem:[%s193 + $0x2e0] sm:$0xff]
                %288 = vst [vmem:[%s194 + $0x170] sm:$0xff] %v287
                %v289 = vld [vmem:[%s193 + $0x2e8] sm:$0xff]
                %290 = vst [vmem:[%s194 + $0x178] sm:$0xff] %v289
                %v291 = vld [vmem:[%s193 + $0x300] sm:$0xff]
                %292 = vst [vmem:[%s194 + $0x180] sm:$0xff] %v291
                %v293 = vld [vmem:[%s193 + $0x308] sm:$0xff]
                %294 = vst [vmem:[%s194 + $0x188] sm:$0xff] %v293
                %v295 = vld [vmem:[%s193 + $0x320] sm:$0xff]
                %296 = vst [vmem:[%s194 + $0x190] sm:$0xff] %v295
                %v297 = vld [vmem:[%s193 + $0x328] sm:$0xff]
                %298 = vst [vmem:[%s194 + $0x198] sm:$0xff] %v297
                %v299 = vld [vmem:[%s193 + $0x340] sm:$0xff]
                %300 = vst [vmem:[%s194 + $0x1a0] sm:$0xff] %v299
                %v301 = vld [vmem:[%s193 + $0x348] sm:$0xff]
                %302 = vst [vmem:[%s194 + $0x1a8] sm:$0xff] %v301
                %v303 = vld [vmem:[%s193 + $0x360] sm:$0xff]
                %304 = vst [vmem:[%s194 + $0x1b0] sm:$0xff] %v303
                %v305 = vld [vmem:[%s193 + $0x368] sm:$0xff]
                %306 = vst [vmem:[%s194 + $0x1b8] sm:$0xff] %v305
                %v307 = vld [vmem:[%s193 + $0x380] sm:$0xff]
                %308 = vst [vmem:[%s194 + $0x1c0] sm:$0xff] %v307
                %v309 = vld [vmem:[%s193 + $0x388] sm:$0xff]
                %310 = vst [vmem:[%s194 + $0x1c8] sm:$0xff] %v309
                %v311 = vld [vmem:[%s193 + $0x3a0] sm:$0xff]
                %312 = vst [vmem:[%s194 + $0x1d0] sm:$0xff] %v311
                %v313 = vld [vmem:[%s193 + $0x3a8] sm:$0xff]
                %314 = vst [vmem:[%s194 + $0x1d8] sm:$0xff] %v313
                %v315 = vld [vmem:[%s193 + $0x3c0] sm:$0xff]
                %316 = vst [vmem:[%s194 + $0x1e0] sm:$0xff] %v315
                %v317 = vld [vmem:[%s193 + $0x3c8] sm:$0xff]
                %318 = vst [vmem:[%s194 + $0x1e8] sm:$0xff] %v317
                %v319 = vld [vmem:[%s193 + $0x3e0] sm:$0xff]
                %320 = vst [vmem:[%s194 + $0x1f0] sm:$0xff] %v319
                %v321 = vld [vmem:[%s193 + $0x3e8] sm:$0xff]
                %322 = vst [vmem:[%s194 + $0x1f8] sm:$0xff] %v321
                %v323 = vld [vmem:[%s193 + $0x400] sm:$0xff]
                %324 = vst [vmem:[%s194 + $0x200] sm:$0xff] %v323
                %v325 = vld [vmem:[%s193 + $0x408] sm:$0xff]
                %326 = vst [vmem:[%s194 + $0x208] sm:$0xff] %v325
                %v327 = vld [vmem:[%s193 + $0x420] sm:$0xff]
                %328 = vst [vmem:[%s194 + $0x210] sm:$0xff] %v327
                %v329 = vld [vmem:[%s193 + $0x428] sm:$0xff]
                %330 = vst [vmem:[%s194 + $0x218] sm:$0xff] %v329
                %v331 = vld [vmem:[%s193 + $0x440] sm:$0xff]
                %332 = vst [vmem:[%s194 + $0x220] sm:$0xff] %v331
                %v333 = vld [vmem:[%s193 + $0x448] sm:$0xff]
                %334 = vst [vmem:[%s194 + $0x228] sm:$0xff] %v333
                %v335 = vld [vmem:[%s193 + $0x460] sm:$0xff]
                %336 = vst [vmem:[%s194 + $0x230] sm:$0xff] %v335
                %v337 = vld [vmem:[%s193 + $0x468] sm:$0xff]
                %338 = vst [vmem:[%s194 + $0x238] sm:$0xff] %v337
                %v339 = vld [vmem:[%s193 + $0x480] sm:$0xff]
                %340 = vst [vmem:[%s194 + $0x240] sm:$0xff] %v339
                %v341 = vld [vmem:[%s193 + $0x488] sm:$0xff]
                %342 = vst [vmem:[%s194 + $0x248] sm:$0xff] %v341
                %v343 = vld [vmem:[%s193 + $0x4a0] sm:$0xff]
                %344 = vst [vmem:[%s194 + $0x250] sm:$0xff] %v343
                %v345 = vld [vmem:[%s193 + $0x4a8] sm:$0xff]
                %346 = vst [vmem:[%s194 + $0x258] sm:$0xff] %v345
                %v347 = vld [vmem:[%s193 + $0x4c0] sm:$0xff]
                %348 = vst [vmem:[%s194 + $0x260] sm:$0xff] %v347
                %v349 = vld [vmem:[%s193 + $0x4c8] sm:$0xff]
                %350 = vst [vmem:[%s194 + $0x268] sm:$0xff] %v349
                %v351 = vld [vmem:[%s193 + $0x4e0] sm:$0xff]
                %352 = vst [vmem:[%s194 + $0x270] sm:$0xff] %v351
                %v353 = vld [vmem:[%s193 + $0x4e8] sm:$0xff]
                %354 = vst [vmem:[%s194 + $0x278] sm:$0xff] %v353
                %v355 = vld [vmem:[%s193 + $0x500] sm:$0xff]
                %356 = vst [vmem:[%s194 + $0x280] sm:$0xff] %v355
                %v357 = vld [vmem:[%s193 + $0x508] sm:$0xff]
                %358 = vst [vmem:[%s194 + $0x288] sm:$0xff] %v357
                %v359 = vld [vmem:[%s193 + $0x520] sm:$0xff]
                %360 = vst [vmem:[%s194 + $0x290] sm:$0xff] %v359
                %v361 = vld [vmem:[%s193 + $0x528] sm:$0xff]
                %362 = vst [vmem:[%s194 + $0x298] sm:$0xff] %v361
                %v363 = vld [vmem:[%s193 + $0x540] sm:$0xff]
                %364 = vst [vmem:[%s194 + $0x2a0] sm:$0xff] %v363
                %v365 = vld [vmem:[%s193 + $0x548] sm:$0xff]
                %366 = vst [vmem:[%s194 + $0x2a8] sm:$0xff] %v365
                %v367 = vld [vmem:[%s193 + $0x560] sm:$0xff]
                %368 = vst [vmem:[%s194 + $0x2b0] sm:$0xff] %v367
                %v369 = vld [vmem:[%s193 + $0x568] sm:$0xff]
                %370 = vst [vmem:[%s194 + $0x2b8] sm:$0xff] %v369
                %v371 = vld [vmem:[%s193 + $0x580] sm:$0xff]
                %372 = vst [vmem:[%s194 + $0x2c0] sm:$0xff] %v371
                %v373 = vld [vmem:[%s193 + $0x588] sm:$0xff]
                %374 = vst [vmem:[%s194 + $0x2c8] sm:$0xff] %v373
                %v375 = vld [vmem:[%s193 + $0x5a0] sm:$0xff]
                %376 = vst [vmem:[%s194 + $0x2d0] sm:$0xff] %v375
                %v377 = vld [vmem:[%s193 + $0x5a8] sm:$0xff]
                %378 = vst [vmem:[%s194 + $0x2d8] sm:$0xff] %v377
                %v379 = vld [vmem:[%s193 + $0x5c0] sm:$0xff]
                %380 = vst [vmem:[%s194 + $0x2e0] sm:$0xff] %v379
                %v381 = vld [vmem:[%s193 + $0x5c8] sm:$0xff]
                %382 = vst [vmem:[%s194 + $0x2e8] sm:$0xff] %v381
                %v383 = vld [vmem:[%s193 + $0x5e0] sm:$0xff]
                %384 = vst [vmem:[%s194 + $0x2f0] sm:$0xff] %v383
                %v385 = vld [vmem:[%s193 + $0x5e8] sm:$0xff]
                %386 = vst [vmem:[%s194 + $0x2f8] sm:$0xff] %v385
                %v387 = vld [vmem:[%s193 + $0x600] sm:$0xff]
                %388 = vst [vmem:[%s194 + $0x300] sm:$0xff] %v387
                %v389 = vld [vmem:[%s193 + $0x608] sm:$0xff]
                %390 = vst [vmem:[%s194 + $0x308] sm:$0xff] %v389
                %v391 = vld [vmem:[%s193 + $0x620] sm:$0xff]
                %392 = vst [vmem:[%s194 + $0x310] sm:$0xff] %v391
                %v393 = vld [vmem:[%s193 + $0x628] sm:$0xff]
                %394 = vst [vmem:[%s194 + $0x318] sm:$0xff] %v393
                %v395 = vld [vmem:[%s193 + $0x640] sm:$0xff]
                %396 = vst [vmem:[%s194 + $0x320] sm:$0xff] %v395
                %v397 = vld [vmem:[%s193 + $0x648] sm:$0xff]
                %398 = vst [vmem:[%s194 + $0x328] sm:$0xff] %v397
                %v399 = vld [vmem:[%s193 + $0x660] sm:$0xff]
                %400 = vst [vmem:[%s194 + $0x330] sm:$0xff] %v399
                %v401 = vld [vmem:[%s193 + $0x668] sm:$0xff]
                %402 = vst [vmem:[%s194 + $0x338] sm:$0xff] %v401
                %v403 = vld [vmem:[%s193 + $0x680] sm:$0xff]
                %404 = vst [vmem:[%s194 + $0x340] sm:$0xff] %v403
                %v405 = vld [vmem:[%s193 + $0x688] sm:$0xff]
                %406 = vst [vmem:[%s194 + $0x348] sm:$0xff] %v405
                %v407 = vld [vmem:[%s193 + $0x6a0] sm:$0xff]
                %408 = vst [vmem:[%s194 + $0x350] sm:$0xff] %v407
                %v409 = vld [vmem:[%s193 + $0x6a8] sm:$0xff]
                %410 = vst [vmem:[%s194 + $0x358] sm:$0xff] %v409
                %v411 = vld [vmem:[%s193 + $0x6c0] sm:$0xff]
                %412 = vst [vmem:[%s194 + $0x360] sm:$0xff] %v411
                %v413 = vld [vmem:[%s193 + $0x6c8] sm:$0xff]
                %414 = vst [vmem:[%s194 + $0x368] sm:$0xff] %v413
                %v415 = vld [vmem:[%s193 + $0x6e0] sm:$0xff]
                %416 = vst [vmem:[%s194 + $0x370] sm:$0xff] %v415
                %v417 = vld [vmem:[%s193 + $0x6e8] sm:$0xff]
                %418 = vst [vmem:[%s194 + $0x378] sm:$0xff] %v417
                %v419 = vld [vmem:[%s193 + $0x700] sm:$0xff]
                %420 = vst [vmem:[%s194 + $0x380] sm:$0xff] %v419
                %v421 = vld [vmem:[%s193 + $0x708] sm:$0xff]
                %422 = vst [vmem:[%s194 + $0x388] sm:$0xff] %v421
                %v423 = vld [vmem:[%s193 + $0x720] sm:$0xff]
                %424 = vst [vmem:[%s194 + $0x390] sm:$0xff] %v423
                %v425 = vld [vmem:[%s193 + $0x728] sm:$0xff]
                %426 = vst [vmem:[%s194 + $0x398] sm:$0xff] %v425
                %v427 = vld [vmem:[%s193 + $0x740] sm:$0xff]
                %428 = vst [vmem:[%s194 + $0x3a0] sm:$0xff] %v427
                %v429 = vld [vmem:[%s193 + $0x748] sm:$0xff]
                %430 = vst [vmem:[%s194 + $0x3a8] sm:$0xff] %v429
                %v431 = vld [vmem:[%s193 + $0x760] sm:$0xff]
                %432 = vst [vmem:[%s194 + $0x3b0] sm:$0xff] %v431
                %v433 = vld [vmem:[%s193 + $0x768] sm:$0xff]
                %434 = vst [vmem:[%s194 + $0x3b8] sm:$0xff] %v433
                %v435 = vld [vmem:[%s193 + $0x780] sm:$0xff]
                %436 = vst [vmem:[%s194 + $0x3c0] sm:$0xff] %v435
                %v437 = vld [vmem:[%s193 + $0x788] sm:$0xff]
                %438 = vst [vmem:[%s194 + $0x3c8] sm:$0xff] %v437
                %v439 = vld [vmem:[%s193 + $0x7a0] sm:$0xff]
                %440 = vst [vmem:[%s194 + $0x3d0] sm:$0xff] %v439
                %v441 = vld [vmem:[%s193 + $0x7a8] sm:$0xff]
                %442 = vst [vmem:[%s194 + $0x3d8] sm:$0xff] %v441
                %v443 = vld [vmem:[%s193 + $0x7c0] sm:$0xff]
                %444 = vst [vmem:[%s194 + $0x3e0] sm:$0xff] %v443
                %v445 = vld [vmem:[%s193 + $0x7c8] sm:$0xff]
                %446 = vst [vmem:[%s194 + $0x3e8] sm:$0xff] %v445
                %v447 = vld [vmem:[%s193 + $0x7e0] sm:$0xff]
                %448 = vst [vmem:[%s194 + $0x3f0] sm:$0xff] %v447
                %v449 = vld [vmem:[%s193 + $0x7e8] sm:$0xff]
                %450 = vst [vmem:[%s194 + $0x3f8] sm:$0xff] %v449
              $region37: #{alexnet_forward.19} parent=31 // loop_footer
                %s192 = sadd.s32 1, %s188
              $region38: #{alexnet_forward.19} parent=31 // loop_footer_branch
                %187 = sbr.rel target = $region34
              $region39: #{alexnet_forward.19} parent=31 // loop_exit
                _
            $region32: #{alexnet_forward.19} parent=27 // pred_fallthru
              _
            // Predicated region
            $region40: #{alexnet_forward.19} parent=27 // pred_check
              _
            $region41: #{alexnet_forward.19} parent=27 // pred_check_branch
              %452 = sbr.rel target = $region43
            $region42: #{alexnet_forward.19} parent=27 // pred_region
              _
            $region43: #{alexnet_forward.19} parent=27 // pred_fallthru
              _
          $region28: #{alexnet_forward.19} parent=23 // pred_fallthru
            _
          %453 = vnop
        $region24: #{alexnet_forward.19} parent=15 // pred_fallthru
          _
        // Predicated region
        $region44: #{alexnet_forward.19} parent=15 // pred_check
          %p454 = pneg %p104
        $region45: #{alexnet_forward.19} parent=15 // pred_check_branch
          %456 = sbr.rel (%p454) target = $region47
        $region46: #{alexnet_forward.19} parent=15 // pred_region
          %s457 = smul.u32 4, %s17
          %p458 = scmp.lt.s32.totalorder %s457, 7
          %s459 = scalar_select %p458, %s457, 7
          %s460 = scalar_lea.vmem %s2, %s459
          %s461 = smul.u32 4, %s17
        $region47: #{alexnet_forward.19} parent=15 // pred_fallthru
          _
      $region16: #{alexnet_forward.19} parent=5 // pred_fallthru
        _
      %p462 = scmp.le.s32.totalorder 1, %s9
      %p463 = scmp.lt.s32.totalorder %s9, 9
      %p464 = pnand %p462, %p463
      %p465 = pneg %p464
      // Predicated region
      $region48: #{alexnet_forward.19} parent=5 // pred_check
        _
      $region49: #{alexnet_forward.19} parent=5 // pred_check_branch
        %467 = sbr.rel (%p464) target = $region51
      $region50: #{alexnet_forward.19} parent=5 // pred_region
        %s468 = ssub.s32 %s9, 1
        %s469 = sand.u32 %s71, 1
        %s470 = sand.u32 %s71, 1
        %s471 = smul.addr %s470, 1024
        %s472 = scalar_lea.vmem [#allocation3], %s471
        // Predicated region
        $region52: #{alexnet_forward.19} parent=50 // pred_check
          %p473 = pneg %p84
        $region53: #{alexnet_forward.19} parent=50 // pred_check_branch
          %475 = sbr.rel (%p473) target = $region55
        $region54: #{alexnet_forward.19} parent=50 // pred_region
          _
        $region55: #{alexnet_forward.19} parent=50 // pred_fallthru
          _
        %s476 = smul.u32 4, %s21
        %p477 = scmp.lt.s32.totalorder %s19, 0
        %s478 = scalar_select %p477, %s19, 0
        %p479 = scmp.lt.s32.totalorder %s476, 15
        %s480 = scalar_select %p479, %s476, 15
        %s481 = smul.addr %s478, 16
        %s482 = sadd.s32 %s480, %s481
        %s483 = smul.addr %s482, 4
        %s484 = scalar_lea.vmem %s0, %s483
        %p485 = pneg %p56
        %p486 = pneg %p53
        %s487 = sand.u32 %s71, 1
        %s488 = sand.u32 %s71, 1
        %s489 = smul.addr %s488, 1024
        %s490 = scalar_lea.vmem [#allocation3], %s489
        %p491 = pneg %p84
        %p492 = pneg %p81
        %s493 = smul.u32 4, %s20
        %p494 = scmp.lt.s32.totalorder %s493, 7
        %s495 = scalar_select %p494, %s493, 7
        %s496 = scalar_lea.vmem %s2, %s495
        %p497 = pneg %p110
        %p498 = pneg %p107
        %p499 = pneg %p138
        %p500 = pneg %p135
        %s501 = smul.u32 4, %s20
        %p502 = scmp.lt.s32.totalorder %s19, 0
        %s503 = scalar_select %p502, %s19, 0
        %p504 = scmp.lt.s32.totalorder %s501, 7
        %s505 = scalar_select %p504, %s501, 7
        %s506 = smul.addr %s503, 8
        %s507 = sadd.s32 %s505, %s506
        %s508 = smul.addr %s507, 8
        %s509 = scalar_lea.vmem %s3, %s508
        %s510 = smul.u32 4, %s21
        %p511 = scmp.lt.s32.totalorder %s19, 0
        %s512 = scalar_select %p511, %s19, 0
        %p513 = scmp.lt.s32.totalorder %s510, 15
        %s514 = scalar_select %p513, %s510, 15
        %s515 = smul.addr %s512, 16
        %s516 = sadd.s32 %s514, %s515
        %s517 = smul.addr %s516, 4
        %s518 = scalar_lea.vmem %s0, %s517
        %s519 = smul.u32 4, %s21
        %s520 = smul.u32 64, %s21
        %s521 = smul.u32 4, %s20
        %s522 = smul.u32 4, %s20
        %p523 = scmp.lt.s32.totalorder %s522, 7
        %s524 = scalar_select %p523, %s522, 7
        %s525 = scalar_lea.vmem %s2, %s524
        %s526 = smul.u32 4, %s20
        %s527 = smul.u32 4, %s20
        %p528 = scmp.lt.s32.totalorder %s19, 0
        %s529 = scalar_select %p528, %s19, 0
        %p530 = scmp.lt.s32.totalorder %s527, 7
        %s531 = scalar_select %p530, %s527, 7
        %s532 = smul.addr %s529, 8
        %s533 = sadd.s32 %s531, %s532
        %s534 = smul.addr %s533, 8
        %s535 = scalar_lea.vmem %s3, %s534
        %s536 = smul.u32 4, %s20
        %p537 = scmp.eq.s32.totalorder %s21, 0
        // Predicated region
        $region56: #{alexnet_forward.19} parent=50 // pred_check
          %p538 = pneg %p537
        $region57: #{alexnet_forward.19} parent=50 // pred_check_branch
          %540 = sbr.rel (%p538) target = $region59
        $region58: #{alexnet_forward.19} parent=50 // pred_region
          %541 = vst [vmem:[#allocation2] sm:$0xff] 0.0
          %542 = vst [vmem:[#allocation2 + $0x8] sm:$0xff] 0.0
          %543 = vst [vmem:[#allocation2 + $0x10] sm:$0xff] 0.0
          %544 = vst [vmem:[#allocation2 + $0x18] sm:$0xff] 0.0
        $region59: #{alexnet_forward.19} parent=50 // pred_fallthru
          _
        %v545 = vld [vmem:[#allocation2] sm:$0xff]
        %v546 = vld [vmem:[#allocation2 + $0x8] sm:$0xff]
        %v547 = vld [vmem:[#allocation2 + $0x10] sm:$0xff]
        %v548 = vld [vmem:[#allocation2 + $0x18] sm:$0xff]
        %v549 = vld [vmem:[%s518] sm:$0xff]
        %v550 = vld [vmem:[%s518 + $0x8] sm:$0xff]
        %v551 = vld [vmem:[%s472] sm:$0xff]
        %v552 = vld [vmem:[%s472 + $0x8] sm:$0xff]
        %v553 = vld [vmem:[%s472 + $0x10] sm:$0xff]
        %v554 = vld [vmem:[%s472 + $0x18] sm:$0xff]
        %v555 = vld [vmem:[%s472 + $0x20] sm:$0xff]
        %v556 = vld [vmem:[%s472 + $0x28] sm:$0xff]
        %v557 = vld [vmem:[%s472 + $0x30] sm:$0xff]
        %v558 = vld [vmem:[%s472 + $0x38] sm:$0xff]
        %v559 = vld [vmem:[%s472 + $0x40] sm:$0xff]
        %v560 = vld [vmem:[%s472 + $0x48] sm:$0xff]
        %v561 = vld [vmem:[%s472 + $0x50] sm:$0xff]
        %v562 = vld [vmem:[%s472 + $0x58] sm:$0xff]
        %v563 = vld [vmem:[%s472 + $0x60] sm:$0xff]
        %v564 = vld [vmem:[%s472 + $0x68] sm:$0xff]
        %v565 = vld [vmem:[%s472 + $0x70] sm:$0xff]
        %v566 = vld [vmem:[%s472 + $0x78] sm:$0xff]
        %v567 = vld [vmem:[%s472 + $0x80] sm:$0xff]
        %v568 = vld [vmem:[%s472 + $0x88] sm:$0xff]
        %v569 = vld [vmem:[%s472 + $0x90] sm:$0xff]
        %v570 = vld [vmem:[%s472 + $0x98] sm:$0xff]
        %v571 = vld [vmem:[%s472 + $0xa0] sm:$0xff]
        %v572 = vld [vmem:[%s472 + $0xa8] sm:$0xff]
        %v573 = vld [vmem:[%s472 + $0xb0] sm:$0xff]
        %v574 = vld [vmem:[%s472 + $0xb8] sm:$0xff]
        %v575 = vld [vmem:[%s472 + $0xc0] sm:$0xff]
        %v576 = vld [vmem:[%s472 + $0xc8] sm:$0xff]
        %v577 = vld [vmem:[%s472 + $0xd0] sm:$0xff]
        %v578 = vld [vmem:[%s472 + $0xd8] sm:$0xff]
        %v579 = vld [vmem:[%s472 + $0xe0] sm:$0xff]
        %v580 = vld [vmem:[%s472 + $0xe8] sm:$0xff]
        %v581 = vld [vmem:[%s472 + $0xf0] sm:$0xff]
        %v582 = vld [vmem:[%s472 + $0xf8] sm:$0xff]
        %v583 = vld [vmem:[%s472 + $0x100] sm:$0xff]
        %v584 = vld [vmem:[%s472 + $0x108] sm:$0xff]
        %v585 = vld [vmem:[%s472 + $0x110] sm:$0xff]
        %v586 = vld [vmem:[%s472 + $0x118] sm:$0xff]
        %v587 = vld [vmem:[%s472 + $0x120] sm:$0xff]
        %v588 = vld [vmem:[%s472 + $0x128] sm:$0xff]
        %v589 = vld [vmem:[%s472 + $0x130] sm:$0xff]
        %v590 = vld [vmem:[%s472 + $0x138] sm:$0xff]
        %v591 = vld [vmem:[%s472 + $0x140] sm:$0xff]
        %v592 = vld [vmem:[%s472 + $0x148] sm:$0xff]
        %v593 = vld [vmem:[%s472 + $0x150] sm:$0xff]
        %v594 = vld [vmem:[%s472 + $0x158] sm:$0xff]
        %v595 = vld [vmem:[%s472 + $0x160] sm:$0xff]
        %v596 = vld [vmem:[%s472 + $0x168] sm:$0xff]
        %v597 = vld [vmem:[%s472 + $0x170] sm:$0xff]
        %v598 = vld [vmem:[%s472 + $0x178] sm:$0xff]
        %v599 = vld [vmem:[%s472 + $0x180] sm:$0xff]
        %v600 = vld [vmem:[%s472 + $0x188] sm:$0xff]
        %v601 = vld [vmem:[%s472 + $0x190] sm:$0xff]
        %v602 = vld [vmem:[%s472 + $0x198] sm:$0xff]
        %v603 = vld [vmem:[%s472 + $0x1a0] sm:$0xff]
        %v604 = vld [vmem:[%s472 + $0x1a8] sm:$0xff]
        %v605 = vld [vmem:[%s472 + $0x1b0] sm:$0xff]
        %v606 = vld [vmem:[%s472 + $0x1b8] sm:$0xff]
        %v607 = vld [vmem:[%s472 + $0x1c0] sm:$0xff]
        %v608 = vld [vmem:[%s472 + $0x1c8] sm:$0xff]
        %v609 = vld [vmem:[%s472 + $0x1d0] sm:$0xff]
        %v610 = vld [vmem:[%s472 + $0x1d8] sm:$0xff]
        %v611 = vld [vmem:[%s472 + $0x1e0] sm:$0xff]
        %v612 = vld [vmem:[%s472 + $0x1e8] sm:$0xff]
        %v613 = vld [vmem:[%s472 + $0x1f0] sm:$0xff]
        %v614 = vld [vmem:[%s472 + $0x1f8] sm:$0xff]
        %v615 = vld [vmem:[%s472 + $0x200] sm:$0xff]
        %v616 = vld [vmem:[%s472 + $0x208] sm:$0xff]
        %v617 = vld [vmem:[%s472 + $0x210] sm:$0xff]
        %v618 = vld [vmem:[%s472 + $0x218] sm:$0xff]
        %v619 = vld [vmem:[%s472 + $0x220] sm:$0xff]
        %v620 = vld [vmem:[%s472 + $0x228] sm:$0xff]
        %v621 = vld [vmem:[%s472 + $0x230] sm:$0xff]
        %v622 = vld [vmem:[%s472 + $0x238] sm:$0xff]
        %v623 = vld [vmem:[%s472 + $0x240] sm:$0xff]
        %v624 = vld [vmem:[%s472 + $0x248] sm:$0xff]
        %v625 = vld [vmem:[%s472 + $0x250] sm:$0xff]
        %v626 = vld [vmem:[%s472 + $0x258] sm:$0xff]
        %v627 = vld [vmem:[%s472 + $0x260] sm:$0xff]
        %v628 = vld [vmem:[%s472 + $0x268] sm:$0xff]
        %v629 = vld [vmem:[%s472 + $0x270] sm:$0xff]
        %v630 = vld [vmem:[%s472 + $0x278] sm:$0xff]
        %v631 = vld [vmem:[%s472 + $0x280] sm:$0xff]
        %v632 = vld [vmem:[%s472 + $0x288] sm:$0xff]
        %v633 = vld [vmem:[%s472 + $0x290] sm:$0xff]
        %v634 = vld [vmem:[%s472 + $0x298] sm:$0xff]
        %v635 = vld [vmem:[%s472 + $0x2a0] sm:$0xff]
        %v636 = vld [vmem:[%s472 + $0x2a8] sm:$0xff]
        %v637 = vld [vmem:[%s472 + $0x2b0] sm:$0xff]
        %v638 = vld [vmem:[%s472 + $0x2b8] sm:$0xff]
        %v639 = vld [vmem:[%s472 + $0x2c0] sm:$0xff]
        %v640 = vld [vmem:[%s472 + $0x2c8] sm:$0xff]
        %v641 = vld [vmem:[%s472 + $0x2d0] sm:$0xff]
        %v642 = vld [vmem:[%s472 + $0x2d8] sm:$0xff]
        %v643 = vld [vmem:[%s472 + $0x2e0] sm:$0xff]
        %v644 = vld [vmem:[%s472 + $0x2e8] sm:$0xff]
        %v645 = vld [vmem:[%s472 + $0x2f0] sm:$0xff]
        %v646 = vld [vmem:[%s472 + $0x2f8] sm:$0xff]
        %v647 = vld [vmem:[%s472 + $0x300] sm:$0xff]
        %v648 = vld [vmem:[%s472 + $0x308] sm:$0xff]
        %v649 = vld [vmem:[%s472 + $0x310] sm:$0xff]
        %v650 = vld [vmem:[%s472 + $0x318] sm:$0xff]
        %v651 = vld [vmem:[%s472 + $0x320] sm:$0xff]
        %v652 = vld [vmem:[%s472 + $0x328] sm:$0xff]
        %v653 = vld [vmem:[%s472 + $0x330] sm:$0xff]
        %v654 = vld [vmem:[%s472 + $0x338] sm:$0xff]
        %v655 = vld [vmem:[%s472 + $0x340] sm:$0xff]
        %v656 = vld [vmem:[%s472 + $0x348] sm:$0xff]
        %v657 = vld [vmem:[%s472 + $0x350] sm:$0xff]
        %v658 = vld [vmem:[%s472 + $0x358] sm:$0xff]
        %v659 = vld [vmem:[%s472 + $0x360] sm:$0xff]
        %v660 = vld [vmem:[%s472 + $0x368] sm:$0xff]
        %v661 = vld [vmem:[%s472 + $0x370] sm:$0xff]
        %v662 = vld [vmem:[%s472 + $0x378] sm:$0xff]
        %v663 = vld [vmem:[%s472 + $0x380] sm:$0xff]
        %v664 = vld [vmem:[%s472 + $0x388] sm:$0xff]
        %v665 = vld [vmem:[%s472 + $0x390] sm:$0xff]
        %v666 = vld [vmem:[%s472 + $0x398] sm:$0xff]
        %v667 = vld [vmem:[%s472 + $0x3a0] sm:$0xff]
        %v668 = vld [vmem:[%s472 + $0x3a8] sm:$0xff]
        %v669 = vld [vmem:[%s472 + $0x3b0] sm:$0xff]
        %v670 = vld [vmem:[%s472 + $0x3b8] sm:$0xff]
        %v671 = vld [vmem:[%s472 + $0x3c0] sm:$0xff]
        %v672 = vld [vmem:[%s472 + $0x3c8] sm:$0xff]
        %v673 = vld [vmem:[%s472 + $0x3d0] sm:$0xff]
        %v674 = vld [vmem:[%s472 + $0x3d8] sm:$0xff]
        %v675 = vld [vmem:[%s472 + $0x3e0] sm:$0xff]
        %v676 = vld [vmem:[%s472 + $0x3e8] sm:$0xff]
        %v677 = vld [vmem:[%s472 + $0x3f0] sm:$0xff]
        %v678 = vld [vmem:[%s472 + $0x3f8] sm:$0xff]
        %v681 = vunpack.c.l.b16 %v549
        %v682 = vunpack.c.h.b16 %v549
        %v683 = vunpack.c.l.b16 %v550
        %v684 = vunpack.c.h.b16 %v550
        %v685 = vpack.c.b16 %v681, %v681
        %v686 = vpack.c.b16 %v682, %v682
        %v687 = vpack.c.b16 %v683, %v683
        %v688 = vpack.c.b16 %v684, %v684
        %v821 = vunpack.c.l.b16 %v551
        %v822 = vunpack.c.h.b16 %v551
        %v823 = vunpack.c.l.b16 %v552
        %v824 = vunpack.c.h.b16 %v552
        %v825 = vunpack.c.l.b16 %v553
        %v826 = vunpack.c.h.b16 %v553
        %v827 = vunpack.c.l.b16 %v554
        %v828 = vunpack.c.h.b16 %v554
        %v829 = vunpack.c.l.b16 %v555
        %v830 = vunpack.c.h.b16 %v555
        %v831 = vunpack.c.l.b16 %v556
        %v832 = vunpack.c.h.b16 %v556
        %v833 = vunpack.c.l.b16 %v557
        %v834 = vunpack.c.h.b16 %v557
        %v835 = vunpack.c.l.b16 %v558
        %v836 = vunpack.c.h.b16 %v558
        %v837 = vunpack.c.l.b16 %v559
        %v838 = vunpack.c.h.b16 %v559
        %v839 = vunpack.c.l.b16 %v560
        %v840 = vunpack.c.h.b16 %v560
        %v841 = vunpack.c.l.b16 %v561
        %v842 = vunpack.c.h.b16 %v561
        %v843 = vunpack.c.l.b16 %v562
        %v844 = vunpack.c.h.b16 %v562
        %v845 = vunpack.c.l.b16 %v563
        %v846 = vunpack.c.h.b16 %v563
        %v847 = vunpack.c.l.b16 %v564
        %v848 = vunpack.c.h.b16 %v564
        %v849 = vunpack.c.l.b16 %v565
        %v850 = vunpack.c.h.b16 %v565
        %v851 = vunpack.c.l.b16 %v566
        %v852 = vunpack.c.h.b16 %v566
        %v853 = vunpack.c.l.b16 %v567
        %v854 = vunpack.c.h.b16 %v567
        %v855 = vunpack.c.l.b16 %v568
        %v856 = vunpack.c.h.b16 %v568
        %v857 = vunpack.c.l.b16 %v569
        %v858 = vunpack.c.h.b16 %v569
        %v859 = vunpack.c.l.b16 %v570
        %v860 = vunpack.c.h.b16 %v570
        %v861 = vunpack.c.l.b16 %v571
        %v862 = vunpack.c.h.b16 %v571
        %v863 = vunpack.c.l.b16 %v572
        %v864 = vunpack.c.h.b16 %v572
        %v865 = vunpack.c.l.b16 %v573
        %v866 = vunpack.c.h.b16 %v573
        %v867 = vunpack.c.l.b16 %v574
        %v868 = vunpack.c.h.b16 %v574
        %v869 = vunpack.c.l.b16 %v575
        %v870 = vunpack.c.h.b16 %v575
        %v871 = vunpack.c.l.b16 %v576
        %v872 = vunpack.c.h.b16 %v576
        %v873 = vunpack.c.l.b16 %v577
        %v874 = vunpack.c.h.b16 %v577
        %v875 = vunpack.c.l.b16 %v578
        %v876 = vunpack.c.h.b16 %v578
        %v877 = vunpack.c.l.b16 %v579
        %v878 = vunpack.c.h.b16 %v579
        %v879 = vunpack.c.l.b16 %v580
        %v880 = vunpack.c.h.b16 %v580
        %v881 = vunpack.c.l.b16 %v581
        %v882 = vunpack.c.h.b16 %v581
        %v883 = vunpack.c.l.b16 %v582
        %v884 = vunpack.c.h.b16 %v582
        %v885 = vunpack.c.l.b16 %v583
        %v886 = vunpack.c.h.b16 %v583
        %v887 = vunpack.c.l.b16 %v584
        %v888 = vunpack.c.h.b16 %v584
        %v889 = vunpack.c.l.b16 %v585
        %v890 = vunpack.c.h.b16 %v585
        %v891 = vunpack.c.l.b16 %v586
        %v892 = vunpack.c.h.b16 %v586
        %v893 = vunpack.c.l.b16 %v587
        %v894 = vunpack.c.h.b16 %v587
        %v895 = vunpack.c.l.b16 %v588
        %v896 = vunpack.c.h.b16 %v588
        %v897 = vunpack.c.l.b16 %v589
        %v898 = vunpack.c.h.b16 %v589
        %v899 = vunpack.c.l.b16 %v590
        %v900 = vunpack.c.h.b16 %v590
        %v901 = vunpack.c.l.b16 %v591
        %v902 = vunpack.c.h.b16 %v591
        %v903 = vunpack.c.l.b16 %v592
        %v904 = vunpack.c.h.b16 %v592
        %v905 = vunpack.c.l.b16 %v593
        %v906 = vunpack.c.h.b16 %v593
        %v907 = vunpack.c.l.b16 %v594
        %v908 = vunpack.c.h.b16 %v594
        %v909 = vunpack.c.l.b16 %v595
        %v910 = vunpack.c.h.b16 %v595
        %v911 = vunpack.c.l.b16 %v596
        %v912 = vunpack.c.h.b16 %v596
        %v913 = vunpack.c.l.b16 %v597
        %v914 = vunpack.c.h.b16 %v597
        %v915 = vunpack.c.l.b16 %v598
        %v916 = vunpack.c.h.b16 %v598
        %v917 = vunpack.c.l.b16 %v599
        %v918 = vunpack.c.h.b16 %v599
        %v919 = vunpack.c.l.b16 %v600
        %v920 = vunpack.c.h.b16 %v600
        %v921 = vunpack.c.l.b16 %v601
        %v922 = vunpack.c.h.b16 %v601
        %v923 = vunpack.c.l.b16 %v602
        %v924 = vunpack.c.h.b16 %v602
        %v925 = vunpack.c.l.b16 %v603
        %v926 = vunpack.c.h.b16 %v603
        %v927 = vunpack.c.l.b16 %v604
        %v928 = vunpack.c.h.b16 %v604
        %v929 = vunpack.c.l.b16 %v605
        %v930 = vunpack.c.h.b16 %v605
        %v931 = vunpack.c.l.b16 %v606
        %v932 = vunpack.c.h.b16 %v606
        %v933 = vunpack.c.l.b16 %v607
        %v934 = vunpack.c.h.b16 %v607
        %v935 = vunpack.c.l.b16 %v608
        %v936 = vunpack.c.h.b16 %v608
        %v937 = vunpack.c.l.b16 %v609
        %v938 = vunpack.c.h.b16 %v609
        %v939 = vunpack.c.l.b16 %v610
        %v940 = vunpack.c.h.b16 %v610
        %v941 = vunpack.c.l.b16 %v611
        %v942 = vunpack.c.h.b16 %v611
        %v943 = vunpack.c.l.b16 %v612
        %v944 = vunpack.c.h.b16 %v612
        %v945 = vunpack.c.l.b16 %v613
        %v946 = vunpack.c.h.b16 %v613
        %v947 = vunpack.c.l.b16 %v614
        %v948 = vunpack.c.h.b16 %v614
        %v949 = vunpack.c.l.b16 %v615
        %v950 = vunpack.c.h.b16 %v615
        %v951 = vunpack.c.l.b16 %v616
        %v952 = vunpack.c.h.b16 %v616
        %v953 = vunpack.c.l.b16 %v617
        %v954 = vunpack.c.h.b16 %v617
        %v955 = vunpack.c.l.b16 %v618
        %v956 = vunpack.c.h.b16 %v618
        %v957 = vunpack.c.l.b16 %v619
        %v958 = vunpack.c.h.b16 %v619
        %v959 = vunpack.c.l.b16 %v620
        %v960 = vunpack.c.h.b16 %v620
        %v961 = vunpack.c.l.b16 %v621
        %v962 = vunpack.c.h.b16 %v621
        %v963 = vunpack.c.l.b16 %v622
        %v964 = vunpack.c.h.b16 %v622
        %v965 = vunpack.c.l.b16 %v623
        %v966 = vunpack.c.h.b16 %v623
        %v967 = vunpack.c.l.b16 %v624
        %v968 = vunpack.c.h.b16 %v624
        %v969 = vunpack.c.l.b16 %v625
        %v970 = vunpack.c.h.b16 %v625
        %v971 = vunpack.c.l.b16 %v626
        %v972 = vunpack.c.h.b16 %v626
        %v973 = vunpack.c.l.b16 %v627
        %v974 = vunpack.c.h.b16 %v627
        %v975 = vunpack.c.l.b16 %v628
        %v976 = vunpack.c.h.b16 %v628
        %v977 = vunpack.c.l.b16 %v629
        %v978 = vunpack.c.h.b16 %v629
        %v979 = vunpack.c.l.b16 %v630
        %v980 = vunpack.c.h.b16 %v630
        %v981 = vunpack.c.l.b16 %v631
        %v982 = vunpack.c.h.b16 %v631
        %v983 = vunpack.c.l.b16 %v632
        %v984 = vunpack.c.h.b16 %v632
        %v985 = vunpack.c.l.b16 %v633
        %v986 = vunpack.c.h.b16 %v633
        %v987 = vunpack.c.l.b16 %v634
        %v988 = vunpack.c.h.b16 %v634
        %v989 = vunpack.c.l.b16 %v635
        %v990 = vunpack.c.h.b16 %v635
        %v991 = vunpack.c.l.b16 %v636
        %v992 = vunpack.c.h.b16 %v636
        %v993 = vunpack.c.l.b16 %v637
        %v994 = vunpack.c.h.b16 %v637
        %v995 = vunpack.c.l.b16 %v638
        %v996 = vunpack.c.h.b16 %v638
        %v997 = vunpack.c.l.b16 %v639
        %v998 = vunpack.c.h.b16 %v639
        %v999 = vunpack.c.l.b16 %v640
        %v1000 = vunpack.c.h.b16 %v640
        %v1001 = vunpack.c.l.b16 %v641
        %v1002 = vunpack.c.h.b16 %v641
        %v1003 = vunpack.c.l.b16 %v642
        %v1004 = vunpack.c.h.b16 %v642
        %v1005 = vunpack.c.l.b16 %v643
        %v1006 = vunpack.c.h.b16 %v643
        %v1007 = vunpack.c.l.b16 %v644
        %v1008 = vunpack.c.h.b16 %v644
        %v1009 = vunpack.c.l.b16 %v645
        %v1010 = vunpack.c.h.b16 %v645
        %v1011 = vunpack.c.l.b16 %v646
        %v1012 = vunpack.c.h.b16 %v646
        %v1013 = vunpack.c.l.b16 %v647
        %v1014 = vunpack.c.h.b16 %v647
        %v1015 = vunpack.c.l.b16 %v648
        %v1016 = vunpack.c.h.b16 %v648
        %v1017 = vunpack.c.l.b16 %v649
        %v1018 = vunpack.c.h.b16 %v649
        %v1019 = vunpack.c.l.b16 %v650
        %v1020 = vunpack.c.h.b16 %v650
        %v1021 = vunpack.c.l.b16 %v651
        %v1022 = vunpack.c.h.b16 %v651
        %v1023 = vunpack.c.l.b16 %v652
        %v1024 = vunpack.c.h.b16 %v652
        %v1025 = vunpack.c.l.b16 %v653
        %v1026 = vunpack.c.h.b16 %v653
        %v1027 = vunpack.c.l.b16 %v654
        %v1028 = vunpack.c.h.b16 %v654
        %v1029 = vunpack.c.l.b16 %v655
        %v1030 = vunpack.c.h.b16 %v655
        %v1031 = vunpack.c.l.b16 %v656
        %v1032 = vunpack.c.h.b16 %v656
        %v1033 = vunpack.c.l.b16 %v657
        %v1034 = vunpack.c.h.b16 %v657
        %v1035 = vunpack.c.l.b16 %v658
        %v1036 = vunpack.c.h.b16 %v658
        %v1037 = vunpack.c.l.b16 %v659
        %v1038 = vunpack.c.h.b16 %v659
        %v1039 = vunpack.c.l.b16 %v660
        %v1040 = vunpack.c.h.b16 %v660
        %v1041 = vunpack.c.l.b16 %v661
        %v1042 = vunpack.c.h.b16 %v661
        %v1043 = vunpack.c.l.b16 %v662
        %v1044 = vunpack.c.h.b16 %v662
        %v1045 = vunpack.c.l.b16 %v663
        %v1046 = vunpack.c.h.b16 %v663
        %v1047 = vunpack.c.l.b16 %v664
        %v1048 = vunpack.c.h.b16 %v664
        %v1049 = vunpack.c.l.b16 %v665
        %v1050 = vunpack.c.h.b16 %v665
        %v1051 = vunpack.c.l.b16 %v666
        %v1052 = vunpack.c.h.b16 %v666
        %v1053 = vunpack.c.l.b16 %v667
        %v1054 = vunpack.c.h.b16 %v667
        %v1055 = vunpack.c.l.b16 %v668
        %v1056 = vunpack.c.h.b16 %v668
        %v1057 = vunpack.c.l.b16 %v669
        %v1058 = vunpack.c.h.b16 %v669
        %v1059 = vunpack.c.l.b16 %v670
        %v1060 = vunpack.c.h.b16 %v670
        %v1061 = vunpack.c.l.b16 %v671
        %v1062 = vunpack.c.h.b16 %v671
        %v1063 = vunpack.c.l.b16 %v672
        %v1064 = vunpack.c.h.b16 %v672
        %v1065 = vunpack.c.l.b16 %v673
        %v1066 = vunpack.c.h.b16 %v673
        %v1067 = vunpack.c.l.b16 %v674
        %v1068 = vunpack.c.h.b16 %v674
        %v1069 = vunpack.c.l.b16 %v675
        %v1070 = vunpack.c.h.b16 %v675
        %v1071 = vunpack.c.l.b16 %v676
        %v1072 = vunpack.c.h.b16 %v676
        %v1073 = vunpack.c.l.b16 %v677
        %v1074 = vunpack.c.h.b16 %v677
        %v1075 = vunpack.c.l.b16 %v678
        %v1076 = vunpack.c.h.b16 %v678
        %v1077 = vpack.c.b16 %v825, %v821
        %v1078 = vpack.c.b16 %v826, %v822
        %v1079 = vpack.c.b16 %v827, %v823
        %v1080 = vpack.c.b16 %v828, %v824
        %v1081 = vpack.c.b16 %v833, %v829
        %v1082 = vpack.c.b16 %v834, %v830
        %v1083 = vpack.c.b16 %v835, %v831
        %v1084 = vpack.c.b16 %v836, %v832
        %v1085 = vpack.c.b16 %v841, %v837
        %v1086 = vpack.c.b16 %v842, %v838
        %v1087 = vpack.c.b16 %v843, %v839
        %v1088 = vpack.c.b16 %v844, %v840
        %v1089 = vpack.c.b16 %v849, %v845
        %v1090 = vpack.c.b16 %v850, %v846
        %v1091 = vpack.c.b16 %v851, %v847
        %v1092 = vpack.c.b16 %v852, %v848
        %v1093 = vpack.c.b16 %v857, %v853
        %v1094 = vpack.c.b16 %v858, %v854
        %v1095 = vpack.c.b16 %v859, %v855
        %v1096 = vpack.c.b16 %v860, %v856
        %v1097 = vpack.c.b16 %v865, %v861
        %v1098 = vpack.c.b16 %v866, %v862
        %v1099 = vpack.c.b16 %v867, %v863
        %v1100 = vpack.c.b16 %v868, %v864
        %v1101 = vpack.c.b16 %v873, %v869
        %v1102 = vpack.c.b16 %v874, %v870
        %v1103 = vpack.c.b16 %v875, %v871
        %v1104 = vpack.c.b16 %v876, %v872
        %v1105 = vpack.c.b16 %v881, %v877
        %v1106 = vpack.c.b16 %v882, %v878
        %v1107 = vpack.c.b16 %v883, %v879
        %v1108 = vpack.c.b16 %v884, %v880
        %v1109 = vpack.c.b16 %v889, %v885
        %v1110 = vpack.c.b16 %v890, %v886
        %v1111 = vpack.c.b16 %v891, %v887
        %v1112 = vpack.c.b16 %v892, %v888
        %v1113 = vpack.c.b16 %v897, %v893
        %v1114 = vpack.c.b16 %v898, %v894
        %v1115 = vpack.c.b16 %v899, %v895
        %v1116 = vpack.c.b16 %v900, %v896
        %v1117 = vpack.c.b16 %v905, %v901
        %v1118 = vpack.c.b16 %v906, %v902
        %v1119 = vpack.c.b16 %v907, %v903
        %v1120 = vpack.c.b16 %v908, %v904
        %v1121 = vpack.c.b16 %v913, %v909
        %v1122 = vpack.c.b16 %v914, %v910
        %v1123 = vpack.c.b16 %v915, %v911
        %v1124 = vpack.c.b16 %v916, %v912
        %v1125 = vpack.c.b16 %v921, %v917
        %v1126 = vpack.c.b16 %v922, %v918
        %v1127 = vpack.c.b16 %v923, %v919
        %v1128 = vpack.c.b16 %v924, %v920
        %v1129 = vpack.c.b16 %v929, %v925
        %v1130 = vpack.c.b16 %v930, %v926
        %v1131 = vpack.c.b16 %v931, %v927
        %v1132 = vpack.c.b16 %v932, %v928
        %v1133 = vpack.c.b16 %v937, %v933
        %v1134 = vpack.c.b16 %v938, %v934
        %v1135 = vpack.c.b16 %v939, %v935
        %v1136 = vpack.c.b16 %v940, %v936
        %v1137 = vpack.c.b16 %v945, %v941
        %v1138 = vpack.c.b16 %v946, %v942
        %v1139 = vpack.c.b16 %v947, %v943
        %v1140 = vpack.c.b16 %v948, %v944
        %v1141 = vpack.c.b16 %v953, %v949
        %v1142 = vpack.c.b16 %v954, %v950
        %v1143 = vpack.c.b16 %v955, %v951
        %v1144 = vpack.c.b16 %v956, %v952
        %v1145 = vpack.c.b16 %v961, %v957
        %v1146 = vpack.c.b16 %v962, %v958
        %v1147 = vpack.c.b16 %v963, %v959
        %v1148 = vpack.c.b16 %v964, %v960
        %v1149 = vpack.c.b16 %v969, %v965
        %v1150 = vpack.c.b16 %v970, %v966
        %v1151 = vpack.c.b16 %v971, %v967
        %v1152 = vpack.c.b16 %v972, %v968
        %v1153 = vpack.c.b16 %v977, %v973
        %v1154 = vpack.c.b16 %v978, %v974
        %v1155 = vpack.c.b16 %v979, %v975
        %v1156 = vpack.c.b16 %v980, %v976
        %v1157 = vpack.c.b16 %v985, %v981
        %v1158 = vpack.c.b16 %v986, %v982
        %v1159 = vpack.c.b16 %v987, %v983
        %v1160 = vpack.c.b16 %v988, %v984
        %v1161 = vpack.c.b16 %v993, %v989
        %v1162 = vpack.c.b16 %v994, %v990
        %v1163 = vpack.c.b16 %v995, %v991
        %v1164 = vpack.c.b16 %v996, %v992
        %v1165 = vpack.c.b16 %v1001, %v997
        %v1166 = vpack.c.b16 %v1002, %v998
        %v1167 = vpack.c.b16 %v1003, %v999
        %v1168 = vpack.c.b16 %v1004, %v1000
        %v1169 = vpack.c.b16 %v1009, %v1005
        %v1170 = vpack.c.b16 %v1010, %v1006
        %v1171 = vpack.c.b16 %v1011, %v1007
        %v1172 = vpack.c.b16 %v1012, %v1008
        %v1173 = vpack.c.b16 %v1017, %v1013
        %v1174 = vpack.c.b16 %v1018, %v1014
        %v1175 = vpack.c.b16 %v1019, %v1015
        %v1176 = vpack.c.b16 %v1020, %v1016
        %v1177 = vpack.c.b16 %v1025, %v1021
        %v1178 = vpack.c.b16 %v1026, %v1022
        %v1179 = vpack.c.b16 %v1027, %v1023
        %v1180 = vpack.c.b16 %v1028, %v1024
        %v1181 = vpack.c.b16 %v1033, %v1029
        %v1182 = vpack.c.b16 %v1034, %v1030
        %v1183 = vpack.c.b16 %v1035, %v1031
        %v1184 = vpack.c.b16 %v1036, %v1032
        %v1185 = vpack.c.b16 %v1041, %v1037
        %v1186 = vpack.c.b16 %v1042, %v1038
        %v1187 = vpack.c.b16 %v1043, %v1039
        %v1188 = vpack.c.b16 %v1044, %v1040
        %v1189 = vpack.c.b16 %v1049, %v1045
        %v1190 = vpack.c.b16 %v1050, %v1046
        %v1191 = vpack.c.b16 %v1051, %v1047
        %v1192 = vpack.c.b16 %v1052, %v1048
        %v1193 = vpack.c.b16 %v1057, %v1053
        %v1194 = vpack.c.b16 %v1058, %v1054
        %v1195 = vpack.c.b16 %v1059, %v1055
        %v1196 = vpack.c.b16 %v1060, %v1056
        %v1197 = vpack.c.b16 %v1065, %v1061
        %v1198 = vpack.c.b16 %v1066, %v1062
        %v1199 = vpack.c.b16 %v1067, %v1063
        %v1200 = vpack.c.b16 %v1068, %v1064
        %v1201 = vpack.c.b16 %v1073, %v1069
        %v1202 = vpack.c.b16 %v1074, %v1070
        %v1203 = vpack.c.b16 %v1075, %v1071
        %v1204 = vpack.c.b16 %v1076, %v1072
        %1333 = vmatprep.subr.bf16.mxu0 %v1106
        %1334 = vmatpush1.bf16.msra.mxu0 %v1105
        %1335 = vmatprep.subr.bf16.mxu0 %v1102
        %1336 = vmatpush1.bf16.msra.mxu0 %v1101
        %1337 = vmatprep.subr.bf16.mxu0 %v1098
        %1338 = vmatpush1.bf16.msra.mxu0 %v1097
        %1339 = vmatprep.subr.bf16.mxu0 %v1094
        %1340 = vmatpush1.bf16.msra.mxu0 %v1093
        %1341 = vmatprep.subr.bf16.mxu0 %v1090
        %1342 = vmatpush1.bf16.msra.mxu0 %v1089
        %1343 = vmatprep.subr.bf16.mxu0 %v1086
        %1344 = vmatpush1.bf16.msra.mxu0 %v1085
        %1345 = vmatprep.subr.bf16.mxu0 %v1082
        %1346 = vmatpush1.bf16.msra.mxu0 %v1081
        %1347 = vmatprep.subr.bf16.mxu0 %v1078
        %1348 = vmatpush1.bf16.msra.mxu0 %v1077
        %1349 = vmatprep.subr.bf16.mxu0 %v1138
        %1350 = vmatpush2.bf16.msra.mxu0 %v1137
        %1351 = vmatprep.subr.bf16.mxu0 %v1134
        %1352 = vmatpush2.bf16.msra.mxu0 %v1133
        %1353 = vmatprep.subr.bf16.mxu0 %v1130
        %1354 = vmatpush2.bf16.msra.mxu0 %v1129
        %1355 = vmatprep.subr.bf16.mxu0 %v1126
        %1356 = vmatpush2.bf16.msra.mxu0 %v1125
        %1357 = vmatprep.subr.bf16.mxu0 %v1122
        %1358 = vmatpush2.bf16.msra.mxu0 %v1121
        %1359 = vmatprep.subr.bf16.mxu0 %v1118
        %1360 = vmatpush2.bf16.msra.mxu0 %v1117
        %1361 = vmatprep.subr.bf16.mxu0 %v1114
        %1362 = vmatpush2.bf16.msra.mxu0 %v1113
        %1363 = vmatprep.subr.bf16.mxu0 %v1110
        %1364 = vmatpush2.bf16.msra.mxu0 %v1109
        %1365 = vmatprep.mubr.bf16.mxu0 %v686
        %1366 = vmatmul.mubr.bf16.gmra.mxu0 %v685
        %v1367 = vpop.f32.mrf.mxu0
        %v1368 = vadd.f32 0.0, %v1367
        %v1369 = vpop.f32.mrf.mxu0
        %v1370 = vadd.f32 0.0, %v1369
        %v1371 = vpop.f32.mrf.mxu0
        %v1372 = vpop.f32.mrf.mxu0
        %1373 = vdwg.mxu0
        %1374 = vmatprep.subr.bf16.mxu0 %v1170
        %1375 = vmatpush1.bf16.msra.mxu0 %v1169
        %1376 = vmatprep.subr.bf16.mxu0 %v1166
        %1377 = vmatpush1.bf16.msra.mxu0 %v1165
        %1378 = vmatprep.subr.bf16.mxu0 %v1162
        %1379 = vmatpush1.bf16.msra.mxu0 %v1161
        %1380 = vmatprep.subr.bf16.mxu0 %v1158
        %1381 = vmatpush1.bf16.msra.mxu0 %v1157
        %1382 = vmatprep.subr.bf16.mxu0 %v1154
        %1383 = vmatpush1.bf16.msra.mxu0 %v1153
        %1384 = vmatprep.subr.bf16.mxu0 %v1150
        %1385 = vmatpush1.bf16.msra.mxu0 %v1149
        %1386 = vmatprep.subr.bf16.mxu0 %v1146
        %1387 = vmatpush1.bf16.msra.mxu0 %v1145
        %1388 = vmatprep.subr.bf16.mxu0 %v1142
        %1389 = vmatpush1.bf16.msra.mxu0 %v1141
        %1390 = vmatprep.subr.bf16.mxu0 %v1202
        %1391 = vmatpush2.bf16.msra.mxu0 %v1201
        %1392 = vmatprep.subr.bf16.mxu0 %v1198
        %1393 = vmatpush2.bf16.msra.mxu0 %v1197
        %1394 = vmatprep.subr.bf16.mxu0 %v1194
        %1395 = vmatpush2.bf16.msra.mxu0 %v1193
        %1396 = vmatprep.subr.bf16.mxu0 %v1190
        %1397 = vmatpush2.bf16.msra.mxu0 %v1189
        %1398 = vmatprep.subr.bf16.mxu0 %v1186
        %1399 = vmatpush2.bf16.msra.mxu0 %v1185
        %1400 = vmatprep.subr.bf16.mxu0 %v1182
        %1401 = vmatpush2.bf16.msra.mxu0 %v1181
        %1402 = vmatprep.subr.bf16.mxu0 %v1178
        %1403 = vmatpush2.bf16.msra.mxu0 %v1177
        %1404 = vmatprep.subr.bf16.mxu0 %v1174
        %1405 = vmatpush2.bf16.msra.mxu0 %v1173
        %1406 = vmatprep.mubr.bf16.mxu0 %v688
        %1407 = vmatmul.mubr.bf16.gmra.mxu0 %v687
        %v1408 = vpop.f32.mrf.mxu0
        %v1409 = vadd.f32 %v1368, %v1408
        %v1410 = vpop.f32.mrf.mxu0
        %v1411 = vadd.f32 %v1370, %v1410
        %v1412 = vpop.f32.mrf.mxu0
        %v1413 = vpop.f32.mrf.mxu0
        %1414 = vdwg.mxu0
        %1415 = vmatprep.subr.bf16.mxu0 %v1108
        %1416 = vmatpush1.bf16.msra.mxu0 %v1107
        %1417 = vmatprep.subr.bf16.mxu0 %v1104
        %1418 = vmatpush1.bf16.msra.mxu0 %v1103
        %1419 = vmatprep.subr.bf16.mxu0 %v1100
        %1420 = vmatpush1.bf16.msra.mxu0 %v1099
        %1421 = vmatprep.subr.bf16.mxu0 %v1096
        %1422 = vmatpush1.bf16.msra.mxu0 %v1095
        %1423 = vmatprep.subr.bf16.mxu0 %v1092
        %1424 = vmatpush1.bf16.msra.mxu0 %v1091
        %1425 = vmatprep.subr.bf16.mxu0 %v1088
        %1426 = vmatpush1.bf16.msra.mxu0 %v1087
        %1427 = vmatprep.subr.bf16.mxu0 %v1084
        %1428 = vmatpush1.bf16.msra.mxu0 %v1083
        %1429 = vmatprep.subr.bf16.mxu0 %v1080
        %1430 = vmatpush1.bf16.msra.mxu0 %v1079
        %1431 = vmatprep.subr.bf16.mxu0 %v1140
        %1432 = vmatpush2.bf16.msra.mxu0 %v1139
        %1433 = vmatprep.subr.bf16.mxu0 %v1136
        %1434 = vmatpush2.bf16.msra.mxu0 %v1135
        %1435 = vmatprep.subr.bf16.mxu0 %v1132
        %1436 = vmatpush2.bf16.msra.mxu0 %v1131
        %1437 = vmatprep.subr.bf16.mxu0 %v1128
        %1438 = vmatpush2.bf16.msra.mxu0 %v1127
        %1439 = vmatprep.subr.bf16.mxu0 %v1124
        %1440 = vmatpush2.bf16.msra.mxu0 %v1123
        %1441 = vmatprep.subr.bf16.mxu0 %v1120
        %1442 = vmatpush2.bf16.msra.mxu0 %v1119
        %1443 = vmatprep.subr.bf16.mxu0 %v1116
        %1444 = vmatpush2.bf16.msra.mxu0 %v1115
        %1445 = vmatprep.subr.bf16.mxu0 %v1112
        %1446 = vmatpush2.bf16.msra.mxu0 %v1111
        %1447 = vmatprep.mubr.bf16.mxu0 %v686
        %1448 = vmatmul.mubr.bf16.gmra.mxu0 %v685
        %v1449 = vpop.f32.mrf.mxu0
        %v1450 = vadd.f32 0.0, %v1449
        %v1451 = vpop.f32.mrf.mxu0
        %v1452 = vadd.f32 0.0, %v1451
        %v1453 = vpop.f32.mrf.mxu0
        %v1454 = vpop.f32.mrf.mxu0
        %1455 = vdwg.mxu0
        %1456 = vmatprep.subr.bf16.mxu0 %v1172
        %1457 = vmatpush1.bf16.msra.mxu0 %v1171
        %1458 = vmatprep.subr.bf16.mxu0 %v1168
        %1459 = vmatpush1.bf16.msra.mxu0 %v1167
        %1460 = vmatprep.subr.bf16.mxu0 %v1164
        %1461 = vmatpush1.bf16.msra.mxu0 %v1163
        %1462 = vmatprep.subr.bf16.mxu0 %v1160
        %1463 = vmatpush1.bf16.msra.mxu0 %v1159
        %1464 = vmatprep.subr.bf16.mxu0 %v1156
        %1465 = vmatpush1.bf16.msra.mxu0 %v1155
        %1466 = vmatprep.subr.bf16.mxu0 %v1152
        %1467 = vmatpush1.bf16.msra.mxu0 %v1151
        %1468 = vmatprep.subr.bf16.mxu0 %v1148
        %1469 = vmatpush1.bf16.msra.mxu0 %v1147
        %1470 = vmatprep.subr.bf16.mxu0 %v1144
        %1471 = vmatpush1.bf16.msra.mxu0 %v1143
        %1472 = vmatprep.subr.bf16.mxu0 %v1204
        %1473 = vmatpush2.bf16.msra.mxu0 %v1203
        %1474 = vmatprep.subr.bf16.mxu0 %v1200
        %1475 = vmatpush2.bf16.msra.mxu0 %v1199
        %1476 = vmatprep.subr.bf16.mxu0 %v1196
        %1477 = vmatpush2.bf16.msra.mxu0 %v1195
        %1478 = vmatprep.subr.bf16.mxu0 %v1192
        %1479 = vmatpush2.bf16.msra.mxu0 %v1191
        %1480 = vmatprep.subr.bf16.mxu0 %v1188
        %1481 = vmatpush2.bf16.msra.mxu0 %v1187
        %1482 = vmatprep.subr.bf16.mxu0 %v1184
        %1483 = vmatpush2.bf16.msra.mxu0 %v1183
        %1484 = vmatprep.subr.bf16.mxu0 %v1180
        %1485 = vmatpush2.bf16.msra.mxu0 %v1179
        %1486 = vmatprep.subr.bf16.mxu0 %v1176
        %1487 = vmatpush2.bf16.msra.mxu0 %v1175
        %1488 = vmatprep.mubr.bf16.mxu0 %v688
        %1489 = vmatmul.mubr.bf16.gmra.mxu0 %v687
        %v1490 = vpop.f32.mrf.mxu0
        %v1491 = vadd.f32 %v1450, %v1490
        %v1492 = vpop.f32.mrf.mxu0
        %v1493 = vadd.f32 %v1452, %v1492
        %v1494 = vpop.f32.mrf.mxu0
        %v1495 = vpop.f32.mrf.mxu0
        %1496 = vdwg.mxu0
        %v1497 = vadd.f32 %v545, %v1409
        %v1498 = vadd.f32 %v546, %v1411
        %v1499 = vadd.f32 %v547, %v1491
        %v1500 = vadd.f32 %v548, %v1493
        %1501 = vst [vmem:[#allocation2] sm:$0xff] %v1497
        %1502 = vst [vmem:[#allocation2 + $0x8] sm:$0xff] %v1498
        %1503 = vst [vmem:[#allocation2 + $0x10] sm:$0xff] %v1499
        %1504 = vst [vmem:[#allocation2 + $0x18] sm:$0xff] %v1500
        %p1505 = scmp.eq.s32.totalorder %s21, 3
        // Predicated region
        $region60: #{alexnet_forward.19} parent=50 // pred_check
          %p1506 = pneg %p1505
        $region61: #{alexnet_forward.19} parent=50 // pred_check_branch
          %1508 = sbr.rel (%p1506) target = $region63
        $region62: #{alexnet_forward.19} parent=50 // pred_region
          %v1509 = vld [vmem:[#allocation2] sm:$0xff]
          %v1510 = vld [vmem:[#allocation2 + $0x8] sm:$0xff]
          %v1511 = vld [vmem:[#allocation2 + $0x10] sm:$0xff]
          %v1512 = vld [vmem:[#allocation2 + $0x18] sm:$0xff]
          %v1513 = vld [vmem:[%s525] sm:$0xf]
          %v1515 = vlaneseq
          %v1516 = vshrl.u32 %v1515, 7
          %v1517 = vsub.s32 0, %v1516
          %v1518 = vrot.slane %v1513, %v1517
          %v1519 = vlaneseq
          %v1520 = vshrl.u32 %v1519, 7
          %v1521 = vsub.s32 1, %v1520
          %v1522 = vrot.slane %v1513, %v1521
          %v1523 = vlaneseq
          %v1524 = vshrl.u32 %v1523, 7
          %v1525 = vsub.s32 2, %v1524
          %v1526 = vrot.slane %v1513, %v1525
          %v1527 = vlaneseq
          %v1528 = vshrl.u32 %v1527, 7
          %v1529 = vsub.s32 3, %v1528
          %v1530 = vrot.slane %v1513, %v1529
          %v1535 = vadd.f32 %v1509, %v1518
          %v1536 = vadd.f32 %v1510, %v1522
          %v1537 = vadd.f32 %v1511, %v1526
          %v1538 = vadd.f32 %v1512, %v1530
          %v1539 = vmax.f32 %v1535, 0.0
          %v1540 = vmax.f32 %v1536, 0.0
          %v1541 = vmax.f32 %v1537, 0.0
          %v1542 = vmax.f32 %v1538, 0.0
          %1543 = vst [vmem:[%s535] sm:$0xff] %v1539
          %1544 = vst [vmem:[%s535 + $0x8] sm:$0xff] %v1540
          %1545 = vst [vmem:[%s535 + $0x10] sm:$0xff] %v1541
          %1546 = vst [vmem:[%s535 + $0x18] sm:$0xff] %v1542
        $region63: #{alexnet_forward.19} parent=50 // pred_fallthru
          _
        %s1547 = smul.u32 4, %s20
        %p1548 = scmp.lt.s32.totalorder %s19, 0
        %s1549 = scalar_select %p1548, %s19, 0
        %p1550 = scmp.lt.s32.totalorder %s1547, 7
        %s1551 = scalar_select %p1550, %s1547, 7
        %s1552 = smul.addr %s1549, 8
        %s1553 = sadd.s32 %s1551, %s1552
        %s1554 = smul.addr %s1553, 8
        %s1555 = scalar_lea.vmem %s3, %s1554
        // Predicated region
        $region64: #{alexnet_forward.19} parent=50 // pred_check
          %p1556 = pneg %p135
        $region65: #{alexnet_forward.19} parent=50 // pred_check_branch
          %1558 = sbr.rel (%p1556) target = $region67
        $region66: #{alexnet_forward.19} parent=50 // pred_region
          %s1559 = smul.u32 4, %s20
        $region67: #{alexnet_forward.19} parent=50 // pred_fallthru
          _
      $region51: #{alexnet_forward.19} parent=5 // pred_fallthru
        _
      %p1560 = scmp.le.s32.totalorder 2, %s9
      // Predicated region
      $region68: #{alexnet_forward.19} parent=5 // pred_check
        %p1561 = pneg %p1560
      $region69: #{alexnet_forward.19} parent=5 // pred_check_branch
        %1563 = sbr.rel (%p1561) target = $region71
      $region70: #{alexnet_forward.19} parent=5 // pred_region
        %s1564 = ssub.s32 %s9, 2
        // Predicated region
        $region72: #{alexnet_forward.19} parent=70 // pred_check
          %p1565 = pneg %p141
        $region73: #{alexnet_forward.19} parent=70 // pred_check_branch
          %1567 = sbr.rel (%p1565) target = $region75
        $region74: #{alexnet_forward.19} parent=70 // pred_region
          %s1568 = smul.u32 4, %s23
          %p1569 = scmp.lt.s32.totalorder %s22, 0
          %s1570 = scalar_select %p1569, %s22, 0
          %p1571 = scmp.lt.s32.totalorder %s1568, 7
          %s1572 = scalar_select %p1571, %s1568, 7
          %s1573 = smul.addr %s1570, 8
          %s1574 = sadd.s32 %s1572, %s1573
          %s1575 = smul.addr %s1574, 8
          %s1576 = scalar_lea.vmem %s3, %s1575
        $region75: #{alexnet_forward.19} parent=70 // pred_fallthru
          _
      $region71: #{alexnet_forward.19} parent=5 // pred_fallthru
        _
    $region6: #{alexnet_forward.19} parent=1 // loop_footer
      %s13 = sadd.s32 1, %s9
    $region7: #{alexnet_forward.19} parent=1 // loop_footer_branch
      %8 = sbr.rel target = $region3
    $region8: #{alexnet_forward.19} parent=1 // loop_exit
      _

// kernel: alexnet_forward.21
$region0: #{alexnet_forward.21}
  #allocation0 [shape = 'u32[]', space=smem, size = 0x4, offset = 0x4, fixed_abs, tag = 'smem constant byte address 0x4 - core index']
  #allocation1 [shape = 'u32[144,128]{1,0:T(1,128)}', space=vmem, size = 0x12000, scoped, tag = 'internal scratch']
  #allocation2 [shape = 'f32[8,128]{1,0:T(8,128)}', space=vmem, size = 0x1000, scoped, tag = 'scratch operand']
  %s0 = inlined_call_operand.vmem [shape: bf16[8,512], index: 0, kind: input, shape index: {}]
  %s1 = inlined_call_operand.vmem [shape: bf16[512,128], index: 1, kind: input, shape index: {}]
  %s2 = inlined_call_operand.vmem [shape: f32[1,128], index: 2, kind: input, shape index: {}]
  %s3 = inlined_call_operand.vmem [shape: f32[8,128], index: 3, kind: output, shape index: {}]
  %s4 = sld [smem:[#allocation0]]
  $region30: #{alexnet_forward.21} parent=0
    _
  %s6 = ssub.s32 1, %s4
  %s7 = scalar_select 0, %s6, %s4
  // Predicated region
  $region2: #{alexnet_forward.21} parent=0 // pred_check
    _
  $region3: #{alexnet_forward.21} parent=0 // pred_check_branch
    %9 = sbr.rel (0) target = $region5
  $region4: #{alexnet_forward.21} parent=0 // pred_region
    _
  $region5: #{alexnet_forward.21} parent=0 // pred_fallthru
    _
  // Predicated region
  $region6: #{alexnet_forward.21} parent=0 // pred_check
    _
  $region7: #{alexnet_forward.21} parent=0 // pred_check_branch
    %11 = sbr.rel (0) target = $region9
  $region8: #{alexnet_forward.21} parent=0 // pred_region
    _
  $region9: #{alexnet_forward.21} parent=0 // pred_fallthru
    _
  // Predicated region
  $region10: #{alexnet_forward.21} parent=0 // pred_check
    _
  $region11: #{alexnet_forward.21} parent=0 // pred_check_branch
    %13 = sbr.rel (0) target = $region13
  $region12: #{alexnet_forward.21} parent=0 // pred_region
    _
  $region13: #{alexnet_forward.21} parent=0 // pred_fallthru
    _
  %p15 = scmp.eq.s32.totalorder 0, 0
  // Predicated region
  $region14: #{alexnet_forward.21} parent=0 // pred_check
    %p16 = pneg %p15
  $region15: #{alexnet_forward.21} parent=0 // pred_check_branch
    %18 = sbr.rel (%p16) target = $region17
  $region16: #{alexnet_forward.21} parent=0 // pred_region
    %19 = vst [vmem:[#allocation2] sm:$0xff] 0.0
  $region17: #{alexnet_forward.21} parent=0 // pred_fallthru
    _
  %v20 = vld [vmem:[#allocation2] sm:$0xff]
  %v21 = vld [vmem:[%s0] sm:$0xff]
  %v22 = vld [vmem:[%s0 + $0x8] sm:$0xff]
  %v23 = vld [vmem:[%s1] sm:$0xf]
  %v24 = vld [vmem:[%s1 + $0x4] sm:$0xf]
  %v25 = vld [vmem:[%s1 + $0x8] sm:$0xf]
  %v26 = vld [vmem:[%s1 + $0xc] sm:$0xf]
  %v27 = vld [vmem:[%s1 + $0x10] sm:$0xf]
  %v28 = vld [vmem:[%s1 + $0x14] sm:$0xf]
  %v29 = vld [vmem:[%s1 + $0x18] sm:$0xf]
  %v30 = vld [vmem:[%s1 + $0x1c] sm:$0xf]
  %v31 = vld [vmem:[%s1 + $0x20] sm:$0xf]
  %v32 = vld [vmem:[%s1 + $0x24] sm:$0xf]
  %v33 = vld [vmem:[%s1 + $0x28] sm:$0xf]
  %v34 = vld [vmem:[%s1 + $0x2c] sm:$0xf]
  %v35 = vld [vmem:[%s1 + $0x30] sm:$0xf]
  %v36 = vld [vmem:[%s1 + $0x34] sm:$0xf]
  %v37 = vld [vmem:[%s1 + $0x38] sm:$0xf]
  %v38 = vld [vmem:[%s1 + $0x3c] sm:$0xf]
  %v39 = vld [vmem:[%s1 + $0x40] sm:$0xf]
  %v40 = vld [vmem:[%s1 + $0x44] sm:$0xf]
  %v41 = vld [vmem:[%s1 + $0x48] sm:$0xf]
  %v42 = vld [vmem:[%s1 + $0x4c] sm:$0xf]
  %v43 = vld [vmem:[%s1 + $0x50] sm:$0xf]
  %v44 = vld [vmem:[%s1 + $0x54] sm:$0xf]
  %v45 = vld [vmem:[%s1 + $0x58] sm:$0xf]
  %v46 = vld [vmem:[%s1 + $0x5c] sm:$0xf]
  %v47 = vld [vmem:[%s1 + $0x60] sm:$0xf]
  %v48 = vld [vmem:[%s1 + $0x64] sm:$0xf]
  %v49 = vld [vmem:[%s1 + $0x68] sm:$0xf]
  %v50 = vld [vmem:[%s1 + $0x6c] sm:$0xf]
  %v51 = vld [vmem:[%s1 + $0x70] sm:$0xf]
  %v52 = vld [vmem:[%s1 + $0x74] sm:$0xf]
  %v53 = vld [vmem:[%s1 + $0x78] sm:$0xf]
  %v54 = vld [vmem:[%s1 + $0x7c] sm:$0xf]
  %v55 = vld [vmem:[%s1 + $0x80] sm:$0xf]
  %v56 = vld [vmem:[%s1 + $0x84] sm:$0xf]
  %v57 = vld [vmem:[%s1 + $0x88] sm:$0xf]
  %v58 = vld [vmem:[%s1 + $0x8c] sm:$0xf]
  %v59 = vld [vmem:[%s1 + $0x90] sm:$0xf]
  %v60 = vld [vmem:[%s1 + $0x94] sm:$0xf]
  %v61 = vld [vmem:[%s1 + $0x98] sm:$0xf]
  %v62 = vld [vmem:[%s1 + $0x9c] sm:$0xf]
  %v63 = vld [vmem:[%s1 + $0xa0] sm:$0xf]
  %v64 = vld [vmem:[%s1 + $0xa4] sm:$0xf]
  %v65 = vld [vmem:[%s1 + $0xa8] sm:$0xf]
  %v66 = vld [vmem:[%s1 + $0xac] sm:$0xf]
  %v67 = vld [vmem:[%s1 + $0xb0] sm:$0xf]
  %v68 = vld [vmem:[%s1 + $0xb4] sm:$0xf]
  %v69 = vld [vmem:[%s1 + $0xb8] sm:$0xf]
  %v70 = vld [vmem:[%s1 + $0xbc] sm:$0xf]
  %v71 = vld [vmem:[%s1 + $0xc0] sm:$0xf]
  %v72 = vld [vmem:[%s1 + $0xc4] sm:$0xf]
  %v73 = vld [vmem:[%s1 + $0xc8] sm:$0xf]
  %v74 = vld [vmem:[%s1 + $0xcc] sm:$0xf]
  %v75 = vld [vmem:[%s1 + $0xd0] sm:$0xf]
  %v76 = vld [vmem:[%s1 + $0xd4] sm:$0xf]
  %v77 = vld [vmem:[%s1 + $0xd8] sm:$0xf]
  %v78 = vld [vmem:[%s1 + $0xdc] sm:$0xf]
  %v79 = vld [vmem:[%s1 + $0xe0] sm:$0xf]
  %v80 = vld [vmem:[%s1 + $0xe4] sm:$0xf]
  %v81 = vld [vmem:[%s1 + $0xe8] sm:$0xf]
  %v82 = vld [vmem:[%s1 + $0xec] sm:$0xf]
  %v83 = vld [vmem:[%s1 + $0xf0] sm:$0xf]
  %v84 = vld [vmem:[%s1 + $0xf4] sm:$0xf]
  %v85 = vld [vmem:[%s1 + $0xf8] sm:$0xf]
  %v86 = vld [vmem:[%s1 + $0xfc] sm:$0xf]
  %v89 = vunpack.c.l.b16 %v21
  %v90 = vunpack.c.h.b16 %v21
  %v91 = vunpack.c.l.b16 %v22
  %v92 = vunpack.c.h.b16 %v22
  %v93 = vpack.c.b16 %v89, %v89
  %v94 = vpack.c.b16 %v90, %v90
  %v95 = vpack.c.b16 %v91, %v91
  %v96 = vpack.c.b16 %v92, %v92
  %v165 = vunpack.c.l.b16 %v23
  %v166 = vunpack.c.l.b16 %v24
  %v167 = vunpack.c.l.b16 %v25
  %v168 = vunpack.c.l.b16 %v26
  %v169 = vunpack.c.l.b16 %v27
  %v170 = vunpack.c.l.b16 %v28
  %v171 = vunpack.c.l.b16 %v29
  %v172 = vunpack.c.l.b16 %v30
  %v173 = vunpack.c.l.b16 %v31
  %v174 = vunpack.c.l.b16 %v32
  %v175 = vunpack.c.l.b16 %v33
  %v176 = vunpack.c.l.b16 %v34
  %v177 = vunpack.c.l.b16 %v35
  %v178 = vunpack.c.l.b16 %v36
  %v179 = vunpack.c.l.b16 %v37
  %v180 = vunpack.c.l.b16 %v38
  %v181 = vunpack.c.l.b16 %v39
  %v182 = vunpack.c.l.b16 %v40
  %v183 = vunpack.c.l.b16 %v41
  %v184 = vunpack.c.l.b16 %v42
  %v185 = vunpack.c.l.b16 %v43
  %v186 = vunpack.c.l.b16 %v44
  %v187 = vunpack.c.l.b16 %v45
  %v188 = vunpack.c.l.b16 %v46
  %v189 = vunpack.c.l.b16 %v47
  %v190 = vunpack.c.l.b16 %v48
  %v191 = vunpack.c.l.b16 %v49
  %v192 = vunpack.c.l.b16 %v50
  %v193 = vunpack.c.l.b16 %v51
  %v194 = vunpack.c.l.b16 %v52
  %v195 = vunpack.c.l.b16 %v53
  %v196 = vunpack.c.l.b16 %v54
  %v197 = vunpack.c.l.b16 %v55
  %v198 = vunpack.c.l.b16 %v56
  %v199 = vunpack.c.l.b16 %v57
  %v200 = vunpack.c.l.b16 %v58
  %v201 = vunpack.c.l.b16 %v59
  %v202 = vunpack.c.l.b16 %v60
  %v203 = vunpack.c.l.b16 %v61
  %v204 = vunpack.c.l.b16 %v62
  %v205 = vunpack.c.l.b16 %v63
  %v206 = vunpack.c.l.b16 %v64
  %v207 = vunpack.c.l.b16 %v65
  %v208 = vunpack.c.l.b16 %v66
  %v209 = vunpack.c.l.b16 %v67
  %v210 = vunpack.c.l.b16 %v68
  %v211 = vunpack.c.l.b16 %v69
  %v212 = vunpack.c.l.b16 %v70
  %v213 = vunpack.c.l.b16 %v71
  %v214 = vunpack.c.l.b16 %v72
  %v215 = vunpack.c.l.b16 %v73
  %v216 = vunpack.c.l.b16 %v74
  %v217 = vunpack.c.l.b16 %v75
  %v218 = vunpack.c.l.b16 %v76
  %v219 = vunpack.c.l.b16 %v77
  %v220 = vunpack.c.l.b16 %v78
  %v221 = vunpack.c.l.b16 %v79
  %v222 = vunpack.c.l.b16 %v80
  %v223 = vunpack.c.l.b16 %v81
  %v224 = vunpack.c.l.b16 %v82
  %v225 = vunpack.c.l.b16 %v83
  %v226 = vunpack.c.l.b16 %v84
  %v227 = vunpack.c.l.b16 %v85
  %v228 = vunpack.c.l.b16 %v86
  %v229 = vpack.c.b16 %v166, %v165
  %v230 = vpack.c.b16 %v168, %v167
  %v231 = vpack.c.b16 %v170, %v169
  %v232 = vpack.c.b16 %v172, %v171
  %v233 = vpack.c.b16 %v174, %v173
  %v234 = vpack.c.b16 %v176, %v175
  %v235 = vpack.c.b16 %v178, %v177
  %v236 = vpack.c.b16 %v180, %v179
  %v237 = vpack.c.b16 %v182, %v181
  %v238 = vpack.c.b16 %v184, %v183
  %v239 = vpack.c.b16 %v186, %v185
  %v240 = vpack.c.b16 %v188, %v187
  %v241 = vpack.c.b16 %v190, %v189
  %v242 = vpack.c.b16 %v192, %v191
  %v243 = vpack.c.b16 %v194, %v193
  %v244 = vpack.c.b16 %v196, %v195
  %v245 = vpack.c.b16 %v198, %v197
  %v246 = vpack.c.b16 %v200, %v199
  %v247 = vpack.c.b16 %v202, %v201
  %v248 = vpack.c.b16 %v204, %v203
  %v249 = vpack.c.b16 %v206, %v205
  %v250 = vpack.c.b16 %v208, %v207
  %v251 = vpack.c.b16 %v210, %v209
  %v252 = vpack.c.b16 %v212, %v211
  %v253 = vpack.c.b16 %v214, %v213
  %v254 = vpack.c.b16 %v216, %v215
  %v255 = vpack.c.b16 %v218, %v217
  %v256 = vpack.c.b16 %v220, %v219
  %v257 = vpack.c.b16 %v222, %v221
  %v258 = vpack.c.b16 %v224, %v223
  %v259 = vpack.c.b16 %v226, %v225
  %v260 = vpack.c.b16 %v228, %v227
  %293 = vmatprep.subr.bf16.mxu0 0
  %294 = vmatpush1.bf16.msra.mxu0 %v236
  %295 = vmatprep.subr.bf16.mxu0 0
  %296 = vmatpush1.bf16.msra.mxu0 %v235
  %297 = vmatprep.subr.bf16.mxu0 0
  %298 = vmatpush1.bf16.msra.mxu0 %v234
  %299 = vmatprep.subr.bf16.mxu0 0
  %300 = vmatpush1.bf16.msra.mxu0 %v233
  %301 = vmatprep.subr.bf16.mxu0 0
  %302 = vmatpush1.bf16.msra.mxu0 %v232
  %303 = vmatprep.subr.bf16.mxu0 0
  %304 = vmatpush1.bf16.msra.mxu0 %v231
  %305 = vmatprep.subr.bf16.mxu0 0
  %306 = vmatpush1.bf16.msra.mxu0 %v230
  %307 = vmatprep.subr.bf16.mxu0 0
  %308 = vmatpush1.bf16.msra.mxu0 %v229
  %309 = vmatprep.subr.bf16.mxu0 0
  %310 = vmatpush2.bf16.msra.mxu0 %v244
  %311 = vmatprep.subr.bf16.mxu0 0
  %312 = vmatpush2.bf16.msra.mxu0 %v243
  %313 = vmatprep.subr.bf16.mxu0 0
  %314 = vmatpush2.bf16.msra.mxu0 %v242
  %315 = vmatprep.subr.bf16.mxu0 0
  %316 = vmatpush2.bf16.msra.mxu0 %v241
  %317 = vmatprep.subr.bf16.mxu0 0
  %318 = vmatpush2.bf16.msra.mxu0 %v240
  %319 = vmatprep.subr.bf16.mxu0 0
  %320 = vmatpush2.bf16.msra.mxu0 %v239
  %321 = vmatprep.subr.bf16.mxu0 0
  %322 = vmatpush2.bf16.msra.mxu0 %v238
  %323 = vmatprep.subr.bf16.mxu0 0
  %324 = vmatpush2.bf16.msra.mxu0 %v237
  %325 = vmatprep.mubr.bf16.mxu0 %v94
  %326 = vmatmul.mubr.bf16.gmra.mxu0 %v93
  %v327 = vpop.f32.mrf.mxu0
  %v328 = vadd.f32 0.0, %v327
  %v329 = vpop.f32.mrf.mxu0
  %v330 = vpop.f32.mrf.mxu0
  %v331 = vpop.f32.mrf.mxu0
  %332 = vdwg.mxu0
  %333 = vmatprep.subr.bf16.mxu0 0
  %334 = vmatpush1.bf16.msra.mxu0 %v252
  %335 = vmatprep.subr.bf16.mxu0 0
  %336 = vmatpush1.bf16.msra.mxu0 %v251
  %337 = vmatprep.subr.bf16.mxu0 0
  %338 = vmatpush1.bf16.msra.mxu0 %v250
  %339 = vmatprep.subr.bf16.mxu0 0
  %340 = vmatpush1.bf16.msra.mxu0 %v249
  %341 = vmatprep.subr.bf16.mxu0 0
  %342 = vmatpush1.bf16.msra.mxu0 %v248
  %343 = vmatprep.subr.bf16.mxu0 0
  %344 = vmatpush1.bf16.msra.mxu0 %v247
  %345 = vmatprep.subr.bf16.mxu0 0
  %346 = vmatpush1.bf16.msra.mxu0 %v246
  %347 = vmatprep.subr.bf16.mxu0 0
  %348 = vmatpush1.bf16.msra.mxu0 %v245
  %349 = vmatprep.subr.bf16.mxu0 0
  %350 = vmatpush2.bf16.msra.mxu0 %v260
  %351 = vmatprep.subr.bf16.mxu0 0
  %352 = vmatpush2.bf16.msra.mxu0 %v259
  %353 = vmatprep.subr.bf16.mxu0 0
  %354 = vmatpush2.bf16.msra.mxu0 %v258
  %355 = vmatprep.subr.bf16.mxu0 0
  %356 = vmatpush2.bf16.msra.mxu0 %v257
  %357 = vmatprep.subr.bf16.mxu0 0
  %358 = vmatpush2.bf16.msra.mxu0 %v256
  %359 = vmatprep.subr.bf16.mxu0 0
  %360 = vmatpush2.bf16.msra.mxu0 %v255
  %361 = vmatprep.subr.bf16.mxu0 0
  %362 = vmatpush2.bf16.msra.mxu0 %v254
  %363 = vmatprep.subr.bf16.mxu0 0
  %364 = vmatpush2.bf16.msra.mxu0 %v253
  %365 = vmatprep.mubr.bf16.mxu0 %v96
  %366 = vmatmul.mubr.bf16.gmra.mxu0 %v95
  %v367 = vpop.f32.mrf.mxu0
  %v368 = vadd.f32 %v328, %v367
  %v369 = vpop.f32.mrf.mxu0
  %v370 = vpop.f32.mrf.mxu0
  %v371 = vpop.f32.mrf.mxu0
  %372 = vdwg.mxu0
  %v373 = vadd.f32 %v20, %v368
  %374 = vst [vmem:[#allocation2] sm:$0xff] %v373
  // Predicated region
  $region18: #{alexnet_forward.21} parent=0 // pred_check
    %p375 = pneg %p15
  $region19: #{alexnet_forward.21} parent=0 // pred_check_branch
    %377 = sbr.rel (%p375) target = $region21
  $region20: #{alexnet_forward.21} parent=0 // pred_region
    %v378 = vld [vmem:[#allocation2] sm:$0xff]
    %v379 = vld [vmem:[%s2] sm:$0x1]
    %v381 = vlaneseq
    %v382 = vshrl.u32 %v381, 7
    %v383 = vsub.s32 0, %v382
    %v384 = vrot.slane %v379, %v383
    %v386 = vadd.f32 %v378, %v384
    %387 = vst [vmem:[%s3] sm:$0xff] %v386
  $region21: #{alexnet_forward.21} parent=0 // pred_fallthru
    _
  // Predicated region
  $region22: #{alexnet_forward.21} parent=0 // pred_check
    _
  $region23: #{alexnet_forward.21} parent=0 // pred_check_branch
    %389 = sbr.rel (0) target = $region25
  $region24: #{alexnet_forward.21} parent=0 // pred_region
    _
  $region25: #{alexnet_forward.21} parent=0 // pred_fallthru
    _
  // Predicated region
  $region26: #{alexnet_forward.21} parent=0 // pred_check
    _
  $region27: #{alexnet_forward.21} parent=0 // pred_check_branch
    %391 = sbr.rel (0) target = $region29
  $region28: #{alexnet_forward.21} parent=0 // pred_region
    _
  $region29: #{alexnet_forward.21} parent=0 // pred_fallthru
    _

</llo_original>
